<compile_context>
chip_gen: v6e
topology: v6e:2x2x1
jax: 0.10.0
libtpu: 0.0.40
codegen_flags: <defaults>
</compile_context>

<pallas_src>
import functools

import jax
import jax.numpy as jnp
from jax.experimental import pallas as pl
from jax.experimental.pallas import tpu as pltpu


# ----------------------------------------------------------------------------
# Kernel 1: frame-level (K axis) work, fully fused, one grid step per batch.
# ----------------------------------------------------------------------------
def _frame_kernel(
    x_ref, et_ref, mk_ref,
    dw1_ref, db1_ref, dw2_ref, db2_ref,        # duration predictor
    ew1_ref, eb1_ref, ew2_ref, eb2_ref,        # energy predictor
    vw_ref, vb_ref,                            # energy_variance (pointwise E -> H)
    ww_ref, wb_ref, wg_ref,                    # upsampler conv_w + MaskedGroupNorm
    cw_ref, cb_ref, cg_ref,                    # upsampler conv_c + MaskedGroupNorm
    dur_ref, ep_ref, vout_ref, vwn_ref, vcn_ref):
    f32 = jnp.float32
    x = x_ref[0].astype(f32)                   # (K, H)
    mk = mk_ref[0].astype(f32)                 # (K, 1) text mask (1/0)
    K = x.shape[0]

    # "same"-padding shift operators for the kernel-3 convs (row i of sh_dn picks x[i-1],
    # row i of sh_up picks x[i+1], boundary rows are zero); applied on the MXU.
    ri = jax.lax.broadcasted_iota(jnp.int32, (K, K), 0)
    ci = jax.lax.broadcasted_iota(jnp.int32, (K, K), 1)
    sh_dn = (ri == ci + 1).astype(f32)
    sh_up = (ri == ci - 1).astype(f32)

    def pw_glu(inp, w_ref, b_ref):
        # pointwise Conv1dGLU; GLU halves are pre-split: w (2, Cin, Cout), b (2, Cout).
        za = jnp.dot(inp, w_ref[0], preferred_element_type=f32) + b_ref[0:1, :]
        zb = jnp.dot(inp, w_ref[1], preferred_element_type=f32) + b_ref[1:2, :]
        return za * jax.nn.sigmoid(zb)

    def conv3_glu(inp, w_ref, b_ref):
        # kernel-3 "same" Conv1dGLU; w (2, 3, Cin, Cout), b (2, Cout).
        im1 = jnp.dot(sh_dn, inp, preferred_element_type=f32)
        ip1 = jnp.dot(sh_up, inp, preferred_element_type=f32)

        def half(h, b_row):
            w = w_ref[h]                       # (3, Cin, Cout)
            return (jnp.dot(im1, w[0], preferred_element_type=f32)
                    + jnp.dot(inp, w[1], preferred_element_type=f32)
                    + jnp.dot(ip1, w[2], preferred_element_type=f32)) + b_row

        return half(0, b_ref[0:1, :]) * jax.nn.sigmoid(half(1, b_ref[1:2, :]))

    def masked_group_norm(y, g_ref):
        # MaskedGroupNorm(C, C) == per-channel stats over valid (mask==1) frames.
        cnt = jnp.maximum(jnp.sum(mk, axis=0, keepdims=True), 1.0)          # (1, 1)
        mean = jnp.sum(y * mk, axis=0, keepdims=True) / cnt                  # (1, C)
        cen = (y - mean) * mk
        var = jnp.sum(cen * cen, axis=0, keepdims=True) / cnt                # (1, C)
        yn = (y - mean) * jax.lax.rsqrt(var + 1e-5)
        return (yn * g_ref[0:1, :] + g_ref[1:2, :]) * mk

    # --- duration predictor: Conv1dGLU(H,H,1) -> Conv1d(H,1,1), masked_fill(~text_mask, 0)
    h = pw_glu(x, dw1_ref, db1_ref)
    dur = jnp.dot(h, dw2_ref[...], preferred_element_type=f32) + db2_ref[...]
    dur_ref[0] = (dur * mk).astype(dur_ref.dtype)

    # --- energy predictor: Conv1dGLU(H,H,3) -> Conv1dGLU(H,E,1)
    h = conv3_glu(x, ew1_ref, eb1_ref)
    ep_ref[0] = pw_glu(h, ew2_ref, eb2_ref).astype(ep_ref.dtype)

    # --- energy variance (pointwise E->H) added to encoded
    v = x + jnp.dot(et_ref[0].astype(f32), vw_ref[...], preferred_element_type=f32) + vb_ref[...]
    vout_ref[0] = v.astype(vout_ref.dtype)

    # --- LearnedUpsamplingNet conv_w / conv_c + MaskedGroupNorm(8, 8)
    vwn_ref[0] = masked_group_norm(conv3_glu(v, ww_ref, wb_ref), wg_ref).astype(vwn_ref.dtype)
    vcn_ref[0] = masked_group_norm(conv3_glu(v, cw_ref, cb_ref), cg_ref).astype(vcn_ref.dtype)


def frame_level(x, et, mk, p, *, vmem_limit_bytes):
    B, K, H = x.shape
    E = et.shape[-1]
    C = p['upw_w'].shape[-1]

    def batch_spec(shape):
        nd = len(shape)
        return pl.BlockSpec((1,) + tuple(shape[1:]),
                            lambda b, nd=nd: (b,) + (0,) * (nd - 1))

    def weight_spec(w):
        nd = w.ndim
        return pl.BlockSpec(tuple(w.shape), lambda b, nd=nd: (0,) * nd)

    weights = [p['dur_w1'], p['dur_b1'], p['dur_w2'], p['dur_b2'],
               p['enr_w1'], p['enr_b1'], p['enr_w2'], p['enr_b2'],
               p['var_w'], p['var_b'],
               p['upw_w'], p['upw_b'], p['upw_g'],
               p['upc_w'], p['upc_b'], p['upc_g']]

    out_shape = (jax.ShapeDtypeStruct((B, K, 1), x.dtype),
                 jax.ShapeDtypeStruct((B, K, E), x.dtype),
                 jax.ShapeDtypeStruct((B, K, H), x.dtype),
                 jax.ShapeDtypeStruct((B, K, C), x.dtype),
                 jax.ShapeDtypeStruct((B, K, C), x.dtype))

    grid_spec = pltpu.PrefetchScalarGridSpec(
        num_scalar_prefetch=0,
        grid=(B,),
        in_specs=([batch_spec(x.shape), batch_spec(et.shape), batch_spec(mk.shape)]
                  + [weight_spec(w) for w in weights]),
        out_specs=[batch_spec(s.shape) for s in out_shape],
    )
    return pl.pallas_call(
        _frame_kernel,
        out_shape=out_shape,
        grid_spec=grid_spec,
        compiler_params=pltpu.CompilerParams(
            dimension_semantics=("parallel",),
            vmem_limit_bytes=vmem_limit_bytes),
    )(x, et, mk, *weights)


# ----------------------------------------------------------------------------
# Kernel 2: upsampling attention over (T x K), tiled over T, lane-dense MLPs.
# ----------------------------------------------------------------------------
def _upsample_kernel(qw_ref, qc_ref, v_ref, mt_ref, mk_ref,
                     uw_ref, bd2_ref, b2_ref, bd3_ref, a_ref, cpar_ref,
                     o_ref):
    f32 = jnp.float32
    tt = mt_ref.shape[1]

    # absolute 0-based frame indices covered by this T-tile
    t0 = pl.program_id(1) * tt
    t_col = (jax.lax.broadcasted_iota(jnp.int32, (tt, 1), 0) + t0).astype(f32)   # (tt, 1)

    mt = mt_ref[0].astype(f32)                 # (tt, 1) mel mask
    mk = mk_ref[0].astype(f32)                 # (1, K)  text mask
    m_tk = mt * mk                             # (tt, K) == bmm(mask_T, mask_K)

    # ---- W-branch MLP: per-k 16-wide chunks packed along lanes (K*16 lanes), GLU halves
    #      pre-split, hidden layer as block-diagonal MXU matmuls; final bias dropped
    #      (constant shift cancels in the softmax).
    qw2 = qw_ref[0]                                                # (2, K*16)
    z1a = t_col * uw_ref[0:1, :] + qw2[0:1, :]                      # (tt, K*16)
    z1b = t_col * uw_ref[1:2, :] + qw2[1:2, :]
    h1 = z1a * jax.nn.sigmoid(z1b)
    wd = bd2_ref.dtype
    z2a = jnp.dot(h1.astype(wd), bd2_ref[0], preferred_element_type=f32) + b2_ref[0:1, :]
    z2b = jnp.dot(h1.astype(wd), bd2_ref[1], preferred_element_type=f32) + b2_ref[1:2, :]
    h2 = z2a * jax.nn.sigmoid(z2b)
    logits = jnp.dot(h2.astype(wd), bd3_ref[...], preferred_element_type=f32)   # (tt, K)

    # masked softmax over K (finite "-inf" so fully-masked rows stay finite; zeroed after)
    lg = jnp.where(m_tk > 0.0, logits, -1e30)
    lg = lg - jnp.max(lg, axis=-1, keepdims=True)
    pexp = jnp.exp(lg)
    den = jnp.sum(pexp, axis=-1, keepdims=True)
    w = jnp.where(m_tk > 0.0, pexp / den, 0.0)                      # (tt, K)

    # ---- C-branch MLP (hidden width 2): scalar-channel formulation, pure (tt, K) VPU work.
    qc = qc_ref[0]                                                  # (4, K)

    def cpar(i):                                                    # (1,1) "scalar"
        return cpar_ref[0:1, i:i + 1]

    z1c = [t_col * cpar(j) + qc[j:j + 1, :] for j in range(4)]
    h1c0 = z1c[0] * jax.nn.sigmoid(z1c[2])
    h1c1 = z1c[1] * jax.nn.sigmoid(z1c[3])
    z2c = [h1c0 * cpar(4 + j) + h1c1 * cpar(8 + j) + cpar(12 + j) for j in range(4)]
    c0 = z2c[0] * jax.nn.sigmoid(z2c[2])
    c1 = z2c[1] * jax.nn.sigmoid(z2c[3])

    # ---- readout O = W @ V^T  +  A([sum W*c0, sum W*c1]),  masked_fill(~mask_T, 0)
    v = v_ref[0]                                                    # (K, H)
    o = jnp.dot(w.astype(v.dtype), v, preferred_element_type=f32)   # (tt, H)
    csum0 = jnp.sum(w * c0, axis=-1, keepdims=True)                 # (tt, 1)
    csum1 = jnp.sum(w * c1, axis=-1, keepdims=True)
    o = o + csum0 * a_ref[0:1, :] + csum1 * a_ref[1:2, :] + a_ref[2:3, :]
    o_ref[0] = (o * mt).astype(o_ref.dtype)


def upsample_level(qw_ab, qc_t, v, mt, mk, uw_ab, bd2, b2, bd3, a_mat, cpar,
                   *, t_tile, vmem_limit_bytes):
    B, K, H = v.shape
    N = qw_ab.shape[-1]
    Tp = mt.shape[1]
    grid = (B, Tp // t_tile)

    in_specs = [
        pl.BlockSpec((1, 2, N), lambda b, t: (b, 0, 0)),          # qw_ab
        pl.BlockSpec((1, 4, K), lambda b, t: (b, 0, 0)),          # qc_t
        pl.BlockSpec((1, K, H), lambda b, t: (b, 0, 0)),          # V
        pl.BlockSpec((1, t_tile, 1), lambda b, t: (b, t, 0)),     # mask_T tile
        pl.BlockSpec((1, 1, K), lambda b, t: (b, 0, 0)),          # mask_K
        pl.BlockSpec((2, N), lambda b, t: (0, 0)),                # uw_ab
        pl.BlockSpec((2, N, N), lambda b, t: (0, 0, 0)),          # block-diag layer-2 weights
        pl.BlockSpec((2, N), lambda b, t: (0, 0)),                # layer-2 biases (tiled)
        pl.BlockSpec((N, K), lambda b, t: (0, 0)),                # block-diag layer-3 weights
        pl.BlockSpec((3, H), lambda b, t: (0, 0)),                # A: rows a0, a1, bias
        pl.BlockSpec((1, 16), lambda b, t: (0, 0)),               # mlp_c small params
    ]
    out_specs = pl.BlockSpec((1, t_tile, H), lambda b, t: (b, t, 0))

    return pl.pallas_call(
        _upsample_kernel,
        out_shape=jax.ShapeDtypeStruct((B, Tp, H), v.dtype),
        grid_spec=pltpu.PrefetchScalarGridSpec(
            num_scalar_prefetch=0, grid=grid,
            in_specs=in_specs, out_specs=out_specs),
        compiler_params=pltpu.CompilerParams(
            dimension_semantics=("parallel", "parallel"),
            vmem_limit_bytes=vmem_limit_bytes),
    )(qw_ab, qc_t, v, mt, mk, uw_ab, bd2, b2, bd3, a_mat, cpar)


# ----------------------------------------------------------------------------
# Full VarianceAdaptor.forward
# ----------------------------------------------------------------------------
def variance_adaptor_forward(params, encoded, text_mask, mel_mask, duration_target,
                             energy_target, *, t_tile=256, mxu_dtype=jnp.float32):
    """encoded (B,K,H), text_mask (B,K,1) bool, mel_mask (B,T,1) bool,
    duration_target (B,K) int, energy_target (B,E,K).
    Returns (expanded (B,T,H), duration_prediction (B,K), energy_prediction (B,E,K))."""
    f32 = jnp.float32
    B, K, H = encoded.shape
    T = mel_mask.shape[1]
    vmem_limit = 64 * 1024 * 1024

    mk = text_mask.astype(encoded.dtype)                                   # (B, K, 1)
    et = jnp.transpose(energy_target, (0, 2, 1)).astype(encoded.dtype)     # (B, K, E)

    # ---- kernel 1: all frame-level (K axis) work in one fused call.
    dur, ep, v, vwn, vcn = frame_level(encoded, et, mk, params,
                                       vmem_limit_bytes=vmem_limit)

    # ---- tiny plain-JAX glue: durations cumsum, fold S/E into MLP layer 1 (k-dependent
    #      part), build lane-dense block-diagonal weights for the (t,k)-pointwise MLPs.
    d = duration_target.astype(f32)
    e_cum = jnp.cumsum(d, axis=1)                                          # (B, K)
    s_cum = e_cum - d

    w1w, b1w = params['mlpw1_w'].astype(f32), params['mlpw1_b'].astype(f32)
    w1c, b1c = params['mlpc1_w'].astype(f32), params['mlpc1_b'].astype(f32)
    qw = (vwn.astype(f32) @ w1w[2:] + b1w
          - s_cum[..., None] * w1w[0] + e_cum[..., None] * w1w[1])          # (B, K, 32)
    qc = (vcn.astype(f32) @ w1c[2:] + b1c
          - s_cum[..., None] * w1c[0] + e_cum[..., None] * w1c[1])          # (B, K, 4)
    nh = w1w.shape[1] // 2                                                  # 16
    N = K * nh
    qw_ab = jnp.stack([qw[..., :nh].reshape(B, N), qw[..., nh:].reshape(B, N)], axis=1)
    qc_t = jnp.transpose(qc, (0, 2, 1))                                     # (B, 4, K)

    uw = w1w[0] - w1w[1]
    uw_ab = jnp.stack([jnp.tile(uw[:nh], K), jnp.tile(uw[nh:], K)], axis=0)  # (2, N)
    eye_k = jnp.eye(K, dtype=f32)
    w2w, b2w = params['mlpw2_w'].astype(f32), params['mlpw2_b'].astype(f32)
    bd2 = jnp.stack([jnp.kron(eye_k, w2w[:, :nh]),
                     jnp.kron(eye_k, w2w[:, nh:])], axis=0).astype(mxu_dtype)  # (2, N, N)
    b2 = jnp.stack([jnp.tile(b2w[:nh], K), jnp.tile(b2w[nh:], K)], axis=0)     # (2, N)
    bd3 = jnp.kron(eye_k, params['mlpw3_w'].astype(f32)).astype(mxu_dtype)     # (N, K)
    # params['mlpw3_b'] is a constant logit shift -> no effect on the softmax; dropped.

    uc = w1c[0] - w1c[1]
    cpar = jnp.concatenate([uc, params['mlpc2_w'].astype(f32).reshape(-1),
                            params['mlpc2_b'].astype(f32)]).reshape(1, 16)
    a_mat = jnp.concatenate([params['A_w'].astype(f32),
                             params['A_b'].astype(f32)[None, :]], axis=0)      # (3, H)

    # ---- kernel 2: the (T x K) upsampling attention, tiled over T.
    tt = min(t_tile, T)
    t_pad = ((T + tt - 1) // tt) * tt
    mt = mel_mask.astype(encoded.dtype)                                        # (B, T, 1)
    if t_pad != T:
        mt = jnp.pad(mt, ((0, 0), (0, t_pad - T), (0, 0)))
    mk_row = jnp.transpose(mk, (0, 2, 1))                                      # (B, 1, K)

    expanded = upsample_level(qw_ab, qc_t, v, mt, mk_row, uw_ab, bd2, b2, bd3,
                              a_mat, cpar, t_tile=tt, vmem_limit_bytes=vmem_limit)
    expanded = expanded[:, :T, :]

    return expanded, dur[..., 0], jnp.transpose(ep, (0, 2, 1))


# ----------------------------------------------------------------------------
# Pure-JAX reference (same inferred math, no Pallas) for correctness checking.
# ----------------------------------------------------------------------------
def reference_forward(p, encoded, text_mask, mel_mask, duration_target, energy_target):
    f32 = jnp.float32
    x = encoded.astype(f32)
    mk = text_mask.astype(f32)
    mt = mel_mask.astype(f32)
    B, K, H = x.shape
    T = mel_mask.shape[1]

    def pw_glu(inp, w, b):
        return (inp @ w[0] + b[0]) * jax.nn.sigmoid(inp @ w[1] + b[1])

    def shift(inp, k):
        z = jnp.zeros_like(inp[:, :1])
        return (jnp.concatenate([z, inp[:, :-1]], axis=1) if k < 0
                else jnp.concatenate([inp[:, 1:], z], axis=1))

    def conv3_glu(inp, w, b):
        im1, ip1 = shift(inp, -1), shift(inp, +1)

        def taps(h):
            return im1 @ w[h, 0] + inp @ w[h, 1] + ip1 @ w[h, 2]

        return (taps(0) + b[0]) * jax.nn.sigmoid(taps(1) + b[1])

    def masked_gn(y, g):
        cnt = jnp.maximum(jnp.sum(mk, axis=1, keepdims=True), 1.0)
        mean = jnp.sum(y * mk, axis=1, keepdims=True) / cnt
        cen = (y - mean) * mk
        var = jnp.sum(cen * cen, axis=1, keepdims=True) / cnt
        return ((y - mean) * jax.lax.rsqrt(var + 1e-5) * g[0] + g[1]) * mk

    dur = ((pw_glu(x, p['dur_w1'], p['dur_b1']) @ p['dur_w2'] + p['dur_b2']) * mk)[..., 0]
    ep = pw_glu(conv3_glu(x, p['enr_w1'], p['enr_b1']), p['enr_w2'], p['enr_b2'])
    et = jnp.transpose(energy_target, (0, 2, 1)).astype(f32)
    v = x + et @ p['var_w'] + p['var_b']
    vwn = masked_gn(conv3_glu(v, p['upw_w'], p['upw_b']), p['upw_g'])
    vcn = masked_gn(conv3_glu(v, p['upc_w'], p['upc_b']), p['upc_g'])

    d = duration_target.astype(f32)
    e_cum = jnp.cumsum(d, axis=1)
    s_cum = e_cum - d
    tgrid = jnp.arange(T, dtype=f32)[None, :, None]
    S = tgrid - s_cum[:, None, :]
    E = e_cum[:, None, :] - tgrid

    def lin_glu(z, w, b):
        y = z @ w + b
        co = w.shape[1] // 2
        return y[..., :co] * jax.nn.sigmoid(y[..., co:])

    c8 = vwn.shape[-1]
    sev_w = jnp.concatenate([S[..., None], E[..., None],
                             jnp.broadcast_to(vwn[:, None], (B, T, K, c8))], axis=-1)
    sev_c = jnp.concatenate([S[..., None], E[..., None],
                             jnp.broadcast_to(vcn[:, None], (B, T, K, c8))], axis=-1)
    hw = lin_glu(lin_glu(sev_w, p['mlpw1_w'], p['mlpw1_b']), p['mlpw2_w'], p['mlpw2_b'])
    logits = (hw @ p['mlpw3_w'])[..., 0] + p['mlpw3_b'][0]
    m_tk = (mt * jnp.transpose(mk, (0, 2, 1))) > 0.0
    logits = jnp.where(m_tk, logits, -jnp.inf)
    w_att = jnp.where(m_tk, jax.nn.softmax(logits, axis=-1), 0.0)
    c = lin_glu(lin_glu(sev_c, p['mlpc1_w'], p['mlpc1_b']), p['mlpc2_w'], p['mlpc2_b'])
    o = jnp.einsum('btk,bkh->bth', w_att, v)
    c0 = jnp.sum(w_att * c[..., 0], axis=-1, keepdims=True)
    c1 = jnp.sum(w_att * c[..., 1], axis=-1, keepdims=True)
    o = (o + c0 * p['A_w'][0] + c1 * p['A_w'][1] + p['A_b']) * mt
    return o, dur, jnp.transpose(ep, (0, 2, 1))


# ----------------------------------------------------------------------------
if __name__ == "__main__":
    B, K, H = 2, 16, 32        # batch, text frames, num_hidden
    E = 8                      # num_energy
    C = 8                      # LearnedUpsamplingNet conv channels

    keys = iter(jax.random.split(jax.random.PRNGKey(0), 64))

    def rnd(shape, scale=0.1):
        return scale * jax.random.normal(next(keys), shape, dtype=jnp.float32)

    params = {
        # duration_predictor = Conv1dGLU(H,H,1) + Conv1d(H,1,1)  (GLU halves pre-split)
        'dur_w1': rnd((2, H, H)), 'dur_b1': rnd((2, H), 0.05),
        'dur_w2': rnd((H, 1)), 'dur_b2': rnd((1, 1), 0.05),
        # energy_predictor = Conv1dGLU(H,H,3) + Conv1dGLU(H,E,1)
        'enr_w1': rnd((2, 3, H, H)), 'enr_b1': rnd((2, H), 0.05),
        'enr_w2': rnd((2, H, E)), 'enr_b2': rnd((2, E), 0.05),
        # energy_variance = Conv1d(E,H,1)
        'var_w': rnd((E, H)), 'var_b': rnd((1, H), 0.05),
        # upsampler conv_w / conv_c (Conv1dGLU(H,8,3)) + MaskedGroupNorm(8,8) [gamma; beta]
        'upw_w': rnd((2, 3, H, C)), 'upw_b': rnd((2, C), 0.05),
        'upw_g': jnp.stack([1.0 + rnd((C,), 0.1), rnd((C,), 0.05)], axis=0),
        'upc_w': rnd((2, 3, H, C)), 'upc_b': rnd((2, C), 0.05),
        'upc_g': jnp.stack([1.0 + rnd((C,), 0.1), rnd((C,), 0.05)], axis=0),
        # mlp_w = LinearGLU(10,16) -> LinearGLU(16,16) -> Linear(16,1)   (weights transposed)
        'mlpw1_w': rnd((2 + C, 32)), 'mlpw1_b': rnd((32,), 0.05),
        'mlpw2_w': rnd((16, 32)), 'mlpw2_b': rnd((32,), 0.05),
        'mlpw3_w': rnd((16, 1)), 'mlpw3_b': rnd((1,), 0.05),
        # mlp_c = LinearGLU(10,2) -> LinearGLU(2,2)
        'mlpc1_w': rnd((2 + C, 4)), 'mlpc1_b': rnd((4,), 0.05),
        'mlpc2_w': rnd((2, 4)), 'mlpc2_b': rnd((4,), 0.05),
        # A = Linear(2, H)   (weight transposed)
        'A_w': rnd((2, H)), 'A_b': rnd((H,), 0.05),
    }

    encoded = jax.random.normal(next(keys), (B, K, H), dtype=jnp.float32)
    energy_target = jax.random.normal(next(keys), (B, E, K), dtype=jnp.float32)

    # text mask: batch 0 fully valid, batch 1 only first 12 frames valid
    valid_k = jnp.array([K, 12])
    text_mask = (jnp.arange(K)[None, :] < valid_k[:, None])[..., None]         # (B,K,1) bool

    # deterministic integer durations (0 on padded text frames); T = max total duration
    dur_raw = (jnp.arange(K)[None, :] + jnp.arange(B)[:, None]) % 3 + 1
    duration_target = jnp.where(text_mask[..., 0], dur_raw, 0).astype(jnp.int32)
    total = jnp.sum(duration_target, axis=1)
    T = int(jnp.max(total))
    mel_mask = (jnp.arange(T)[None, :] < total[:, None])[..., None]            # (B,T,1) bool

    fwd = jax.jit(functools.partial(variance_adaptor_forward, t_tile=256))
    expanded, dur_pred, energy_pred = fwd(params, encoded, text_mask, mel_mask,
                                          duration_target, energy_target)
    jax.block_until_ready((expanded, dur_pred, energy_pred))

    exp_ref, dur_ref, ep_ref = reference_forward(params, encoded, text_mask, mel_mask,
                                                 duration_target, energy_target)

    assert expanded.shape == (B, T, H)
    assert dur_pred.shape == (B, K)
    assert energy_pred.shape == (B, E, K)
    assert jnp.allclose(expanded, exp_ref, atol=1e-3, rtol=1e-3), \
        float(jnp.max(jnp.abs(expanded - exp_ref)))
    assert jnp.allclose(dur_pred, dur_ref, atol=1e-4, rtol=1e-4)
    assert jnp.allclose(energy_pred, ep_ref, atol=1e-4, rtol=1e-4)

    print("KERNEL_OK")
</pallas_src>

<mosaic_0001>
module attributes {stable_mosaic.version = 11 : i64} {
  func.func @_frame_kernel(%arg0: i32, %arg1: memref<1x16x32xf32, #tpu.memory_space<vmem>>, %arg2: memref<1x16x8xf32, #tpu.memory_space<vmem>>, %arg3: memref<1x16x1xf32, #tpu.memory_space<vmem>>, %arg4: memref<2x32x32xf32, #tpu.memory_space<vmem>>, %arg5: memref<2x32xf32, #tpu.memory_space<vmem>>, %arg6: memref<32x1xf32, #tpu.memory_space<vmem>>, %arg7: memref<1x1xf32, #tpu.memory_space<vmem>>, %arg8: memref<2x3x32x32xf32, #tpu.memory_space<vmem>>, %arg9: memref<2x32xf32, #tpu.memory_space<vmem>>, %arg10: memref<2x32x8xf32, #tpu.memory_space<vmem>>, %arg11: memref<2x8xf32, #tpu.memory_space<vmem>>, %arg12: memref<8x32xf32, #tpu.memory_space<vmem>>, %arg13: memref<1x32xf32, #tpu.memory_space<vmem>>, %arg14: memref<2x3x32x8xf32, #tpu.memory_space<vmem>>, %arg15: memref<2x8xf32, #tpu.memory_space<vmem>>, %arg16: memref<2x8xf32, #tpu.memory_space<vmem>>, %arg17: memref<2x3x32x8xf32, #tpu.memory_space<vmem>>, %arg18: memref<2x8xf32, #tpu.memory_space<vmem>>, %arg19: memref<2x8xf32, #tpu.memory_space<vmem>>, %arg20: memref<1x16x1xf32, #tpu.memory_space<vmem>>, %arg21: memref<1x16x8xf32, #tpu.memory_space<vmem>>, %arg22: memref<1x16x32xf32, #tpu.memory_space<vmem>>, %arg23: memref<1x16x8xf32, #tpu.memory_space<vmem>>, %arg24: memref<1x16x8xf32, #tpu.memory_space<vmem>>) attributes {dimension_semantics = [#tpu.dimension_semantics<parallel>], iteration_bounds = array<i64: 2>, scalar_prefetch = 0 : i64, scratch_operands = 0 : i64, tpu.core_type = #tpu.core_type<tc>, window_params = [{transform_indices = @transform_0, window_bounds = array<i64: 1, 16, 32>}, {transform_indices = @transform_1, window_bounds = array<i64: 1, 16, 8>}, {transform_indices = @transform_2, window_bounds = array<i64: 1, 16, 1>}, {pipeline_mode = #tpu.pipeline_mode<synchronous>, transform_indices = @transform_3, window_bounds = array<i64: 2, 32, 32>}, {pipeline_mode = #tpu.pipeline_mode<synchronous>, transform_indices = @transform_4, window_bounds = array<i64: 2, 32>}, {pipeline_mode = #tpu.pipeline_mode<synchronous>, transform_indices = @transform_5, window_bounds = array<i64: 32, 1>}, {pipeline_mode = #tpu.pipeline_mode<synchronous>, transform_indices = @transform_6, window_bounds = array<i64: 1, 1>}, {pipeline_mode = #tpu.pipeline_mode<synchronous>, transform_indices = @transform_7, window_bounds = array<i64: 2, 3, 32, 32>}, {pipeline_mode = #tpu.pipeline_mode<synchronous>, transform_indices = @transform_8, window_bounds = array<i64: 2, 32>}, {pipeline_mode = #tpu.pipeline_mode<synchronous>, transform_indices = @transform_9, window_bounds = array<i64: 2, 32, 8>}, {pipeline_mode = #tpu.pipeline_mode<synchronous>, transform_indices = @transform_10, window_bounds = array<i64: 2, 8>}, {pipeline_mode = #tpu.pipeline_mode<synchronous>, transform_indices = @transform_11, window_bounds = array<i64: 8, 32>}, {pipeline_mode = #tpu.pipeline_mode<synchronous>, transform_indices = @transform_12, window_bounds = array<i64: 1, 32>}, {pipeline_mode = #tpu.pipeline_mode<synchronous>, transform_indices = @transform_13, window_bounds = array<i64: 2, 3, 32, 8>}, {pipeline_mode = #tpu.pipeline_mode<synchronous>, transform_indices = @transform_14, window_bounds = array<i64: 2, 8>}, {pipeline_mode = #tpu.pipeline_mode<synchronous>, transform_indices = @transform_15, window_bounds = array<i64: 2, 8>}, {pipeline_mode = #tpu.pipeline_mode<synchronous>, transform_indices = @transform_16, window_bounds = array<i64: 2, 3, 32, 8>}, {pipeline_mode = #tpu.pipeline_mode<synchronous>, transform_indices = @transform_17, window_bounds = array<i64: 2, 8>}, {pipeline_mode = #tpu.pipeline_mode<synchronous>, transform_indices = @transform_18, window_bounds = array<i64: 2, 8>}, {transform_indices = @transform_19, window_bounds = array<i64: 1, 16, 1>}, {transform_indices = @transform_20, window_bounds = array<i64: 1, 16, 8>}, {transform_indices = @transform_21, window_bounds = array<i64: 1, 16, 32>}, {transform_indices = @transform_22, window_bounds = array<i64: 1, 16, 8>}, {transform_indices = @transform_23, window_bounds = array<i64: 1, 16, 8>}]} {
    %c0 = arith.constant 0 : index
    %c0_0 = arith.constant 0 : index
    %c0_1 = arith.constant 0 : index
    %0 = vector.load %arg1[%c0, %c0_0, %c0_1] : memref<1x16x32xf32, #tpu.memory_space<vmem>>, vector<1x16x32xf32>
    %1 = vector.shape_cast %0 : vector<1x16x32xf32> to vector<16x32xf32>
    %c0_2 = arith.constant 0 : index
    %c0_3 = arith.constant 0 : index
    %c0_4 = arith.constant 0 : index
    %2 = vector.load %arg3[%c0_2, %c0_3, %c0_4] : memref<1x16x1xf32, #tpu.memory_space<vmem>>, vector<1x16x1xf32>
    %3 = vector.shape_cast %2 : vector<1x16x1xf32> to vector<16x1xf32>
    %4 = tpu.iota {dimensions = array<i32: 0>} : vector<16x16xi32>
    %5 = tpu.iota {dimensions = array<i32: 1>} : vector<16x16xi32>
    %c1_i32 = arith.constant 1 : i32
    %6 = vector.broadcast %c1_i32 : i32 to vector<16x16xi32>
    %7 = arith.addi %5, %6 : vector<16x16xi32>
    %8 = arith.cmpi eq, %4, %7 : vector<16x16xi32>
    %9 = arith.extui %8 : vector<16x16xi1> to vector<16x16xi32>
    %10 = arith.sitofp %9 : vector<16x16xi32> to vector<16x16xf32>
    %c1_i32_5 = arith.constant 1 : i32
    %11 = vector.broadcast %c1_i32_5 : i32 to vector<16x16xi32>
    %12 = arith.subi %5, %11 : vector<16x16xi32>
    %13 = arith.cmpi eq, %4, %12 : vector<16x16xi32>
    %14 = arith.extui %13 : vector<16x16xi1> to vector<16x16xi32>
    %15 = arith.sitofp %14 : vector<16x16xi32> to vector<16x16xf32>
    %c0_6 = arith.constant 0 : index
    %c0_7 = arith.constant 0 : index
    %c0_8 = arith.constant 0 : index
    %16 = vector.load %arg4[%c0_6, %c0_7, %c0_8] : memref<2x32x32xf32, #tpu.memory_space<vmem>>, vector<1x32x32xf32>
    %17 = vector.shape_cast %16 : vector<1x32x32xf32> to vector<32x32xf32>
    %cst = arith.constant dense<0.000000e+00> : vector<16x32xf32>
    %18 = tpu.matmul %1, %17, %cst {dimension_numbers = #tpu.dot_dimension_numbers<[1], [0], [0], [1], [0, 0, 1, 1], [], []>} : vector<16x32xf32>, vector<32x32xf32>, vector<16x32xf32> -> vector<16x32xf32>
    %c0_9 = arith.constant 0 : index
    %c0_10 = arith.constant 0 : index
    %19 = vector.load %arg5[%c0_9, %c0_10] : memref<2x32xf32, #tpu.memory_space<vmem>>, vector<1x32xf32>
    %20 = vector.broadcast %19 : vector<1x32xf32> to vector<16x32xf32>
    %21 = arith.addf %18, %20 : vector<16x32xf32>
    %c1 = arith.constant 1 : index
    %c0_11 = arith.constant 0 : index
    %c0_12 = arith.constant 0 : index
    %22 = vector.load %arg4[%c1, %c0_11, %c0_12] : memref<2x32x32xf32, #tpu.memory_space<vmem>>, vector<1x32x32xf32>
    %23 = vector.shape_cast %22 : vector<1x32x32xf32> to vector<32x32xf32>
    %cst_13 = arith.constant dense<0.000000e+00> : vector<16x32xf32>
    %24 = tpu.matmul %1, %23, %cst_13 {dimension_numbers = #tpu.dot_dimension_numbers<[1], [0], [0], [1], [0, 0, 1, 1], [], []>} : vector<16x32xf32>, vector<32x32xf32>, vector<16x32xf32> -> vector<16x32xf32>
    %c1_14 = arith.constant 1 : index
    %c0_15 = arith.constant 0 : index
    %25 = vector.load %arg5[%c1_14, %c0_15] : memref<2x32xf32, #tpu.memory_space<vmem>>, vector<1x32xf32>
    %26 = vector.broadcast %25 : vector<1x32xf32> to vector<16x32xf32>
    %27 = arith.addf %24, %26 : vector<16x32xf32>
    %28 = arith.negf %27 : vector<16x32xf32>
    %29 = math.exp %28 : vector<16x32xf32>
    %cst_16 = arith.constant 1.000000e+00 : f32
    %30 = vector.broadcast %cst_16 : f32 to vector<16x32xf32>
    %31 = arith.addf %30, %29 : vector<16x32xf32>
    %32 = arith.divf %30, %31 : vector<16x32xf32>
    %33 = arith.mulf %21, %32 : vector<16x32xf32>
    %c0_17 = arith.constant 0 : index
    %c0_18 = arith.constant 0 : index
    %34 = vector.load %arg6[%c0_17, %c0_18] : memref<32x1xf32, #tpu.memory_space<vmem>>, vector<32x1xf32>
    %cst_19 = arith.constant dense<0.000000e+00> : vector<16x1xf32>
    %35 = tpu.matmul %33, %34, %cst_19 {dimension_numbers = #tpu.dot_dimension_numbers<[1], [0], [0], [1], [0, 0, 1, 1], [], []>} : vector<16x32xf32>, vector<32x1xf32>, vector<16x1xf32> -> vector<16x1xf32>
    %c0_20 = arith.constant 0 : index
    %c0_21 = arith.constant 0 : index
    %36 = vector.load %arg7[%c0_20, %c0_21] : memref<1x1xf32, #tpu.memory_space<vmem>>, vector<1x1xf32>
    %37 = vector.broadcast %36 : vector<1x1xf32> to vector<16x1xf32>
    %38 = arith.addf %35, %37 : vector<16x1xf32>
    %39 = arith.mulf %38, %3 : vector<16x1xf32>
    %c0_22 = arith.constant 0 : index
    %c0_23 = arith.constant 0 : index
    %c0_24 = arith.constant 0 : index
    %40 = vector.load %arg20[%c0_22, %c0_23, %c0_24] : memref<1x16x1xf32, #tpu.memory_space<vmem>>, vector<1x16x1xf32>
    %41 = vector.shape_cast %40 : vector<1x16x1xf32> to vector<16x1xf32>
    %42 = vector.shape_cast %39 : vector<16x1xf32> to vector<1x16x1xf32>
    tpu.vector_store %arg20[%c0_22, %c0_23, %c0_24], %42 {strides = array<i32>} : memref<1x16x1xf32, #tpu.memory_space<vmem>>, vector<1x16x1xf32>,
    %cst_25 = arith.constant dense<0.000000e+00> : vector<16x32xf32>
    %43 = tpu.matmul %10, %1, %cst_25 {dimension_numbers = #tpu.dot_dimension_numbers<[1], [0], [0], [1], [0, 0, 1, 1], [], []>} : vector<16x16xf32>, vector<16x32xf32>, vector<16x32xf32> -> vector<16x32xf32>
    %cst_26 = arith.constant dense<0.000000e+00> : vector<16x32xf32>
    %44 = tpu.matmul %15, %1, %cst_26 {dimension_numbers = #tpu.dot_dimension_numbers<[1], [0], [0], [1], [0, 0, 1, 1], [], []>} : vector<16x16xf32>, vector<16x32xf32>, vector<16x32xf32> -> vector<16x32xf32>
    %c0_27 = arith.constant 0 : index
    %c0_28 = arith.constant 0 : index
    %45 = vector.load %arg9[%c0_27, %c0_28] : memref<2x32xf32, #tpu.memory_space<vmem>>, vector<1x32xf32>
    %c0_29 = arith.constant 0 : index
    %c0_30 = arith.constant 0 : index
    %c0_31 = arith.constant 0 : index
    %c0_32 = arith.constant 0 : index
    %46 = vector.load %arg8[%c0_29, %c0_30, %c0_31, %c0_32] : memref<2x3x32x32xf32, #tpu.memory_space<vmem>>, vector<1x3x32x32xf32>
    %47 = vector.shape_cast %46 : vector<1x3x32x32xf32> to vector<3x32x32xf32>
    %48 = vector.extract_strided_slice %47 {offsets = [0, 0, 0], sizes = [1, 32, 32], strides = [1, 1, 1]} : vector<3x32x32xf32> to vector<1x32x32xf32>
    %49 = vector.shape_cast %48 : vector<1x32x32xf32> to vector<32x32xf32>
    %cst_33 = arith.constant dense<0.000000e+00> : vector<16x32xf32>
    %50 = tpu.matmul %43, %49, %cst_33 {dimension_numbers = #tpu.dot_dimension_numbers<[1], [0], [0], [1], [0, 0, 1, 1], [], []>} : vector<16x32xf32>, vector<32x32xf32>, vector<16x32xf32> -> vector<16x32xf32>
    %51 = vector.extract_strided_slice %47 {offsets = [1, 0, 0], sizes = [1, 32, 32], strides = [1, 1, 1]} : vector<3x32x32xf32> to vector<1x32x32xf32>
    %52 = vector.shape_cast %51 : vector<1x32x32xf32> to vector<32x32xf32>
    %cst_34 = arith.constant dense<0.000000e+00> : vector<16x32xf32>
    %53 = tpu.matmul %1, %52, %cst_34 {dimension_numbers = #tpu.dot_dimension_numbers<[1], [0], [0], [1], [0, 0, 1, 1], [], []>} : vector<16x32xf32>, vector<32x32xf32>, vector<16x32xf32> -> vector<16x32xf32>
    %54 = arith.addf %50, %53 : vector<16x32xf32>
    %55 = vector.extract_strided_slice %47 {offsets = [2, 0, 0], sizes = [1, 32, 32], strides = [1, 1, 1]} : vector<3x32x32xf32> to vector<1x32x32xf32>
    %56 = vector.shape_cast %55 : vector<1x32x32xf32> to vector<32x32xf32>
    %cst_35 = arith.constant dense<0.000000e+00> : vector<16x32xf32>
    %57 = tpu.matmul %44, %56, %cst_35 {dimension_numbers = #tpu.dot_dimension_numbers<[1], [0], [0], [1], [0, 0, 1, 1], [], []>} : vector<16x32xf32>, vector<32x32xf32>, vector<16x32xf32> -> vector<16x32xf32>
    %58 = arith.addf %54, %57 : vector<16x32xf32>
    %59 = vector.broadcast %45 : vector<1x32xf32> to vector<16x32xf32>
    %60 = arith.addf %58, %59 : vector<16x32xf32>
    %c1_36 = arith.constant 1 : index
    %c0_37 = arith.constant 0 : index
    %61 = vector.load %arg9[%c1_36, %c0_37] : memref<2x32xf32, #tpu.memory_space<vmem>>, vector<1x32xf32>
    %c1_38 = arith.constant 1 : index
    %c0_39 = arith.constant 0 : index
    %c0_40 = arith.constant 0 : index
    %c0_41 = arith.constant 0 : index
    %62 = vector.load %arg8[%c1_38, %c0_39, %c0_40, %c0_41] : memref<2x3x32x32xf32, #tpu.memory_space<vmem>>, vector<1x3x32x32xf32>
    %63 = vector.shape_cast %62 : vector<1x3x32x32xf32> to vector<3x32x32xf32>
    %64 = vector.extract_strided_slice %63 {offsets = [0, 0, 0], sizes = [1, 32, 32], strides = [1, 1, 1]} : vector<3x32x32xf32> to vector<1x32x32xf32>
    %65 = vector.shape_cast %64 : vector<1x32x32xf32> to vector<32x32xf32>
    %cst_42 = arith.constant dense<0.000000e+00> : vector<16x32xf32>
    %66 = tpu.matmul %43, %65, %cst_42 {dimension_numbers = #tpu.dot_dimension_numbers<[1], [0], [0], [1], [0, 0, 1, 1], [], []>} : vector<16x32xf32>, vector<32x32xf32>, vector<16x32xf32> -> vector<16x32xf32>
    %67 = vector.extract_strided_slice %63 {offsets = [1, 0, 0], sizes = [1, 32, 32], strides = [1, 1, 1]} : vector<3x32x32xf32> to vector<1x32x32xf32>
    %68 = vector.shape_cast %67 : vector<1x32x32xf32> to vector<32x32xf32>
    %cst_43 = arith.constant dense<0.000000e+00> : vector<16x32xf32>
    %69 = tpu.matmul %1, %68, %cst_43 {dimension_numbers = #tpu.dot_dimension_numbers<[1], [0], [0], [1], [0, 0, 1, 1], [], []>} : vector<16x32xf32>, vector<32x32xf32>, vector<16x32xf32> -> vector<16x32xf32>
    %70 = arith.addf %66, %69 : vector<16x32xf32>
    %71 = vector.extract_strided_slice %63 {offsets = [2, 0, 0], sizes = [1, 32, 32], strides = [1, 1, 1]} : vector<3x32x32xf32> to vector<1x32x32xf32>
    %72 = vector.shape_cast %71 : vector<1x32x32xf32> to vector<32x32xf32>
    %cst_44 = arith.constant dense<0.000000e+00> : vector<16x32xf32>
    %73 = tpu.matmul %44, %72, %cst_44 {dimension_numbers = #tpu.dot_dimension_numbers<[1], [0], [0], [1], [0, 0, 1, 1], [], []>} : vector<16x32xf32>, vector<32x32xf32>, vector<16x32xf32> -> vector<16x32xf32>
    %74 = arith.addf %70, %73 : vector<16x32xf32>
    %75 = vector.broadcast %61 : vector<1x32xf32> to vector<16x32xf32>
    %76 = arith.addf %74, %75 : vector<16x32xf32>
    %77 = arith.negf %76 : vector<16x32xf32>
    %78 = math.exp %77 : vector<16x32xf32>
    %cst_45 = arith.constant 1.000000e+00 : f32
    %79 = vector.broadcast %cst_45 : f32 to vector<16x32xf32>
    %80 = arith.addf %79, %78 : vector<16x32xf32>
    %81 = arith.divf %79, %80 : vector<16x32xf32>
    %82 = arith.mulf %60, %81 : vector<16x32xf32>
    %c0_46 = arith.constant 0 : index
    %c0_47 = arith.constant 0 : index
    %c0_48 = arith.constant 0 : index
    %83 = vector.load %arg10[%c0_46, %c0_47, %c0_48] : memref<2x32x8xf32, #tpu.memory_space<vmem>>, vector<1x32x8xf32>
    %84 = vector.shape_cast %83 : vector<1x32x8xf32> to vector<32x8xf32>
    %cst_49 = arith.constant dense<0.000000e+00> : vector<16x8xf32>
    %85 = tpu.matmul %82, %84, %cst_49 {dimension_numbers = #tpu.dot_dimension_numbers<[1], [0], [0], [1], [0, 0, 1, 1], [], []>} : vector<16x32xf32>, vector<32x8xf32>, vector<16x8xf32> -> vector<16x8xf32>
    %c0_50 = arith.constant 0 : index
    %c0_51 = arith.constant 0 : index
    %86 = vector.load %arg11[%c0_50, %c0_51] : memref<2x8xf32, #tpu.memory_space<vmem>>, vector<1x8xf32>
    %87 = vector.broadcast %86 : vector<1x8xf32> to vector<16x8xf32>
    %88 = arith.addf %85, %87 : vector<16x8xf32>
    %c1_52 = arith.constant 1 : index
    %c0_53 = arith.constant 0 : index
    %c0_54 = arith.constant 0 : index
    %89 = vector.load %arg10[%c1_52, %c0_53, %c0_54] : memref<2x32x8xf32, #tpu.memory_space<vmem>>, vector<1x32x8xf32>
    %90 = vector.shape_cast %89 : vector<1x32x8xf32> to vector<32x8xf32>
    %cst_55 = arith.constant dense<0.000000e+00> : vector<16x8xf32>
    %91 = tpu.matmul %82, %90, %cst_55 {dimension_numbers = #tpu.dot_dimension_numbers<[1], [0], [0], [1], [0, 0, 1, 1], [], []>} : vector<16x32xf32>, vector<32x8xf32>, vector<16x8xf32> -> vector<16x8xf32>
    %c1_56 = arith.constant 1 : index
    %c0_57 = arith.constant 0 : index
    %92 = vector.load %arg11[%c1_56, %c0_57] : memref<2x8xf32, #tpu.memory_space<vmem>>, vector<1x8xf32>
    %93 = vector.broadcast %92 : vector<1x8xf32> to vector<16x8xf32>
    %94 = arith.addf %91, %93 : vector<16x8xf32>
    %95 = arith.negf %94 : vector<16x8xf32>
    %96 = math.exp %95 : vector<16x8xf32>
    %cst_58 = arith.constant 1.000000e+00 : f32
    %97 = vector.broadcast %cst_58 : f32 to vector<16x8xf32>
    %98 = arith.addf %97, %96 : vector<16x8xf32>
    %99 = arith.divf %97, %98 : vector<16x8xf32>
    %100 = arith.mulf %88, %99 : vector<16x8xf32>
    %c0_59 = arith.constant 0 : index
    %c0_60 = arith.constant 0 : index
    %c0_61 = arith.constant 0 : index
    %101 = vector.load %arg21[%c0_59, %c0_60, %c0_61] : memref<1x16x8xf32, #tpu.memory_space<vmem>>, vector<1x16x8xf32>
    %102 = vector.shape_cast %101 : vector<1x16x8xf32> to vector<16x8xf32>
    %103 = vector.shape_cast %100 : vector<16x8xf32> to vector<1x16x8xf32>
    tpu.vector_store %arg21[%c0_59, %c0_60, %c0_61], %103 {strides = array<i32>} : memref<1x16x8xf32, #tpu.memory_space<vmem>>, vector<1x16x8xf32>,
    %c0_62 = arith.constant 0 : index
    %c0_63 = arith.constant 0 : index
    %c0_64 = arith.constant 0 : index
    %104 = vector.load %arg2[%c0_62, %c0_63, %c0_64] : memref<1x16x8xf32, #tpu.memory_space<vmem>>, vector<1x16x8xf32>
    %105 = vector.shape_cast %104 : vector<1x16x8xf32> to vector<16x8xf32>
    %c0_65 = arith.constant 0 : index
    %c0_66 = arith.constant 0 : index
    %106 = vector.load %arg12[%c0_65, %c0_66] : memref<8x32xf32, #tpu.memory_space<vmem>>, vector<8x32xf32>
    %cst_67 = arith.constant dense<0.000000e+00> : vector<16x32xf32>
    %107 = tpu.matmul %105, %106, %cst_67 {dimension_numbers = #tpu.dot_dimension_numbers<[1], [0], [0], [1], [0, 0, 1, 1], [], []>} : vector<16x8xf32>, vector<8x32xf32>, vector<16x32xf32> -> vector<16x32xf32>
    %108 = arith.addf %1, %107 : vector<16x32xf32>
    %c0_68 = arith.constant 0 : index
    %c0_69 = arith.constant 0 : index
    %109 = vector.load %arg13[%c0_68, %c0_69] : memref<1x32xf32, #tpu.memory_space<vmem>>, vector<1x32xf32>
    %110 = vector.broadcast %109 : vector<1x32xf32> to vector<16x32xf32>
    %111 = arith.addf %108, %110 : vector<16x32xf32>
    %c0_70 = arith.constant 0 : index
    %c0_71 = arith.constant 0 : index
    %c0_72 = arith.constant 0 : index
    %112 = vector.load %arg22[%c0_70, %c0_71, %c0_72] : memref<1x16x32xf32, #tpu.memory_space<vmem>>, vector<1x16x32xf32>
    %113 = vector.shape_cast %112 : vector<1x16x32xf32> to vector<16x32xf32>
    %114 = vector.shape_cast %111 : vector<16x32xf32> to vector<1x16x32xf32>
    tpu.vector_store %arg22[%c0_70, %c0_71, %c0_72], %114 {strides = array<i32>} : memref<1x16x32xf32, #tpu.memory_space<vmem>>, vector<1x16x32xf32>,
    %cst_73 = arith.constant dense<0.000000e+00> : vector<16x32xf32>
    %115 = tpu.matmul %10, %111, %cst_73 {dimension_numbers = #tpu.dot_dimension_numbers<[1], [0], [0], [1], [0, 0, 1, 1], [], []>} : vector<16x16xf32>, vector<16x32xf32>, vector<16x32xf32> -> vector<16x32xf32>
    %cst_74 = arith.constant dense<0.000000e+00> : vector<16x32xf32>
    %116 = tpu.matmul %15, %111, %cst_74 {dimension_numbers = #tpu.dot_dimension_numbers<[1], [0], [0], [1], [0, 0, 1, 1], [], []>} : vector<16x16xf32>, vector<16x32xf32>, vector<16x32xf32> -> vector<16x32xf32>
    %c0_75 = arith.constant 0 : index
    %c0_76 = arith.constant 0 : index
    %117 = vector.load %arg15[%c0_75, %c0_76] : memref<2x8xf32, #tpu.memory_space<vmem>>, vector<1x8xf32>
    %c0_77 = arith.constant 0 : index
    %c0_78 = arith.constant 0 : index
    %c0_79 = arith.constant 0 : index
    %c0_80 = arith.constant 0 : index
    %118 = vector.load %arg14[%c0_77, %c0_78, %c0_79, %c0_80] : memref<2x3x32x8xf32, #tpu.memory_space<vmem>>, vector<1x3x32x8xf32>
    %119 = vector.shape_cast %118 : vector<1x3x32x8xf32> to vector<3x32x8xf32>
    %120 = vector.extract_strided_slice %119 {offsets = [0, 0, 0], sizes = [1, 32, 8], strides = [1, 1, 1]} : vector<3x32x8xf32> to vector<1x32x8xf32>
    %121 = vector.shape_cast %120 : vector<1x32x8xf32> to vector<32x8xf32>
    %cst_81 = arith.constant dense<0.000000e+00> : vector<16x8xf32>
    %122 = tpu.matmul %115, %121, %cst_81 {dimension_numbers = #tpu.dot_dimension_numbers<[1], [0], [0], [1], [0, 0, 1, 1], [], []>} : vector<16x32xf32>, vector<32x8xf32>, vector<16x8xf32> -> vector<16x8xf32>
    %123 = vector.extract_strided_slice %119 {offsets = [1, 0, 0], sizes = [1, 32, 8], strides = [1, 1, 1]} : vector<3x32x8xf32> to vector<1x32x8xf32>
    %124 = vector.shape_cast %123 : vector<1x32x8xf32> to vector<32x8xf32>
    %cst_82 = arith.constant dense<0.000000e+00> : vector<16x8xf32>
    %125 = tpu.matmul %111, %124, %cst_82 {dimension_numbers = #tpu.dot_dimension_numbers<[1], [0], [0], [1], [0, 0, 1, 1], [], []>} : vector<16x32xf32>, vector<32x8xf32>, vector<16x8xf32> -> vector<16x8xf32>
    %126 = arith.addf %122, %125 : vector<16x8xf32>
    %127 = vector.extract_strided_slice %119 {offsets = [2, 0, 0], sizes = [1, 32, 8], strides = [1, 1, 1]} : vector<3x32x8xf32> to vector<1x32x8xf32>
    %128 = vector.shape_cast %127 : vector<1x32x8xf32> to vector<32x8xf32>
    %cst_83 = arith.constant dense<0.000000e+00> : vector<16x8xf32>
    %129 = tpu.matmul %116, %128, %cst_83 {dimension_numbers = #tpu.dot_dimension_numbers<[1], [0], [0], [1], [0, 0, 1, 1], [], []>} : vector<16x32xf32>, vector<32x8xf32>, vector<16x8xf32> -> vector<16x8xf32>
    %130 = arith.addf %126, %129 : vector<16x8xf32>
    %131 = vector.broadcast %117 : vector<1x8xf32> to vector<16x8xf32>
    %132 = arith.addf %130, %131 : vector<16x8xf32>
    %c1_84 = arith.constant 1 : index
    %c0_85 = arith.constant 0 : index
    %133 = vector.load %arg15[%c1_84, %c0_85] : memref<2x8xf32, #tpu.memory_space<vmem>>, vector<1x8xf32>
    %c1_86 = arith.constant 1 : index
    %c0_87 = arith.constant 0 : index
    %c0_88 = arith.constant 0 : index
    %c0_89 = arith.constant 0 : index
    %134 = vector.load %arg14[%c1_86, %c0_87, %c0_88, %c0_89] : memref<2x3x32x8xf32, #tpu.memory_space<vmem>>, vector<1x3x32x8xf32>
    %135 = vector.shape_cast %134 : vector<1x3x32x8xf32> to vector<3x32x8xf32>
    %136 = vector.extract_strided_slice %135 {offsets = [0, 0, 0], sizes = [1, 32, 8], strides = [1, 1, 1]} : vector<3x32x8xf32> to vector<1x32x8xf32>
    %137 = vector.shape_cast %136 : vector<1x32x8xf32> to vector<32x8xf32>
    %cst_90 = arith.constant dense<0.000000e+00> : vector<16x8xf32>
    %138 = tpu.matmul %115, %137, %cst_90 {dimension_numbers = #tpu.dot_dimension_numbers<[1], [0], [0], [1], [0, 0, 1, 1], [], []>} : vector<16x32xf32>, vector<32x8xf32>, vector<16x8xf32> -> vector<16x8xf32>
    %139 = vector.extract_strided_slice %135 {offsets = [1, 0, 0], sizes = [1, 32, 8], strides = [1, 1, 1]} : vector<3x32x8xf32> to vector<1x32x8xf32>
    %140 = vector.shape_cast %139 : vector<1x32x8xf32> to vector<32x8xf32>
    %cst_91 = arith.constant dense<0.000000e+00> : vector<16x8xf32>
    %141 = tpu.matmul %111, %140, %cst_91 {dimension_numbers = #tpu.dot_dimension_numbers<[1], [0], [0], [1], [0, 0, 1, 1], [], []>} : vector<16x32xf32>, vector<32x8xf32>, vector<16x8xf32> -> vector<16x8xf32>
    %142 = arith.addf %138, %141 : vector<16x8xf32>
    %143 = vector.extract_strided_slice %135 {offsets = [2, 0, 0], sizes = [1, 32, 8], strides = [1, 1, 1]} : vector<3x32x8xf32> to vector<1x32x8xf32>
    %144 = vector.shape_cast %143 : vector<1x32x8xf32> to vector<32x8xf32>
    %cst_92 = arith.constant dense<0.000000e+00> : vector<16x8xf32>
    %145 = tpu.matmul %116, %144, %cst_92 {dimension_numbers = #tpu.dot_dimension_numbers<[1], [0], [0], [1], [0, 0, 1, 1], [], []>} : vector<16x32xf32>, vector<32x8xf32>, vector<16x8xf32> -> vector<16x8xf32>
    %146 = arith.addf %142, %145 : vector<16x8xf32>
    %147 = vector.broadcast %133 : vector<1x8xf32> to vector<16x8xf32>
    %148 = arith.addf %146, %147 : vector<16x8xf32>
    %149 = arith.negf %148 : vector<16x8xf32>
    %150 = math.exp %149 : vector<16x8xf32>
    %cst_93 = arith.constant 1.000000e+00 : f32
    %151 = vector.broadcast %cst_93 : f32 to vector<16x8xf32>
    %152 = arith.addf %151, %150 : vector<16x8xf32>
    %153 = arith.divf %151, %152 : vector<16x8xf32>
    %154 = arith.mulf %132, %153 : vector<16x8xf32>
    %cst_94 = arith.constant dense<0.000000e+00> : vector<1xf32>
    %155 = vector.multi_reduction <add>, %3, %cst_94 [0] : vector<16x1xf32> to vector<1xf32>
    %156 = vector.shape_cast %155 : vector<1xf32> to vector<1x1xf32>
    %cst_95 = arith.constant 1.000000e+00 : f32
    %157 = vector.broadcast %cst_95 : f32 to vector<1x1xf32>
    %158 = arith.maximumf %156, %157 : vector<1x1xf32>
    %159 = vector.broadcast %3 : vector<16x1xf32> to vector<16x8xf32>
    %160 = arith.mulf %154, %159 : vector<16x8xf32>
    %cst_96 = arith.constant dense<0.000000e+00> : vector<8xf32>
    %161 = vector.multi_reduction <add>, %160, %cst_96 [0] : vector<16x8xf32> to vector<8xf32>
    %162 = vector.shape_cast %161 : vector<8xf32> to vector<1x8xf32>
    %163 = vector.broadcast %158 : vector<1x1xf32> to vector<1x8xf32>
    %164 = arith.divf %162, %163 : vector<1x8xf32>
    %165 = vector.broadcast %164 : vector<1x8xf32> to vector<16x8xf32>
    %166 = arith.subf %154, %165 : vector<16x8xf32>
    %167 = vector.broadcast %3 : vector<16x1xf32> to vector<16x8xf32>
    %168 = arith.mulf %166, %167 : vector<16x8xf32>
    %169 = arith.mulf %168, %168 : vector<16x8xf32>
    %cst_97 = arith.constant dense<0.000000e+00> : vector<8xf32>
    %170 = vector.multi_reduction <add>, %169, %cst_97 [0] : vector<16x8xf32> to vector<8xf32>
    %171 = vector.shape_cast %170 : vector<8xf32> to vector<1x8xf32>
    %172 = vector.broadcast %158 : vector<1x1xf32> to vector<1x8xf32>
    %173 = arith.divf %171, %172 : vector<1x8xf32>
    %174 = vector.broadcast %164 : vector<1x8xf32> to vector<16x8xf32>
    %175 = arith.subf %154, %174 : vector<16x8xf32>
    %cst_98 = arith.constant 9.99999974E-6 : f32
    %176 = vector.broadcast %cst_98 : f32 to vector<1x8xf32>
    %177 = arith.addf %173, %176 : vector<1x8xf32>
    %178 = math.rsqrt %177 : vector<1x8xf32>
    %179 = vector.broadcast %178 : vector<1x8xf32> to vector<16x8xf32>
    %180 = arith.mulf %175, %179 : vector<16x8xf32>
    %c0_99 = arith.constant 0 : index
    %c0_100 = arith.constant 0 : index
    %181 = vector.load %arg16[%c0_99, %c0_100] : memref<2x8xf32, #tpu.memory_space<vmem>>, vector<1x8xf32>
    %182 = vector.broadcast %181 : vector<1x8xf32> to vector<16x8xf32>
    %183 = arith.mulf %180, %182 : vector<16x8xf32>
    %c1_101 = arith.constant 1 : index
    %c0_102 = arith.constant 0 : index
    %184 = vector.load %arg16[%c1_101, %c0_102] : memref<2x8xf32, #tpu.memory_space<vmem>>, vector<1x8xf32>
    %185 = vector.broadcast %184 : vector<1x8xf32> to vector<16x8xf32>
    %186 = arith.addf %183, %185 : vector<16x8xf32>
    %187 = vector.broadcast %3 : vector<16x1xf32> to vector<16x8xf32>
    %188 = arith.mulf %186, %187 : vector<16x8xf32>
    %c0_103 = arith.constant 0 : index
    %c0_104 = arith.constant 0 : index
    %c0_105 = arith.constant 0 : index
    %189 = vector.load %arg23[%c0_103, %c0_104, %c0_105] : memref<1x16x8xf32, #tpu.memory_space<vmem>>, vector<1x16x8xf32>
    %190 = vector.shape_cast %189 : vector<1x16x8xf32> to vector<16x8xf32>
    %191 = vector.shape_cast %188 : vector<16x8xf32> to vector<1x16x8xf32>
    tpu.vector_store %arg23[%c0_103, %c0_104, %c0_105], %191 {strides = array<i32>} : memref<1x16x8xf32, #tpu.memory_space<vmem>>, vector<1x16x8xf32>,
    %cst_106 = arith.constant dense<0.000000e+00> : vector<16x32xf32>
    %192 = tpu.matmul %10, %111, %cst_106 {dimension_numbers = #tpu.dot_dimension_numbers<[1], [0], [0], [1], [0, 0, 1, 1], [], []>} : vector<16x16xf32>, vector<16x32xf32>, vector<16x32xf32> -> vector<16x32xf32>
    %cst_107 = arith.constant dense<0.000000e+00> : vector<16x32xf32>
    %193 = tpu.matmul %15, %111, %cst_107 {dimension_numbers = #tpu.dot_dimension_numbers<[1], [0], [0], [1], [0, 0, 1, 1], [], []>} : vector<16x16xf32>, vector<16x32xf32>, vector<16x32xf32> -> vector<16x32xf32>
    %c0_108 = arith.constant 0 : index
    %c0_109 = arith.constant 0 : index
    %194 = vector.load %arg18[%c0_108, %c0_109] : memref<2x8xf32, #tpu.memory_space<vmem>>, vector<1x8xf32>
    %c0_110 = arith.constant 0 : index
    %c0_111 = arith.constant 0 : index
    %c0_112 = arith.constant 0 : index
    %c0_113 = arith.constant 0 : index
    %195 = vector.load %arg17[%c0_110, %c0_111, %c0_112, %c0_113] : memref<2x3x32x8xf32, #tpu.memory_space<vmem>>, vector<1x3x32x8xf32>
    %196 = vector.shape_cast %195 : vector<1x3x32x8xf32> to vector<3x32x8xf32>
    %197 = vector.extract_strided_slice %196 {offsets = [0, 0, 0], sizes = [1, 32, 8], strides = [1, 1, 1]} : vector<3x32x8xf32> to vector<1x32x8xf32>
    %198 = vector.shape_cast %197 : vector<1x32x8xf32> to vector<32x8xf32>
    %cst_114 = arith.constant dense<0.000000e+00> : vector<16x8xf32>
    %199 = tpu.matmul %192, %198, %cst_114 {dimension_numbers = #tpu.dot_dimension_numbers<[1], [0], [0], [1], [0, 0, 1, 1], [], []>} : vector<16x32xf32>, vector<32x8xf32>, vector<16x8xf32> -> vector<16x8xf32>
    %200 = vector.extract_strided_slice %196 {offsets = [1, 0, 0], sizes = [1, 32, 8], strides = [1, 1, 1]} : vector<3x32x8xf32> to vector<1x32x8xf32>
    %201 = vector.shape_cast %200 : vector<1x32x8xf32> to vector<32x8xf32>
    %cst_115 = arith.constant dense<0.000000e+00> : vector<16x8xf32>
    %202 = tpu.matmul %111, %201, %cst_115 {dimension_numbers = #tpu.dot_dimension_numbers<[1], [0], [0], [1], [0, 0, 1, 1], [], []>} : vector<16x32xf32>, vector<32x8xf32>, vector<16x8xf32> -> vector<16x8xf32>
    %203 = arith.addf %199, %202 : vector<16x8xf32>
    %204 = vector.extract_strided_slice %196 {offsets = [2, 0, 0], sizes = [1, 32, 8], strides = [1, 1, 1]} : vector<3x32x8xf32> to vector<1x32x8xf32>
    %205 = vector.shape_cast %204 : vector<1x32x8xf32> to vector<32x8xf32>
    %cst_116 = arith.constant dense<0.000000e+00> : vector<16x8xf32>
    %206 = tpu.matmul %193, %205, %cst_116 {dimension_numbers = #tpu.dot_dimension_numbers<[1], [0], [0], [1], [0, 0, 1, 1], [], []>} : vector<16x32xf32>, vector<32x8xf32>, vector<16x8xf32> -> vector<16x8xf32>
    %207 = arith.addf %203, %206 : vector<16x8xf32>
    %208 = vector.broadcast %194 : vector<1x8xf32> to vector<16x8xf32>
    %209 = arith.addf %207, %208 : vector<16x8xf32>
    %c1_117 = arith.constant 1 : index
    %c0_118 = arith.constant 0 : index
    %210 = vector.load %arg18[%c1_117, %c0_118] : memref<2x8xf32, #tpu.memory_space<vmem>>, vector<1x8xf32>
    %c1_119 = arith.constant 1 : index
    %c0_120 = arith.constant 0 : index
    %c0_121 = arith.constant 0 : index
    %c0_122 = arith.constant 0 : index
    %211 = vector.load %arg17[%c1_119, %c0_120, %c0_121, %c0_122] : memref<2x3x32x8xf32, #tpu.memory_space<vmem>>, vector<1x3x32x8xf32>
    %212 = vector.shape_cast %211 : vector<1x3x32x8xf32> to vector<3x32x8xf32>
    %213 = vector.extract_strided_slice %212 {offsets = [0, 0, 0], sizes = [1, 32, 8], strides = [1, 1, 1]} : vector<3x32x8xf32> to vector<1x32x8xf32>
    %214 = vector.shape_cast %213 : vector<1x32x8xf32> to vector<32x8xf32>
    %cst_123 = arith.constant dense<0.000000e+00> : vector<16x8xf32>
    %215 = tpu.matmul %192, %214, %cst_123 {dimension_numbers = #tpu.dot_dimension_numbers<[1], [0], [0], [1], [0, 0, 1, 1], [], []>} : vector<16x32xf32>, vector<32x8xf32>, vector<16x8xf32> -> vector<16x8xf32>
    %216 = vector.extract_strided_slice %212 {offsets = [1, 0, 0], sizes = [1, 32, 8], strides = [1, 1, 1]} : vector<3x32x8xf32> to vector<1x32x8xf32>
    %217 = vector.shape_cast %216 : vector<1x32x8xf32> to vector<32x8xf32>
    %cst_124 = arith.constant dense<0.000000e+00> : vector<16x8xf32>
    %218 = tpu.matmul %111, %217, %cst_124 {dimension_numbers = #tpu.dot_dimension_numbers<[1], [0], [0], [1], [0, 0, 1, 1], [], []>} : vector<16x32xf32>, vector<32x8xf32>, vector<16x8xf32> -> vector<16x8xf32>
    %219 = arith.addf %215, %218 : vector<16x8xf32>
    %220 = vector.extract_strided_slice %212 {offsets = [2, 0, 0], sizes = [1, 32, 8], strides = [1, 1, 1]} : vector<3x32x8xf32> to vector<1x32x8xf32>
    %221 = vector.shape_cast %220 : vector<1x32x8xf32> to vector<32x8xf32>
    %cst_125 = arith.constant dense<0.000000e+00> : vector<16x8xf32>
    %222 = tpu.matmul %193, %221, %cst_125 {dimension_numbers = #tpu.dot_dimension_numbers<[1], [0], [0], [1], [0, 0, 1, 1], [], []>} : vector<16x32xf32>, vector<32x8xf32>, vector<16x8xf32> -> vector<16x8xf32>
    %223 = arith.addf %219, %222 : vector<16x8xf32>
    %224 = vector.broadcast %210 : vector<1x8xf32> to vector<16x8xf32>
    %225 = arith.addf %223, %224 : vector<16x8xf32>
    %226 = arith.negf %225 : vector<16x8xf32>
    %227 = math.exp %226 : vector<16x8xf32>
    %cst_126 = arith.constant 1.000000e+00 : f32
    %228 = vector.broadcast %cst_126 : f32 to vector<16x8xf32>
    %229 = arith.addf %228, %227 : vector<16x8xf32>
    %230 = arith.divf %228, %229 : vector<16x8xf32>
    %231 = arith.mulf %209, %230 : vector<16x8xf32>
    %cst_127 = arith.constant dense<0.000000e+00> : vector<1xf32>
    %232 = vector.multi_reduction <add>, %3, %cst_127 [0] : vector<16x1xf32> to vector<1xf32>
    %233 = vector.shape_cast %232 : vector<1xf32> to vector<1x1xf32>
    %cst_128 = arith.constant 1.000000e+00 : f32
    %234 = vector.broadcast %cst_128 : f32 to vector<1x1xf32>
    %235 = arith.maximumf %233, %234 : vector<1x1xf32>
    %236 = vector.broadcast %3 : vector<16x1xf32> to vector<16x8xf32>
    %237 = arith.mulf %231, %236 : vector<16x8xf32>
    %cst_129 = arith.constant dense<0.000000e+00> : vector<8xf32>
    %238 = vector.multi_reduction <add>, %237, %cst_129 [0] : vector<16x8xf32> to vector<8xf32>
    %239 = vector.shape_cast %238 : vector<8xf32> to vector<1x8xf32>
    %240 = vector.broadcast %235 : vector<1x1xf32> to vector<1x8xf32>
    %241 = arith.divf %239, %240 : vector<1x8xf32>
    %242 = vector.broadcast %241 : vector<1x8xf32> to vector<16x8xf32>
    %243 = arith.subf %231, %242 : vector<16x8xf32>
    %244 = vector.broadcast %3 : vector<16x1xf32> to vector<16x8xf32>
    %245 = arith.mulf %243, %244 : vector<16x8xf32>
    %246 = arith.mulf %245, %245 : vector<16x8xf32>
    %cst_130 = arith.constant dense<0.000000e+00> : vector<8xf32>
    %247 = vector.multi_reduction <add>, %246, %cst_130 [0] : vector<16x8xf32> to vector<8xf32>
    %248 = vector.shape_cast %247 : vector<8xf32> to vector<1x8xf32>
    %249 = vector.broadcast %235 : vector<1x1xf32> to vector<1x8xf32>
    %250 = arith.divf %248, %249 : vector<1x8xf32>
    %251 = vector.broadcast %241 : vector<1x8xf32> to vector<16x8xf32>
    %252 = arith.subf %231, %251 : vector<16x8xf32>
    %cst_131 = arith.constant 9.99999974E-6 : f32
    %253 = vector.broadcast %cst_131 : f32 to vector<1x8xf32>
    %254 = arith.addf %250, %253 : vector<1x8xf32>
    %255 = math.rsqrt %254 : vector<1x8xf32>
    %256 = vector.broadcast %255 : vector<1x8xf32> to vector<16x8xf32>
    %257 = arith.mulf %252, %256 : vector<16x8xf32>
    %c0_132 = arith.constant 0 : index
    %c0_133 = arith.constant 0 : index
    %258 = vector.load %arg19[%c0_132, %c0_133] : memref<2x8xf32, #tpu.memory_space<vmem>>, vector<1x8xf32>
    %259 = vector.broadcast %258 : vector<1x8xf32> to vector<16x8xf32>
    %260 = arith.mulf %257, %259 : vector<16x8xf32>
    %c1_134 = arith.constant 1 : index
    %c0_135 = arith.constant 0 : index
    %261 = vector.load %arg19[%c1_134, %c0_135] : memref<2x8xf32, #tpu.memory_space<vmem>>, vector<1x8xf32>
    %262 = vector.broadcast %261 : vector<1x8xf32> to vector<16x8xf32>
    %263 = arith.addf %260, %262 : vector<16x8xf32>
    %264 = vector.broadcast %3 : vector<16x1xf32> to vector<16x8xf32>
    %265 = arith.mulf %263, %264 : vector<16x8xf32>
    %c0_136 = arith.constant 0 : index
    %c0_137 = arith.constant 0 : index
    %c0_138 = arith.constant 0 : index
    %266 = vector.load %arg24[%c0_136, %c0_137, %c0_138] : memref<1x16x8xf32, #tpu.memory_space<vmem>>, vector<1x16x8xf32>
    %267 = vector.shape_cast %266 : vector<1x16x8xf32> to vector<16x8xf32>
    %268 = vector.shape_cast %265 : vector<16x8xf32> to vector<1x16x8xf32>
    tpu.vector_store %arg24[%c0_136, %c0_137, %c0_138], %268 {strides = array<i32>} : memref<1x16x8xf32, #tpu.memory_space<vmem>>, vector<1x16x8xf32>,
    return
  }
  func.func @transform_0(%arg0: i32) -> (i32, i32, i32) {
    %c0_i32 = arith.constant 0 : i32
    %c0_i32_0 = arith.constant 0 : i32
    %c0_i32_1 = arith.constant 0 : i32
    return %arg0, %c0_i32, %c0_i32_0 : i32, i32, i32
  }
  func.func @transform_1(%arg0: i32) -> (i32, i32, i32) {
    %c0_i32 = arith.constant 0 : i32
    %c0_i32_0 = arith.constant 0 : i32
    %c0_i32_1 = arith.constant 0 : i32
    return %arg0, %c0_i32, %c0_i32_0 : i32, i32, i32
  }
  func.func @transform_2(%arg0: i32) -> (i32, i32, i32) {
    %c0_i32 = arith.constant 0 : i32
    %c0_i32_0 = arith.constant 0 : i32
    %c0_i32_1 = arith.constant 0 : i32
    return %arg0, %c0_i32, %c0_i32_0 : i32, i32, i32
  }
  func.func @transform_3(%arg0: i32) -> (i32, i32, i32) {
    %c0_i32 = arith.constant 0 : i32
    %c0_i32_0 = arith.constant 0 : i32
    %c0_i32_1 = arith.constant 0 : i32
    %c0_i32_2 = arith.constant 0 : i32
    return %c0_i32, %c0_i32_0, %c0_i32_1 : i32, i32, i32
  }
  func.func @transform_4(%arg0: i32) -> (i32, i32) {
    %c0_i32 = arith.constant 0 : i32
    %c0_i32_0 = arith.constant 0 : i32
    %c0_i32_1 = arith.constant 0 : i32
    return %c0_i32, %c0_i32_0 : i32, i32
  }
  func.func @transform_5(%arg0: i32) -> (i32, i32) {
    %c0_i32 = arith.constant 0 : i32
    %c0_i32_0 = arith.constant 0 : i32
    %c0_i32_1 = arith.constant 0 : i32
    return %c0_i32, %c0_i32_0 : i32, i32
  }
  func.func @transform_6(%arg0: i32) -> (i32, i32) {
    %c0_i32 = arith.constant 0 : i32
    %c0_i32_0 = arith.constant 0 : i32
    %c0_i32_1 = arith.constant 0 : i32
    return %c0_i32, %c0_i32_0 : i32, i32
  }
  func.func @transform_7(%arg0: i32) -> (i32, i32, i32, i32) {
    %c0_i32 = arith.constant 0 : i32
    %c0_i32_0 = arith.constant 0 : i32
    %c0_i32_1 = arith.constant 0 : i32
    %c0_i32_2 = arith.constant 0 : i32
    %c0_i32_3 = arith.constant 0 : i32
    return %c0_i32, %c0_i32_0, %c0_i32_1, %c0_i32_2 : i32, i32, i32, i32
  }
  func.func @transform_8(%arg0: i32) -> (i32, i32) {
    %c0_i32 = arith.constant 0 : i32
    %c0_i32_0 = arith.constant 0 : i32
    %c0_i32_1 = arith.constant 0 : i32
    return %c0_i32, %c0_i32_0 : i32, i32
  }
  func.func @transform_9(%arg0: i32) -> (i32, i32, i32) {
    %c0_i32 = arith.constant 0 : i32
    %c0_i32_0 = arith.constant 0 : i32
    %c0_i32_1 = arith.constant 0 : i32
    %c0_i32_2 = arith.constant 0 : i32
    return %c0_i32, %c0_i32_0, %c0_i32_1 : i32, i32, i32
  }
  func.func @transform_10(%arg0: i32) -> (i32, i32) {
    %c0_i32 = arith.constant 0 : i32
    %c0_i32_0 = arith.constant 0 : i32
    %c0_i32_1 = arith.constant 0 : i32
    return %c0_i32, %c0_i32_0 : i32, i32
  }
  func.func @transform_11(%arg0: i32) -> (i32, i32) {
    %c0_i32 = arith.constant 0 : i32
    %c0_i32_0 = arith.constant 0 : i32
    %c0_i32_1 = arith.constant 0 : i32
    return %c0_i32, %c0_i32_0 : i32, i32
  }
  func.func @transform_12(%arg0: i32) -> (i32, i32) {
    %c0_i32 = arith.constant 0 : i32
    %c0_i32_0 = arith.constant 0 : i32
    %c0_i32_1 = arith.constant 0 : i32
    return %c0_i32, %c0_i32_0 : i32, i32
  }
  func.func @transform_13(%arg0: i32) -> (i32, i32, i32, i32) {
    %c0_i32 = arith.constant 0 : i32
    %c0_i32_0 = arith.constant 0 : i32
    %c0_i32_1 = arith.constant 0 : i32
    %c0_i32_2 = arith.constant 0 : i32
    %c0_i32_3 = arith.constant 0 : i32
    return %c0_i32, %c0_i32_0, %c0_i32_1, %c0_i32_2 : i32, i32, i32, i32
  }
  func.func @transform_14(%arg0: i32) -> (i32, i32) {
    %c0_i32 = arith.constant 0 : i32
    %c0_i32_0 = arith.constant 0 : i32
    %c0_i32_1 = arith.constant 0 : i32
    return %c0_i32, %c0_i32_0 : i32, i32
  }
  func.func @transform_15(%arg0: i32) -> (i32, i32) {
    %c0_i32 = arith.constant 0 : i32
    %c0_i32_0 = arith.constant 0 : i32
    %c0_i32_1 = arith.constant 0 : i32
    return %c0_i32, %c0_i32_0 : i32, i32
  }
  func.func @transform_16(%arg0: i32) -> (i32, i32, i32, i32) {
    %c0_i32 = arith.constant 0 : i32
    %c0_i32_0 = arith.constant 0 : i32
    %c0_i32_1 = arith.constant 0 : i32
    %c0_i32_2 = arith.constant 0 : i32
    %c0_i32_3 = arith.constant 0 : i32
    return %c0_i32, %c0_i32_0, %c0_i32_1, %c0_i32_2 : i32, i32, i32, i32
  }
  func.func @transform_17(%arg0: i32) -> (i32, i32) {
    %c0_i32 = arith.constant 0 : i32
    %c0_i32_0 = arith.constant 0 : i32
    %c0_i32_1 = arith.constant 0 : i32
    return %c0_i32, %c0_i32_0 : i32, i32
  }
  func.func @transform_18(%arg0: i32) -> (i32, i32) {
    %c0_i32 = arith.constant 0 : i32
    %c0_i32_0 = arith.constant 0 : i32
    %c0_i32_1 = arith.constant 0 : i32
    return %c0_i32, %c0_i32_0 : i32, i32
  }
  func.func @transform_19(%arg0: i32) -> (i32, i32, i32) {
    %c0_i32 = arith.constant 0 : i32
    %c0_i32_0 = arith.constant 0 : i32
    %c0_i32_1 = arith.constant 0 : i32
    return %arg0, %c0_i32, %c0_i32_0 : i32, i32, i32
  }
  func.func @transform_20(%arg0: i32) -> (i32, i32, i32) {
    %c0_i32 = arith.constant 0 : i32
    %c0_i32_0 = arith.constant 0 : i32
    %c0_i32_1 = arith.constant 0 : i32
    return %arg0, %c0_i32, %c0_i32_0 : i32, i32, i32
  }
  func.func @transform_21(%arg0: i32) -> (i32, i32, i32) {
    %c0_i32 = arith.constant 0 : i32
    %c0_i32_0 = arith.constant 0 : i32
    %c0_i32_1 = arith.constant 0 : i32
    return %arg0, %c0_i32, %c0_i32_0 : i32, i32, i32
  }
  func.func @transform_22(%arg0: i32) -> (i32, i32, i32) {
    %c0_i32 = arith.constant 0 : i32
    %c0_i32_0 = arith.constant 0 : i32
    %c0_i32_1 = arith.constant 0 : i32
    return %arg0, %c0_i32, %c0_i32_0 : i32, i32, i32
  }
  func.func @transform_23(%arg0: i32) -> (i32, i32, i32) {
    %c0_i32 = arith.constant 0 : i32
    %c0_i32_0 = arith.constant 0 : i32
    %c0_i32_1 = arith.constant 0 : i32
    return %arg0, %c0_i32, %c0_i32_0 : i32, i32, i32
  }
}

module attributes {stable_mosaic.version = 11 : i64} {
  func.func @_upsample_kernel(%arg0: i32, %arg1: i32, %arg2: memref<1x2x256xf32, #tpu.memory_space<vmem>>, %arg3: memref<1x4x16xf32, #tpu.memory_space<vmem>>, %arg4: memref<1x16x32xf32, #tpu.memory_space<vmem>>, %arg5: memref<1x31x1xf32, #tpu.memory_space<vmem>>, %arg6: memref<1x1x16xf32, #tpu.memory_space<vmem>>, %arg7: memref<2x256xf32, #tpu.memory_space<vmem>>, %arg8: memref<2x256x256xf32, #tpu.memory_space<vmem>>, %arg9: memref<2x256xf32, #tpu.memory_space<vmem>>, %arg10: memref<256x16xf32, #tpu.memory_space<vmem>>, %arg11: memref<3x32xf32, #tpu.memory_space<vmem>>, %arg12: memref<1x16xf32, #tpu.memory_space<vmem>>, %arg13: memref<1x31x32xf32, #tpu.memory_space<vmem>>) attributes {dimension_semantics = [#tpu.dimension_semantics<parallel>, #tpu.dimension_semantics<parallel>], iteration_bounds = array<i64: 2, 1>, scalar_prefetch = 0 : i64, scratch_operands = 0 : i64, tpu.core_type = #tpu.core_type<tc>, window_params = [{transform_indices = @transform_0, window_bounds = array<i64: 1, 2, 256>}, {transform_indices = @transform_1, window_bounds = array<i64: 1, 4, 16>}, {transform_indices = @transform_2, window_bounds = array<i64: 1, 16, 32>}, {transform_indices = @transform_3, window_bounds = array<i64: 1, 31, 1>}, {transform_indices = @transform_4, window_bounds = array<i64: 1, 1, 16>}, {pipeline_mode = #tpu.pipeline_mode<synchronous>, transform_indices = @transform_5, window_bounds = array<i64: 2, 256>}, {pipeline_mode = #tpu.pipeline_mode<synchronous>, transform_indices = @transform_6, window_bounds = array<i64: 2, 256, 256>}, {pipeline_mode = #tpu.pipeline_mode<synchronous>, transform_indices = @transform_7, window_bounds = array<i64: 2, 256>}, {pipeline_mode = #tpu.pipeline_mode<synchronous>, transform_indices = @transform_8, window_bounds = array<i64: 256, 16>}, {pipeline_mode = #tpu.pipeline_mode<synchronous>, transform_indices = @transform_9, window_bounds = array<i64: 3, 32>}, {pipeline_mode = #tpu.pipeline_mode<synchronous>, transform_indices = @transform_10, window_bounds = array<i64: 1, 16>}, {transform_indices = @transform_11, window_bounds = array<i64: 1, 31, 32>}]} {
    %c31_i32 = arith.constant 31 : i32
    %0 = arith.muli %arg1, %c31_i32 : i32
    %1 = tpu.iota {dimensions = array<i32: 0>} : vector<31x1xi32>
    %2 = vector.broadcast %0 : i32 to vector<31x1xi32>
    %3 = arith.addi %1, %2 : vector<31x1xi32>
    %4 = arith.sitofp %3 : vector<31x1xi32> to vector<31x1xf32>
    %c0 = arith.constant 0 : index
    %c0_0 = arith.constant 0 : index
    %c0_1 = arith.constant 0 : index
    %5 = vector.load %arg5[%c0, %c0_0, %c0_1] : memref<1x31x1xf32, #tpu.memory_space<vmem>>, vector<1x31x1xf32>
    %6 = vector.shape_cast %5 : vector<1x31x1xf32> to vector<31x1xf32>
    %c0_2 = arith.constant 0 : index
    %c0_3 = arith.constant 0 : index
    %c0_4 = arith.constant 0 : index
    %7 = vector.load %arg6[%c0_2, %c0_3, %c0_4] : memref<1x1x16xf32, #tpu.memory_space<vmem>>, vector<1x1x16xf32>
    %8 = vector.shape_cast %7 : vector<1x1x16xf32> to vector<1x16xf32>
    %9 = vector.broadcast %6 : vector<31x1xf32> to vector<31x16xf32>
    %10 = vector.broadcast %8 : vector<1x16xf32> to vector<31x16xf32>
    %11 = arith.mulf %9, %10 : vector<31x16xf32>
    %c0_5 = arith.constant 0 : index
    %c0_6 = arith.constant 0 : index
    %c0_7 = arith.constant 0 : index
    %12 = vector.load %arg2[%c0_5, %c0_6, %c0_7] : memref<1x2x256xf32, #tpu.memory_space<vmem>>, vector<1x2x256xf32>
    %13 = vector.shape_cast %12 : vector<1x2x256xf32> to vector<2x256xf32>
    %c0_8 = arith.constant 0 : index
    %c0_9 = arith.constant 0 : index
    %14 = vector.load %arg7[%c0_8, %c0_9] : memref<2x256xf32, #tpu.memory_space<vmem>>, vector<1x256xf32>
    %15 = vector.broadcast %4 : vector<31x1xf32> to vector<31x256xf32>
    %16 = vector.broadcast %14 : vector<1x256xf32> to vector<31x256xf32>
    %17 = arith.mulf %15, %16 : vector<31x256xf32>
    %18 = vector.extract_strided_slice %13 {offsets = [0, 0], sizes = [1, 256], strides = [1, 1]} : vector<2x256xf32> to vector<1x256xf32>
    %19 = vector.broadcast %18 : vector<1x256xf32> to vector<31x256xf32>
    %20 = arith.addf %17, %19 : vector<31x256xf32>
    %c1 = arith.constant 1 : index
    %c0_10 = arith.constant 0 : index
    %21 = vector.load %arg7[%c1, %c0_10] : memref<2x256xf32, #tpu.memory_space<vmem>>, vector<1x256xf32>
    %22 = vector.broadcast %4 : vector<31x1xf32> to vector<31x256xf32>
    %23 = vector.broadcast %21 : vector<1x256xf32> to vector<31x256xf32>
    %24 = arith.mulf %22, %23 : vector<31x256xf32>
    %25 = vector.extract_strided_slice %13 {offsets = [1, 0], sizes = [1, 256], strides = [1, 1]} : vector<2x256xf32> to vector<1x256xf32>
    %26 = vector.broadcast %25 : vector<1x256xf32> to vector<31x256xf32>
    %27 = arith.addf %24, %26 : vector<31x256xf32>
    %28 = arith.negf %27 : vector<31x256xf32>
    %29 = math.exp %28 : vector<31x256xf32>
    %cst = arith.constant 1.000000e+00 : f32
    %30 = vector.broadcast %cst : f32 to vector<31x256xf32>
    %31 = arith.addf %30, %29 : vector<31x256xf32>
    %32 = arith.divf %30, %31 : vector<31x256xf32>
    %33 = arith.mulf %20, %32 : vector<31x256xf32>
    %c0_11 = arith.constant 0 : index
    %c0_12 = arith.constant 0 : index
    %c0_13 = arith.constant 0 : index
    %34 = vector.load %arg8[%c0_11, %c0_12, %c0_13] : memref<2x256x256xf32, #tpu.memory_space<vmem>>, vector<1x256x256xf32>
    %35 = vector.shape_cast %34 : vector<1x256x256xf32> to vector<256x256xf32>
    %cst_14 = arith.constant dense<0.000000e+00> : vector<31x256xf32>
    %36 = tpu.matmul %33, %35, %cst_14 {dimension_numbers = #tpu.dot_dimension_numbers<[1], [0], [0], [1], [0, 0, 1, 1], [], []>} : vector<31x256xf32>, vector<256x256xf32>, vector<31x256xf32> -> vector<31x256xf32>
    %c0_15 = arith.constant 0 : index
    %c0_16 = arith.constant 0 : index
    %37 = vector.load %arg9[%c0_15, %c0_16] : memref<2x256xf32, #tpu.memory_space<vmem>>, vector<1x256xf32>
    %38 = vector.broadcast %37 : vector<1x256xf32> to vector<31x256xf32>
    %39 = arith.addf %36, %38 : vector<31x256xf32>
    %c1_17 = arith.constant 1 : index
    %c0_18 = arith.constant 0 : index
    %c0_19 = arith.constant 0 : index
    %40 = vector.load %arg8[%c1_17, %c0_18, %c0_19] : memref<2x256x256xf32, #tpu.memory_space<vmem>>, vector<1x256x256xf32>
    %41 = vector.shape_cast %40 : vector<1x256x256xf32> to vector<256x256xf32>
    %cst_20 = arith.constant dense<0.000000e+00> : vector<31x256xf32>
    %42 = tpu.matmul %33, %41, %cst_20 {dimension_numbers = #tpu.dot_dimension_numbers<[1], [0], [0], [1], [0, 0, 1, 1], [], []>} : vector<31x256xf32>, vector<256x256xf32>, vector<31x256xf32> -> vector<31x256xf32>
    %c1_21 = arith.constant 1 : index
    %c0_22 = arith.constant 0 : index
    %43 = vector.load %arg9[%c1_21, %c0_22] : memref<2x256xf32, #tpu.memory_space<vmem>>, vector<1x256xf32>
    %44 = vector.broadcast %43 : vector<1x256xf32> to vector<31x256xf32>
    %45 = arith.addf %42, %44 : vector<31x256xf32>
    %46 = arith.negf %45 : vector<31x256xf32>
    %47 = math.exp %46 : vector<31x256xf32>
    %cst_23 = arith.constant 1.000000e+00 : f32
    %48 = vector.broadcast %cst_23 : f32 to vector<31x256xf32>
    %49 = arith.addf %48, %47 : vector<31x256xf32>
    %50 = arith.divf %48, %49 : vector<31x256xf32>
    %51 = arith.mulf %39, %50 : vector<31x256xf32>
    %c0_24 = arith.constant 0 : index
    %c0_25 = arith.constant 0 : index
    %52 = vector.load %arg10[%c0_24, %c0_25] : memref<256x16xf32, #tpu.memory_space<vmem>>, vector<256x16xf32>
    %cst_26 = arith.constant dense<0.000000e+00> : vector<31x16xf32>
    %53 = tpu.matmul %51, %52, %cst_26 {dimension_numbers = #tpu.dot_dimension_numbers<[1], [0], [0], [1], [0, 0, 1, 1], [], []>} : vector<31x256xf32>, vector<256x16xf32>, vector<31x16xf32> -> vector<31x16xf32>
    %cst_27 = arith.constant 0.000000e+00 : f32
    %54 = vector.broadcast %cst_27 : f32 to vector<31x16xf32>
    %55 = arith.cmpf ogt, %11, %54 : vector<31x16xf32>
    %cst_28 = arith.constant -1.000000e+30 : f32
    %56 = vector.broadcast %cst_28 : f32 to vector<31x16xf32>
    %57 = arith.select %55, %53, %56 : vector<31x16xi1>, vector<31x16xf32>
    %cst_29 = arith.constant dense<0xFF800000> : vector<31xf32>
    %58 = vector.multi_reduction <maximumf>, %57, %cst_29 [1] : vector<31x16xf32> to vector<31xf32>
    %59 = vector.shape_cast %58 : vector<31xf32> to vector<31x1xf32>
    %60 = vector.broadcast %59 : vector<31x1xf32> to vector<31x16xf32>
    %61 = arith.subf %57, %60 : vector<31x16xf32>
    %62 = math.exp %61 : vector<31x16xf32>
    %cst_30 = arith.constant dense<0.000000e+00> : vector<31xf32>
    %63 = vector.multi_reduction <add>, %62, %cst_30 [1] : vector<31x16xf32> to vector<31xf32>
    %64 = vector.shape_cast %63 : vector<31xf32> to vector<31x1xf32>
    %cst_31 = arith.constant 0.000000e+00 : f32
    %65 = vector.broadcast %cst_31 : f32 to vector<31x16xf32>
    %66 = arith.cmpf ogt, %11, %65 : vector<31x16xf32>
    %67 = vector.broadcast %64 : vector<31x1xf32> to vector<31x16xf32>
    %68 = arith.divf %62, %67 : vector<31x16xf32>
    %cst_32 = arith.constant 0.000000e+00 : f32
    %69 = vector.broadcast %cst_32 : f32 to vector<31x16xf32>
    %70 = arith.select %66, %68, %69 : vector<31x16xi1>, vector<31x16xf32>
    %c0_33 = arith.constant 0 : index
    %c0_34 = arith.constant 0 : index
    %c0_35 = arith.constant 0 : index
    %71 = vector.load %arg3[%c0_33, %c0_34, %c0_35] : memref<1x4x16xf32, #tpu.memory_space<vmem>>, vector<1x4x16xf32>
    %72 = vector.shape_cast %71 : vector<1x4x16xf32> to vector<4x16xf32>
    %c0_36 = arith.constant 0 : index
    %c0_37 = arith.constant 0 : index
    %73 = vector.load %arg12[%c0_36, %c0_37] : memref<1x16xf32, #tpu.memory_space<vmem>>, vector<1x1xf32>
    %74 = vector.broadcast %73 : vector<1x1xf32> to vector<31x1xf32>
    %75 = arith.mulf %4, %74 : vector<31x1xf32>
    %76 = vector.extract_strided_slice %72 {offsets = [0, 0], sizes = [1, 16], strides = [1, 1]} : vector<4x16xf32> to vector<1x16xf32>
    %77 = vector.broadcast %75 : vector<31x1xf32> to vector<31x16xf32>
    %78 = vector.broadcast %76 : vector<1x16xf32> to vector<31x16xf32>
    %79 = arith.addf %77, %78 : vector<31x16xf32>
    %c0_38 = arith.constant 0 : index
    %c1_39 = arith.constant 1 : index
    %80 = vector.load %arg12[%c0_38, %c1_39] : memref<1x16xf32, #tpu.memory_space<vmem>>, vector<1x1xf32>
    %81 = vector.broadcast %80 : vector<1x1xf32> to vector<31x1xf32>
    %82 = arith.mulf %4, %81 : vector<31x1xf32>
    %83 = vector.extract_strided_slice %72 {offsets = [1, 0], sizes = [1, 16], strides = [1, 1]} : vector<4x16xf32> to vector<1x16xf32>
    %84 = vector.broadcast %82 : vector<31x1xf32> to vector<31x16xf32>
    %85 = vector.broadcast %83 : vector<1x16xf32> to vector<31x16xf32>
    %86 = arith.addf %84, %85 : vector<31x16xf32>
    %c0_40 = arith.constant 0 : index
    %c2 = arith.constant 2 : index
    %87 = vector.load %arg12[%c0_40, %c2] : memref<1x16xf32, #tpu.memory_space<vmem>>, vector<1x1xf32>
    %88 = vector.broadcast %87 : vector<1x1xf32> to vector<31x1xf32>
    %89 = arith.mulf %4, %88 : vector<31x1xf32>
    %90 = vector.extract_strided_slice %72 {offsets = [2, 0], sizes = [1, 16], strides = [1, 1]} : vector<4x16xf32> to vector<1x16xf32>
    %91 = vector.broadcast %89 : vector<31x1xf32> to vector<31x16xf32>
    %92 = vector.broadcast %90 : vector<1x16xf32> to vector<31x16xf32>
    %93 = arith.addf %91, %92 : vector<31x16xf32>
    %c0_41 = arith.constant 0 : index
    %c3 = arith.constant 3 : index
    %94 = vector.load %arg12[%c0_41, %c3] : memref<1x16xf32, #tpu.memory_space<vmem>>, vector<1x1xf32>
    %95 = vector.broadcast %94 : vector<1x1xf32> to vector<31x1xf32>
    %96 = arith.mulf %4, %95 : vector<31x1xf32>
    %97 = vector.extract_strided_slice %72 {offsets = [3, 0], sizes = [1, 16], strides = [1, 1]} : vector<4x16xf32> to vector<1x16xf32>
    %98 = vector.broadcast %96 : vector<31x1xf32> to vector<31x16xf32>
    %99 = vector.broadcast %97 : vector<1x16xf32> to vector<31x16xf32>
    %100 = arith.addf %98, %99 : vector<31x16xf32>
    %101 = arith.negf %93 : vector<31x16xf32>
    %102 = math.exp %101 : vector<31x16xf32>
    %cst_42 = arith.constant 1.000000e+00 : f32
    %103 = vector.broadcast %cst_42 : f32 to vector<31x16xf32>
    %104 = arith.addf %103, %102 : vector<31x16xf32>
    %105 = arith.divf %103, %104 : vector<31x16xf32>
    %106 = arith.mulf %79, %105 : vector<31x16xf32>
    %107 = arith.negf %100 : vector<31x16xf32>
    %108 = math.exp %107 : vector<31x16xf32>
    %cst_43 = arith.constant 1.000000e+00 : f32
    %109 = vector.broadcast %cst_43 : f32 to vector<31x16xf32>
    %110 = arith.addf %109, %108 : vector<31x16xf32>
    %111 = arith.divf %109, %110 : vector<31x16xf32>
    %112 = arith.mulf %86, %111 : vector<31x16xf32>
    %c0_44 = arith.constant 0 : index
    %c4 = arith.constant 4 : index
    %113 = vector.load %arg12[%c0_44, %c4] : memref<1x16xf32, #tpu.memory_space<vmem>>, vector<1x1xf32>
    %114 = vector.broadcast %113 : vector<1x1xf32> to vector<31x16xf32>
    %115 = arith.mulf %106, %114 : vector<31x16xf32>
    %c0_45 = arith.constant 0 : index
    %c8 = arith.constant 8 : index
    %116 = vector.load %arg12[%c0_45, %c8] : memref<1x16xf32, #tpu.memory_space<vmem>>, vector<1x1xf32>
    %117 = vector.broadcast %116 : vector<1x1xf32> to vector<31x16xf32>
    %118 = arith.mulf %112, %117 : vector<31x16xf32>
    %119 = arith.addf %115, %118 : vector<31x16xf32>
    %c0_46 = arith.constant 0 : index
    %c12 = arith.constant 12 : index
    %120 = vector.load %arg12[%c0_46, %c12] : memref<1x16xf32, #tpu.memory_space<vmem>>, vector<1x1xf32>
    %121 = vector.broadcast %120 : vector<1x1xf32> to vector<31x16xf32>
    %122 = arith.addf %119, %121 : vector<31x16xf32>
    %c0_47 = arith.constant 0 : index
    %c5 = arith.constant 5 : index
    %123 = vector.load %arg12[%c0_47, %c5] : memref<1x16xf32, #tpu.memory_space<vmem>>, vector<1x1xf32>
    %124 = vector.broadcast %123 : vector<1x1xf32> to vector<31x16xf32>
    %125 = arith.mulf %106, %124 : vector<31x16xf32>
    %c0_48 = arith.constant 0 : index
    %c9 = arith.constant 9 : index
    %126 = vector.load %arg12[%c0_48, %c9] : memref<1x16xf32, #tpu.memory_space<vmem>>, vector<1x1xf32>
    %127 = vector.broadcast %126 : vector<1x1xf32> to vector<31x16xf32>
    %128 = arith.mulf %112, %127 : vector<31x16xf32>
    %129 = arith.addf %125, %128 : vector<31x16xf32>
    %c0_49 = arith.constant 0 : index
    %c13 = arith.constant 13 : index
    %130 = vector.load %arg12[%c0_49, %c13] : memref<1x16xf32, #tpu.memory_space<vmem>>, vector<1x1xf32>
    %131 = vector.broadcast %130 : vector<1x1xf32> to vector<31x16xf32>
    %132 = arith.addf %129, %131 : vector<31x16xf32>
    %c0_50 = arith.constant 0 : index
    %c6 = arith.constant 6 : index
    %133 = vector.load %arg12[%c0_50, %c6] : memref<1x16xf32, #tpu.memory_space<vmem>>, vector<1x1xf32>
    %134 = vector.broadcast %133 : vector<1x1xf32> to vector<31x16xf32>
    %135 = arith.mulf %106, %134 : vector<31x16xf32>
    %c0_51 = arith.constant 0 : index
    %c10 = arith.constant 10 : index
    %136 = vector.load %arg12[%c0_51, %c10] : memref<1x16xf32, #tpu.memory_space<vmem>>, vector<1x1xf32>
    %137 = vector.broadcast %136 : vector<1x1xf32> to vector<31x16xf32>
    %138 = arith.mulf %112, %137 : vector<31x16xf32>
    %139 = arith.addf %135, %138 : vector<31x16xf32>
    %c0_52 = arith.constant 0 : index
    %c14 = arith.constant 14 : index
    %140 = vector.load %arg12[%c0_52, %c14] : memref<1x16xf32, #tpu.memory_space<vmem>>, vector<1x1xf32>
    %141 = vector.broadcast %140 : vector<1x1xf32> to vector<31x16xf32>
    %142 = arith.addf %139, %141 : vector<31x16xf32>
    %c0_53 = arith.constant 0 : index
    %c7 = arith.constant 7 : index
    %143 = vector.load %arg12[%c0_53, %c7] : memref<1x16xf32, #tpu.memory_space<vmem>>, vector<1x1xf32>
    %144 = vector.broadcast %143 : vector<1x1xf32> to vector<31x16xf32>
    %145 = arith.mulf %106, %144 : vector<31x16xf32>
    %c0_54 = arith.constant 0 : index
    %c11 = arith.constant 11 : index
    %146 = vector.load %arg12[%c0_54, %c11] : memref<1x16xf32, #tpu.memory_space<vmem>>, vector<1x1xf32>
    %147 = vector.broadcast %146 : vector<1x1xf32> to vector<31x16xf32>
    %148 = arith.mulf %112, %147 : vector<31x16xf32>
    %149 = arith.addf %145, %148 : vector<31x16xf32>
    %c0_55 = arith.constant 0 : index
    %c15 = arith.constant 15 : index
    %150 = vector.load %arg12[%c0_55, %c15] : memref<1x16xf32, #tpu.memory_space<vmem>>, vector<1x1xf32>
    %151 = vector.broadcast %150 : vector<1x1xf32> to vector<31x16xf32>
    %152 = arith.addf %149, %151 : vector<31x16xf32>
    %153 = arith.negf %142 : vector<31x16xf32>
    %154 = math.exp %153 : vector<31x16xf32>
    %cst_56 = arith.constant 1.000000e+00 : f32
    %155 = vector.broadcast %cst_56 : f32 to vector<31x16xf32>
    %156 = arith.addf %155, %154 : vector<31x16xf32>
    %157 = arith.divf %155, %156 : vector<31x16xf32>
    %158 = arith.mulf %122, %157 : vector<31x16xf32>
    %159 = arith.negf %152 : vector<31x16xf32>
    %160 = math.exp %159 : vector<31x16xf32>
    %cst_57 = arith.constant 1.000000e+00 : f32
    %161 = vector.broadcast %cst_57 : f32 to vector<31x16xf32>
    %162 = arith.addf %161, %160 : vector<31x16xf32>
    %163 = arith.divf %161, %162 : vector<31x16xf32>
    %164 = arith.mulf %132, %163 : vector<31x16xf32>
    %c0_58 = arith.constant 0 : index
    %c0_59 = arith.constant 0 : index
    %c0_60 = arith.constant 0 : index
    %165 = vector.load %arg4[%c0_58, %c0_59, %c0_60] : memref<1x16x32xf32, #tpu.memory_space<vmem>>, vector<1x16x32xf32>
    %166 = vector.shape_cast %165 : vector<1x16x32xf32> to vector<16x32xf32>
    %cst_61 = arith.constant dense<0.000000e+00> : vector<31x32xf32>
    %167 = tpu.matmul %70, %166, %cst_61 {dimension_numbers = #tpu.dot_dimension_numbers<[1], [0], [0], [1], [0, 0, 1, 1], [], []>} : vector<31x16xf32>, vector<16x32xf32>, vector<31x32xf32> -> vector<31x32xf32>
    %168 = arith.mulf %70, %158 : vector<31x16xf32>
    %cst_62 = arith.constant dense<0.000000e+00> : vector<31xf32>
    %169 = vector.multi_reduction <add>, %168, %cst_62 [1] : vector<31x16xf32> to vector<31xf32>
    %170 = vector.shape_cast %169 : vector<31xf32> to vector<31x1xf32>
    %171 = arith.mulf %70, %164 : vector<31x16xf32>
    %cst_63 = arith.constant dense<0.000000e+00> : vector<31xf32>
    %172 = vector.multi_reduction <add>, %171, %cst_63 [1] : vector<31x16xf32> to vector<31xf32>
    %173 = vector.shape_cast %172 : vector<31xf32> to vector<31x1xf32>
    %c0_64 = arith.constant 0 : index
    %c0_65 = arith.constant 0 : index
    %174 = vector.load %arg11[%c0_64, %c0_65] : memref<3x32xf32, #tpu.memory_space<vmem>>, vector<1x32xf32>
    %175 = vector.broadcast %170 : vector<31x1xf32> to vector<31x32xf32>
    %176 = vector.broadcast %174 : vector<1x32xf32> to vector<31x32xf32>
    %177 = arith.mulf %175, %176 : vector<31x32xf32>
    %178 = arith.addf %167, %177 : vector<31x32xf32>
    %c1_66 = arith.constant 1 : index
    %c0_67 = arith.constant 0 : index
    %179 = vector.load %arg11[%c1_66, %c0_67] : memref<3x32xf32, #tpu.memory_space<vmem>>, vector<1x32xf32>
    %180 = vector.broadcast %173 : vector<31x1xf32> to vector<31x32xf32>
    %181 = vector.broadcast %179 : vector<1x32xf32> to vector<31x32xf32>
    %182 = arith.mulf %180, %181 : vector<31x32xf32>
    %183 = arith.addf %178, %182 : vector<31x32xf32>
    %c2_68 = arith.constant 2 : index
    %c0_69 = arith.constant 0 : index
    %184 = vector.load %arg11[%c2_68, %c0_69] : memref<3x32xf32, #tpu.memory_space<vmem>>, vector<1x32xf32>
    %185 = vector.broadcast %184 : vector<1x32xf32> to vector<31x32xf32>
    %186 = arith.addf %183, %185 : vector<31x32xf32>
    %187 = vector.broadcast %6 : vector<31x1xf32> to vector<31x32xf32>
    %188 = arith.mulf %186, %187 : vector<31x32xf32>
    %c0_70 = arith.constant 0 : index
    %c0_71 = arith.constant 0 : index
    %c0_72 = arith.constant 0 : index
    %189 = vector.load %arg13[%c0_70, %c0_71, %c0_72] : memref<1x31x32xf32, #tpu.memory_space<vmem>>, vector<1x31x32xf32>
    %190 = vector.shape_cast %189 : vector<1x31x32xf32> to vector<31x32xf32>
    %191 = vector.shape_cast %188 : vector<31x32xf32> to vector<1x31x32xf32>
    tpu.vector_store %arg13[%c0_70, %c0_71, %c0_72], %191 {strides = array<i32>} : memref<1x31x32xf32, #tpu.memory_space<vmem>>, vector<1x31x32xf32>,
    return
  }
  func.func @transform_0(%arg0: i32, %arg1: i32) -> (i32, i32, i32) {
    %c0_i32 = arith.constant 0 : i32
    %c0_i32_0 = arith.constant 0 : i32
    %c0_i32_1 = arith.constant 0 : i32
    return %arg0, %c0_i32, %c0_i32_0 : i32, i32, i32
  }
  func.func @transform_1(%arg0: i32, %arg1: i32) -> (i32, i32, i32) {
    %c0_i32 = arith.constant 0 : i32
    %c0_i32_0 = arith.constant 0 : i32
    %c0_i32_1 = arith.constant 0 : i32
    return %arg0, %c0_i32, %c0_i32_0 : i32, i32, i32
  }
  func.func @transform_2(%arg0: i32, %arg1: i32) -> (i32, i32, i32) {
    %c0_i32 = arith.constant 0 : i32
    %c0_i32_0 = arith.constant 0 : i32
    %c0_i32_1 = arith.constant 0 : i32
    return %arg0, %c0_i32, %c0_i32_0 : i32, i32, i32
  }
  func.func @transform_3(%arg0: i32, %arg1: i32) -> (i32, i32, i32) {
    %c0_i32 = arith.constant 0 : i32
    %c0_i32_0 = arith.constant 0 : i32
    return %arg0, %arg1, %c0_i32 : i32, i32, i32
  }
  func.func @transform_4(%arg0: i32, %arg1: i32) -> (i32, i32, i32) {
    %c0_i32 = arith.constant 0 : i32
    %c0_i32_0 = arith.constant 0 : i32
    %c0_i32_1 = arith.constant 0 : i32
    return %arg0, %c0_i32, %c0_i32_0 : i32, i32, i32
  }
  func.func @transform_5(%arg0: i32, %arg1: i32) -> (i32, i32) {
    %c0_i32 = arith.constant 0 : i32
    %c0_i32_0 = arith.constant 0 : i32
    %c0_i32_1 = arith.constant 0 : i32
    return %c0_i32, %c0_i32_0 : i32, i32
  }
  func.func @transform_6(%arg0: i32, %arg1: i32) -> (i32, i32, i32) {
    %c0_i32 = arith.constant 0 : i32
    %c0_i32_0 = arith.constant 0 : i32
    %c0_i32_1 = arith.constant 0 : i32
    %c0_i32_2 = arith.constant 0 : i32
    return %c0_i32, %c0_i32_0, %c0_i32_1 : i32, i32, i32
  }
  func.func @transform_7(%arg0: i32, %arg1: i32) -> (i32, i32) {
    %c0_i32 = arith.constant 0 : i32
    %c0_i32_0 = arith.constant 0 : i32
    %c0_i32_1 = arith.constant 0 : i32
    return %c0_i32, %c0_i32_0 : i32, i32
  }
  func.func @transform_8(%arg0: i32, %arg1: i32) -> (i32, i32) {
    %c0_i32 = arith.constant 0 : i32
    %c0_i32_0 = arith.constant 0 : i32
    %c0_i32_1 = arith.constant 0 : i32
    return %c0_i32, %c0_i32_0 : i32, i32
  }
  func.func @transform_9(%arg0: i32, %arg1: i32) -> (i32, i32) {
    %c0_i32 = arith.constant 0 : i32
    %c0_i32_0 = arith.constant 0 : i32
    %c0_i32_1 = arith.constant 0 : i32
    return %c0_i32, %c0_i32_0 : i32, i32
  }
  func.func @transform_10(%arg0: i32, %arg1: i32) -> (i32, i32) {
    %c0_i32 = arith.constant 0 : i32
    %c0_i32_0 = arith.constant 0 : i32
    %c0_i32_1 = arith.constant 0 : i32
    return %c0_i32, %c0_i32_0 : i32, i32
  }
  func.func @transform_11(%arg0: i32, %arg1: i32) -> (i32, i32, i32) {
    %c0_i32 = arith.constant 0 : i32
    %c0_i32_0 = arith.constant 0 : i32
    return %arg0, %arg1, %c0_i32 : i32, i32, i32
  }
}

</mosaic_0001>

<llo_original>
// kernel: tile.23
$region0: #{tile.23}
  #allocation0 [shape = 's32[1]{0}', space=sflag, size = 0x4, scoped, tag = 'scoped memory for tile.23']
  %s0 = inlined_call_operand.vmem [shape: f32[16], index: 0, kind: input, shape index: {}]
  %s1 = inlined_call_operand.vmem [shape: f32[16,16], index: 1, kind: output, shape index: {}]
  // Predicated region
  $region2: #{tile.23} parent=0 // pred_check
    _
  $region3: #{tile.23} parent=0 // pred_check_branch
    %3 = sbr.rel (0) target = $region5
  $region4: #{tile.23} parent=0 // pred_region
    _
  $region5: #{tile.23} parent=0 // pred_fallthru
    _
  %v4 = vld [vmem:[%s0] ss:$0 sm:$0xff]
  %5 = vst [vmem:[%s1] sm:$0xff] %v4
  %s6 = scalar_lea.vmem %s1, 8
  %7 = vst [vmem:[%s6] sm:$0xff] %v4

// kernel: tile.28
$region0: #{tile.28}
  %s0 = inlined_call_operand.vmem [shape: f32[16,16], index: 0, kind: input, shape index: {}]
  %s1 = inlined_call_operand.vmem [shape: f32[1,256], index: 1, kind: output, shape index: {}]
  $region1: #{tile.28} parent=0
    #allocation0 [shape = 'u8[8192]{0}', space=vmem, size = 0x2000, scoped, tag = 'scoped mem for output reshape']
    %s2 = smov 3
    %v3 = vld [vmem:[%s0] ss:$8 sm:%s2]
    %vm4 = vcmask 130048
    %5 = vst.msk [vmem:[#allocation0] ss:$8 sm:$0x3] %vm4, %v3
    %s6 = scalar_lea.vmem %s0, 7
    %s7 = smov 3
    %v8 = vld [vmem:[%s6] ss:$8 sm:%s7]
    %9 = vrot.lane.b32.xlu0 %v8, 112
    %v10 = vpop.permute.xlu0 %9
    %vm11 = vcmask 1048448
    %12 = vst.msk [vmem:[#allocation0] ss:$8 sm:$0x3] %vm11, %v10
    %s13 = scalar_lea.vmem %s0, 6
    %s14 = smov 3
    %v15 = vld [vmem:[%s13] ss:$8 sm:%s14]
    %16 = vrot.lane.b32.xlu0 %v15, 96
    %v17 = vpop.permute.xlu0 %16
    %vm18 = vcmask 917248
    %19 = vst.msk [vmem:[#allocation0] ss:$8 sm:$0x3] %vm18, %v17
    %s20 = scalar_lea.vmem %s0, 5
    %s21 = smov 3
    %v22 = vld [vmem:[%s20] ss:$8 sm:%s21]
    %23 = vrot.lane.b32.xlu0 %v22, 80
    %v24 = vpop.permute.xlu0 %23
    %vm25 = vcmask 786048
    %26 = vst.msk [vmem:[#allocation0] ss:$8 sm:$0x3] %vm25, %v24
    %s27 = scalar_lea.vmem %s0, 4
    %s28 = smov 3
    %v29 = vld [vmem:[%s27] ss:$8 sm:%s28]
    %30 = vrot.lane.b32.xlu0 %v29, 64
    %v31 = vpop.permute.xlu0 %30
    %vm32 = vcmask 654848
    %33 = vst.msk [vmem:[#allocation0] ss:$8 sm:$0x3] %vm32, %v31
    %s34 = scalar_lea.vmem %s0, 3
    %s35 = smov 3
    %v36 = vld [vmem:[%s34] ss:$8 sm:%s35]
    %37 = vrot.lane.b32.xlu0 %v36, 48
    %v38 = vpop.permute.xlu0 %37
    %vm39 = vcmask 523648
    %40 = vst.msk [vmem:[#allocation0] ss:$8 sm:$0x3] %vm39, %v38
    %s41 = scalar_lea.vmem %s0, 2
    %s42 = smov 3
    %v43 = vld [vmem:[%s41] ss:$8 sm:%s42]
    %44 = vrot.lane.b32.xlu0 %v43, 32
    %v45 = vpop.permute.xlu0 %44
    %vm46 = vcmask 392448
    %47 = vst.msk [vmem:[#allocation0] ss:$8 sm:$0x3] %vm46, %v45
    %s48 = scalar_lea.vmem %s0, 1
    %s49 = smov 3
    %v50 = vld [vmem:[%s48] ss:$8 sm:%s49]
    %51 = vrot.lane.b32.xlu0 %v50, 16
    %v52 = vpop.permute.xlu0 %51
    %vm53 = vcmask 261248
    %54 = vst.msk [vmem:[#allocation0] ss:$8 sm:$0x3] %vm53, %v52
    %s56 = sshll.u32 1, 1
    %s57 = ssub.s32 %s56, 1
    %v59 = vld [vmem:[#allocation0] sm:%s57]
    %s60 = sshll.u32 1, 1
    %s61 = ssub.s32 %s60, 1
    %62 = vst [vmem:[%s1] sm:%s61] %v59
    %s63 = scalar_lea.vmem [#allocation0], 8
    %v64 = vld [vmem:[%s63] sm:%s57]
    %s65 = sshll.u32 1, 1
    %s66 = ssub.s32 %s65, 1
    %s67 = scalar_lea.vmem %s1, 1
    %68 = vst [vmem:[%s67] sm:%s66] %v64

// kernel: sub.9
$region0: #{sub.9}
  #allocation0 [shape = 's32[1]{0}', space=sflag, size = 0x4, scoped, tag = 'scoped memory for sub.9']
  %s0 = inlined_call_operand.vmem [shape: f32[4], index: 0, kind: input, shape index: {}]
  %s1 = inlined_call_operand.vmem [shape: f32[4], index: 1, kind: input, shape index: {}]
  %s2 = inlined_call_operand.vmem [shape: f32[4], index: 2, kind: output, shape index: {}]
  %v3 = vld [vmem:[%s0] sm:$0x1]
  %v4 = vld [vmem:[%s1] sm:$0x1]
  %5 = xla_tuple %v3, %v4
  %6 = xla_tuple %5
  %v7 = vsub.f32 %v3, %v4
  %8 = xla_tuple %v7
  %9 = vst [vmem:[%s2] sm:$0x1] %v7

// kernel: variance_adaptor_forward.2
$region0: #{variance_adaptor_forward.2}
  #allocation0 [shape = 'u32[]', space=smem, size = 0x4, offset = 0x4, fixed_abs, tag = 'smem constant byte address 0x4 - core index']
  #allocation1 [shape = 'u32[144,128]{1,0:T(1,128)}', space=vmem, size = 0x12000, scoped, tag = 'internal scratch']
  #allocation2 [shape = 'f32[1,1]{1,0:T(1,128)S(1)}', space=vmem, size = 0x200, scoped, tag = 'scoped memory for variance_adaptor_forward.2']
  %s0 = inlined_call_operand.hbm [shape: f32[2,16,32], index: 0, kind: input, shape index: {}]
  %s1 = inlined_call_operand.vmem [shape: f32[2,16,8], index: 1, kind: input, shape index: {}]
  %s2 = inlined_call_operand.vmem [shape: f32[2,16,1], index: 2, kind: input, shape index: {}]
  %s3 = inlined_call_operand.hbm [shape: f32[2,32,32], index: 3, kind: input, shape index: {}]
  %s4 = inlined_call_operand.hbm [shape: f32[2,32], index: 4, kind: input, shape index: {}]
  %s5 = inlined_call_operand.vmem [shape: f32[32,1], index: 5, kind: input, shape index: {}]
  %s6 = inlined_call_operand.<no memory space> [shape: f32[1,1], index: 6, kind: input, shape index: {}]
  %s7 = inlined_call_operand.hbm [shape: f32[2,3,32,32], index: 7, kind: input, shape index: {}]
  %s8 = inlined_call_operand.hbm [shape: f32[2,32], index: 8, kind: input, shape index: {}]
  %s9 = inlined_call_operand.vmem [shape: f32[2,32,8], index: 9, kind: input, shape index: {}]
  %s10 = inlined_call_operand.hbm [shape: f32[2,8], index: 10, kind: input, shape index: {}]
  %s11 = inlined_call_operand.hbm [shape: f32[8,32], index: 11, kind: input, shape index: {}]
  %s12 = inlined_call_operand.hbm [shape: f32[1,32], index: 12, kind: input, shape index: {}]
  %s13 = inlined_call_operand.vmem [shape: f32[2,3,32,8], index: 13, kind: input, shape index: {}]
  %s14 = inlined_call_operand.hbm [shape: f32[2,8], index: 14, kind: input, shape index: {}]
  %s15 = inlined_call_operand.hbm [shape: f32[2,8], index: 15, kind: input, shape index: {}]
  %s16 = inlined_call_operand.vmem [shape: f32[2,3,32,8], index: 16, kind: input, shape index: {}]
  %s17 = inlined_call_operand.hbm [shape: f32[2,8], index: 17, kind: input, shape index: {}]
  %s18 = inlined_call_operand.hbm [shape: f32[2,8], index: 18, kind: input, shape index: {}]
  %s19 = inlined_call_operand.vmem [shape: f32[2,16,1], index: 19, kind: output, shape index: {0}]
  %s20 = inlined_call_operand.vmem [shape: f32[2,16,8], index: 20, kind: output, shape index: {1}]
  %s21 = inlined_call_operand.vmem [shape: f32[2,16,32], index: 21, kind: output, shape index: {2}]
  %s22 = inlined_call_operand.vmem [shape: f32[2,16,8], index: 22, kind: output, shape index: {3}]
  %s23 = inlined_call_operand.vmem [shape: f32[2,16,8], index: 23, kind: output, shape index: {4}]
  %24 = xla_tuple %s19, %s20, %s21, %s22, %s23
  %s25 = sld [smem:[#allocation0]]
  $region189: #{variance_adaptor_forward.2} parent=0
    _
  %s27 = ssub.s32 1, %s25
  %s28 = scalar_select 0, %s27, %s25
  %v29 = vstv %s6
  %30 = vst [vmem:[#allocation2] sm:$0x1] %v29
  $region1: #{variance_adaptor_forward.2} parent=0
    #allocation3 [shape = 'u8[16384]{0}', space=vmem, size = 0x4000, scoped, tag = 'input window, operand 0']
    #allocation4 [shape = 's32[2]{0}', space=sflag, size = 0x8, scoped, tag = 'scoped memory for variance_adaptor_forward.2']
    #allocation5 [shape = 'u8[32768]{0}', space=vmem, size = 0x8000, scoped, tag = 'input window, operand 3, single buffered']
    #allocation6 [shape = 's32[1]{0}', space=sflag, size = 0x4, scoped, tag = 'scoped memory for variance_adaptor_forward.2']
    #allocation7 [shape = 'u8[1024]{0}', space=vmem, size = 0x400, scoped, tag = 'input window, operand 4, single buffered']
    #allocation8 [shape = 'u8[98304]{0}', space=vmem, size = 0x18000, scoped, tag = 'input window, operand 7, single buffered']
    #allocation9 [shape = 's32[1]{0}', space=sflag, size = 0x4, scoped, tag = 'scoped memory for variance_adaptor_forward.2']
    #allocation10 [shape = 'u8[1024]{0}', space=vmem, size = 0x400, scoped, tag = 'input window, operand 8, single buffered']
    #allocation11 [shape = 'u8[1024]{0}', space=vmem, size = 0x400, scoped, tag = 'input window, operand 10, single buffered']
    #allocation12 [shape = 's32[1]{0}', space=sflag, size = 0x4, scoped, tag = 'scoped memory for variance_adaptor_forward.2']
    #allocation13 [shape = 'u8[4096]{0}', space=vmem, size = 0x1000, scoped, tag = 'input window, operand 11, single buffered']
    #allocation14 [shape = 'u8[512]{0}', space=vmem, size = 0x400, scoped, tag = 'input window, operand 12, single buffered']
    #allocation15 [shape = 's32[1]{0}', space=sflag, size = 0x4, scoped, tag = 'scoped memory for variance_adaptor_forward.2']
    #allocation16 [shape = 'u8[1024]{0}', space=vmem, size = 0x400, scoped, tag = 'input window, operand 14, single buffered']
    #allocation17 [shape = 'u8[1024]{0}', space=vmem, size = 0x400, scoped, tag = 'input window, operand 15, single buffered']
    #allocation18 [shape = 's32[1]{0}', space=sflag, size = 0x4, scoped, tag = 'scoped memory for variance_adaptor_forward.2']
    #allocation19 [shape = 'u8[1024]{0}', space=vmem, size = 0x400, scoped, tag = 'input window, operand 17, single buffered']
    #allocation20 [shape = 'u8[1024]{0}', space=vmem, size = 0x400, scoped, tag = 'input window, operand 18, single buffered']
    #allocation21 [shape = 's32[1]{0}', space=sflag, size = 0x4, scoped, tag = 'scoped memory for variance_adaptor_forward.2']
    %31 = vsyncpa [#allocation4], 0
    %s32 = scalar_lea.sflag [#allocation4], 1
    %33 = vsyncpa %s32, 0
    %34 = vsyncpa [#allocation6], 0
    %35 = vsyncpa [#allocation9], 0
    %36 = vsyncpa [#allocation12], 0
    %37 = vsyncpa [#allocation15], 0
    %38 = vsyncpa [#allocation18], 0
    %39 = vsyncpa [#allocation21], 0
    loop: start=0, step=1, limit=4
    $region2: #{variance_adaptor_forward.2} parent=1 // loop_pre_header
      _
    $region3: #{variance_adaptor_forward.2} parent=1 // loop_header
      %s41 = sphi 0, %s45
      %p42 = scmp.ge.s32.totalorder %s41, 4
      %s51 = sphi 0, %s53
      %s54 = sphi 0, %s51
      %s55 = sphi 0, %s54
      %s71 = sphi 0, %s55
      %s77 = sphi 0, %s79
      %s80 = sphi 0, %s77
      %s81 = sphi 0, %s80
      %s97 = sphi 0, %s81
      %s103 = sphi 0, %s105
      %s106 = sphi 0, %s103
      %s107 = sphi 0, %s106
      %s123 = sphi 0, %s107
      %s127 = sphi 0, %s127
      %s129 = sphi 0, %s127
      %s130 = sphi 0, %s129
      %s144 = sphi 0, %s130
      %s148 = sphi 0, %s148
      %s150 = sphi 0, %s148
      %s151 = sphi 0, %s150
      %s165 = sphi 0, %s151
      %s169 = sphi 0, %s169
      %s171 = sphi 0, %s169
      %s172 = sphi 0, %s171
      %s186 = sphi 0, %s172
      %s190 = sphi 0, %s190
      %s192 = sphi 0, %s190
      %s193 = sphi 0, %s192
      %s207 = sphi 0, %s193
      %s211 = sphi 0, %s211
      %s213 = sphi 0, %s211
      %s214 = sphi 0, %s213
      %s228 = sphi 0, %s214
      %s232 = sphi 0, %s232
      %s234 = sphi 0, %s232
      %s235 = sphi 0, %s234
      %s249 = sphi 0, %s235
      %s253 = sphi 0, %s253
      %s255 = sphi 0, %s253
      %s256 = sphi 0, %s255
      %s270 = sphi 0, %s256
      %s274 = sphi 0, %s274
      %s276 = sphi 0, %s274
      %s277 = sphi 0, %s276
      %s291 = sphi 0, %s277
      %s295 = sphi 0, %s295
      %s297 = sphi 0, %s295
      %s298 = sphi 0, %s297
      %s312 = sphi 0, %s298
      %s316 = sphi 0, %s316
      %s318 = sphi 0, %s316
      %s319 = sphi 0, %s318
      %s333 = sphi 0, %s319
      %s337 = sphi 0, %s337
      %s339 = sphi 0, %s337
      %s340 = sphi 0, %s339
      %s354 = sphi 0, %s340
      %s358 = sphi 0, %s358
      %s360 = sphi 0, %s358
      %s361 = sphi 0, %s360
      %s375 = sphi 0, %s361
      %s379 = sphi 0, %s379
      %s381 = sphi 0, %s379
      %s382 = sphi 0, %s381
      %s396 = sphi 0, %s382
      %s400 = sphi 0, %s400
      %s402 = sphi 0, %s400
      %s403 = sphi 0, %s402
      %s417 = sphi 0, %s403
      %s421 = sphi 0, %s421
      %s423 = sphi 0, %s421
      %s424 = sphi 0, %s423
      %s438 = sphi 0, %s424
      %s442 = sphi 0, %s442
      %s444 = sphi 0, %s442
      %s445 = sphi 0, %s444
      %s459 = sphi 0, %s445
      %s465 = sphi 0, %s467
      %s468 = sphi 0, %s465
      %s469 = sphi 0, %s468
      %s485 = sphi 0, %s469
      %s491 = sphi 0, %s493
      %s494 = sphi 0, %s491
      %s495 = sphi 0, %s494
      %s511 = sphi 0, %s495
      %s517 = sphi 0, %s519
      %s520 = sphi 0, %s517
      %s521 = sphi 0, %s520
      %s537 = sphi 0, %s521
      %s543 = sphi 0, %s545
      %s546 = sphi 0, %s543
      %s547 = sphi 0, %s546
      %s563 = sphi 0, %s547
      %s569 = sphi 0, %s571
      %s572 = sphi 0, %s569
      %s573 = sphi 0, %s572
      %s589 = sphi 0, %s573
    $region4: #{variance_adaptor_forward.2} parent=1 // loop_header_branch
      %44 = sbr.rel (%p42) target = $region8
    $region5: #{variance_adaptor_forward.2} parent=1 // loop_body
      %s46 = ssub.s32 %s41, 1
      %s47 = ssub.s32 %s41, 2
      %s48 = sadd.s32 %s41, 1
      %s49 = ssub.s32 %s41, %s48
      %p50 = scmp.eq.s32.totalorder %s49, 0
      %s52 = sadd.s32 %s51, 1
      %s53 = scalar_select %p50, %s51, %s52
      %p56 = pneg %p50
      %p57 = scmp.eq.s32.totalorder %s41, 1
      %p58 = por %p56, %p57
      %p59 = scmp.ne.s32.totalorder %s51, %s54
      %p60 = scmp.eq.s32.totalorder %s41, 0
      %p61 = por %p59, %p60
      %p62 = scmp.ne.s32.totalorder %s51, %s54
      %p63 = scmp.eq.s32.totalorder %s46, 1
      %p64 = por %p62, %p63
      %p65 = scmp.ne.s32.totalorder %s54, %s55
      %p66 = scmp.eq.s32.totalorder %s46, 0
      %p67 = por %p65, %p66
      %p68 = scmp.ne.s32.totalorder %s54, %s55
      %p69 = scmp.eq.s32.totalorder %s47, 1
      %p70 = por %p68, %p69
      %p72 = scmp.ne.s32.totalorder %s55, %s71
      %p73 = scmp.eq.s32.totalorder %s47, 0
      %p74 = por %p72, %p73
      %s75 = ssub.s32 %s41, %s48
      %p76 = scmp.eq.s32.totalorder %s75, 0
      %s78 = sadd.s32 %s77, 1
      %s79 = scalar_select %p76, %s77, %s78
      %p82 = pneg %p76
      %p83 = scmp.eq.s32.totalorder %s41, 1
      %p84 = por %p82, %p83
      %p85 = scmp.ne.s32.totalorder %s77, %s80
      %p86 = scmp.eq.s32.totalorder %s41, 0
      %p87 = por %p85, %p86
      %p88 = scmp.ne.s32.totalorder %s77, %s80
      %p89 = scmp.eq.s32.totalorder %s46, 1
      %p90 = por %p88, %p89
      %p91 = scmp.ne.s32.totalorder %s80, %s81
      %p92 = scmp.eq.s32.totalorder %s46, 0
      %p93 = por %p91, %p92
      %p94 = scmp.ne.s32.totalorder %s80, %s81
      %p95 = scmp.eq.s32.totalorder %s47, 1
      %p96 = por %p94, %p95
      %p98 = scmp.ne.s32.totalorder %s81, %s97
      %p99 = scmp.eq.s32.totalorder %s47, 0
      %p100 = por %p98, %p99
      %s101 = ssub.s32 %s41, %s48
      %p102 = scmp.eq.s32.totalorder %s101, 0
      %s104 = sadd.s32 %s103, 1
      %s105 = scalar_select %p102, %s103, %s104
      %p108 = pneg %p102
      %p109 = scmp.eq.s32.totalorder %s41, 1
      %p110 = por %p108, %p109
      %p111 = scmp.ne.s32.totalorder %s103, %s106
      %p112 = scmp.eq.s32.totalorder %s41, 0
      %p113 = por %p111, %p112
      %p114 = scmp.ne.s32.totalorder %s103, %s106
      %p115 = scmp.eq.s32.totalorder %s46, 1
      %p116 = por %p114, %p115
      %p117 = scmp.ne.s32.totalorder %s106, %s107
      %p118 = scmp.eq.s32.totalorder %s46, 0
      %p119 = por %p117, %p118
      %p120 = scmp.ne.s32.totalorder %s106, %s107
      %p121 = scmp.eq.s32.totalorder %s47, 1
      %p122 = por %p120, %p121
      %p124 = scmp.ne.s32.totalorder %s107, %s123
      %p125 = scmp.eq.s32.totalorder %s47, 0
      %p126 = por %p124, %p125
      %s128 = sadd.s32 %s127, 1
      %p131 = scmp.eq.s32.totalorder %s41, 1
      %p132 = scmp.ne.s32.totalorder %s127, %s129
      %p133 = scmp.eq.s32.totalorder %s41, 0
      %p134 = por %p132, %p133
      %p135 = scmp.ne.s32.totalorder %s127, %s129
      %p136 = scmp.eq.s32.totalorder %s46, 1
      %p137 = por %p135, %p136
      %p138 = scmp.ne.s32.totalorder %s129, %s130
      %p139 = scmp.eq.s32.totalorder %s46, 0
      %p140 = por %p138, %p139
      %p141 = scmp.ne.s32.totalorder %s129, %s130
      %p142 = scmp.eq.s32.totalorder %s47, 1
      %p143 = por %p141, %p142
      %p145 = scmp.ne.s32.totalorder %s130, %s144
      %p146 = scmp.eq.s32.totalorder %s47, 0
      %p147 = por %p145, %p146
      %s149 = sadd.s32 %s148, 1
      %p152 = scmp.eq.s32.totalorder %s41, 1
      %p153 = scmp.ne.s32.totalorder %s148, %s150
      %p154 = scmp.eq.s32.totalorder %s41, 0
      %p155 = por %p153, %p154
      %p156 = scmp.ne.s32.totalorder %s148, %s150
      %p157 = scmp.eq.s32.totalorder %s46, 1
      %p158 = por %p156, %p157
      %p159 = scmp.ne.s32.totalorder %s150, %s151
      %p160 = scmp.eq.s32.totalorder %s46, 0
      %p161 = por %p159, %p160
      %p162 = scmp.ne.s32.totalorder %s150, %s151
      %p163 = scmp.eq.s32.totalorder %s47, 1
      %p164 = por %p162, %p163
      %p166 = scmp.ne.s32.totalorder %s151, %s165
      %p167 = scmp.eq.s32.totalorder %s47, 0
      %p168 = por %p166, %p167
      %s170 = sadd.s32 %s169, 1
      %p173 = scmp.eq.s32.totalorder %s41, 1
      %p174 = scmp.ne.s32.totalorder %s169, %s171
      %p175 = scmp.eq.s32.totalorder %s41, 0
      %p176 = por %p174, %p175
      %p177 = scmp.ne.s32.totalorder %s169, %s171
      %p178 = scmp.eq.s32.totalorder %s46, 1
      %p179 = por %p177, %p178
      %p180 = scmp.ne.s32.totalorder %s171, %s172
      %p181 = scmp.eq.s32.totalorder %s46, 0
      %p182 = por %p180, %p181
      %p183 = scmp.ne.s32.totalorder %s171, %s172
      %p184 = scmp.eq.s32.totalorder %s47, 1
      %p185 = por %p183, %p184
      %p187 = scmp.ne.s32.totalorder %s172, %s186
      %p188 = scmp.eq.s32.totalorder %s47, 0
      %p189 = por %p187, %p188
      %s191 = sadd.s32 %s190, 1
      %p194 = scmp.eq.s32.totalorder %s41, 1
      %p195 = scmp.ne.s32.totalorder %s190, %s192
      %p196 = scmp.eq.s32.totalorder %s41, 0
      %p197 = por %p195, %p196
      %p198 = scmp.ne.s32.totalorder %s190, %s192
      %p199 = scmp.eq.s32.totalorder %s46, 1
      %p200 = por %p198, %p199
      %p201 = scmp.ne.s32.totalorder %s192, %s193
      %p202 = scmp.eq.s32.totalorder %s46, 0
      %p203 = por %p201, %p202
      %p204 = scmp.ne.s32.totalorder %s192, %s193
      %p205 = scmp.eq.s32.totalorder %s47, 1
      %p206 = por %p204, %p205
      %p208 = scmp.ne.s32.totalorder %s193, %s207
      %p209 = scmp.eq.s32.totalorder %s47, 0
      %p210 = por %p208, %p209
      %s212 = sadd.s32 %s211, 1
      %p215 = scmp.eq.s32.totalorder %s41, 1
      %p216 = scmp.ne.s32.totalorder %s211, %s213
      %p217 = scmp.eq.s32.totalorder %s41, 0
      %p218 = por %p216, %p217
      %p219 = scmp.ne.s32.totalorder %s211, %s213
      %p220 = scmp.eq.s32.totalorder %s46, 1
      %p221 = por %p219, %p220
      %p222 = scmp.ne.s32.totalorder %s213, %s214
      %p223 = scmp.eq.s32.totalorder %s46, 0
      %p224 = por %p222, %p223
      %p225 = scmp.ne.s32.totalorder %s213, %s214
      %p226 = scmp.eq.s32.totalorder %s47, 1
      %p227 = por %p225, %p226
      %p229 = scmp.ne.s32.totalorder %s214, %s228
      %p230 = scmp.eq.s32.totalorder %s47, 0
      %p231 = por %p229, %p230
      %s233 = sadd.s32 %s232, 1
      %p236 = scmp.eq.s32.totalorder %s41, 1
      %p237 = scmp.ne.s32.totalorder %s232, %s234
      %p238 = scmp.eq.s32.totalorder %s41, 0
      %p239 = por %p237, %p238
      %p240 = scmp.ne.s32.totalorder %s232, %s234
      %p241 = scmp.eq.s32.totalorder %s46, 1
      %p242 = por %p240, %p241
      %p243 = scmp.ne.s32.totalorder %s234, %s235
      %p244 = scmp.eq.s32.totalorder %s46, 0
      %p245 = por %p243, %p244
      %p246 = scmp.ne.s32.totalorder %s234, %s235
      %p247 = scmp.eq.s32.totalorder %s47, 1
      %p248 = por %p246, %p247
      %p250 = scmp.ne.s32.totalorder %s235, %s249
      %p251 = scmp.eq.s32.totalorder %s47, 0
      %p252 = por %p250, %p251
      %s254 = sadd.s32 %s253, 1
      %p257 = scmp.eq.s32.totalorder %s41, 1
      %p258 = scmp.ne.s32.totalorder %s253, %s255
      %p259 = scmp.eq.s32.totalorder %s41, 0
      %p260 = por %p258, %p259
      %p261 = scmp.ne.s32.totalorder %s253, %s255
      %p262 = scmp.eq.s32.totalorder %s46, 1
      %p263 = por %p261, %p262
      %p264 = scmp.ne.s32.totalorder %s255, %s256
      %p265 = scmp.eq.s32.totalorder %s46, 0
      %p266 = por %p264, %p265
      %p267 = scmp.ne.s32.totalorder %s255, %s256
      %p268 = scmp.eq.s32.totalorder %s47, 1
      %p269 = por %p267, %p268
      %p271 = scmp.ne.s32.totalorder %s256, %s270
      %p272 = scmp.eq.s32.totalorder %s47, 0
      %p273 = por %p271, %p272
      %s275 = sadd.s32 %s274, 1
      %p278 = scmp.eq.s32.totalorder %s41, 1
      %p279 = scmp.ne.s32.totalorder %s274, %s276
      %p280 = scmp.eq.s32.totalorder %s41, 0
      %p281 = por %p279, %p280
      %p282 = scmp.ne.s32.totalorder %s274, %s276
      %p283 = scmp.eq.s32.totalorder %s46, 1
      %p284 = por %p282, %p283
      %p285 = scmp.ne.s32.totalorder %s276, %s277
      %p286 = scmp.eq.s32.totalorder %s46, 0
      %p287 = por %p285, %p286
      %p288 = scmp.ne.s32.totalorder %s276, %s277
      %p289 = scmp.eq.s32.totalorder %s47, 1
      %p290 = por %p288, %p289
      %p292 = scmp.ne.s32.totalorder %s277, %s291
      %p293 = scmp.eq.s32.totalorder %s47, 0
      %p294 = por %p292, %p293
      %s296 = sadd.s32 %s295, 1
      %p299 = scmp.eq.s32.totalorder %s41, 1
      %p300 = scmp.ne.s32.totalorder %s295, %s297
      %p301 = scmp.eq.s32.totalorder %s41, 0
      %p302 = por %p300, %p301
      %p303 = scmp.ne.s32.totalorder %s295, %s297
      %p304 = scmp.eq.s32.totalorder %s46, 1
      %p305 = por %p303, %p304
      %p306 = scmp.ne.s32.totalorder %s297, %s298
      %p307 = scmp.eq.s32.totalorder %s46, 0
      %p308 = por %p306, %p307
      %p309 = scmp.ne.s32.totalorder %s297, %s298
      %p310 = scmp.eq.s32.totalorder %s47, 1
      %p311 = por %p309, %p310
      %p313 = scmp.ne.s32.totalorder %s298, %s312
      %p314 = scmp.eq.s32.totalorder %s47, 0
      %p315 = por %p313, %p314
      %s317 = sadd.s32 %s316, 1
      %p320 = scmp.eq.s32.totalorder %s41, 1
      %p321 = scmp.ne.s32.totalorder %s316, %s318
      %p322 = scmp.eq.s32.totalorder %s41, 0
      %p323 = por %p321, %p322
      %p324 = scmp.ne.s32.totalorder %s316, %s318
      %p325 = scmp.eq.s32.totalorder %s46, 1
      %p326 = por %p324, %p325
      %p327 = scmp.ne.s32.totalorder %s318, %s319
      %p328 = scmp.eq.s32.totalorder %s46, 0
      %p329 = por %p327, %p328
      %p330 = scmp.ne.s32.totalorder %s318, %s319
      %p331 = scmp.eq.s32.totalorder %s47, 1
      %p332 = por %p330, %p331
      %p334 = scmp.ne.s32.totalorder %s319, %s333
      %p335 = scmp.eq.s32.totalorder %s47, 0
      %p336 = por %p334, %p335
      %s338 = sadd.s32 %s337, 1
      %p341 = scmp.eq.s32.totalorder %s41, 1
      %p342 = scmp.ne.s32.totalorder %s337, %s339
      %p343 = scmp.eq.s32.totalorder %s41, 0
      %p344 = por %p342, %p343
      %p345 = scmp.ne.s32.totalorder %s337, %s339
      %p346 = scmp.eq.s32.totalorder %s46, 1
      %p347 = por %p345, %p346
      %p348 = scmp.ne.s32.totalorder %s339, %s340
      %p349 = scmp.eq.s32.totalorder %s46, 0
      %p350 = por %p348, %p349
      %p351 = scmp.ne.s32.totalorder %s339, %s340
      %p352 = scmp.eq.s32.totalorder %s47, 1
      %p353 = por %p351, %p352
      %p355 = scmp.ne.s32.totalorder %s340, %s354
      %p356 = scmp.eq.s32.totalorder %s47, 0
      %p357 = por %p355, %p356
      %s359 = sadd.s32 %s358, 1
      %p362 = scmp.eq.s32.totalorder %s41, 1
      %p363 = scmp.ne.s32.totalorder %s358, %s360
      %p364 = scmp.eq.s32.totalorder %s41, 0
      %p365 = por %p363, %p364
      %p366 = scmp.ne.s32.totalorder %s358, %s360
      %p367 = scmp.eq.s32.totalorder %s46, 1
      %p368 = por %p366, %p367
      %p369 = scmp.ne.s32.totalorder %s360, %s361
      %p370 = scmp.eq.s32.totalorder %s46, 0
      %p371 = por %p369, %p370
      %p372 = scmp.ne.s32.totalorder %s360, %s361
      %p373 = scmp.eq.s32.totalorder %s47, 1
      %p374 = por %p372, %p373
      %p376 = scmp.ne.s32.totalorder %s361, %s375
      %p377 = scmp.eq.s32.totalorder %s47, 0
      %p378 = por %p376, %p377
      %s380 = sadd.s32 %s379, 1
      %p383 = scmp.eq.s32.totalorder %s41, 1
      %p384 = scmp.ne.s32.totalorder %s379, %s381
      %p385 = scmp.eq.s32.totalorder %s41, 0
      %p386 = por %p384, %p385
      %p387 = scmp.ne.s32.totalorder %s379, %s381
      %p388 = scmp.eq.s32.totalorder %s46, 1
      %p389 = por %p387, %p388
      %p390 = scmp.ne.s32.totalorder %s381, %s382
      %p391 = scmp.eq.s32.totalorder %s46, 0
      %p392 = por %p390, %p391
      %p393 = scmp.ne.s32.totalorder %s381, %s382
      %p394 = scmp.eq.s32.totalorder %s47, 1
      %p395 = por %p393, %p394
      %p397 = scmp.ne.s32.totalorder %s382, %s396
      %p398 = scmp.eq.s32.totalorder %s47, 0
      %p399 = por %p397, %p398
      %s401 = sadd.s32 %s400, 1
      %p404 = scmp.eq.s32.totalorder %s41, 1
      %p405 = scmp.ne.s32.totalorder %s400, %s402
      %p406 = scmp.eq.s32.totalorder %s41, 0
      %p407 = por %p405, %p406
      %p408 = scmp.ne.s32.totalorder %s400, %s402
      %p409 = scmp.eq.s32.totalorder %s46, 1
      %p410 = por %p408, %p409
      %p411 = scmp.ne.s32.totalorder %s402, %s403
      %p412 = scmp.eq.s32.totalorder %s46, 0
      %p413 = por %p411, %p412
      %p414 = scmp.ne.s32.totalorder %s402, %s403
      %p415 = scmp.eq.s32.totalorder %s47, 1
      %p416 = por %p414, %p415
      %p418 = scmp.ne.s32.totalorder %s403, %s417
      %p419 = scmp.eq.s32.totalorder %s47, 0
      %p420 = por %p418, %p419
      %s422 = sadd.s32 %s421, 1
      %p425 = scmp.eq.s32.totalorder %s41, 1
      %p426 = scmp.ne.s32.totalorder %s421, %s423
      %p427 = scmp.eq.s32.totalorder %s41, 0
      %p428 = por %p426, %p427
      %p429 = scmp.ne.s32.totalorder %s421, %s423
      %p430 = scmp.eq.s32.totalorder %s46, 1
      %p431 = por %p429, %p430
      %p432 = scmp.ne.s32.totalorder %s423, %s424
      %p433 = scmp.eq.s32.totalorder %s46, 0
      %p434 = por %p432, %p433
      %p435 = scmp.ne.s32.totalorder %s423, %s424
      %p436 = scmp.eq.s32.totalorder %s47, 1
      %p437 = por %p435, %p436
      %p439 = scmp.ne.s32.totalorder %s424, %s438
      %p440 = scmp.eq.s32.totalorder %s47, 0
      %p441 = por %p439, %p440
      %s443 = sadd.s32 %s442, 1
      %p446 = scmp.eq.s32.totalorder %s41, 1
      %p447 = scmp.ne.s32.totalorder %s442, %s444
      %p448 = scmp.eq.s32.totalorder %s41, 0
      %p449 = por %p447, %p448
      %p450 = scmp.ne.s32.totalorder %s442, %s444
      %p451 = scmp.eq.s32.totalorder %s46, 1
      %p452 = por %p450, %p451
      %p453 = scmp.ne.s32.totalorder %s444, %s445
      %p454 = scmp.eq.s32.totalorder %s46, 0
      %p455 = por %p453, %p454
      %p456 = scmp.ne.s32.totalorder %s444, %s445
      %p457 = scmp.eq.s32.totalorder %s47, 1
      %p458 = por %p456, %p457
      %p460 = scmp.ne.s32.totalorder %s445, %s459
      %p461 = scmp.eq.s32.totalorder %s47, 0
      %p462 = por %p460, %p461
      %s463 = ssub.s32 %s41, %s48
      %p464 = scmp.eq.s32.totalorder %s463, 0
      %s466 = sadd.s32 %s465, 1
      %s467 = scalar_select %p464, %s465, %s466
      %p470 = pneg %p464
      %p471 = scmp.eq.s32.totalorder %s41, 1
      %p472 = por %p470, %p471
      %p473 = scmp.ne.s32.totalorder %s465, %s468
      %p474 = scmp.eq.s32.totalorder %s41, 0
      %p475 = por %p473, %p474
      %p476 = scmp.ne.s32.totalorder %s465, %s468
      %p477 = scmp.eq.s32.totalorder %s46, 1
      %p478 = por %p476, %p477
      %p479 = scmp.ne.s32.totalorder %s468, %s469
      %p480 = scmp.eq.s32.totalorder %s46, 0
      %p481 = por %p479, %p480
      %p482 = scmp.ne.s32.totalorder %s468, %s469
      %p483 = scmp.eq.s32.totalorder %s47, 1
      %p484 = por %p482, %p483
      %p486 = scmp.ne.s32.totalorder %s469, %s485
      %p487 = scmp.eq.s32.totalorder %s47, 0
      %p488 = por %p486, %p487
      %s489 = ssub.s32 %s41, %s48
      %p490 = scmp.eq.s32.totalorder %s489, 0
      %s492 = sadd.s32 %s491, 1
      %s493 = scalar_select %p490, %s491, %s492
      %p496 = pneg %p490
      %p497 = scmp.eq.s32.totalorder %s41, 1
      %p498 = por %p496, %p497
      %p499 = scmp.ne.s32.totalorder %s491, %s494
      %p500 = scmp.eq.s32.totalorder %s41, 0
      %p501 = por %p499, %p500
      %p502 = scmp.ne.s32.totalorder %s491, %s494
      %p503 = scmp.eq.s32.totalorder %s46, 1
      %p504 = por %p502, %p503
      %p505 = scmp.ne.s32.totalorder %s494, %s495
      %p506 = scmp.eq.s32.totalorder %s46, 0
      %p507 = por %p505, %p506
      %p508 = scmp.ne.s32.totalorder %s494, %s495
      %p509 = scmp.eq.s32.totalorder %s47, 1
      %p510 = por %p508, %p509
      %p512 = scmp.ne.s32.totalorder %s495, %s511
      %p513 = scmp.eq.s32.totalorder %s47, 0
      %p514 = por %p512, %p513
      %s515 = ssub.s32 %s41, %s48
      %p516 = scmp.eq.s32.totalorder %s515, 0
      %s518 = sadd.s32 %s517, 1
      %s519 = scalar_select %p516, %s517, %s518
      %p522 = pneg %p516
      %p523 = scmp.eq.s32.totalorder %s41, 1
      %p524 = por %p522, %p523
      %p525 = scmp.ne.s32.totalorder %s517, %s520
      %p526 = scmp.eq.s32.totalorder %s41, 0
      %p527 = por %p525, %p526
      %p528 = scmp.ne.s32.totalorder %s517, %s520
      %p529 = scmp.eq.s32.totalorder %s46, 1
      %p530 = por %p528, %p529
      %p531 = scmp.ne.s32.totalorder %s520, %s521
      %p532 = scmp.eq.s32.totalorder %s46, 0
      %p533 = por %p531, %p532
      %p534 = scmp.ne.s32.totalorder %s520, %s521
      %p535 = scmp.eq.s32.totalorder %s47, 1
      %p536 = por %p534, %p535
      %p538 = scmp.ne.s32.totalorder %s521, %s537
      %p539 = scmp.eq.s32.totalorder %s47, 0
      %p540 = por %p538, %p539
      %s541 = ssub.s32 %s41, %s48
      %p542 = scmp.eq.s32.totalorder %s541, 0
      %s544 = sadd.s32 %s543, 1
      %s545 = scalar_select %p542, %s543, %s544
      %p548 = pneg %p542
      %p549 = scmp.eq.s32.totalorder %s41, 1
      %p550 = por %p548, %p549
      %p551 = scmp.ne.s32.totalorder %s543, %s546
      %p552 = scmp.eq.s32.totalorder %s41, 0
      %p553 = por %p551, %p552
      %p554 = scmp.ne.s32.totalorder %s543, %s546
      %p555 = scmp.eq.s32.totalorder %s46, 1
      %p556 = por %p554, %p555
      %p557 = scmp.ne.s32.totalorder %s546, %s547
      %p558 = scmp.eq.s32.totalorder %s46, 0
      %p559 = por %p557, %p558
      %p560 = scmp.ne.s32.totalorder %s546, %s547
      %p561 = scmp.eq.s32.totalorder %s47, 1
      %p562 = por %p560, %p561
      %p564 = scmp.ne.s32.totalorder %s547, %s563
      %p565 = scmp.eq.s32.totalorder %s47, 0
      %p566 = por %p564, %p565
      %s567 = ssub.s32 %s41, %s48
      %p568 = scmp.eq.s32.totalorder %s567, 0
      %s570 = sadd.s32 %s569, 1
      %s571 = scalar_select %p568, %s569, %s570
      %p574 = pneg %p568
      %p575 = scmp.eq.s32.totalorder %s41, 1
      %p576 = por %p574, %p575
      %p577 = scmp.ne.s32.totalorder %s569, %s572
      %p578 = scmp.eq.s32.totalorder %s41, 0
      %p579 = por %p577, %p578
      %p580 = scmp.ne.s32.totalorder %s569, %s572
      %p581 = scmp.eq.s32.totalorder %s46, 1
      %p582 = por %p580, %p581
      %p583 = scmp.ne.s32.totalorder %s572, %s573
      %p584 = scmp.eq.s32.totalorder %s46, 0
      %p585 = por %p583, %p584
      %p586 = scmp.ne.s32.totalorder %s572, %s573
      %p587 = scmp.eq.s32.totalorder %s47, 1
      %p588 = por %p586, %p587
      %p590 = scmp.ne.s32.totalorder %s573, %s589
      %p591 = scmp.eq.s32.totalorder %s47, 0
      %p592 = por %p590, %p591
      %p593 = scmp.le.s32.totalorder 1, %s41
      %p594 = scmp.lt.s32.totalorder %s41, 3
      %p595 = pnand %p593, %p594
      %p596 = pneg %p595
      // Predicated region
      $region9: #{variance_adaptor_forward.2} parent=5 // pred_check
        _
      $region10: #{variance_adaptor_forward.2} parent=5 // pred_check_branch
        %598 = sbr.rel (%p595) target = $region12
      $region11: #{variance_adaptor_forward.2} parent=5 // pred_region
        %s599 = ssub.s32 %s41, 1
        // Predicated region
        $region13: #{variance_adaptor_forward.2} parent=11 // pred_check
          %p600 = pneg %p140
        $region14: #{variance_adaptor_forward.2} parent=11 // pred_check_branch
          %602 = sbr.rel (%p600) target = $region16
        $region15: #{variance_adaptor_forward.2} parent=11 // pred_region
          %s604 = ssub.s32 1024, 1024
          %605 = vsyncadd [#allocation6], %s604
          %s606 = sshll.u32 [#allocation5], 4
          %s607 = int_to_ptr.vmem [resolvable:$true] %s606
          %612 = dma.hbm_to_vmem [thread:$0]  %s3, 1024, %s607, [#allocation6], 128, 128, 8
        $region16: #{variance_adaptor_forward.2} parent=11 // pred_fallthru
          _
        // Predicated region
        $region17: #{variance_adaptor_forward.2} parent=11 // pred_check
          %p613 = pneg %p161
        $region18: #{variance_adaptor_forward.2} parent=11 // pred_check_branch
          %615 = sbr.rel (%p613) target = $region20
        $region19: #{variance_adaptor_forward.2} parent=11 // pred_region
          %s617 = ssub.s32 32, 32
          %618 = vsyncadd [#allocation6], %s617
          %s620 = sshll.u32 [#allocation7], 4
          %s621 = int_to_ptr.vmem [resolvable:$true] %s620
          %623 = dma.hbm_to_vmem [thread:$0]  %s4, 32, %s621, [#allocation6]
        $region20: #{variance_adaptor_forward.2} parent=11 // pred_fallthru
          _
        // Predicated region
        $region21: #{variance_adaptor_forward.2} parent=11 // pred_check
          %p624 = pneg %p182
        $region22: #{variance_adaptor_forward.2} parent=11 // pred_check_branch
          %626 = sbr.rel (%p624) target = $region24
        $region23: #{variance_adaptor_forward.2} parent=11 // pred_region
          _
        $region24: #{variance_adaptor_forward.2} parent=11 // pred_fallthru
          _
        // Predicated region
        $region25: #{variance_adaptor_forward.2} parent=11 // pred_check
          %p627 = pneg %p203
        $region26: #{variance_adaptor_forward.2} parent=11 // pred_check_branch
          %629 = sbr.rel (%p627) target = $region28
        $region27: #{variance_adaptor_forward.2} parent=11 // pred_region
          _
        $region28: #{variance_adaptor_forward.2} parent=11 // pred_fallthru
          _
        // Predicated region
        $region29: #{variance_adaptor_forward.2} parent=11 // pred_check
          %p630 = pneg %p224
        $region30: #{variance_adaptor_forward.2} parent=11 // pred_check_branch
          %632 = sbr.rel (%p630) target = $region32
        $region31: #{variance_adaptor_forward.2} parent=11 // pred_region
          %s634 = ssub.s32 3072, 3072
          %635 = vsyncadd [#allocation9], %s634
          %s636 = sshll.u32 [#allocation8], 4
          %s637 = int_to_ptr.vmem [resolvable:$true] %s636
          %642 = dma.hbm_to_vmem [thread:$0]  %s7, 3072, %s637, [#allocation9], 128, 128, 8
        $region32: #{variance_adaptor_forward.2} parent=11 // pred_fallthru
          _
        // Predicated region
        $region33: #{variance_adaptor_forward.2} parent=11 // pred_check
          %p643 = pneg %p245
        $region34: #{variance_adaptor_forward.2} parent=11 // pred_check_branch
          %645 = sbr.rel (%p643) target = $region36
        $region35: #{variance_adaptor_forward.2} parent=11 // pred_region
          %s647 = ssub.s32 32, 32
          %648 = vsyncadd [#allocation9], %s647
          %s650 = sshll.u32 [#allocation10], 4
          %s651 = int_to_ptr.vmem [resolvable:$true] %s650
          %653 = dma.hbm_to_vmem [thread:$0]  %s8, 32, %s651, [#allocation9]
        $region36: #{variance_adaptor_forward.2} parent=11 // pred_fallthru
          _
        // Predicated region
        $region37: #{variance_adaptor_forward.2} parent=11 // pred_check
          %p654 = pneg %p266
        $region38: #{variance_adaptor_forward.2} parent=11 // pred_check_branch
          %656 = sbr.rel (%p654) target = $region40
        $region39: #{variance_adaptor_forward.2} parent=11 // pred_region
          _
        $region40: #{variance_adaptor_forward.2} parent=11 // pred_fallthru
          _
        // Predicated region
        $region41: #{variance_adaptor_forward.2} parent=11 // pred_check
          %p657 = pneg %p287
        $region42: #{variance_adaptor_forward.2} parent=11 // pred_check_branch
          %659 = sbr.rel (%p657) target = $region44
        $region43: #{variance_adaptor_forward.2} parent=11 // pred_region
          %s661 = ssub.s32 32, 32
          %662 = vsyncadd [#allocation12], %s661
          %s664 = sshll.u32 [#allocation11], 4
          %s665 = int_to_ptr.vmem [resolvable:$true] %s664
          %667 = dma.hbm_to_vmem [thread:$0]  %s10, 32, %s665, [#allocation12]
        $region44: #{variance_adaptor_forward.2} parent=11 // pred_fallthru
          _
        // Predicated region
        $region45: #{variance_adaptor_forward.2} parent=11 // pred_check
          %p668 = pneg %p308
        $region46: #{variance_adaptor_forward.2} parent=11 // pred_check_branch
          %670 = sbr.rel (%p668) target = $region48
        $region47: #{variance_adaptor_forward.2} parent=11 // pred_region
          %s672 = ssub.s32 128, 128
          %673 = vsyncadd [#allocation12], %s672
          %s675 = sshll.u32 [#allocation13], 4
          %s676 = int_to_ptr.vmem [resolvable:$true] %s675
          %678 = dma.hbm_to_vmem [thread:$0]  %s11, 128, %s676, [#allocation12]
        $region48: #{variance_adaptor_forward.2} parent=11 // pred_fallthru
          _
        // Predicated region
        $region49: #{variance_adaptor_forward.2} parent=11 // pred_check
          %p679 = pneg %p329
        $region50: #{variance_adaptor_forward.2} parent=11 // pred_check_branch
          %681 = sbr.rel (%p679) target = $region52
        $region51: #{variance_adaptor_forward.2} parent=11 // pred_region
          %s683 = ssub.s32 16, 16
          %684 = vsyncadd [#allocation15], %s683
          %s686 = sshll.u32 [#allocation14], 4
          %s687 = int_to_ptr.vmem [resolvable:$true] %s686
          %689 = dma.hbm_to_vmem [thread:$0]  %s12, 16, %s687, [#allocation15]
        $region52: #{variance_adaptor_forward.2} parent=11 // pred_fallthru
          _
        // Predicated region
        $region53: #{variance_adaptor_forward.2} parent=11 // pred_check
          %p690 = pneg %p350
        $region54: #{variance_adaptor_forward.2} parent=11 // pred_check_branch
          %692 = sbr.rel (%p690) target = $region56
        $region55: #{variance_adaptor_forward.2} parent=11 // pred_region
          _
        $region56: #{variance_adaptor_forward.2} parent=11 // pred_fallthru
          _
        // Predicated region
        $region57: #{variance_adaptor_forward.2} parent=11 // pred_check
          %p693 = pneg %p371
        $region58: #{variance_adaptor_forward.2} parent=11 // pred_check_branch
          %695 = sbr.rel (%p693) target = $region60
        $region59: #{variance_adaptor_forward.2} parent=11 // pred_region
          %s697 = ssub.s32 32, 32
          %698 = vsyncadd [#allocation15], %s697
          %s700 = sshll.u32 [#allocation16], 4
          %s701 = int_to_ptr.vmem [resolvable:$true] %s700
          %703 = dma.hbm_to_vmem [thread:$0]  %s14, 32, %s701, [#allocation15]
        $region60: #{variance_adaptor_forward.2} parent=11 // pred_fallthru
          _
        // Predicated region
        $region61: #{variance_adaptor_forward.2} parent=11 // pred_check
          %p704 = pneg %p392
        $region62: #{variance_adaptor_forward.2} parent=11 // pred_check_branch
          %706 = sbr.rel (%p704) target = $region64
        $region63: #{variance_adaptor_forward.2} parent=11 // pred_region
          %s708 = ssub.s32 32, 32
          %709 = vsyncadd [#allocation18], %s708
          %s711 = sshll.u32 [#allocation17], 4
          %s712 = int_to_ptr.vmem [resolvable:$true] %s711
          %714 = dma.hbm_to_vmem [thread:$0]  %s15, 32, %s712, [#allocation18]
        $region64: #{variance_adaptor_forward.2} parent=11 // pred_fallthru
          _
        // Predicated region
        $region65: #{variance_adaptor_forward.2} parent=11 // pred_check
          %p715 = pneg %p413
        $region66: #{variance_adaptor_forward.2} parent=11 // pred_check_branch
          %717 = sbr.rel (%p715) target = $region68
        $region67: #{variance_adaptor_forward.2} parent=11 // pred_region
          _
        $region68: #{variance_adaptor_forward.2} parent=11 // pred_fallthru
          _
        // Predicated region
        $region69: #{variance_adaptor_forward.2} parent=11 // pred_check
          %p718 = pneg %p434
        $region70: #{variance_adaptor_forward.2} parent=11 // pred_check_branch
          %720 = sbr.rel (%p718) target = $region72
        $region71: #{variance_adaptor_forward.2} parent=11 // pred_region
          %s722 = ssub.s32 32, 32
          %723 = vsyncadd [#allocation18], %s722
          %s725 = sshll.u32 [#allocation19], 4
          %s726 = int_to_ptr.vmem [resolvable:$true] %s725
          %728 = dma.hbm_to_vmem [thread:$0]  %s17, 32, %s726, [#allocation18]
        $region72: #{variance_adaptor_forward.2} parent=11 // pred_fallthru
          _
        // Predicated region
        $region73: #{variance_adaptor_forward.2} parent=11 // pred_check
          %p729 = pneg %p455
        $region74: #{variance_adaptor_forward.2} parent=11 // pred_check_branch
          %731 = sbr.rel (%p729) target = $region76
        $region75: #{variance_adaptor_forward.2} parent=11 // pred_region
          %s733 = ssub.s32 32, 32
          %734 = vsyncadd [#allocation21], %s733
          %s736 = sshll.u32 [#allocation20], 4
          %s737 = int_to_ptr.vmem [resolvable:$true] %s736
          %739 = dma.hbm_to_vmem [thread:$0]  %s18, 32, %s737, [#allocation21]
        $region76: #{variance_adaptor_forward.2} parent=11 // pred_fallthru
          _
      $region12: #{variance_adaptor_forward.2} parent=5 // pred_fallthru
        _
      %p740 = scmp.lt.s32.totalorder %s41, 2
      // Predicated region
      $region77: #{variance_adaptor_forward.2} parent=5 // pred_check
        %p741 = pneg %p740
      $region78: #{variance_adaptor_forward.2} parent=5 // pred_check_branch
        %743 = sbr.rel (%p741) target = $region80
      $region79: #{variance_adaptor_forward.2} parent=5 // pred_region
        // Predicated region
        $region81: #{variance_adaptor_forward.2} parent=79 // pred_check
          %p744 = pneg %p61
        $region82: #{variance_adaptor_forward.2} parent=79 // pred_check_branch
          %746 = sbr.rel (%p744) target = $region84
        $region83: #{variance_adaptor_forward.2} parent=79 // pred_region
          %s747 = sand.u32 %s51, 1
          %s748 = scalar_lea.sflag [#allocation4], %s747
          %s749 = sand.u32 %s51, 1
          %s750 = smul.addr %s749, 16
          %s751 = scalar_lea.vmem [#allocation3], %s750
          %s753 = ssub.s32 256, 256
          %754 = vsyncadd %s748, %s753
          %s755 = smul.addr %s41, 2
          %s756 = smul.addr %s755, 128
          %s757 = scalar_lea.hbm %s0, %s756
          %s758 = sshll.u32 %s751, 4
          %s759 = int_to_ptr.vmem [resolvable:$true] %s758
          %764 = dma.hbm_to_vmem [thread:$0]  %s757, 256, %s759, %s748, 128, 128, 8
        $region84: #{variance_adaptor_forward.2} parent=79 // pred_fallthru
          _
        // Predicated region
        $region85: #{variance_adaptor_forward.2} parent=79 // pred_check
          %p765 = pneg %p87
        $region86: #{variance_adaptor_forward.2} parent=79 // pred_check_branch
          %767 = sbr.rel (%p765) target = $region88
        $region87: #{variance_adaptor_forward.2} parent=79 // pred_region
          %p768 = scmp.lt.s32.totalorder %s41, 1
          %s769 = scalar_select %p768, %s41, 1
          %s770 = smul.addr %s769, 2
          %s771 = smul.addr %s770, 8
          %s772 = scalar_lea.vmem %s1, %s771
        $region88: #{variance_adaptor_forward.2} parent=79 // pred_fallthru
          _
        // Predicated region
        $region89: #{variance_adaptor_forward.2} parent=79 // pred_check
          %p773 = pneg %p113
        $region90: #{variance_adaptor_forward.2} parent=79 // pred_check_branch
          %775 = sbr.rel (%p773) target = $region92
        $region91: #{variance_adaptor_forward.2} parent=79 // pred_region
          %p776 = scmp.lt.s32.totalorder %s41, 1
          %s777 = scalar_select %p776, %s41, 1
          %s778 = smul.addr %s777, 2
          %s779 = smul.addr %s778, 8
          %s780 = scalar_lea.vmem %s2, %s779
        $region92: #{variance_adaptor_forward.2} parent=79 // pred_fallthru
          _
      $region80: #{variance_adaptor_forward.2} parent=5 // pred_fallthru
        _
      %p781 = scmp.le.s32.totalorder 1, %s41
      %p782 = scmp.lt.s32.totalorder %s41, 3
      %p783 = pnand %p781, %p782
      %p784 = pneg %p783
      // Predicated region
      $region93: #{variance_adaptor_forward.2} parent=5 // pred_check
        _
      $region94: #{variance_adaptor_forward.2} parent=5 // pred_check_branch
        %786 = sbr.rel (%p783) target = $region96
      $region95: #{variance_adaptor_forward.2} parent=5 // pred_region
        %s787 = ssub.s32 %s41, 1
        %s788 = sand.u32 %s54, 1
        %s789 = scalar_lea.sflag [#allocation4], %s788
        %s790 = sand.u32 %s54, 1
        %s791 = smul.addr %s790, 16
        %s792 = scalar_lea.vmem [#allocation3], %s791
        // Predicated region
        $region97: #{variance_adaptor_forward.2} parent=95 // pred_check
          %p793 = pneg %p67
        $region98: #{variance_adaptor_forward.2} parent=95 // pred_check_branch
          %795 = sbr.rel (%p793) target = $region100
        $region99: #{variance_adaptor_forward.2} parent=95 // pred_region
          %796 = dma.done %s789, 256
        $region100: #{variance_adaptor_forward.2} parent=95 // pred_fallthru
          _
        // Predicated region
        $region101: #{variance_adaptor_forward.2} parent=95 // pred_check
          %p797 = pneg %p140
        $region102: #{variance_adaptor_forward.2} parent=95 // pred_check_branch
          %799 = sbr.rel (%p797) target = $region104
        $region103: #{variance_adaptor_forward.2} parent=95 // pred_region
          %800 = dma.done [#allocation6], 1024
        $region104: #{variance_adaptor_forward.2} parent=95 // pred_fallthru
          _
        // Predicated region
        $region105: #{variance_adaptor_forward.2} parent=95 // pred_check
          %p801 = pneg %p161
        $region106: #{variance_adaptor_forward.2} parent=95 // pred_check_branch
          %803 = sbr.rel (%p801) target = $region108
        $region107: #{variance_adaptor_forward.2} parent=95 // pred_region
          %804 = dma.done [#allocation6], 32
        $region108: #{variance_adaptor_forward.2} parent=95 // pred_fallthru
          _
        // Predicated region
        $region109: #{variance_adaptor_forward.2} parent=95 // pred_check
          %p805 = pneg %p224
        $region110: #{variance_adaptor_forward.2} parent=95 // pred_check_branch
          %807 = sbr.rel (%p805) target = $region112
        $region111: #{variance_adaptor_forward.2} parent=95 // pred_region
          %808 = dma.done [#allocation9], 3072
        $region112: #{variance_adaptor_forward.2} parent=95 // pred_fallthru
          _
        // Predicated region
        $region113: #{variance_adaptor_forward.2} parent=95 // pred_check
          %p809 = pneg %p245
        $region114: #{variance_adaptor_forward.2} parent=95 // pred_check_branch
          %811 = sbr.rel (%p809) target = $region116
        $region115: #{variance_adaptor_forward.2} parent=95 // pred_region
          %812 = dma.done [#allocation9], 32
        $region116: #{variance_adaptor_forward.2} parent=95 // pred_fallthru
          _
        // Predicated region
        $region117: #{variance_adaptor_forward.2} parent=95 // pred_check
          %p813 = pneg %p287
        $region118: #{variance_adaptor_forward.2} parent=95 // pred_check_branch
          %815 = sbr.rel (%p813) target = $region120
        $region119: #{variance_adaptor_forward.2} parent=95 // pred_region
          %816 = dma.done [#allocation12], 32
        $region120: #{variance_adaptor_forward.2} parent=95 // pred_fallthru
          _
        // Predicated region
        $region121: #{variance_adaptor_forward.2} parent=95 // pred_check
          %p817 = pneg %p308
        $region122: #{variance_adaptor_forward.2} parent=95 // pred_check_branch
          %819 = sbr.rel (%p817) target = $region124
        $region123: #{variance_adaptor_forward.2} parent=95 // pred_region
          %820 = dma.done [#allocation12], 128
        $region124: #{variance_adaptor_forward.2} parent=95 // pred_fallthru
          _
        // Predicated region
        $region125: #{variance_adaptor_forward.2} parent=95 // pred_check
          %p821 = pneg %p329
        $region126: #{variance_adaptor_forward.2} parent=95 // pred_check_branch
          %823 = sbr.rel (%p821) target = $region128
        $region127: #{variance_adaptor_forward.2} parent=95 // pred_region
          %824 = dma.done [#allocation15], 16
        $region128: #{variance_adaptor_forward.2} parent=95 // pred_fallthru
          _
        // Predicated region
        $region129: #{variance_adaptor_forward.2} parent=95 // pred_check
          %p825 = pneg %p371
        $region130: #{variance_adaptor_forward.2} parent=95 // pred_check_branch
          %827 = sbr.rel (%p825) target = $region132
        $region131: #{variance_adaptor_forward.2} parent=95 // pred_region
          %828 = dma.done [#allocation15], 32
        $region132: #{variance_adaptor_forward.2} parent=95 // pred_fallthru
          _
        // Predicated region
        $region133: #{variance_adaptor_forward.2} parent=95 // pred_check
          %p829 = pneg %p392
        $region134: #{variance_adaptor_forward.2} parent=95 // pred_check_branch
          %831 = sbr.rel (%p829) target = $region136
        $region135: #{variance_adaptor_forward.2} parent=95 // pred_region
          %832 = dma.done [#allocation18], 32
        $region136: #{variance_adaptor_forward.2} parent=95 // pred_fallthru
          _
        // Predicated region
        $region137: #{variance_adaptor_forward.2} parent=95 // pred_check
          %p833 = pneg %p434
        $region138: #{variance_adaptor_forward.2} parent=95 // pred_check_branch
          %835 = sbr.rel (%p833) target = $region140
        $region139: #{variance_adaptor_forward.2} parent=95 // pred_region
          %836 = dma.done [#allocation18], 32
        $region140: #{variance_adaptor_forward.2} parent=95 // pred_fallthru
          _
        // Predicated region
        $region141: #{variance_adaptor_forward.2} parent=95 // pred_check
          %p837 = pneg %p455
        $region142: #{variance_adaptor_forward.2} parent=95 // pred_check_branch
          %839 = sbr.rel (%p837) target = $region144
        $region143: #{variance_adaptor_forward.2} parent=95 // pred_region
          %840 = dma.done [#allocation21], 32
        $region144: #{variance_adaptor_forward.2} parent=95 // pred_fallthru
          _
        %s841 = sand.u32 %s54, 1
        %s842 = scalar_lea.sflag [#allocation4], %s841
        %s843 = sand.u32 %s54, 1
        %s844 = smul.addr %s843, 16
        %s845 = scalar_lea.vmem [#allocation3], %s844
        %p846 = pneg %p67
        %p847 = pneg %p64
        %p848 = scmp.lt.s32.totalorder %s46, 1
        %s849 = scalar_select %p848, %s46, 1
        %s850 = smul.addr %s849, 2
        %s851 = smul.addr %s850, 8
        %s852 = scalar_lea.vmem %s1, %s851
        %p853 = pneg %p93
        %p854 = pneg %p90
        %p855 = scmp.lt.s32.totalorder %s46, 1
        %s856 = scalar_select %p855, %s46, 1
        %s857 = smul.addr %s856, 2
        %s858 = smul.addr %s857, 8
        %s859 = scalar_lea.vmem %s2, %s858
        %p860 = pneg %p119
        %p861 = pneg %p116
        %p862 = pneg %p140
        %p863 = pneg %p137
        %p864 = pneg %p161
        %p865 = pneg %p158
        %p866 = pneg %p182
        %p867 = pneg %p179
        %p868 = pneg %p203
        %p869 = pneg %p200
        %p870 = pneg %p224
        %p871 = pneg %p221
        %p872 = pneg %p245
        %p873 = pneg %p242
        %p874 = pneg %p266
        %p875 = pneg %p263
        %p876 = pneg %p287
        %p877 = pneg %p284
        %p878 = pneg %p308
        %p879 = pneg %p305
        %p880 = pneg %p329
        %p881 = pneg %p326
        %p882 = pneg %p350
        %p883 = pneg %p347
        %p884 = pneg %p371
        %p885 = pneg %p368
        %p886 = pneg %p392
        %p887 = pneg %p389
        %p888 = pneg %p413
        %p889 = pneg %p410
        %p890 = pneg %p434
        %p891 = pneg %p431
        %p892 = pneg %p455
        %p893 = pneg %p452
        %p894 = pneg %p481
        %p895 = pneg %p478
        %p896 = scmp.lt.s32.totalorder %s46, 1
        %s897 = scalar_select %p896, %s46, 1
        %s898 = smul.addr %s897, 2
        %s899 = smul.addr %s898, 8
        %s900 = scalar_lea.vmem %s19, %s899
        %p901 = pneg %p507
        %p902 = pneg %p504
        %p903 = scmp.lt.s32.totalorder %s46, 1
        %s904 = scalar_select %p903, %s46, 1
        %s905 = smul.addr %s904, 2
        %s906 = smul.addr %s905, 8
        %s907 = scalar_lea.vmem %s20, %s906
        %p908 = pneg %p533
        %p909 = pneg %p530
        %p910 = scmp.lt.s32.totalorder %s46, 1
        %s911 = scalar_select %p910, %s46, 1
        %s912 = smul.addr %s911, 2
        %s913 = smul.addr %s912, 8
        %s914 = scalar_lea.vmem %s21, %s913
        %p915 = pneg %p559
        %p916 = pneg %p556
        %p917 = scmp.lt.s32.totalorder %s46, 1
        %s918 = scalar_select %p917, %s46, 1
        %s919 = smul.addr %s918, 2
        %s920 = smul.addr %s919, 8
        %s921 = scalar_lea.vmem %s22, %s920
        %p922 = pneg %p585
        %p923 = pneg %p582
        %p924 = scmp.lt.s32.totalorder %s46, 1
        %s925 = scalar_select %p924, %s46, 1
        %s926 = smul.addr %s925, 2
        %s927 = smul.addr %s926, 8
        %s928 = scalar_lea.vmem %s23, %s927
        %p929 = scmp.lt.s32.totalorder %s46, 1
        %s930 = scalar_select %p929, %s46, 1
        %s931 = smul.addr %s930, 2
        %s932 = smul.addr %s931, 8
        %s933 = scalar_lea.vmem %s1, %s932
        %p934 = scmp.lt.s32.totalorder %s46, 1
        %s935 = scalar_select %p934, %s46, 1
        %s936 = smul.addr %s935, 2
        %s937 = smul.addr %s936, 8
        %s938 = scalar_lea.vmem %s2, %s937
        %p939 = scmp.lt.s32.totalorder %s46, 1
        %s940 = scalar_select %p939, %s46, 1
        %s941 = smul.addr %s940, 2
        %s942 = smul.addr %s941, 8
        %s943 = scalar_lea.vmem %s19, %s942
        %p944 = scmp.lt.s32.totalorder %s46, 1
        %s945 = scalar_select %p944, %s46, 1
        %s946 = smul.addr %s945, 2
        %s947 = smul.addr %s946, 8
        %s948 = scalar_lea.vmem %s20, %s947
        %p949 = scmp.lt.s32.totalorder %s46, 1
        %s950 = scalar_select %p949, %s46, 1
        %s951 = smul.addr %s950, 2
        %s952 = smul.addr %s951, 8
        %s953 = scalar_lea.vmem %s21, %s952
        %p954 = scmp.lt.s32.totalorder %s46, 1
        %s955 = scalar_select %p954, %s46, 1
        %s956 = smul.addr %s955, 2
        %s957 = smul.addr %s956, 8
        %s958 = scalar_lea.vmem %s22, %s957
        %p959 = scmp.lt.s32.totalorder %s46, 1
        %s960 = scalar_select %p959, %s46, 1
        %s961 = smul.addr %s960, 2
        %s962 = smul.addr %s961, 8
        %s963 = scalar_lea.vmem %s23, %s962
        %v964 = vld [vmem:[%s792] sm:$0xff]
        %v965 = vld [vmem:[%s792 + $0x8] sm:$0xff]
        %v966 = vld [vmem:[%s938] sm:$0xff]
        %v967 = vld [vmem:[%s938 + $0x8] sm:$0xff]
        %v968 = vlaneseq
        %v969 = vshrl.u32 %v968, 7
        %v970 = vadd.s32 %v969, 8
        %v971 = vlaneseq
        %v972 = vand.u32 %v971, 127
        %v973 = vadd.s32 %v972, 1
        %vm974 = vcmp.eq.s32.totalorder %v969, %v973
        %vm975 = vcmp.eq.s32.totalorder %v970, %v973
        %v976 = vsel %vm974, 1, 0
        %v977 = vsel %vm975, 1, 0
        %v978 = vcvt.s32.f32 %v976
        %v979 = vcvt.s32.f32 %v977
        %v980 = vsub.s32 %v972, 1
        %vm981 = vcmp.eq.s32.totalorder %v969, %v980
        %vm982 = vcmp.eq.s32.totalorder %v970, %v980
        %v983 = vsel %vm981, 1, 0
        %v984 = vsel %vm982, 1, 0
        %v985 = vcvt.s32.f32 %v983
        %v986 = vcvt.s32.f32 %v984
        %v987 = vld [vmem:[#allocation5] sm:$0xff]
        %v988 = vld [vmem:[#allocation5 + $0x8] sm:$0xff]
        %v989 = vld [vmem:[#allocation5 + $0x10] sm:$0xff]
        %v990 = vld [vmem:[#allocation5 + $0x18] sm:$0xff]
        %v991 = vld [vmem:[#allocation7] sm:$0x1]
        %v992 = vlaneseq
        %v993 = vshrl.u32 %v992, 7
        %v994 = vsub.s32 0, %v993
        %v995 = vrot.slane %v991, %v994
        %vm996 = vcmask 261120
        %v998 = vsel %vm996, %v964, 0
        %v1001 = vsel %vm996, %v965, 0
        %1003 = vmatprep.subr.mxu0 0.0
        %1004 = vmatpush1.msra.mxu0 0.0
        %1005 = vmatprep.subr.mxu0 0.0
        %1006 = vmatpush1.msra.mxu0 0.0
        %1007 = vmatprep.subr.mxu0 0.0
        %1008 = vmatpush1.msra.mxu0 0.0
        %1009 = vmatprep.subr.mxu0 0.0
        %1010 = vmatpush1.msra.mxu0 0.0
        %1011 = vmatprep.subr.mxu0 0.0
        %1012 = vmatpush1.msra.mxu0 0.0
        %1013 = vmatprep.subr.mxu0 0.0
        %1014 = vmatpush1.msra.mxu0 0.0
        %1015 = vmatprep.subr.mxu0 0.0
        %1016 = vmatpush1.msra.mxu0 0.0
        %1017 = vmatprep.subr.mxu0 0.0
        %1018 = vmatpush1.msra.mxu0 0.0
        %1019 = vmatprep.subr.mxu0 0.0
        %1020 = vmatpush1.msra.mxu0 0.0
        %1021 = vmatprep.subr.mxu0 0.0
        %1022 = vmatpush1.msra.mxu0 0.0
        %1023 = vmatprep.subr.mxu0 0.0
        %1024 = vmatpush1.msra.mxu0 0.0
        %1025 = vmatprep.subr.mxu0 0.0
        %1026 = vmatpush1.msra.mxu0 0.0
        %1027 = vmatprep.subr.mxu0 0.0
        %1028 = vmatpush1.msra.mxu0 %v990
        %1029 = vmatprep.subr.mxu0 0.0
        %1030 = vmatpush1.msra.mxu0 %v989
        %1031 = vmatprep.subr.mxu0 0.0
        %1032 = vmatpush1.msra.mxu0 %v988
        %1033 = vmatprep.subr.mxu0 0.0
        %1034 = vmatpush1.msra.mxu0 %v987
        %1035 = vmatprep.subr.mxu0 0.0
        %1036 = vmatpush2.msra.mxu0 0.0
        %1037 = vmatprep.subr.mxu0 0.0
        %1038 = vmatpush2.msra.mxu0 0.0
        %1039 = vmatprep.subr.mxu0 0.0
        %1040 = vmatpush2.msra.mxu0 0.0
        %1041 = vmatprep.subr.mxu0 0.0
        %1042 = vmatpush2.msra.mxu0 0.0
        %1043 = vmatprep.subr.mxu0 0.0
        %1044 = vmatpush2.msra.mxu0 0.0
        %1045 = vmatprep.subr.mxu0 0.0
        %1046 = vmatpush2.msra.mxu0 0.0
        %1047 = vmatprep.subr.mxu0 0.0
        %1048 = vmatpush2.msra.mxu0 0.0
        %1049 = vmatprep.subr.mxu0 0.0
        %1050 = vmatpush2.msra.mxu0 0.0
        %1051 = vmatprep.subr.mxu0 0.0
        %1052 = vmatpush2.msra.mxu0 0.0
        %1053 = vmatprep.subr.mxu0 0.0
        %1054 = vmatpush2.msra.mxu0 0.0
        %1055 = vmatprep.subr.mxu0 0.0
        %1056 = vmatpush2.msra.mxu0 0.0
        %1057 = vmatprep.subr.mxu0 0.0
        %1058 = vmatpush2.msra.mxu0 0.0
        %1059 = vmatprep.subr.mxu0 0.0
        %1060 = vmatpush2.msra.mxu0 0.0
        %1061 = vmatprep.subr.mxu0 0.0
        %1062 = vmatpush2.msra.mxu0 0.0
        %1063 = vmatprep.subr.mxu0 0.0
        %1064 = vmatpush2.msra.mxu0 0.0
        %1065 = vmatprep.subr.mxu0 0.0
        %1066 = vmatpush2.msra.mxu0 0.0
        %1067 = vmatprep.mubr.f32.mxu0 0.0
        %1068 = vmatmul.mubr.f32.gmra.mxu0 %v998
        %v1069 = vpop.f32.mrf.mxu0
        %v1070 = vadd.f32 %v995, %v1069
        %v1071 = vpop.f32.mrf.mxu0
        %1072 = vmatprep.mubr.f32.mxu0 0.0
        %1073 = vmatmul.mubr.f32.gmra.mxu0 %v1001
        %v1074 = vpop.f32.mrf.mxu0
        %v1075 = vadd.f32 %v995, %v1074
        %v1076 = vpop.f32.mrf.mxu0
        %1077 = vdwg.mxu0
        %s1078 = scalar_lea.vmem [#allocation5], 32
        %v1079 = vld [vmem:[%s1078] sm:$0xff]
        %v1080 = vld [vmem:[%s1078 + $0x8] sm:$0xff]
        %v1081 = vld [vmem:[%s1078 + $0x10] sm:$0xff]
        %v1082 = vld [vmem:[%s1078 + $0x18] sm:$0xff]
        %v1083 = vld [vmem:[#allocation7 + $0x1] sm:$0x1]
        %v1084 = vlaneseq
        %v1085 = vshrl.u32 %v1084, 7
        %v1086 = vsub.s32 0, %v1085
        %v1087 = vrot.slane %v1083, %v1086
        %1088 = vmatprep.subr.mxu0 0.0
        %1089 = vmatpush1.msra.mxu0 0.0
        %1090 = vmatprep.subr.mxu0 0.0
        %1091 = vmatpush1.msra.mxu0 0.0
        %1092 = vmatprep.subr.mxu0 0.0
        %1093 = vmatpush1.msra.mxu0 0.0
        %1094 = vmatprep.subr.mxu0 0.0
        %1095 = vmatpush1.msra.mxu0 0.0
        %1096 = vmatprep.subr.mxu0 0.0
        %1097 = vmatpush1.msra.mxu0 0.0
        %1098 = vmatprep.subr.mxu0 0.0
        %1099 = vmatpush1.msra.mxu0 0.0
        %1100 = vmatprep.subr.mxu0 0.0
        %1101 = vmatpush1.msra.mxu0 0.0
        %1102 = vmatprep.subr.mxu0 0.0
        %1103 = vmatpush1.msra.mxu0 0.0
        %1104 = vmatprep.subr.mxu0 0.0
        %1105 = vmatpush1.msra.mxu0 0.0
        %1106 = vmatprep.subr.mxu0 0.0
        %1107 = vmatpush1.msra.mxu0 0.0
        %1108 = vmatprep.subr.mxu0 0.0
        %1109 = vmatpush1.msra.mxu0 0.0
        %1110 = vmatprep.subr.mxu0 0.0
        %1111 = vmatpush1.msra.mxu0 0.0
        %1112 = vmatprep.subr.mxu0 0.0
        %1113 = vmatpush1.msra.mxu0 %v1082
        %1114 = vmatprep.subr.mxu0 0.0
        %1115 = vmatpush1.msra.mxu0 %v1081
        %1116 = vmatprep.subr.mxu0 0.0
        %1117 = vmatpush1.msra.mxu0 %v1080
        %1118 = vmatprep.subr.mxu0 0.0
        %1119 = vmatpush1.msra.mxu0 %v1079
        %1120 = vmatprep.subr.mxu0 0.0
        %1121 = vmatpush2.msra.mxu0 0.0
        %1122 = vmatprep.subr.mxu0 0.0
        %1123 = vmatpush2.msra.mxu0 0.0
        %1124 = vmatprep.subr.mxu0 0.0
        %1125 = vmatpush2.msra.mxu0 0.0
        %1126 = vmatprep.subr.mxu0 0.0
        %1127 = vmatpush2.msra.mxu0 0.0
        %1128 = vmatprep.subr.mxu0 0.0
        %1129 = vmatpush2.msra.mxu0 0.0
        %1130 = vmatprep.subr.mxu0 0.0
        %1131 = vmatpush2.msra.mxu0 0.0
        %1132 = vmatprep.subr.mxu0 0.0
        %1133 = vmatpush2.msra.mxu0 0.0
        %1134 = vmatprep.subr.mxu0 0.0
        %1135 = vmatpush2.msra.mxu0 0.0
        %1136 = vmatprep.subr.mxu0 0.0
        %1137 = vmatpush2.msra.mxu0 0.0
        %1138 = vmatprep.subr.mxu0 0.0
        %1139 = vmatpush2.msra.mxu0 0.0
        %1140 = vmatprep.subr.mxu0 0.0
        %1141 = vmatpush2.msra.mxu0 0.0
        %1142 = vmatprep.subr.mxu0 0.0
        %1143 = vmatpush2.msra.mxu0 0.0
        %1144 = vmatprep.subr.mxu0 0.0
        %1145 = vmatpush2.msra.mxu0 0.0
        %1146 = vmatprep.subr.mxu0 0.0
        %1147 = vmatpush2.msra.mxu0 0.0
        %1148 = vmatprep.subr.mxu0 0.0
        %1149 = vmatpush2.msra.mxu0 0.0
        %1150 = vmatprep.subr.mxu0 0.0
        %1151 = vmatpush2.msra.mxu0 0.0
        %1152 = vmatprep.mubr.f32.mxu0 0.0
        %1153 = vmatmul.mubr.f32.gmra.mxu0 %v998
        %v1154 = vpop.f32.mrf.mxu0
        %v1155 = vadd.f32 %v1087, %v1154
        %v1156 = vpop.f32.mrf.mxu0
        %1157 = vmatprep.mubr.f32.mxu0 0.0
        %1158 = vmatmul.mubr.f32.gmra.mxu0 %v1001
        %v1159 = vpop.f32.mrf.mxu0
        %v1160 = vadd.f32 %v1087, %v1159
        %v1161 = vpop.f32.mrf.mxu0
        %1162 = vdwg.mxu0
        %v1163 = vxor.u32 %v1155, 2147483648
        %v1164 = vxor.u32 %v1160, 2147483648
        %v1165 = vmul.f32 %v1163, 1.442695
        %v1166 = vpow.pop %v1165
        %v1167 = vmul.f32 %v1164, 1.442695
        %v1168 = vpow.pop %v1167
        %v1169 = vadd.f32 %v1166, 1.0
        %v1170 = vadd.f32 %v1168, 1.0
        %v1171 = vrcp.pop %v1169
        %v1172 = vmul.f32 1.0, %v1171
        %v1173 = vrcp.pop %v1170
        %v1174 = vmul.f32 1.0, %v1173
        %v1175 = vmul.f32 %v1070, %v1172
        %v1176 = vmul.f32 %v1075, %v1174
        %v1177 = vld [vmem:[%s5] sm:$0xff]
        %v1178 = vld [vmem:[%s5 + $0x8] sm:$0xff]
        %v1179 = vld [vmem:[%s5 + $0x10] sm:$0xff]
        %v1180 = vld [vmem:[%s5 + $0x18] sm:$0xff]
        %v1181 = vld [vmem:[#allocation2] sm:$0x1]
        %v1183 = vlaneseq
        %v1184 = vshrl.u32 %v1183, 7
        %v1185 = vsub.s32 0, %v1184
        %v1186 = vrot.slane %v1181, %v1185
        %v1189 = vsel %vm996, %v1175, 0
        %v1192 = vsel %vm996, %v1176, 0
        %1194 = vmatprep.subr.mxu0 0.0
        %1195 = vmatpush1.msra.mxu0 0.0
        %1196 = vmatprep.subr.mxu0 0.0
        %1197 = vmatpush1.msra.mxu0 0.0
        %1198 = vmatprep.subr.mxu0 0.0
        %1199 = vmatpush1.msra.mxu0 0.0
        %1200 = vmatprep.subr.mxu0 0.0
        %1201 = vmatpush1.msra.mxu0 0.0
        %1202 = vmatprep.subr.mxu0 0.0
        %1203 = vmatpush1.msra.mxu0 0.0
        %1204 = vmatprep.subr.mxu0 0.0
        %1205 = vmatpush1.msra.mxu0 0.0
        %1206 = vmatprep.subr.mxu0 0.0
        %1207 = vmatpush1.msra.mxu0 0.0
        %1208 = vmatprep.subr.mxu0 0.0
        %1209 = vmatpush1.msra.mxu0 0.0
        %1210 = vmatprep.subr.mxu0 0.0
        %1211 = vmatpush1.msra.mxu0 0.0
        %1212 = vmatprep.subr.mxu0 0.0
        %1213 = vmatpush1.msra.mxu0 0.0
        %1214 = vmatprep.subr.mxu0 0.0
        %1215 = vmatpush1.msra.mxu0 0.0
        %1216 = vmatprep.subr.mxu0 0.0
        %1217 = vmatpush1.msra.mxu0 0.0
        %1218 = vmatprep.subr.mxu0 0.0
        %1219 = vmatpush1.msra.mxu0 %v1180
        %1220 = vmatprep.subr.mxu0 0.0
        %1221 = vmatpush1.msra.mxu0 %v1179
        %1222 = vmatprep.subr.mxu0 0.0
        %1223 = vmatpush1.msra.mxu0 %v1178
        %1224 = vmatprep.subr.mxu0 0.0
        %1225 = vmatpush1.msra.mxu0 %v1177
        %1226 = vmatprep.subr.mxu0 0.0
        %1227 = vmatpush2.msra.mxu0 0.0
        %1228 = vmatprep.subr.mxu0 0.0
        %1229 = vmatpush2.msra.mxu0 0.0
        %1230 = vmatprep.subr.mxu0 0.0
        %1231 = vmatpush2.msra.mxu0 0.0
        %1232 = vmatprep.subr.mxu0 0.0
        %1233 = vmatpush2.msra.mxu0 0.0
        %1234 = vmatprep.subr.mxu0 0.0
        %1235 = vmatpush2.msra.mxu0 0.0
        %1236 = vmatprep.subr.mxu0 0.0
        %1237 = vmatpush2.msra.mxu0 0.0
        %1238 = vmatprep.subr.mxu0 0.0
        %1239 = vmatpush2.msra.mxu0 0.0
        %1240 = vmatprep.subr.mxu0 0.0
        %1241 = vmatpush2.msra.mxu0 0.0
        %1242 = vmatprep.subr.mxu0 0.0
        %1243 = vmatpush2.msra.mxu0 0.0
        %1244 = vmatprep.subr.mxu0 0.0
        %1245 = vmatpush2.msra.mxu0 0.0
        %1246 = vmatprep.subr.mxu0 0.0
        %1247 = vmatpush2.msra.mxu0 0.0
        %1248 = vmatprep.subr.mxu0 0.0
        %1249 = vmatpush2.msra.mxu0 0.0
        %1250 = vmatprep.subr.mxu0 0.0
        %1251 = vmatpush2.msra.mxu0 0.0
        %1252 = vmatprep.subr.mxu0 0.0
        %1253 = vmatpush2.msra.mxu0 0.0
        %1254 = vmatprep.subr.mxu0 0.0
        %1255 = vmatpush2.msra.mxu0 0.0
        %1256 = vmatprep.subr.mxu0 0.0
        %1257 = vmatpush2.msra.mxu0 0.0
        %1258 = vmatprep.mubr.f32.mxu0 0.0
        %1259 = vmatmul.mubr.f32.gmra.mxu0 %v1189
        %v1260 = vpop.f32.mrf.mxu0
        %v1261 = vadd.f32 %v1186, %v1260
        %v1262 = vpop.f32.mrf.mxu0
        %1263 = vmatprep.mubr.f32.mxu0 0.0
        %1264 = vmatmul.mubr.f32.gmra.mxu0 %v1192
        %v1265 = vpop.f32.mrf.mxu0
        %v1266 = vadd.f32 %v1186, %v1265
        %v1267 = vpop.f32.mrf.mxu0
        %1268 = vdwg.mxu0
        %v1269 = vmul.f32 %v1261, %v966
        %v1270 = vmul.f32 %v1266, %v967
        %vm1271 = vcmask 7168
        %1272 = vst.msk [vmem:[%s943] sm:$0xff] %vm1271, %v1269
        %1273 = vst.msk [vmem:[%s943 + $0x8] sm:$0xff] %vm1271, %v1270
        %vm1274 = vcmask 130048
        %v1276 = vsel %vm1274, %v978, 0
        %v1279 = vsel %vm1274, %v979, 0
        %1281 = vmatprep.subr.mxu0 0.0
        %1282 = vmatpush1.msra.mxu0 0.0
        %1283 = vmatprep.subr.mxu0 0.0
        %1284 = vmatpush1.msra.mxu0 0.0
        %1285 = vmatprep.subr.mxu0 0.0
        %1286 = vmatpush1.msra.mxu0 0.0
        %1287 = vmatprep.subr.mxu0 0.0
        %1288 = vmatpush1.msra.mxu0 0.0
        %1289 = vmatprep.subr.mxu0 0.0
        %1290 = vmatpush1.msra.mxu0 0.0
        %1291 = vmatprep.subr.mxu0 0.0
        %1292 = vmatpush1.msra.mxu0 0.0
        %1293 = vmatprep.subr.mxu0 0.0
        %1294 = vmatpush1.msra.mxu0 0.0
        %1295 = vmatprep.subr.mxu0 0.0
        %1296 = vmatpush1.msra.mxu0 0.0
        %1297 = vmatprep.subr.mxu0 0.0
        %1298 = vmatpush1.msra.mxu0 0.0
        %1299 = vmatprep.subr.mxu0 0.0
        %1300 = vmatpush1.msra.mxu0 0.0
        %1301 = vmatprep.subr.mxu0 0.0
        %1302 = vmatpush1.msra.mxu0 0.0
        %1303 = vmatprep.subr.mxu0 0.0
        %1304 = vmatpush1.msra.mxu0 0.0
        %1305 = vmatprep.subr.mxu0 0.0
        %1306 = vmatpush1.msra.mxu0 0.0
        %1307 = vmatprep.subr.mxu0 0.0
        %1308 = vmatpush1.msra.mxu0 0.0
        %1309 = vmatprep.subr.mxu0 0.0
        %1310 = vmatpush1.msra.mxu0 %v965
        %1311 = vmatprep.subr.mxu0 0.0
        %1312 = vmatpush1.msra.mxu0 %v964
        %1313 = vmatprep.subr.mxu0 0.0
        %1314 = vmatpush2.msra.mxu0 0.0
        %1315 = vmatprep.subr.mxu0 0.0
        %1316 = vmatpush2.msra.mxu0 0.0
        %1317 = vmatprep.subr.mxu0 0.0
        %1318 = vmatpush2.msra.mxu0 0.0
        %1319 = vmatprep.subr.mxu0 0.0
        %1320 = vmatpush2.msra.mxu0 0.0
        %1321 = vmatprep.subr.mxu0 0.0
        %1322 = vmatpush2.msra.mxu0 0.0
        %1323 = vmatprep.subr.mxu0 0.0
        %1324 = vmatpush2.msra.mxu0 0.0
        %1325 = vmatprep.subr.mxu0 0.0
        %1326 = vmatpush2.msra.mxu0 0.0
        %1327 = vmatprep.subr.mxu0 0.0
        %1328 = vmatpush2.msra.mxu0 0.0
        %1329 = vmatprep.subr.mxu0 0.0
        %1330 = vmatpush2.msra.mxu0 0.0
        %1331 = vmatprep.subr.mxu0 0.0
        %1332 = vmatpush2.msra.mxu0 0.0
        %1333 = vmatprep.subr.mxu0 0.0
        %1334 = vmatpush2.msra.mxu0 0.0
        %1335 = vmatprep.subr.mxu0 0.0
        %1336 = vmatpush2.msra.mxu0 0.0
        %1337 = vmatprep.subr.mxu0 0.0
        %1338 = vmatpush2.msra.mxu0 0.0
        %1339 = vmatprep.subr.mxu0 0.0
        %1340 = vmatpush2.msra.mxu0 0.0
        %1341 = vmatprep.subr.mxu0 0.0
        %1342 = vmatpush2.msra.mxu0 0.0
        %1343 = vmatprep.subr.mxu0 0.0
        %1344 = vmatpush2.msra.mxu0 0.0
        %1345 = vmatprep.mubr.f32.mxu0 0.0
        %1346 = vmatmul.mubr.f32.gmra.mxu0 %v1276
        %v1347 = vpop.f32.mrf.mxu0
        %v1348 = vadd.f32 0.0, %v1347
        %v1349 = vpop.f32.mrf.mxu0
        %1350 = vmatprep.mubr.f32.mxu0 0.0
        %1351 = vmatmul.mubr.f32.gmra.mxu0 %v1279
        %v1352 = vpop.f32.mrf.mxu0
        %v1353 = vadd.f32 0.0, %v1352
        %v1354 = vpop.f32.mrf.mxu0
        %1355 = vdwg.mxu0
        %v1357 = vsel %vm1274, %v985, 0
        %v1360 = vsel %vm1274, %v986, 0
        %1362 = vmatprep.subr.mxu0 0.0
        %1363 = vmatpush1.msra.mxu0 0.0
        %1364 = vmatprep.subr.mxu0 0.0
        %1365 = vmatpush1.msra.mxu0 0.0
        %1366 = vmatprep.subr.mxu0 0.0
        %1367 = vmatpush1.msra.mxu0 0.0
        %1368 = vmatprep.subr.mxu0 0.0
        %1369 = vmatpush1.msra.mxu0 0.0
        %1370 = vmatprep.subr.mxu0 0.0
        %1371 = vmatpush1.msra.mxu0 0.0
        %1372 = vmatprep.subr.mxu0 0.0
        %1373 = vmatpush1.msra.mxu0 0.0
        %1374 = vmatprep.subr.mxu0 0.0
        %1375 = vmatpush1.msra.mxu0 0.0
        %1376 = vmatprep.subr.mxu0 0.0
        %1377 = vmatpush1.msra.mxu0 0.0
        %1378 = vmatprep.subr.mxu0 0.0
        %1379 = vmatpush1.msra.mxu0 0.0
        %1380 = vmatprep.subr.mxu0 0.0
        %1381 = vmatpush1.msra.mxu0 0.0
        %1382 = vmatprep.subr.mxu0 0.0
        %1383 = vmatpush1.msra.mxu0 0.0
        %1384 = vmatprep.subr.mxu0 0.0
        %1385 = vmatpush1.msra.mxu0 0.0
        %1386 = vmatprep.subr.mxu0 0.0
        %1387 = vmatpush1.msra.mxu0 0.0
        %1388 = vmatprep.subr.mxu0 0.0
        %1389 = vmatpush1.msra.mxu0 0.0
        %1390 = vmatprep.subr.mxu0 0.0
        %1391 = vmatpush1.msra.mxu0 %v965
        %1392 = vmatprep.subr.mxu0 0.0
        %1393 = vmatpush1.msra.mxu0 %v964
        %1394 = vmatprep.subr.mxu0 0.0
        %1395 = vmatpush2.msra.mxu0 0.0
        %1396 = vmatprep.subr.mxu0 0.0
        %1397 = vmatpush2.msra.mxu0 0.0
        %1398 = vmatprep.subr.mxu0 0.0
        %1399 = vmatpush2.msra.mxu0 0.0
        %1400 = vmatprep.subr.mxu0 0.0
        %1401 = vmatpush2.msra.mxu0 0.0
        %1402 = vmatprep.subr.mxu0 0.0
        %1403 = vmatpush2.msra.mxu0 0.0
        %1404 = vmatprep.subr.mxu0 0.0
        %1405 = vmatpush2.msra.mxu0 0.0
        %1406 = vmatprep.subr.mxu0 0.0
        %1407 = vmatpush2.msra.mxu0 0.0
        %1408 = vmatprep.subr.mxu0 0.0
        %1409 = vmatpush2.msra.mxu0 0.0
        %1410 = vmatprep.subr.mxu0 0.0
        %1411 = vmatpush2.msra.mxu0 0.0
        %1412 = vmatprep.subr.mxu0 0.0
        %1413 = vmatpush2.msra.mxu0 0.0
        %1414 = vmatprep.subr.mxu0 0.0
        %1415 = vmatpush2.msra.mxu0 0.0
        %1416 = vmatprep.subr.mxu0 0.0
        %1417 = vmatpush2.msra.mxu0 0.0
        %1418 = vmatprep.subr.mxu0 0.0
        %1419 = vmatpush2.msra.mxu0 0.0
        %1420 = vmatprep.subr.mxu0 0.0
        %1421 = vmatpush2.msra.mxu0 0.0
        %1422 = vmatprep.subr.mxu0 0.0
        %1423 = vmatpush2.msra.mxu0 0.0
        %1424 = vmatprep.subr.mxu0 0.0
        %1425 = vmatpush2.msra.mxu0 0.0
        %1426 = vmatprep.mubr.f32.mxu0 0.0
        %1427 = vmatmul.mubr.f32.gmra.mxu0 %v1357
        %v1428 = vpop.f32.mrf.mxu0
        %v1429 = vadd.f32 0.0, %v1428
        %v1430 = vpop.f32.mrf.mxu0
        %1431 = vmatprep.mubr.f32.mxu0 0.0
        %1432 = vmatmul.mubr.f32.gmra.mxu0 %v1360
        %v1433 = vpop.f32.mrf.mxu0
        %v1434 = vadd.f32 0.0, %v1433
        %v1435 = vpop.f32.mrf.mxu0
        %1436 = vdwg.mxu0
        %v1437 = vld [vmem:[#allocation10] sm:$0x1]
        %v1438 = vld [vmem:[#allocation8] sm:$0xff]
        %v1439 = vld [vmem:[#allocation8 + $0x8] sm:$0xff]
        %v1440 = vld [vmem:[#allocation8 + $0x10] sm:$0xff]
        %v1441 = vld [vmem:[#allocation8 + $0x18] sm:$0xff]
        %v1442 = vld [vmem:[#allocation8 + $0x20] sm:$0xff]
        %v1443 = vld [vmem:[#allocation8 + $0x28] sm:$0xff]
        %v1444 = vld [vmem:[#allocation8 + $0x30] sm:$0xff]
        %v1445 = vld [vmem:[#allocation8 + $0x38] sm:$0xff]
        %v1446 = vld [vmem:[#allocation8 + $0x40] sm:$0xff]
        %v1447 = vld [vmem:[#allocation8 + $0x48] sm:$0xff]
        %v1448 = vld [vmem:[#allocation8 + $0x50] sm:$0xff]
        %v1449 = vld [vmem:[#allocation8 + $0x58] sm:$0xff]
        %1450 = vmatprep.subr.mxu0 0.0
        %1451 = vmatpush1.msra.mxu0 0.0
        %1452 = vmatprep.subr.mxu0 0.0
        %1453 = vmatpush1.msra.mxu0 0.0
        %1454 = vmatprep.subr.mxu0 0.0
        %1455 = vmatpush1.msra.mxu0 0.0
        %1456 = vmatprep.subr.mxu0 0.0
        %1457 = vmatpush1.msra.mxu0 0.0
        %1458 = vmatprep.subr.mxu0 0.0
        %1459 = vmatpush1.msra.mxu0 0.0
        %1460 = vmatprep.subr.mxu0 0.0
        %1461 = vmatpush1.msra.mxu0 0.0
        %1462 = vmatprep.subr.mxu0 0.0
        %1463 = vmatpush1.msra.mxu0 0.0
        %1464 = vmatprep.subr.mxu0 0.0
        %1465 = vmatpush1.msra.mxu0 0.0
        %1466 = vmatprep.subr.mxu0 0.0
        %1467 = vmatpush1.msra.mxu0 0.0
        %1468 = vmatprep.subr.mxu0 0.0
        %1469 = vmatpush1.msra.mxu0 0.0
        %1470 = vmatprep.subr.mxu0 0.0
        %1471 = vmatpush1.msra.mxu0 0.0
        %1472 = vmatprep.subr.mxu0 0.0
        %1473 = vmatpush1.msra.mxu0 0.0
        %1474 = vmatprep.subr.mxu0 0.0
        %1475 = vmatpush1.msra.mxu0 %v1445
        %1476 = vmatprep.subr.mxu0 0.0
        %1477 = vmatpush1.msra.mxu0 %v1444
        %1478 = vmatprep.subr.mxu0 0.0
        %1479 = vmatpush1.msra.mxu0 %v1443
        %1480 = vmatprep.subr.mxu0 0.0
        %1481 = vmatpush1.msra.mxu0 %v1442
        %1482 = vmatprep.subr.mxu0 0.0
        %1483 = vmatpush2.msra.mxu0 0.0
        %1484 = vmatprep.subr.mxu0 0.0
        %1485 = vmatpush2.msra.mxu0 0.0
        %1486 = vmatprep.subr.mxu0 0.0
        %1487 = vmatpush2.msra.mxu0 0.0
        %1488 = vmatprep.subr.mxu0 0.0
        %1489 = vmatpush2.msra.mxu0 0.0
        %1490 = vmatprep.subr.mxu0 0.0
        %1491 = vmatpush2.msra.mxu0 0.0
        %1492 = vmatprep.subr.mxu0 0.0
        %1493 = vmatpush2.msra.mxu0 0.0
        %1494 = vmatprep.subr.mxu0 0.0
        %1495 = vmatpush2.msra.mxu0 0.0
        %1496 = vmatprep.subr.mxu0 0.0
        %1497 = vmatpush2.msra.mxu0 0.0
        %1498 = vmatprep.subr.mxu0 0.0
        %1499 = vmatpush2.msra.mxu0 0.0
        %1500 = vmatprep.subr.mxu0 0.0
        %1501 = vmatpush2.msra.mxu0 0.0
        %1502 = vmatprep.subr.mxu0 0.0
        %1503 = vmatpush2.msra.mxu0 0.0
        %1504 = vmatprep.subr.mxu0 0.0
        %1505 = vmatpush2.msra.mxu0 0.0
        %1506 = vmatprep.subr.mxu0 0.0
        %1507 = vmatpush2.msra.mxu0 0.0
        %1508 = vmatprep.subr.mxu0 0.0
        %1509 = vmatpush2.msra.mxu0 0.0
        %1510 = vmatprep.subr.mxu0 0.0
        %1511 = vmatpush2.msra.mxu0 0.0
        %1512 = vmatprep.subr.mxu0 0.0
        %1513 = vmatpush2.msra.mxu0 0.0
        %1514 = vmatprep.mubr.f32.mxu0 0.0
        %1515 = vmatmul.mubr.f32.gmra.mxu0 %v998
        %v1516 = vpop.f32.mrf.mxu0
        %v1517 = vadd.f32 0.0, %v1516
        %v1518 = vpop.f32.mrf.mxu0
        %1519 = vmatprep.mubr.f32.mxu0 0.0
        %1520 = vmatmul.mubr.f32.gmra.mxu0 %v1001
        %v1521 = vpop.f32.mrf.mxu0
        %v1522 = vadd.f32 0.0, %v1521
        %v1523 = vpop.f32.mrf.mxu0
        %1524 = vdwg.mxu0
        %v1526 = vsel %vm996, %v1348, 0
        %v1529 = vsel %vm996, %v1353, 0
        %1531 = vmatprep.subr.mxu0 0.0
        %1532 = vmatpush1.msra.mxu0 0.0
        %1533 = vmatprep.subr.mxu0 0.0
        %1534 = vmatpush1.msra.mxu0 0.0
        %1535 = vmatprep.subr.mxu0 0.0
        %1536 = vmatpush1.msra.mxu0 0.0
        %1537 = vmatprep.subr.mxu0 0.0
        %1538 = vmatpush1.msra.mxu0 0.0
        %1539 = vmatprep.subr.mxu0 0.0
        %1540 = vmatpush1.msra.mxu0 0.0
        %1541 = vmatprep.subr.mxu0 0.0
        %1542 = vmatpush1.msra.mxu0 0.0
        %1543 = vmatprep.subr.mxu0 0.0
        %1544 = vmatpush1.msra.mxu0 0.0
        %1545 = vmatprep.subr.mxu0 0.0
        %1546 = vmatpush1.msra.mxu0 0.0
        %1547 = vmatprep.subr.mxu0 0.0
        %1548 = vmatpush1.msra.mxu0 0.0
        %1549 = vmatprep.subr.mxu0 0.0
        %1550 = vmatpush1.msra.mxu0 0.0
        %1551 = vmatprep.subr.mxu0 0.0
        %1552 = vmatpush1.msra.mxu0 0.0
        %1553 = vmatprep.subr.mxu0 0.0
        %1554 = vmatpush1.msra.mxu0 0.0
        %1555 = vmatprep.subr.mxu0 0.0
        %1556 = vmatpush1.msra.mxu0 %v1441
        %1557 = vmatprep.subr.mxu0 0.0
        %1558 = vmatpush1.msra.mxu0 %v1440
        %1559 = vmatprep.subr.mxu0 0.0
        %1560 = vmatpush1.msra.mxu0 %v1439
        %1561 = vmatprep.subr.mxu0 0.0
        %1562 = vmatpush1.msra.mxu0 %v1438
        %1563 = vmatprep.subr.mxu0 0.0
        %1564 = vmatpush2.msra.mxu0 0.0
        %1565 = vmatprep.subr.mxu0 0.0
        %1566 = vmatpush2.msra.mxu0 0.0
        %1567 = vmatprep.subr.mxu0 0.0
        %1568 = vmatpush2.msra.mxu0 0.0
        %1569 = vmatprep.subr.mxu0 0.0
        %1570 = vmatpush2.msra.mxu0 0.0
        %1571 = vmatprep.subr.mxu0 0.0
        %1572 = vmatpush2.msra.mxu0 0.0
        %1573 = vmatprep.subr.mxu0 0.0
        %1574 = vmatpush2.msra.mxu0 0.0
        %1575 = vmatprep.subr.mxu0 0.0
        %1576 = vmatpush2.msra.mxu0 0.0
        %1577 = vmatprep.subr.mxu0 0.0
        %1578 = vmatpush2.msra.mxu0 0.0
        %1579 = vmatprep.subr.mxu0 0.0
        %1580 = vmatpush2.msra.mxu0 0.0
        %1581 = vmatprep.subr.mxu0 0.0
        %1582 = vmatpush2.msra.mxu0 0.0
        %1583 = vmatprep.subr.mxu0 0.0
        %1584 = vmatpush2.msra.mxu0 0.0
        %1585 = vmatprep.subr.mxu0 0.0
        %1586 = vmatpush2.msra.mxu0 0.0
        %1587 = vmatprep.subr.mxu0 0.0
        %1588 = vmatpush2.msra.mxu0 0.0
        %1589 = vmatprep.subr.mxu0 0.0
        %1590 = vmatpush2.msra.mxu0 0.0
        %1591 = vmatprep.subr.mxu0 0.0
        %1592 = vmatpush2.msra.mxu0 0.0
        %1593 = vmatprep.subr.mxu0 0.0
        %1594 = vmatpush2.msra.mxu0 0.0
        %1595 = vmatprep.mubr.f32.mxu0 0.0
        %1596 = vmatmul.mubr.f32.gmra.mxu0 %v1526
        %v1597 = vpop.f32.mrf.mxu0
        %v1598 = vadd.f32 %v1517, %v1597
        %v1599 = vpop.f32.mrf.mxu0
        %1600 = vmatprep.mubr.f32.mxu0 0.0
        %1601 = vmatmul.mubr.f32.gmra.mxu0 %v1529
        %v1602 = vpop.f32.mrf.mxu0
        %v1603 = vadd.f32 %v1522, %v1602
        %v1604 = vpop.f32.mrf.mxu0
        %1605 = vdwg.mxu0
        %v1607 = vsel %vm996, %v1429, 0
        %v1610 = vsel %vm996, %v1434, 0
        %1612 = vmatprep.subr.mxu0 0.0
        %1613 = vmatpush1.msra.mxu0 0.0
        %1614 = vmatprep.subr.mxu0 0.0
        %1615 = vmatpush1.msra.mxu0 0.0
        %1616 = vmatprep.subr.mxu0 0.0
        %1617 = vmatpush1.msra.mxu0 0.0
        %1618 = vmatprep.subr.mxu0 0.0
        %1619 = vmatpush1.msra.mxu0 0.0
        %1620 = vmatprep.subr.mxu0 0.0
        %1621 = vmatpush1.msra.mxu0 0.0
        %1622 = vmatprep.subr.mxu0 0.0
        %1623 = vmatpush1.msra.mxu0 0.0
        %1624 = vmatprep.subr.mxu0 0.0
        %1625 = vmatpush1.msra.mxu0 0.0
        %1626 = vmatprep.subr.mxu0 0.0
        %1627 = vmatpush1.msra.mxu0 0.0
        %1628 = vmatprep.subr.mxu0 0.0
        %1629 = vmatpush1.msra.mxu0 0.0
        %1630 = vmatprep.subr.mxu0 0.0
        %1631 = vmatpush1.msra.mxu0 0.0
        %1632 = vmatprep.subr.mxu0 0.0
        %1633 = vmatpush1.msra.mxu0 0.0
        %1634 = vmatprep.subr.mxu0 0.0
        %1635 = vmatpush1.msra.mxu0 0.0
        %1636 = vmatprep.subr.mxu0 0.0
        %1637 = vmatpush1.msra.mxu0 %v1449
        %1638 = vmatprep.subr.mxu0 0.0
        %1639 = vmatpush1.msra.mxu0 %v1448
        %1640 = vmatprep.subr.mxu0 0.0
        %1641 = vmatpush1.msra.mxu0 %v1447
        %1642 = vmatprep.subr.mxu0 0.0
        %1643 = vmatpush1.msra.mxu0 %v1446
        %1644 = vmatprep.subr.mxu0 0.0
        %1645 = vmatpush2.msra.mxu0 0.0
        %1646 = vmatprep.subr.mxu0 0.0
        %1647 = vmatpush2.msra.mxu0 0.0
        %1648 = vmatprep.subr.mxu0 0.0
        %1649 = vmatpush2.msra.mxu0 0.0
        %1650 = vmatprep.subr.mxu0 0.0
        %1651 = vmatpush2.msra.mxu0 0.0
        %1652 = vmatprep.subr.mxu0 0.0
        %1653 = vmatpush2.msra.mxu0 0.0
        %1654 = vmatprep.subr.mxu0 0.0
        %1655 = vmatpush2.msra.mxu0 0.0
        %1656 = vmatprep.subr.mxu0 0.0
        %1657 = vmatpush2.msra.mxu0 0.0
        %1658 = vmatprep.subr.mxu0 0.0
        %1659 = vmatpush2.msra.mxu0 0.0
        %1660 = vmatprep.subr.mxu0 0.0
        %1661 = vmatpush2.msra.mxu0 0.0
        %1662 = vmatprep.subr.mxu0 0.0
        %1663 = vmatpush2.msra.mxu0 0.0
        %1664 = vmatprep.subr.mxu0 0.0
        %1665 = vmatpush2.msra.mxu0 0.0
        %1666 = vmatprep.subr.mxu0 0.0
        %1667 = vmatpush2.msra.mxu0 0.0
        %1668 = vmatprep.subr.mxu0 0.0
        %1669 = vmatpush2.msra.mxu0 0.0
        %1670 = vmatprep.subr.mxu0 0.0
        %1671 = vmatpush2.msra.mxu0 0.0
        %1672 = vmatprep.subr.mxu0 0.0
        %1673 = vmatpush2.msra.mxu0 0.0
        %1674 = vmatprep.subr.mxu0 0.0
        %1675 = vmatpush2.msra.mxu0 0.0
        %1676 = vmatprep.mubr.f32.mxu0 0.0
        %1677 = vmatmul.mubr.f32.gmra.mxu0 %v1607
        %v1678 = vpop.f32.mrf.mxu0
        %v1679 = vadd.f32 0.0, %v1678
        %v1680 = vpop.f32.mrf.mxu0
        %1681 = vmatprep.mubr.f32.mxu0 0.0
        %1682 = vmatmul.mubr.f32.gmra.mxu0 %v1610
        %v1683 = vpop.f32.mrf.mxu0
        %v1684 = vadd.f32 0.0, %v1683
        %v1685 = vpop.f32.mrf.mxu0
        %1686 = vdwg.mxu0
        %v1687 = vadd.f32 %v1598, %v1679
        %v1688 = vadd.f32 %v1603, %v1684
        %v1689 = vlaneseq
        %v1690 = vshrl.u32 %v1689, 7
        %v1691 = vsub.s32 0, %v1690
        %v1692 = vrot.slane %v1437, %v1691
        %v1693 = vadd.f32 %v1687, %v1692
        %v1694 = vadd.f32 %v1688, %v1692
        %v1695 = vld [vmem:[#allocation10 + $0x1] sm:$0x1]
        %s1696 = scalar_lea.vmem [#allocation8], 96
        %v1697 = vld [vmem:[%s1696] sm:$0xff]
        %v1698 = vld [vmem:[%s1696 + $0x8] sm:$0xff]
        %v1699 = vld [vmem:[%s1696 + $0x10] sm:$0xff]
        %v1700 = vld [vmem:[%s1696 + $0x18] sm:$0xff]
        %v1701 = vld [vmem:[%s1696 + $0x20] sm:$0xff]
        %v1702 = vld [vmem:[%s1696 + $0x28] sm:$0xff]
        %v1703 = vld [vmem:[%s1696 + $0x30] sm:$0xff]
        %v1704 = vld [vmem:[%s1696 + $0x38] sm:$0xff]
        %v1705 = vld [vmem:[%s1696 + $0x40] sm:$0xff]
        %v1706 = vld [vmem:[%s1696 + $0x48] sm:$0xff]
        %v1707 = vld [vmem:[%s1696 + $0x50] sm:$0xff]
        %v1708 = vld [vmem:[%s1696 + $0x58] sm:$0xff]
        %1709 = vmatprep.subr.mxu0 0.0
        %1710 = vmatpush1.msra.mxu0 0.0
        %1711 = vmatprep.subr.mxu0 0.0
        %1712 = vmatpush1.msra.mxu0 0.0
        %1713 = vmatprep.subr.mxu0 0.0
        %1714 = vmatpush1.msra.mxu0 0.0
        %1715 = vmatprep.subr.mxu0 0.0
        %1716 = vmatpush1.msra.mxu0 0.0
        %1717 = vmatprep.subr.mxu0 0.0
        %1718 = vmatpush1.msra.mxu0 0.0
        %1719 = vmatprep.subr.mxu0 0.0
        %1720 = vmatpush1.msra.mxu0 0.0
        %1721 = vmatprep.subr.mxu0 0.0
        %1722 = vmatpush1.msra.mxu0 0.0
        %1723 = vmatprep.subr.mxu0 0.0
        %1724 = vmatpush1.msra.mxu0 0.0
        %1725 = vmatprep.subr.mxu0 0.0
        %1726 = vmatpush1.msra.mxu0 0.0
        %1727 = vmatprep.subr.mxu0 0.0
        %1728 = vmatpush1.msra.mxu0 0.0
        %1729 = vmatprep.subr.mxu0 0.0
        %1730 = vmatpush1.msra.mxu0 0.0
        %1731 = vmatprep.subr.mxu0 0.0
        %1732 = vmatpush1.msra.mxu0 0.0
        %1733 = vmatprep.subr.mxu0 0.0
        %1734 = vmatpush1.msra.mxu0 %v1704
        %1735 = vmatprep.subr.mxu0 0.0
        %1736 = vmatpush1.msra.mxu0 %v1703
        %1737 = vmatprep.subr.mxu0 0.0
        %1738 = vmatpush1.msra.mxu0 %v1702
        %1739 = vmatprep.subr.mxu0 0.0
        %1740 = vmatpush1.msra.mxu0 %v1701
        %1741 = vmatprep.subr.mxu0 0.0
        %1742 = vmatpush2.msra.mxu0 0.0
        %1743 = vmatprep.subr.mxu0 0.0
        %1744 = vmatpush2.msra.mxu0 0.0
        %1745 = vmatprep.subr.mxu0 0.0
        %1746 = vmatpush2.msra.mxu0 0.0
        %1747 = vmatprep.subr.mxu0 0.0
        %1748 = vmatpush2.msra.mxu0 0.0
        %1749 = vmatprep.subr.mxu0 0.0
        %1750 = vmatpush2.msra.mxu0 0.0
        %1751 = vmatprep.subr.mxu0 0.0
        %1752 = vmatpush2.msra.mxu0 0.0
        %1753 = vmatprep.subr.mxu0 0.0
        %1754 = vmatpush2.msra.mxu0 0.0
        %1755 = vmatprep.subr.mxu0 0.0
        %1756 = vmatpush2.msra.mxu0 0.0
        %1757 = vmatprep.subr.mxu0 0.0
        %1758 = vmatpush2.msra.mxu0 0.0
        %1759 = vmatprep.subr.mxu0 0.0
        %1760 = vmatpush2.msra.mxu0 0.0
        %1761 = vmatprep.subr.mxu0 0.0
        %1762 = vmatpush2.msra.mxu0 0.0
        %1763 = vmatprep.subr.mxu0 0.0
        %1764 = vmatpush2.msra.mxu0 0.0
        %1765 = vmatprep.subr.mxu0 0.0
        %1766 = vmatpush2.msra.mxu0 0.0
        %1767 = vmatprep.subr.mxu0 0.0
        %1768 = vmatpush2.msra.mxu0 0.0
        %1769 = vmatprep.subr.mxu0 0.0
        %1770 = vmatpush2.msra.mxu0 0.0
        %1771 = vmatprep.subr.mxu0 0.0
        %1772 = vmatpush2.msra.mxu0 0.0
        %1773 = vmatprep.mubr.f32.mxu0 0.0
        %1774 = vmatmul.mubr.f32.gmra.mxu0 %v998
        %v1775 = vpop.f32.mrf.mxu0
        %v1776 = vadd.f32 0.0, %v1775
        %v1777 = vpop.f32.mrf.mxu0
        %1778 = vmatprep.mubr.f32.mxu0 0.0
        %1779 = vmatmul.mubr.f32.gmra.mxu0 %v1001
        %v1780 = vpop.f32.mrf.mxu0
        %v1781 = vadd.f32 0.0, %v1780
        %v1782 = vpop.f32.mrf.mxu0
        %1783 = vdwg.mxu0
        %1784 = vmatprep.subr.mxu0 0.0
        %1785 = vmatpush1.msra.mxu0 0.0
        %1786 = vmatprep.subr.mxu0 0.0
        %1787 = vmatpush1.msra.mxu0 0.0
        %1788 = vmatprep.subr.mxu0 0.0
        %1789 = vmatpush1.msra.mxu0 0.0
        %1790 = vmatprep.subr.mxu0 0.0
        %1791 = vmatpush1.msra.mxu0 0.0
        %1792 = vmatprep.subr.mxu0 0.0
        %1793 = vmatpush1.msra.mxu0 0.0
        %1794 = vmatprep.subr.mxu0 0.0
        %1795 = vmatpush1.msra.mxu0 0.0
        %1796 = vmatprep.subr.mxu0 0.0
        %1797 = vmatpush1.msra.mxu0 0.0
        %1798 = vmatprep.subr.mxu0 0.0
        %1799 = vmatpush1.msra.mxu0 0.0
        %1800 = vmatprep.subr.mxu0 0.0
        %1801 = vmatpush1.msra.mxu0 0.0
        %1802 = vmatprep.subr.mxu0 0.0
        %1803 = vmatpush1.msra.mxu0 0.0
        %1804 = vmatprep.subr.mxu0 0.0
        %1805 = vmatpush1.msra.mxu0 0.0
        %1806 = vmatprep.subr.mxu0 0.0
        %1807 = vmatpush1.msra.mxu0 0.0
        %1808 = vmatprep.subr.mxu0 0.0
        %1809 = vmatpush1.msra.mxu0 %v1700
        %1810 = vmatprep.subr.mxu0 0.0
        %1811 = vmatpush1.msra.mxu0 %v1699
        %1812 = vmatprep.subr.mxu0 0.0
        %1813 = vmatpush1.msra.mxu0 %v1698
        %1814 = vmatprep.subr.mxu0 0.0
        %1815 = vmatpush1.msra.mxu0 %v1697
        %1816 = vmatprep.subr.mxu0 0.0
        %1817 = vmatpush2.msra.mxu0 0.0
        %1818 = vmatprep.subr.mxu0 0.0
        %1819 = vmatpush2.msra.mxu0 0.0
        %1820 = vmatprep.subr.mxu0 0.0
        %1821 = vmatpush2.msra.mxu0 0.0
        %1822 = vmatprep.subr.mxu0 0.0
        %1823 = vmatpush2.msra.mxu0 0.0
        %1824 = vmatprep.subr.mxu0 0.0
        %1825 = vmatpush2.msra.mxu0 0.0
        %1826 = vmatprep.subr.mxu0 0.0
        %1827 = vmatpush2.msra.mxu0 0.0
        %1828 = vmatprep.subr.mxu0 0.0
        %1829 = vmatpush2.msra.mxu0 0.0
        %1830 = vmatprep.subr.mxu0 0.0
        %1831 = vmatpush2.msra.mxu0 0.0
        %1832 = vmatprep.subr.mxu0 0.0
        %1833 = vmatpush2.msra.mxu0 0.0
        %1834 = vmatprep.subr.mxu0 0.0
        %1835 = vmatpush2.msra.mxu0 0.0
        %1836 = vmatprep.subr.mxu0 0.0
        %1837 = vmatpush2.msra.mxu0 0.0
        %1838 = vmatprep.subr.mxu0 0.0
        %1839 = vmatpush2.msra.mxu0 0.0
        %1840 = vmatprep.subr.mxu0 0.0
        %1841 = vmatpush2.msra.mxu0 0.0
        %1842 = vmatprep.subr.mxu0 0.0
        %1843 = vmatpush2.msra.mxu0 0.0
        %1844 = vmatprep.subr.mxu0 0.0
        %1845 = vmatpush2.msra.mxu0 0.0
        %1846 = vmatprep.subr.mxu0 0.0
        %1847 = vmatpush2.msra.mxu0 0.0
        %1848 = vmatprep.mubr.f32.mxu0 0.0
        %1849 = vmatmul.mubr.f32.gmra.mxu0 %v1526
        %v1850 = vpop.f32.mrf.mxu0
        %v1851 = vadd.f32 %v1776, %v1850
        %v1852 = vpop.f32.mrf.mxu0
        %1853 = vmatprep.mubr.f32.mxu0 0.0
        %1854 = vmatmul.mubr.f32.gmra.mxu0 %v1529
        %v1855 = vpop.f32.mrf.mxu0
        %v1856 = vadd.f32 %v1781, %v1855
        %v1857 = vpop.f32.mrf.mxu0
        %1858 = vdwg.mxu0
        %1859 = vmatprep.subr.mxu0 0.0
        %1860 = vmatpush1.msra.mxu0 0.0
        %1861 = vmatprep.subr.mxu0 0.0
        %1862 = vmatpush1.msra.mxu0 0.0
        %1863 = vmatprep.subr.mxu0 0.0
        %1864 = vmatpush1.msra.mxu0 0.0
        %1865 = vmatprep.subr.mxu0 0.0
        %1866 = vmatpush1.msra.mxu0 0.0
        %1867 = vmatprep.subr.mxu0 0.0
        %1868 = vmatpush1.msra.mxu0 0.0
        %1869 = vmatprep.subr.mxu0 0.0
        %1870 = vmatpush1.msra.mxu0 0.0
        %1871 = vmatprep.subr.mxu0 0.0
        %1872 = vmatpush1.msra.mxu0 0.0
        %1873 = vmatprep.subr.mxu0 0.0
        %1874 = vmatpush1.msra.mxu0 0.0
        %1875 = vmatprep.subr.mxu0 0.0
        %1876 = vmatpush1.msra.mxu0 0.0
        %1877 = vmatprep.subr.mxu0 0.0
        %1878 = vmatpush1.msra.mxu0 0.0
        %1879 = vmatprep.subr.mxu0 0.0
        %1880 = vmatpush1.msra.mxu0 0.0
        %1881 = vmatprep.subr.mxu0 0.0
        %1882 = vmatpush1.msra.mxu0 0.0
        %1883 = vmatprep.subr.mxu0 0.0
        %1884 = vmatpush1.msra.mxu0 %v1708
        %1885 = vmatprep.subr.mxu0 0.0
        %1886 = vmatpush1.msra.mxu0 %v1707
        %1887 = vmatprep.subr.mxu0 0.0
        %1888 = vmatpush1.msra.mxu0 %v1706
        %1889 = vmatprep.subr.mxu0 0.0
        %1890 = vmatpush1.msra.mxu0 %v1705
        %1891 = vmatprep.subr.mxu0 0.0
        %1892 = vmatpush2.msra.mxu0 0.0
        %1893 = vmatprep.subr.mxu0 0.0
        %1894 = vmatpush2.msra.mxu0 0.0
        %1895 = vmatprep.subr.mxu0 0.0
        %1896 = vmatpush2.msra.mxu0 0.0
        %1897 = vmatprep.subr.mxu0 0.0
        %1898 = vmatpush2.msra.mxu0 0.0
        %1899 = vmatprep.subr.mxu0 0.0
        %1900 = vmatpush2.msra.mxu0 0.0
        %1901 = vmatprep.subr.mxu0 0.0
        %1902 = vmatpush2.msra.mxu0 0.0
        %1903 = vmatprep.subr.mxu0 0.0
        %1904 = vmatpush2.msra.mxu0 0.0
        %1905 = vmatprep.subr.mxu0 0.0
        %1906 = vmatpush2.msra.mxu0 0.0
        %1907 = vmatprep.subr.mxu0 0.0
        %1908 = vmatpush2.msra.mxu0 0.0
        %1909 = vmatprep.subr.mxu0 0.0
        %1910 = vmatpush2.msra.mxu0 0.0
        %1911 = vmatprep.subr.mxu0 0.0
        %1912 = vmatpush2.msra.mxu0 0.0
        %1913 = vmatprep.subr.mxu0 0.0
        %1914 = vmatpush2.msra.mxu0 0.0
        %1915 = vmatprep.subr.mxu0 0.0
        %1916 = vmatpush2.msra.mxu0 0.0
        %1917 = vmatprep.subr.mxu0 0.0
        %1918 = vmatpush2.msra.mxu0 0.0
        %1919 = vmatprep.subr.mxu0 0.0
        %1920 = vmatpush2.msra.mxu0 0.0
        %1921 = vmatprep.subr.mxu0 0.0
        %1922 = vmatpush2.msra.mxu0 0.0
        %1923 = vmatprep.mubr.f32.mxu0 0.0
        %1924 = vmatmul.mubr.f32.gmra.mxu0 %v1607
        %v1925 = vpop.f32.mrf.mxu0
        %v1926 = vadd.f32 0.0, %v1925
        %v1927 = vpop.f32.mrf.mxu0
        %1928 = vmatprep.mubr.f32.mxu0 0.0
        %1929 = vmatmul.mubr.f32.gmra.mxu0 %v1610
        %v1930 = vpop.f32.mrf.mxu0
        %v1931 = vadd.f32 0.0, %v1930
        %v1932 = vpop.f32.mrf.mxu0
        %1933 = vdwg.mxu0
        %v1934 = vadd.f32 %v1851, %v1926
        %v1935 = vadd.f32 %v1856, %v1931
        %v1936 = vlaneseq
        %v1937 = vshrl.u32 %v1936, 7
        %v1938 = vsub.s32 0, %v1937
        %v1939 = vrot.slane %v1695, %v1938
        %v1940 = vadd.f32 %v1934, %v1939
        %v1941 = vadd.f32 %v1935, %v1939
        %v1942 = vxor.u32 %v1940, 2147483648
        %v1943 = vxor.u32 %v1941, 2147483648
        %v1944 = vmul.f32 %v1942, 1.442695
        %v1945 = vpow.pop %v1944
        %v1946 = vmul.f32 %v1943, 1.442695
        %v1947 = vpow.pop %v1946
        %v1948 = vadd.f32 %v1945, 1.0
        %v1949 = vadd.f32 %v1947, 1.0
        %v1950 = vrcp.pop %v1948
        %v1951 = vmul.f32 1.0, %v1950
        %v1952 = vrcp.pop %v1949
        %v1953 = vmul.f32 1.0, %v1952
        %v1954 = vmul.f32 %v1693, %v1951
        %v1955 = vmul.f32 %v1694, %v1953
        %v1956 = vld [vmem:[%s9] sm:$0xff]
        %v1957 = vld [vmem:[%s9 + $0x8] sm:$0xff]
        %v1958 = vld [vmem:[%s9 + $0x10] sm:$0xff]
        %v1959 = vld [vmem:[%s9 + $0x18] sm:$0xff]
        %v1960 = vld [vmem:[#allocation11] sm:$0x1]
        %v1961 = vlaneseq
        %v1962 = vshrl.u32 %v1961, 7
        %v1963 = vsub.s32 0, %v1962
        %v1964 = vrot.slane %v1960, %v1963
        %v1966 = vsel %vm996, %v1954, 0
        %v1969 = vsel %vm996, %v1955, 0
        %1971 = vmatprep.subr.mxu0 0.0
        %1972 = vmatpush1.msra.mxu0 0.0
        %1973 = vmatprep.subr.mxu0 0.0
        %1974 = vmatpush1.msra.mxu0 0.0
        %1975 = vmatprep.subr.mxu0 0.0
        %1976 = vmatpush1.msra.mxu0 0.0
        %1977 = vmatprep.subr.mxu0 0.0
        %1978 = vmatpush1.msra.mxu0 0.0
        %1979 = vmatprep.subr.mxu0 0.0
        %1980 = vmatpush1.msra.mxu0 0.0
        %1981 = vmatprep.subr.mxu0 0.0
        %1982 = vmatpush1.msra.mxu0 0.0
        %1983 = vmatprep.subr.mxu0 0.0
        %1984 = vmatpush1.msra.mxu0 0.0
        %1985 = vmatprep.subr.mxu0 0.0
        %1986 = vmatpush1.msra.mxu0 0.0
        %1987 = vmatprep.subr.mxu0 0.0
        %1988 = vmatpush1.msra.mxu0 0.0
        %1989 = vmatprep.subr.mxu0 0.0
        %1990 = vmatpush1.msra.mxu0 0.0
        %1991 = vmatprep.subr.mxu0 0.0
        %1992 = vmatpush1.msra.mxu0 0.0
        %1993 = vmatprep.subr.mxu0 0.0
        %1994 = vmatpush1.msra.mxu0 0.0
        %1995 = vmatprep.subr.mxu0 0.0
        %1996 = vmatpush1.msra.mxu0 %v1959
        %1997 = vmatprep.subr.mxu0 0.0
        %1998 = vmatpush1.msra.mxu0 %v1958
        %1999 = vmatprep.subr.mxu0 0.0
        %2000 = vmatpush1.msra.mxu0 %v1957
        %2001 = vmatprep.subr.mxu0 0.0
        %2002 = vmatpush1.msra.mxu0 %v1956
        %2003 = vmatprep.subr.mxu0 0.0
        %2004 = vmatpush2.msra.mxu0 0.0
        %2005 = vmatprep.subr.mxu0 0.0
        %2006 = vmatpush2.msra.mxu0 0.0
        %2007 = vmatprep.subr.mxu0 0.0
        %2008 = vmatpush2.msra.mxu0 0.0
        %2009 = vmatprep.subr.mxu0 0.0
        %2010 = vmatpush2.msra.mxu0 0.0
        %2011 = vmatprep.subr.mxu0 0.0
        %2012 = vmatpush2.msra.mxu0 0.0
        %2013 = vmatprep.subr.mxu0 0.0
        %2014 = vmatpush2.msra.mxu0 0.0
        %2015 = vmatprep.subr.mxu0 0.0
        %2016 = vmatpush2.msra.mxu0 0.0
        %2017 = vmatprep.subr.mxu0 0.0
        %2018 = vmatpush2.msra.mxu0 0.0
        %2019 = vmatprep.subr.mxu0 0.0
        %2020 = vmatpush2.msra.mxu0 0.0
        %2021 = vmatprep.subr.mxu0 0.0
        %2022 = vmatpush2.msra.mxu0 0.0
        %2023 = vmatprep.subr.mxu0 0.0
        %2024 = vmatpush2.msra.mxu0 0.0
        %2025 = vmatprep.subr.mxu0 0.0
        %2026 = vmatpush2.msra.mxu0 0.0
        %2027 = vmatprep.subr.mxu0 0.0
        %2028 = vmatpush2.msra.mxu0 0.0
        %2029 = vmatprep.subr.mxu0 0.0
        %2030 = vmatpush2.msra.mxu0 0.0
        %2031 = vmatprep.subr.mxu0 0.0
        %2032 = vmatpush2.msra.mxu0 0.0
        %2033 = vmatprep.subr.mxu0 0.0
        %2034 = vmatpush2.msra.mxu0 0.0
        %2035 = vmatprep.mubr.f32.mxu0 0.0
        %2036 = vmatmul.mubr.f32.gmra.mxu0 %v1966
        %v2037 = vpop.f32.mrf.mxu0
        %v2038 = vadd.f32 %v1964, %v2037
        %v2039 = vpop.f32.mrf.mxu0
        %2040 = vmatprep.mubr.f32.mxu0 0.0
        %2041 = vmatmul.mubr.f32.gmra.mxu0 %v1969
        %v2042 = vpop.f32.mrf.mxu0
        %v2043 = vadd.f32 %v1964, %v2042
        %v2044 = vpop.f32.mrf.mxu0
        %2045 = vdwg.mxu0
        %s2046 = scalar_lea.vmem %s9, 32
        %v2047 = vld [vmem:[%s2046] sm:$0xff]
        %v2048 = vld [vmem:[%s2046 + $0x8] sm:$0xff]
        %v2049 = vld [vmem:[%s2046 + $0x10] sm:$0xff]
        %v2050 = vld [vmem:[%s2046 + $0x18] sm:$0xff]
        %v2051 = vld [vmem:[#allocation11 + $0x1] sm:$0x1]
        %v2052 = vlaneseq
        %v2053 = vshrl.u32 %v2052, 7
        %v2054 = vsub.s32 0, %v2053
        %v2055 = vrot.slane %v2051, %v2054
        %2056 = vmatprep.subr.mxu0 0.0
        %2057 = vmatpush1.msra.mxu0 0.0
        %2058 = vmatprep.subr.mxu0 0.0
        %2059 = vmatpush1.msra.mxu0 0.0
        %2060 = vmatprep.subr.mxu0 0.0
        %2061 = vmatpush1.msra.mxu0 0.0
        %2062 = vmatprep.subr.mxu0 0.0
        %2063 = vmatpush1.msra.mxu0 0.0
        %2064 = vmatprep.subr.mxu0 0.0
        %2065 = vmatpush1.msra.mxu0 0.0
        %2066 = vmatprep.subr.mxu0 0.0
        %2067 = vmatpush1.msra.mxu0 0.0
        %2068 = vmatprep.subr.mxu0 0.0
        %2069 = vmatpush1.msra.mxu0 0.0
        %2070 = vmatprep.subr.mxu0 0.0
        %2071 = vmatpush1.msra.mxu0 0.0
        %2072 = vmatprep.subr.mxu0 0.0
        %2073 = vmatpush1.msra.mxu0 0.0
        %2074 = vmatprep.subr.mxu0 0.0
        %2075 = vmatpush1.msra.mxu0 0.0
        %2076 = vmatprep.subr.mxu0 0.0
        %2077 = vmatpush1.msra.mxu0 0.0
        %2078 = vmatprep.subr.mxu0 0.0
        %2079 = vmatpush1.msra.mxu0 0.0
        %2080 = vmatprep.subr.mxu0 0.0
        %2081 = vmatpush1.msra.mxu0 %v2050
        %2082 = vmatprep.subr.mxu0 0.0
        %2083 = vmatpush1.msra.mxu0 %v2049
        %2084 = vmatprep.subr.mxu0 0.0
        %2085 = vmatpush1.msra.mxu0 %v2048
        %2086 = vmatprep.subr.mxu0 0.0
        %2087 = vmatpush1.msra.mxu0 %v2047
        %2088 = vmatprep.subr.mxu0 0.0
        %2089 = vmatpush2.msra.mxu0 0.0
        %2090 = vmatprep.subr.mxu0 0.0
        %2091 = vmatpush2.msra.mxu0 0.0
        %2092 = vmatprep.subr.mxu0 0.0
        %2093 = vmatpush2.msra.mxu0 0.0
        %2094 = vmatprep.subr.mxu0 0.0
        %2095 = vmatpush2.msra.mxu0 0.0
        %2096 = vmatprep.subr.mxu0 0.0
        %2097 = vmatpush2.msra.mxu0 0.0
        %2098 = vmatprep.subr.mxu0 0.0
        %2099 = vmatpush2.msra.mxu0 0.0
        %2100 = vmatprep.subr.mxu0 0.0
        %2101 = vmatpush2.msra.mxu0 0.0
        %2102 = vmatprep.subr.mxu0 0.0
        %2103 = vmatpush2.msra.mxu0 0.0
        %2104 = vmatprep.subr.mxu0 0.0
        %2105 = vmatpush2.msra.mxu0 0.0
        %2106 = vmatprep.subr.mxu0 0.0
        %2107 = vmatpush2.msra.mxu0 0.0
        %2108 = vmatprep.subr.mxu0 0.0
        %2109 = vmatpush2.msra.mxu0 0.0
        %2110 = vmatprep.subr.mxu0 0.0
        %2111 = vmatpush2.msra.mxu0 0.0
        %2112 = vmatprep.subr.mxu0 0.0
        %2113 = vmatpush2.msra.mxu0 0.0
        %2114 = vmatprep.subr.mxu0 0.0
        %2115 = vmatpush2.msra.mxu0 0.0
        %2116 = vmatprep.subr.mxu0 0.0
        %2117 = vmatpush2.msra.mxu0 0.0
        %2118 = vmatprep.subr.mxu0 0.0
        %2119 = vmatpush2.msra.mxu0 0.0
        %2120 = vmatprep.mubr.f32.mxu0 0.0
        %2121 = vmatmul.mubr.f32.gmra.mxu0 %v1966
        %v2122 = vpop.f32.mrf.mxu0
        %v2123 = vadd.f32 %v2055, %v2122
        %v2124 = vpop.f32.mrf.mxu0
        %2125 = vmatprep.mubr.f32.mxu0 0.0
        %2126 = vmatmul.mubr.f32.gmra.mxu0 %v1969
        %v2127 = vpop.f32.mrf.mxu0
        %v2128 = vadd.f32 %v2055, %v2127
        %v2129 = vpop.f32.mrf.mxu0
        %2130 = vdwg.mxu0
        %v2131 = vxor.u32 %v2123, 2147483648
        %v2132 = vxor.u32 %v2128, 2147483648
        %v2133 = vmul.f32 %v2131, 1.442695
        %v2134 = vpow.pop %v2133
        %v2135 = vmul.f32 %v2132, 1.442695
        %v2136 = vpow.pop %v2135
        %v2137 = vadd.f32 %v2134, 1.0
        %v2138 = vadd.f32 %v2136, 1.0
        %v2139 = vrcp.pop %v2137
        %v2140 = vmul.f32 1.0, %v2139
        %v2141 = vrcp.pop %v2138
        %v2142 = vmul.f32 1.0, %v2141
        %v2143 = vmul.f32 %v2038, %v2140
        %v2144 = vmul.f32 %v2043, %v2142
        %vm2145 = vcmask 64512
        %2146 = vst.msk [vmem:[%s948] sm:$0xff] %vm2145, %v2143
        %2147 = vst.msk [vmem:[%s948 + $0x8] sm:$0xff] %vm2145, %v2144
        %v2148 = vld [vmem:[%s933] sm:$0xff]
        %v2149 = vld [vmem:[%s933 + $0x8] sm:$0xff]
        %v2150 = vld [vmem:[#allocation13] sm:$0xff]
        %v2152 = vsel %vm2145, %v2148, 0
        %v2155 = vsel %vm2145, %v2149, 0
        %2157 = vmatprep.subr.mxu0 0.0
        %2158 = vmatpush1.msra.mxu0 0.0
        %2159 = vmatprep.subr.mxu0 0.0
        %2160 = vmatpush1.msra.mxu0 0.0
        %2161 = vmatprep.subr.mxu0 0.0
        %2162 = vmatpush1.msra.mxu0 0.0
        %2163 = vmatprep.subr.mxu0 0.0
        %2164 = vmatpush1.msra.mxu0 0.0
        %2165 = vmatprep.subr.mxu0 0.0
        %2166 = vmatpush1.msra.mxu0 0.0
        %2167 = vmatprep.subr.mxu0 0.0
        %2168 = vmatpush1.msra.mxu0 0.0
        %2169 = vmatprep.subr.mxu0 0.0
        %2170 = vmatpush1.msra.mxu0 0.0
        %2171 = vmatprep.subr.mxu0 0.0
        %2172 = vmatpush1.msra.mxu0 0.0
        %2173 = vmatprep.subr.mxu0 0.0
        %2174 = vmatpush1.msra.mxu0 0.0
        %2175 = vmatprep.subr.mxu0 0.0
        %2176 = vmatpush1.msra.mxu0 0.0
        %2177 = vmatprep.subr.mxu0 0.0
        %2178 = vmatpush1.msra.mxu0 0.0
        %2179 = vmatprep.subr.mxu0 0.0
        %2180 = vmatpush1.msra.mxu0 0.0
        %2181 = vmatprep.subr.mxu0 0.0
        %2182 = vmatpush1.msra.mxu0 0.0
        %2183 = vmatprep.subr.mxu0 0.0
        %2184 = vmatpush1.msra.mxu0 0.0
        %2185 = vmatprep.subr.mxu0 0.0
        %2186 = vmatpush1.msra.mxu0 0.0
        %2187 = vmatprep.subr.mxu0 0.0
        %2188 = vmatpush1.msra.mxu0 %v2150
        %2189 = vmatprep.subr.mxu0 0.0
        %2190 = vmatpush2.msra.mxu0 0.0
        %2191 = vmatprep.subr.mxu0 0.0
        %2192 = vmatpush2.msra.mxu0 0.0
        %2193 = vmatprep.subr.mxu0 0.0
        %2194 = vmatpush2.msra.mxu0 0.0
        %2195 = vmatprep.subr.mxu0 0.0
        %2196 = vmatpush2.msra.mxu0 0.0
        %2197 = vmatprep.subr.mxu0 0.0
        %2198 = vmatpush2.msra.mxu0 0.0
        %2199 = vmatprep.subr.mxu0 0.0
        %2200 = vmatpush2.msra.mxu0 0.0
        %2201 = vmatprep.subr.mxu0 0.0
        %2202 = vmatpush2.msra.mxu0 0.0
        %2203 = vmatprep.subr.mxu0 0.0
        %2204 = vmatpush2.msra.mxu0 0.0
        %2205 = vmatprep.subr.mxu0 0.0
        %2206 = vmatpush2.msra.mxu0 0.0
        %2207 = vmatprep.subr.mxu0 0.0
        %2208 = vmatpush2.msra.mxu0 0.0
        %2209 = vmatprep.subr.mxu0 0.0
        %2210 = vmatpush2.msra.mxu0 0.0
        %2211 = vmatprep.subr.mxu0 0.0
        %2212 = vmatpush2.msra.mxu0 0.0
        %2213 = vmatprep.subr.mxu0 0.0
        %2214 = vmatpush2.msra.mxu0 0.0
        %2215 = vmatprep.subr.mxu0 0.0
        %2216 = vmatpush2.msra.mxu0 0.0
        %2217 = vmatprep.subr.mxu0 0.0
        %2218 = vmatpush2.msra.mxu0 0.0
        %2219 = vmatprep.subr.mxu0 0.0
        %2220 = vmatpush2.msra.mxu0 0.0
        %2221 = vmatprep.mubr.f32.mxu0 0.0
        %2222 = vmatmul.mubr.f32.gmra.mxu0 %v2152
        %v2223 = vpop.f32.mrf.mxu0
        %v2224 = vadd.f32 0.0, %v2223
        %v2225 = vpop.f32.mrf.mxu0
        %2226 = vmatprep.mubr.f32.mxu0 0.0
        %2227 = vmatmul.mubr.f32.gmra.mxu0 %v2155
        %v2228 = vpop.f32.mrf.mxu0
        %v2229 = vadd.f32 0.0, %v2228
        %v2230 = vpop.f32.mrf.mxu0
        %2231 = vdwg.mxu0
        %v2232 = vadd.f32 %v964, %v2224
        %v2233 = vadd.f32 %v965, %v2229
        %v2234 = vld [vmem:[#allocation14] sm:$0x1]
        %v2236 = vlaneseq
        %v2237 = vshrl.u32 %v2236, 7
        %v2238 = vsub.s32 0, %v2237
        %v2239 = vrot.slane %v2234, %v2238
        %v2241 = vadd.f32 %v2232, %v2239
        %v2242 = vadd.f32 %v2233, %v2239
        %2243 = vst.msk [vmem:[%s953] sm:$0xff] %vm996, %v2241
        %2244 = vst.msk [vmem:[%s953 + $0x8] sm:$0xff] %vm996, %v2242
        %2245 = vmatprep.subr.mxu0 0.0
        %2246 = vmatpush1.msra.mxu0 0.0
        %2247 = vmatprep.subr.mxu0 0.0
        %2248 = vmatpush1.msra.mxu0 0.0
        %2249 = vmatprep.subr.mxu0 0.0
        %2250 = vmatpush1.msra.mxu0 0.0
        %2251 = vmatprep.subr.mxu0 0.0
        %2252 = vmatpush1.msra.mxu0 0.0
        %2253 = vmatprep.subr.mxu0 0.0
        %2254 = vmatpush1.msra.mxu0 0.0
        %2255 = vmatprep.subr.mxu0 0.0
        %2256 = vmatpush1.msra.mxu0 0.0
        %2257 = vmatprep.subr.mxu0 0.0
        %2258 = vmatpush1.msra.mxu0 0.0
        %2259 = vmatprep.subr.mxu0 0.0
        %2260 = vmatpush1.msra.mxu0 0.0
        %2261 = vmatprep.subr.mxu0 0.0
        %2262 = vmatpush1.msra.mxu0 0.0
        %2263 = vmatprep.subr.mxu0 0.0
        %2264 = vmatpush1.msra.mxu0 0.0
        %2265 = vmatprep.subr.mxu0 0.0
        %2266 = vmatpush1.msra.mxu0 0.0
        %2267 = vmatprep.subr.mxu0 0.0
        %2268 = vmatpush1.msra.mxu0 0.0
        %2269 = vmatprep.subr.mxu0 0.0
        %2270 = vmatpush1.msra.mxu0 0.0
        %2271 = vmatprep.subr.mxu0 0.0
        %2272 = vmatpush1.msra.mxu0 0.0
        %2273 = vmatprep.subr.mxu0 0.0
        %2274 = vmatpush1.msra.mxu0 %v2242
        %2275 = vmatprep.subr.mxu0 0.0
        %2276 = vmatpush1.msra.mxu0 %v2241
        %2277 = vmatprep.subr.mxu0 0.0
        %2278 = vmatpush2.msra.mxu0 0.0
        %2279 = vmatprep.subr.mxu0 0.0
        %2280 = vmatpush2.msra.mxu0 0.0
        %2281 = vmatprep.subr.mxu0 0.0
        %2282 = vmatpush2.msra.mxu0 0.0
        %2283 = vmatprep.subr.mxu0 0.0
        %2284 = vmatpush2.msra.mxu0 0.0
        %2285 = vmatprep.subr.mxu0 0.0
        %2286 = vmatpush2.msra.mxu0 0.0
        %2287 = vmatprep.subr.mxu0 0.0
        %2288 = vmatpush2.msra.mxu0 0.0
        %2289 = vmatprep.subr.mxu0 0.0
        %2290 = vmatpush2.msra.mxu0 0.0
        %2291 = vmatprep.subr.mxu0 0.0
        %2292 = vmatpush2.msra.mxu0 0.0
        %2293 = vmatprep.subr.mxu0 0.0
        %2294 = vmatpush2.msra.mxu0 0.0
        %2295 = vmatprep.subr.mxu0 0.0
        %2296 = vmatpush2.msra.mxu0 0.0
        %2297 = vmatprep.subr.mxu0 0.0
        %2298 = vmatpush2.msra.mxu0 0.0
        %2299 = vmatprep.subr.mxu0 0.0
        %2300 = vmatpush2.msra.mxu0 0.0
        %2301 = vmatprep.subr.mxu0 0.0
        %2302 = vmatpush2.msra.mxu0 0.0
        %2303 = vmatprep.subr.mxu0 0.0
        %2304 = vmatpush2.msra.mxu0 0.0
        %2305 = vmatprep.subr.mxu0 0.0
        %2306 = vmatpush2.msra.mxu0 0.0
        %2307 = vmatprep.subr.mxu0 0.0
        %2308 = vmatpush2.msra.mxu0 0.0
        %2309 = vmatprep.mubr.f32.mxu0 0.0
        %2310 = vmatmul.mubr.f32.gmra.mxu0 %v1276
        %v2311 = vpop.f32.mrf.mxu0
        %v2312 = vadd.f32 0.0, %v2311
        %v2313 = vpop.f32.mrf.mxu0
        %2314 = vmatprep.mubr.f32.mxu0 0.0
        %2315 = vmatmul.mubr.f32.gmra.mxu0 %v1279
        %v2316 = vpop.f32.mrf.mxu0
        %v2317 = vadd.f32 0.0, %v2316
        %v2318 = vpop.f32.mrf.mxu0
        %2319 = vdwg.mxu0
        %2320 = vmatprep.subr.mxu0 0.0
        %2321 = vmatpush1.msra.mxu0 0.0
        %2322 = vmatprep.subr.mxu0 0.0
        %2323 = vmatpush1.msra.mxu0 0.0
        %2324 = vmatprep.subr.mxu0 0.0
        %2325 = vmatpush1.msra.mxu0 0.0
        %2326 = vmatprep.subr.mxu0 0.0
        %2327 = vmatpush1.msra.mxu0 0.0
        %2328 = vmatprep.subr.mxu0 0.0
        %2329 = vmatpush1.msra.mxu0 0.0
        %2330 = vmatprep.subr.mxu0 0.0
        %2331 = vmatpush1.msra.mxu0 0.0
        %2332 = vmatprep.subr.mxu0 0.0
        %2333 = vmatpush1.msra.mxu0 0.0
        %2334 = vmatprep.subr.mxu0 0.0
        %2335 = vmatpush1.msra.mxu0 0.0
        %2336 = vmatprep.subr.mxu0 0.0
        %2337 = vmatpush1.msra.mxu0 0.0
        %2338 = vmatprep.subr.mxu0 0.0
        %2339 = vmatpush1.msra.mxu0 0.0
        %2340 = vmatprep.subr.mxu0 0.0
        %2341 = vmatpush1.msra.mxu0 0.0
        %2342 = vmatprep.subr.mxu0 0.0
        %2343 = vmatpush1.msra.mxu0 0.0
        %2344 = vmatprep.subr.mxu0 0.0
        %2345 = vmatpush1.msra.mxu0 0.0
        %2346 = vmatprep.subr.mxu0 0.0
        %2347 = vmatpush1.msra.mxu0 0.0
        %2348 = vmatprep.subr.mxu0 0.0
        %2349 = vmatpush1.msra.mxu0 %v2242
        %2350 = vmatprep.subr.mxu0 0.0
        %2351 = vmatpush1.msra.mxu0 %v2241
        %2352 = vmatprep.subr.mxu0 0.0
        %2353 = vmatpush2.msra.mxu0 0.0
        %2354 = vmatprep.subr.mxu0 0.0
        %2355 = vmatpush2.msra.mxu0 0.0
        %2356 = vmatprep.subr.mxu0 0.0
        %2357 = vmatpush2.msra.mxu0 0.0
        %2358 = vmatprep.subr.mxu0 0.0
        %2359 = vmatpush2.msra.mxu0 0.0
        %2360 = vmatprep.subr.mxu0 0.0
        %2361 = vmatpush2.msra.mxu0 0.0
        %2362 = vmatprep.subr.mxu0 0.0
        %2363 = vmatpush2.msra.mxu0 0.0
        %2364 = vmatprep.subr.mxu0 0.0
        %2365 = vmatpush2.msra.mxu0 0.0
        %2366 = vmatprep.subr.mxu0 0.0
        %2367 = vmatpush2.msra.mxu0 0.0
        %2368 = vmatprep.subr.mxu0 0.0
        %2369 = vmatpush2.msra.mxu0 0.0
        %2370 = vmatprep.subr.mxu0 0.0
        %2371 = vmatpush2.msra.mxu0 0.0
        %2372 = vmatprep.subr.mxu0 0.0
        %2373 = vmatpush2.msra.mxu0 0.0
        %2374 = vmatprep.subr.mxu0 0.0
        %2375 = vmatpush2.msra.mxu0 0.0
        %2376 = vmatprep.subr.mxu0 0.0
        %2377 = vmatpush2.msra.mxu0 0.0
        %2378 = vmatprep.subr.mxu0 0.0
        %2379 = vmatpush2.msra.mxu0 0.0
        %2380 = vmatprep.subr.mxu0 0.0
        %2381 = vmatpush2.msra.mxu0 0.0
        %2382 = vmatprep.subr.mxu0 0.0
        %2383 = vmatpush2.msra.mxu0 0.0
        %2384 = vmatprep.mubr.f32.mxu0 0.0
        %2385 = vmatmul.mubr.f32.gmra.mxu0 %v1357
        %v2386 = vpop.f32.mrf.mxu0
        %v2387 = vadd.f32 0.0, %v2386
        %v2388 = vpop.f32.mrf.mxu0
        %2389 = vmatprep.mubr.f32.mxu0 0.0
        %2390 = vmatmul.mubr.f32.gmra.mxu0 %v1360
        %v2391 = vpop.f32.mrf.mxu0
        %v2392 = vadd.f32 0.0, %v2391
        %v2393 = vpop.f32.mrf.mxu0
        %2394 = vdwg.mxu0
        %v2395 = vld [vmem:[#allocation16] sm:$0x1]
        %v2396 = vld [vmem:[%s13] sm:$0xff]
        %v2397 = vld [vmem:[%s13 + $0x8] sm:$0xff]
        %v2398 = vld [vmem:[%s13 + $0x10] sm:$0xff]
        %v2399 = vld [vmem:[%s13 + $0x18] sm:$0xff]
        %v2400 = vld [vmem:[%s13 + $0x20] sm:$0xff]
        %v2401 = vld [vmem:[%s13 + $0x28] sm:$0xff]
        %v2402 = vld [vmem:[%s13 + $0x30] sm:$0xff]
        %v2403 = vld [vmem:[%s13 + $0x38] sm:$0xff]
        %v2404 = vld [vmem:[%s13 + $0x40] sm:$0xff]
        %v2405 = vld [vmem:[%s13 + $0x48] sm:$0xff]
        %v2406 = vld [vmem:[%s13 + $0x50] sm:$0xff]
        %v2407 = vld [vmem:[%s13 + $0x58] sm:$0xff]
        %v2409 = vsel %vm996, %v2241, 0
        %v2412 = vsel %vm996, %v2242, 0
        %2414 = vmatprep.subr.mxu0 0.0
        %2415 = vmatpush1.msra.mxu0 0.0
        %2416 = vmatprep.subr.mxu0 0.0
        %2417 = vmatpush1.msra.mxu0 0.0
        %2418 = vmatprep.subr.mxu0 0.0
        %2419 = vmatpush1.msra.mxu0 0.0
        %2420 = vmatprep.subr.mxu0 0.0
        %2421 = vmatpush1.msra.mxu0 0.0
        %2422 = vmatprep.subr.mxu0 0.0
        %2423 = vmatpush1.msra.mxu0 0.0
        %2424 = vmatprep.subr.mxu0 0.0
        %2425 = vmatpush1.msra.mxu0 0.0
        %2426 = vmatprep.subr.mxu0 0.0
        %2427 = vmatpush1.msra.mxu0 0.0
        %2428 = vmatprep.subr.mxu0 0.0
        %2429 = vmatpush1.msra.mxu0 0.0
        %2430 = vmatprep.subr.mxu0 0.0
        %2431 = vmatpush1.msra.mxu0 0.0
        %2432 = vmatprep.subr.mxu0 0.0
        %2433 = vmatpush1.msra.mxu0 0.0
        %2434 = vmatprep.subr.mxu0 0.0
        %2435 = vmatpush1.msra.mxu0 0.0
        %2436 = vmatprep.subr.mxu0 0.0
        %2437 = vmatpush1.msra.mxu0 0.0
        %2438 = vmatprep.subr.mxu0 0.0
        %2439 = vmatpush1.msra.mxu0 %v2403
        %2440 = vmatprep.subr.mxu0 0.0
        %2441 = vmatpush1.msra.mxu0 %v2402
        %2442 = vmatprep.subr.mxu0 0.0
        %2443 = vmatpush1.msra.mxu0 %v2401
        %2444 = vmatprep.subr.mxu0 0.0
        %2445 = vmatpush1.msra.mxu0 %v2400
        %2446 = vmatprep.subr.mxu0 0.0
        %2447 = vmatpush2.msra.mxu0 0.0
        %2448 = vmatprep.subr.mxu0 0.0
        %2449 = vmatpush2.msra.mxu0 0.0
        %2450 = vmatprep.subr.mxu0 0.0
        %2451 = vmatpush2.msra.mxu0 0.0
        %2452 = vmatprep.subr.mxu0 0.0
        %2453 = vmatpush2.msra.mxu0 0.0
        %2454 = vmatprep.subr.mxu0 0.0
        %2455 = vmatpush2.msra.mxu0 0.0
        %2456 = vmatprep.subr.mxu0 0.0
        %2457 = vmatpush2.msra.mxu0 0.0
        %2458 = vmatprep.subr.mxu0 0.0
        %2459 = vmatpush2.msra.mxu0 0.0
        %2460 = vmatprep.subr.mxu0 0.0
        %2461 = vmatpush2.msra.mxu0 0.0
        %2462 = vmatprep.subr.mxu0 0.0
        %2463 = vmatpush2.msra.mxu0 0.0
        %2464 = vmatprep.subr.mxu0 0.0
        %2465 = vmatpush2.msra.mxu0 0.0
        %2466 = vmatprep.subr.mxu0 0.0
        %2467 = vmatpush2.msra.mxu0 0.0
        %2468 = vmatprep.subr.mxu0 0.0
        %2469 = vmatpush2.msra.mxu0 0.0
        %2470 = vmatprep.subr.mxu0 0.0
        %2471 = vmatpush2.msra.mxu0 0.0
        %2472 = vmatprep.subr.mxu0 0.0
        %2473 = vmatpush2.msra.mxu0 0.0
        %2474 = vmatprep.subr.mxu0 0.0
        %2475 = vmatpush2.msra.mxu0 0.0
        %2476 = vmatprep.subr.mxu0 0.0
        %2477 = vmatpush2.msra.mxu0 0.0
        %2478 = vmatprep.mubr.f32.mxu0 0.0
        %2479 = vmatmul.mubr.f32.gmra.mxu0 %v2409
        %v2480 = vpop.f32.mrf.mxu0
        %v2481 = vadd.f32 0.0, %v2480
        %v2482 = vpop.f32.mrf.mxu0
        %2483 = vmatprep.mubr.f32.mxu0 0.0
        %2484 = vmatmul.mubr.f32.gmra.mxu0 %v2412
        %v2485 = vpop.f32.mrf.mxu0
        %v2486 = vadd.f32 0.0, %v2485
        %v2487 = vpop.f32.mrf.mxu0
        %2488 = vdwg.mxu0
        %v2490 = vsel %vm996, %v2312, 0
        %v2493 = vsel %vm996, %v2317, 0
        %2495 = vmatprep.subr.mxu0 0.0
        %2496 = vmatpush1.msra.mxu0 0.0
        %2497 = vmatprep.subr.mxu0 0.0
        %2498 = vmatpush1.msra.mxu0 0.0
        %2499 = vmatprep.subr.mxu0 0.0
        %2500 = vmatpush1.msra.mxu0 0.0
        %2501 = vmatprep.subr.mxu0 0.0
        %2502 = vmatpush1.msra.mxu0 0.0
        %2503 = vmatprep.subr.mxu0 0.0
        %2504 = vmatpush1.msra.mxu0 0.0
        %2505 = vmatprep.subr.mxu0 0.0
        %2506 = vmatpush1.msra.mxu0 0.0
        %2507 = vmatprep.subr.mxu0 0.0
        %2508 = vmatpush1.msra.mxu0 0.0
        %2509 = vmatprep.subr.mxu0 0.0
        %2510 = vmatpush1.msra.mxu0 0.0
        %2511 = vmatprep.subr.mxu0 0.0
        %2512 = vmatpush1.msra.mxu0 0.0
        %2513 = vmatprep.subr.mxu0 0.0
        %2514 = vmatpush1.msra.mxu0 0.0
        %2515 = vmatprep.subr.mxu0 0.0
        %2516 = vmatpush1.msra.mxu0 0.0
        %2517 = vmatprep.subr.mxu0 0.0
        %2518 = vmatpush1.msra.mxu0 0.0
        %2519 = vmatprep.subr.mxu0 0.0
        %2520 = vmatpush1.msra.mxu0 %v2399
        %2521 = vmatprep.subr.mxu0 0.0
        %2522 = vmatpush1.msra.mxu0 %v2398
        %2523 = vmatprep.subr.mxu0 0.0
        %2524 = vmatpush1.msra.mxu0 %v2397
        %2525 = vmatprep.subr.mxu0 0.0
        %2526 = vmatpush1.msra.mxu0 %v2396
        %2527 = vmatprep.subr.mxu0 0.0
        %2528 = vmatpush2.msra.mxu0 0.0
        %2529 = vmatprep.subr.mxu0 0.0
        %2530 = vmatpush2.msra.mxu0 0.0
        %2531 = vmatprep.subr.mxu0 0.0
        %2532 = vmatpush2.msra.mxu0 0.0
        %2533 = vmatprep.subr.mxu0 0.0
        %2534 = vmatpush2.msra.mxu0 0.0
        %2535 = vmatprep.subr.mxu0 0.0
        %2536 = vmatpush2.msra.mxu0 0.0
        %2537 = vmatprep.subr.mxu0 0.0
        %2538 = vmatpush2.msra.mxu0 0.0
        %2539 = vmatprep.subr.mxu0 0.0
        %2540 = vmatpush2.msra.mxu0 0.0
        %2541 = vmatprep.subr.mxu0 0.0
        %2542 = vmatpush2.msra.mxu0 0.0
        %2543 = vmatprep.subr.mxu0 0.0
        %2544 = vmatpush2.msra.mxu0 0.0
        %2545 = vmatprep.subr.mxu0 0.0
        %2546 = vmatpush2.msra.mxu0 0.0
        %2547 = vmatprep.subr.mxu0 0.0
        %2548 = vmatpush2.msra.mxu0 0.0
        %2549 = vmatprep.subr.mxu0 0.0
        %2550 = vmatpush2.msra.mxu0 0.0
        %2551 = vmatprep.subr.mxu0 0.0
        %2552 = vmatpush2.msra.mxu0 0.0
        %2553 = vmatprep.subr.mxu0 0.0
        %2554 = vmatpush2.msra.mxu0 0.0
        %2555 = vmatprep.subr.mxu0 0.0
        %2556 = vmatpush2.msra.mxu0 0.0
        %2557 = vmatprep.subr.mxu0 0.0
        %2558 = vmatpush2.msra.mxu0 0.0
        %2559 = vmatprep.mubr.f32.mxu0 0.0
        %2560 = vmatmul.mubr.f32.gmra.mxu0 %v2490
        %v2561 = vpop.f32.mrf.mxu0
        %v2562 = vadd.f32 %v2481, %v2561
        %v2563 = vpop.f32.mrf.mxu0
        %2564 = vmatprep.mubr.f32.mxu0 0.0
        %2565 = vmatmul.mubr.f32.gmra.mxu0 %v2493
        %v2566 = vpop.f32.mrf.mxu0
        %v2567 = vadd.f32 %v2486, %v2566
        %v2568 = vpop.f32.mrf.mxu0
        %2569 = vdwg.mxu0
        %v2571 = vsel %vm996, %v2387, 0
        %v2574 = vsel %vm996, %v2392, 0
        %2576 = vmatprep.subr.mxu0 0.0
        %2577 = vmatpush1.msra.mxu0 0.0
        %2578 = vmatprep.subr.mxu0 0.0
        %2579 = vmatpush1.msra.mxu0 0.0
        %2580 = vmatprep.subr.mxu0 0.0
        %2581 = vmatpush1.msra.mxu0 0.0
        %2582 = vmatprep.subr.mxu0 0.0
        %2583 = vmatpush1.msra.mxu0 0.0
        %2584 = vmatprep.subr.mxu0 0.0
        %2585 = vmatpush1.msra.mxu0 0.0
        %2586 = vmatprep.subr.mxu0 0.0
        %2587 = vmatpush1.msra.mxu0 0.0
        %2588 = vmatprep.subr.mxu0 0.0
        %2589 = vmatpush1.msra.mxu0 0.0
        %2590 = vmatprep.subr.mxu0 0.0
        %2591 = vmatpush1.msra.mxu0 0.0
        %2592 = vmatprep.subr.mxu0 0.0
        %2593 = vmatpush1.msra.mxu0 0.0
        %2594 = vmatprep.subr.mxu0 0.0
        %2595 = vmatpush1.msra.mxu0 0.0
        %2596 = vmatprep.subr.mxu0 0.0
        %2597 = vmatpush1.msra.mxu0 0.0
        %2598 = vmatprep.subr.mxu0 0.0
        %2599 = vmatpush1.msra.mxu0 0.0
        %2600 = vmatprep.subr.mxu0 0.0
        %2601 = vmatpush1.msra.mxu0 %v2407
        %2602 = vmatprep.subr.mxu0 0.0
        %2603 = vmatpush1.msra.mxu0 %v2406
        %2604 = vmatprep.subr.mxu0 0.0
        %2605 = vmatpush1.msra.mxu0 %v2405
        %2606 = vmatprep.subr.mxu0 0.0
        %2607 = vmatpush1.msra.mxu0 %v2404
        %2608 = vmatprep.subr.mxu0 0.0
        %2609 = vmatpush2.msra.mxu0 0.0
        %2610 = vmatprep.subr.mxu0 0.0
        %2611 = vmatpush2.msra.mxu0 0.0
        %2612 = vmatprep.subr.mxu0 0.0
        %2613 = vmatpush2.msra.mxu0 0.0
        %2614 = vmatprep.subr.mxu0 0.0
        %2615 = vmatpush2.msra.mxu0 0.0
        %2616 = vmatprep.subr.mxu0 0.0
        %2617 = vmatpush2.msra.mxu0 0.0
        %2618 = vmatprep.subr.mxu0 0.0
        %2619 = vmatpush2.msra.mxu0 0.0
        %2620 = vmatprep.subr.mxu0 0.0
        %2621 = vmatpush2.msra.mxu0 0.0
        %2622 = vmatprep.subr.mxu0 0.0
        %2623 = vmatpush2.msra.mxu0 0.0
        %2624 = vmatprep.subr.mxu0 0.0
        %2625 = vmatpush2.msra.mxu0 0.0
        %2626 = vmatprep.subr.mxu0 0.0
        %2627 = vmatpush2.msra.mxu0 0.0
        %2628 = vmatprep.subr.mxu0 0.0
        %2629 = vmatpush2.msra.mxu0 0.0
        %2630 = vmatprep.subr.mxu0 0.0
        %2631 = vmatpush2.msra.mxu0 0.0
        %2632 = vmatprep.subr.mxu0 0.0
        %2633 = vmatpush2.msra.mxu0 0.0
        %2634 = vmatprep.subr.mxu0 0.0
        %2635 = vmatpush2.msra.mxu0 0.0
        %2636 = vmatprep.subr.mxu0 0.0
        %2637 = vmatpush2.msra.mxu0 0.0
        %2638 = vmatprep.subr.mxu0 0.0
        %2639 = vmatpush2.msra.mxu0 0.0
        %2640 = vmatprep.mubr.f32.mxu0 0.0
        %2641 = vmatmul.mubr.f32.gmra.mxu0 %v2571
        %v2642 = vpop.f32.mrf.mxu0
        %v2643 = vadd.f32 0.0, %v2642
        %v2644 = vpop.f32.mrf.mxu0
        %2645 = vmatprep.mubr.f32.mxu0 0.0
        %2646 = vmatmul.mubr.f32.gmra.mxu0 %v2574
        %v2647 = vpop.f32.mrf.mxu0
        %v2648 = vadd.f32 0.0, %v2647
        %v2649 = vpop.f32.mrf.mxu0
        %2650 = vdwg.mxu0
        %v2651 = vadd.f32 %v2562, %v2643
        %v2652 = vadd.f32 %v2567, %v2648
        %v2653 = vlaneseq
        %v2654 = vshrl.u32 %v2653, 7
        %v2655 = vsub.s32 0, %v2654
        %v2656 = vrot.slane %v2395, %v2655
        %v2657 = vadd.f32 %v2651, %v2656
        %v2658 = vadd.f32 %v2652, %v2656
        %v2659 = vld [vmem:[#allocation16 + $0x1] sm:$0x1]
        %s2660 = scalar_lea.vmem %s13, 96
        %v2661 = vld [vmem:[%s2660] sm:$0xff]
        %v2662 = vld [vmem:[%s2660 + $0x8] sm:$0xff]
        %v2663 = vld [vmem:[%s2660 + $0x10] sm:$0xff]
        %v2664 = vld [vmem:[%s2660 + $0x18] sm:$0xff]
        %v2665 = vld [vmem:[%s2660 + $0x20] sm:$0xff]
        %v2666 = vld [vmem:[%s2660 + $0x28] sm:$0xff]
        %v2667 = vld [vmem:[%s2660 + $0x30] sm:$0xff]
        %v2668 = vld [vmem:[%s2660 + $0x38] sm:$0xff]
        %v2669 = vld [vmem:[%s2660 + $0x40] sm:$0xff]
        %v2670 = vld [vmem:[%s2660 + $0x48] sm:$0xff]
        %v2671 = vld [vmem:[%s2660 + $0x50] sm:$0xff]
        %v2672 = vld [vmem:[%s2660 + $0x58] sm:$0xff]
        %2673 = vmatprep.subr.mxu0 0.0
        %2674 = vmatpush1.msra.mxu0 0.0
        %2675 = vmatprep.subr.mxu0 0.0
        %2676 = vmatpush1.msra.mxu0 0.0
        %2677 = vmatprep.subr.mxu0 0.0
        %2678 = vmatpush1.msra.mxu0 0.0
        %2679 = vmatprep.subr.mxu0 0.0
        %2680 = vmatpush1.msra.mxu0 0.0
        %2681 = vmatprep.subr.mxu0 0.0
        %2682 = vmatpush1.msra.mxu0 0.0
        %2683 = vmatprep.subr.mxu0 0.0
        %2684 = vmatpush1.msra.mxu0 0.0
        %2685 = vmatprep.subr.mxu0 0.0
        %2686 = vmatpush1.msra.mxu0 0.0
        %2687 = vmatprep.subr.mxu0 0.0
        %2688 = vmatpush1.msra.mxu0 0.0
        %2689 = vmatprep.subr.mxu0 0.0
        %2690 = vmatpush1.msra.mxu0 0.0
        %2691 = vmatprep.subr.mxu0 0.0
        %2692 = vmatpush1.msra.mxu0 0.0
        %2693 = vmatprep.subr.mxu0 0.0
        %2694 = vmatpush1.msra.mxu0 0.0
        %2695 = vmatprep.subr.mxu0 0.0
        %2696 = vmatpush1.msra.mxu0 0.0
        %2697 = vmatprep.subr.mxu0 0.0
        %2698 = vmatpush1.msra.mxu0 %v2668
        %2699 = vmatprep.subr.mxu0 0.0
        %2700 = vmatpush1.msra.mxu0 %v2667
        %2701 = vmatprep.subr.mxu0 0.0
        %2702 = vmatpush1.msra.mxu0 %v2666
        %2703 = vmatprep.subr.mxu0 0.0
        %2704 = vmatpush1.msra.mxu0 %v2665
        %2705 = vmatprep.subr.mxu0 0.0
        %2706 = vmatpush2.msra.mxu0 0.0
        %2707 = vmatprep.subr.mxu0 0.0
        %2708 = vmatpush2.msra.mxu0 0.0
        %2709 = vmatprep.subr.mxu0 0.0
        %2710 = vmatpush2.msra.mxu0 0.0
        %2711 = vmatprep.subr.mxu0 0.0
        %2712 = vmatpush2.msra.mxu0 0.0
        %2713 = vmatprep.subr.mxu0 0.0
        %2714 = vmatpush2.msra.mxu0 0.0
        %2715 = vmatprep.subr.mxu0 0.0
        %2716 = vmatpush2.msra.mxu0 0.0
        %2717 = vmatprep.subr.mxu0 0.0
        %2718 = vmatpush2.msra.mxu0 0.0
        %2719 = vmatprep.subr.mxu0 0.0
        %2720 = vmatpush2.msra.mxu0 0.0
        %2721 = vmatprep.subr.mxu0 0.0
        %2722 = vmatpush2.msra.mxu0 0.0
        %2723 = vmatprep.subr.mxu0 0.0
        %2724 = vmatpush2.msra.mxu0 0.0
        %2725 = vmatprep.subr.mxu0 0.0
        %2726 = vmatpush2.msra.mxu0 0.0
        %2727 = vmatprep.subr.mxu0 0.0
        %2728 = vmatpush2.msra.mxu0 0.0
        %2729 = vmatprep.subr.mxu0 0.0
        %2730 = vmatpush2.msra.mxu0 0.0
        %2731 = vmatprep.subr.mxu0 0.0
        %2732 = vmatpush2.msra.mxu0 0.0
        %2733 = vmatprep.subr.mxu0 0.0
        %2734 = vmatpush2.msra.mxu0 0.0
        %2735 = vmatprep.subr.mxu0 0.0
        %2736 = vmatpush2.msra.mxu0 0.0
        %2737 = vmatprep.mubr.f32.mxu0 0.0
        %2738 = vmatmul.mubr.f32.gmra.mxu0 %v2409
        %v2739 = vpop.f32.mrf.mxu0
        %v2740 = vadd.f32 0.0, %v2739
        %v2741 = vpop.f32.mrf.mxu0
        %2742 = vmatprep.mubr.f32.mxu0 0.0
        %2743 = vmatmul.mubr.f32.gmra.mxu0 %v2412
        %v2744 = vpop.f32.mrf.mxu0
        %v2745 = vadd.f32 0.0, %v2744
        %v2746 = vpop.f32.mrf.mxu0
        %2747 = vdwg.mxu0
        %2748 = vmatprep.subr.mxu0 0.0
        %2749 = vmatpush1.msra.mxu0 0.0
        %2750 = vmatprep.subr.mxu0 0.0
        %2751 = vmatpush1.msra.mxu0 0.0
        %2752 = vmatprep.subr.mxu0 0.0
        %2753 = vmatpush1.msra.mxu0 0.0
        %2754 = vmatprep.subr.mxu0 0.0
        %2755 = vmatpush1.msra.mxu0 0.0
        %2756 = vmatprep.subr.mxu0 0.0
        %2757 = vmatpush1.msra.mxu0 0.0
        %2758 = vmatprep.subr.mxu0 0.0
        %2759 = vmatpush1.msra.mxu0 0.0
        %2760 = vmatprep.subr.mxu0 0.0
        %2761 = vmatpush1.msra.mxu0 0.0
        %2762 = vmatprep.subr.mxu0 0.0
        %2763 = vmatpush1.msra.mxu0 0.0
        %2764 = vmatprep.subr.mxu0 0.0
        %2765 = vmatpush1.msra.mxu0 0.0
        %2766 = vmatprep.subr.mxu0 0.0
        %2767 = vmatpush1.msra.mxu0 0.0
        %2768 = vmatprep.subr.mxu0 0.0
        %2769 = vmatpush1.msra.mxu0 0.0
        %2770 = vmatprep.subr.mxu0 0.0
        %2771 = vmatpush1.msra.mxu0 0.0
        %2772 = vmatprep.subr.mxu0 0.0
        %2773 = vmatpush1.msra.mxu0 %v2664
        %2774 = vmatprep.subr.mxu0 0.0
        %2775 = vmatpush1.msra.mxu0 %v2663
        %2776 = vmatprep.subr.mxu0 0.0
        %2777 = vmatpush1.msra.mxu0 %v2662
        %2778 = vmatprep.subr.mxu0 0.0
        %2779 = vmatpush1.msra.mxu0 %v2661
        %2780 = vmatprep.subr.mxu0 0.0
        %2781 = vmatpush2.msra.mxu0 0.0
        %2782 = vmatprep.subr.mxu0 0.0
        %2783 = vmatpush2.msra.mxu0 0.0
        %2784 = vmatprep.subr.mxu0 0.0
        %2785 = vmatpush2.msra.mxu0 0.0
        %2786 = vmatprep.subr.mxu0 0.0
        %2787 = vmatpush2.msra.mxu0 0.0
        %2788 = vmatprep.subr.mxu0 0.0
        %2789 = vmatpush2.msra.mxu0 0.0
        %2790 = vmatprep.subr.mxu0 0.0
        %2791 = vmatpush2.msra.mxu0 0.0
        %2792 = vmatprep.subr.mxu0 0.0
        %2793 = vmatpush2.msra.mxu0 0.0
        %2794 = vmatprep.subr.mxu0 0.0
        %2795 = vmatpush2.msra.mxu0 0.0
        %2796 = vmatprep.subr.mxu0 0.0
        %2797 = vmatpush2.msra.mxu0 0.0
        %2798 = vmatprep.subr.mxu0 0.0
        %2799 = vmatpush2.msra.mxu0 0.0
        %2800 = vmatprep.subr.mxu0 0.0
        %2801 = vmatpush2.msra.mxu0 0.0
        %2802 = vmatprep.subr.mxu0 0.0
        %2803 = vmatpush2.msra.mxu0 0.0
        %2804 = vmatprep.subr.mxu0 0.0
        %2805 = vmatpush2.msra.mxu0 0.0
        %2806 = vmatprep.subr.mxu0 0.0
        %2807 = vmatpush2.msra.mxu0 0.0
        %2808 = vmatprep.subr.mxu0 0.0
        %2809 = vmatpush2.msra.mxu0 0.0
        %2810 = vmatprep.subr.mxu0 0.0
        %2811 = vmatpush2.msra.mxu0 0.0
        %2812 = vmatprep.mubr.f32.mxu0 0.0
        %2813 = vmatmul.mubr.f32.gmra.mxu0 %v2490
        %v2814 = vpop.f32.mrf.mxu0
        %v2815 = vadd.f32 %v2740, %v2814
        %v2816 = vpop.f32.mrf.mxu0
        %2817 = vmatprep.mubr.f32.mxu0 0.0
        %2818 = vmatmul.mubr.f32.gmra.mxu0 %v2493
        %v2819 = vpop.f32.mrf.mxu0
        %v2820 = vadd.f32 %v2745, %v2819
        %v2821 = vpop.f32.mrf.mxu0
        %2822 = vdwg.mxu0
        %2823 = vmatprep.subr.mxu0 0.0
        %2824 = vmatpush1.msra.mxu0 0.0
        %2825 = vmatprep.subr.mxu0 0.0
        %2826 = vmatpush1.msra.mxu0 0.0
        %2827 = vmatprep.subr.mxu0 0.0
        %2828 = vmatpush1.msra.mxu0 0.0
        %2829 = vmatprep.subr.mxu0 0.0
        %2830 = vmatpush1.msra.mxu0 0.0
        %2831 = vmatprep.subr.mxu0 0.0
        %2832 = vmatpush1.msra.mxu0 0.0
        %2833 = vmatprep.subr.mxu0 0.0
        %2834 = vmatpush1.msra.mxu0 0.0
        %2835 = vmatprep.subr.mxu0 0.0
        %2836 = vmatpush1.msra.mxu0 0.0
        %2837 = vmatprep.subr.mxu0 0.0
        %2838 = vmatpush1.msra.mxu0 0.0
        %2839 = vmatprep.subr.mxu0 0.0
        %2840 = vmatpush1.msra.mxu0 0.0
        %2841 = vmatprep.subr.mxu0 0.0
        %2842 = vmatpush1.msra.mxu0 0.0
        %2843 = vmatprep.subr.mxu0 0.0
        %2844 = vmatpush1.msra.mxu0 0.0
        %2845 = vmatprep.subr.mxu0 0.0
        %2846 = vmatpush1.msra.mxu0 0.0
        %2847 = vmatprep.subr.mxu0 0.0
        %2848 = vmatpush1.msra.mxu0 %v2672
        %2849 = vmatprep.subr.mxu0 0.0
        %2850 = vmatpush1.msra.mxu0 %v2671
        %2851 = vmatprep.subr.mxu0 0.0
        %2852 = vmatpush1.msra.mxu0 %v2670
        %2853 = vmatprep.subr.mxu0 0.0
        %2854 = vmatpush1.msra.mxu0 %v2669
        %2855 = vmatprep.subr.mxu0 0.0
        %2856 = vmatpush2.msra.mxu0 0.0
        %2857 = vmatprep.subr.mxu0 0.0
        %2858 = vmatpush2.msra.mxu0 0.0
        %2859 = vmatprep.subr.mxu0 0.0
        %2860 = vmatpush2.msra.mxu0 0.0
        %2861 = vmatprep.subr.mxu0 0.0
        %2862 = vmatpush2.msra.mxu0 0.0
        %2863 = vmatprep.subr.mxu0 0.0
        %2864 = vmatpush2.msra.mxu0 0.0
        %2865 = vmatprep.subr.mxu0 0.0
        %2866 = vmatpush2.msra.mxu0 0.0
        %2867 = vmatprep.subr.mxu0 0.0
        %2868 = vmatpush2.msra.mxu0 0.0
        %2869 = vmatprep.subr.mxu0 0.0
        %2870 = vmatpush2.msra.mxu0 0.0
        %2871 = vmatprep.subr.mxu0 0.0
        %2872 = vmatpush2.msra.mxu0 0.0
        %2873 = vmatprep.subr.mxu0 0.0
        %2874 = vmatpush2.msra.mxu0 0.0
        %2875 = vmatprep.subr.mxu0 0.0
        %2876 = vmatpush2.msra.mxu0 0.0
        %2877 = vmatprep.subr.mxu0 0.0
        %2878 = vmatpush2.msra.mxu0 0.0
        %2879 = vmatprep.subr.mxu0 0.0
        %2880 = vmatpush2.msra.mxu0 0.0
        %2881 = vmatprep.subr.mxu0 0.0
        %2882 = vmatpush2.msra.mxu0 0.0
        %2883 = vmatprep.subr.mxu0 0.0
        %2884 = vmatpush2.msra.mxu0 0.0
        %2885 = vmatprep.subr.mxu0 0.0
        %2886 = vmatpush2.msra.mxu0 0.0
        %2887 = vmatprep.mubr.f32.mxu0 0.0
        %2888 = vmatmul.mubr.f32.gmra.mxu0 %v2571
        %v2889 = vpop.f32.mrf.mxu0
        %v2890 = vadd.f32 0.0, %v2889
        %v2891 = vpop.f32.mrf.mxu0
        %2892 = vmatprep.mubr.f32.mxu0 0.0
        %2893 = vmatmul.mubr.f32.gmra.mxu0 %v2574
        %v2894 = vpop.f32.mrf.mxu0
        %v2895 = vadd.f32 0.0, %v2894
        %v2896 = vpop.f32.mrf.mxu0
        %2897 = vdwg.mxu0
        %v2898 = vadd.f32 %v2815, %v2890
        %v2899 = vadd.f32 %v2820, %v2895
        %v2900 = vlaneseq
        %v2901 = vshrl.u32 %v2900, 7
        %v2902 = vsub.s32 0, %v2901
        %v2903 = vrot.slane %v2659, %v2902
        %v2904 = vadd.f32 %v2898, %v2903
        %v2905 = vadd.f32 %v2899, %v2903
        %v2906 = vxor.u32 %v2904, 2147483648
        %v2907 = vxor.u32 %v2905, 2147483648
        %v2908 = vmul.f32 %v2906, 1.442695
        %v2909 = vpow.pop %v2908
        %v2910 = vmul.f32 %v2907, 1.442695
        %v2911 = vpow.pop %v2910
        %v2912 = vadd.f32 %v2909, 1.0
        %v2913 = vadd.f32 %v2911, 1.0
        %v2914 = vrcp.pop %v2912
        %v2915 = vmul.f32 1.0, %v2914
        %v2916 = vrcp.pop %v2913
        %v2917 = vmul.f32 1.0, %v2916
        %v2918 = vmul.f32 %v2657, %v2915
        %v2919 = vmul.f32 %v2658, %v2917
        %v2920 = vsel %vm1271, %v966, 0.0
        %v2921 = vsel %vm1271, %v967, 0.0
        %v2922 = vadd.f32 %v2920, %v2921
        %v2923 = vrot.slane %v2922, 4
        %v2924 = vadd.f32 %v2922, %v2923
        %v2925 = vrot.slane %v2924, 2
        %v2926 = vadd.f32 %v2924, %v2925
        %v2927 = vrot.slane %v2926, 1
        %v2928 = vadd.f32 %v2926, %v2927
        %v2929 = vmax.f32 %v2928, 1.0
        %2931 = vset.pattern.permute.xlu0 0
        %2932 = vperm.xlu0 %2931, %v966
        %v2933 = vpop.permute.xlu0 %2932
        %2936 = vset.pattern.permute.xlu0 0
        %2937 = vperm.xlu0 %2936, %v967
        %v2938 = vpop.permute.xlu0 %2937
        %v2940 = vmul.f32 %v2918, %v2933
        %v2941 = vmul.f32 %v2919, %v2938
        %v2942 = vsel %vm2145, %v2940, 0.0
        %v2943 = vsel %vm2145, %v2941, 0.0
        %v2944 = vadd.f32 %v2942, %v2943
        %v2945 = vrot.slane %v2944, 4
        %v2946 = vadd.f32 %v2944, %v2945
        %v2947 = vrot.slane %v2946, 2
        %v2948 = vadd.f32 %v2946, %v2947
        %v2949 = vrot.slane %v2948, 1
        %v2950 = vadd.f32 %v2948, %v2949
        %2952 = vset.pattern.permute.xlu0 0
        %2953 = vperm.xlu0 %2952, %v2929
        %v2954 = vpop.permute.xlu0 %2953
        %v2956 = vrcp.pop %v2954
        %v2957 = vmul.f32 %v2950, %v2956
        %v2958 = vsub.f32 %v2918, %v2957
        %v2959 = vsub.f32 %v2919, %v2957
        %v2960 = vmul.f32 %v2958, %v2933
        %v2961 = vmul.f32 %v2959, %v2938
        %v2962 = vmul.f32 %v2960, %v2960
        %v2963 = vmul.f32 %v2961, %v2961
        %v2964 = vsel %vm2145, %v2962, 0.0
        %v2965 = vsel %vm2145, %v2963, 0.0
        %v2966 = vadd.f32 %v2964, %v2965
        %v2967 = vrot.slane %v2966, 4
        %v2968 = vadd.f32 %v2966, %v2967
        %v2969 = vrot.slane %v2968, 2
        %v2970 = vadd.f32 %v2968, %v2969
        %v2971 = vrot.slane %v2970, 1
        %v2972 = vadd.f32 %v2970, %v2971
        %v2973 = vmul.f32 %v2972, %v2956
        %v2974 = vadd.f32 %v2973, 1e-05
        %v2975 = vrsqrt.pop %v2974
        %v2976 = vmul.f32 %v2958, %v2975
        %v2977 = vmul.f32 %v2959, %v2975
        %v2978 = vld [vmem:[#allocation17] sm:$0x1]
        %v2979 = vlaneseq
        %v2980 = vshrl.u32 %v2979, 7
        %v2981 = vsub.s32 0, %v2980
        %v2982 = vrot.slane %v2978, %v2981
        %v2983 = vmul.f32 %v2976, %v2982
        %v2984 = vmul.f32 %v2977, %v2982
        %v2985 = vld [vmem:[#allocation17 + $0x1] sm:$0x1]
        %v2986 = vlaneseq
        %v2987 = vshrl.u32 %v2986, 7
        %v2988 = vsub.s32 0, %v2987
        %v2989 = vrot.slane %v2985, %v2988
        %v2990 = vadd.f32 %v2983, %v2989
        %v2991 = vadd.f32 %v2984, %v2989
        %v2992 = vmul.f32 %v2990, %v2933
        %v2993 = vmul.f32 %v2991, %v2938
        %2994 = vst.msk [vmem:[%s958] sm:$0xff] %vm2145, %v2992
        %2995 = vst.msk [vmem:[%s958 + $0x8] sm:$0xff] %vm2145, %v2993
        %v2996 = vld [vmem:[#allocation19] sm:$0x1]
        %v2997 = vld [vmem:[%s16] sm:$0xff]
        %v2998 = vld [vmem:[%s16 + $0x8] sm:$0xff]
        %v2999 = vld [vmem:[%s16 + $0x10] sm:$0xff]
        %v3000 = vld [vmem:[%s16 + $0x18] sm:$0xff]
        %v3001 = vld [vmem:[%s16 + $0x20] sm:$0xff]
        %v3002 = vld [vmem:[%s16 + $0x28] sm:$0xff]
        %v3003 = vld [vmem:[%s16 + $0x30] sm:$0xff]
        %v3004 = vld [vmem:[%s16 + $0x38] sm:$0xff]
        %v3005 = vld [vmem:[%s16 + $0x40] sm:$0xff]
        %v3006 = vld [vmem:[%s16 + $0x48] sm:$0xff]
        %v3007 = vld [vmem:[%s16 + $0x50] sm:$0xff]
        %v3008 = vld [vmem:[%s16 + $0x58] sm:$0xff]
        %3009 = vmatprep.subr.mxu0 0.0
        %3010 = vmatpush1.msra.mxu0 0.0
        %3011 = vmatprep.subr.mxu0 0.0
        %3012 = vmatpush1.msra.mxu0 0.0
        %3013 = vmatprep.subr.mxu0 0.0
        %3014 = vmatpush1.msra.mxu0 0.0
        %3015 = vmatprep.subr.mxu0 0.0
        %3016 = vmatpush1.msra.mxu0 0.0
        %3017 = vmatprep.subr.mxu0 0.0
        %3018 = vmatpush1.msra.mxu0 0.0
        %3019 = vmatprep.subr.mxu0 0.0
        %3020 = vmatpush1.msra.mxu0 0.0
        %3021 = vmatprep.subr.mxu0 0.0
        %3022 = vmatpush1.msra.mxu0 0.0
        %3023 = vmatprep.subr.mxu0 0.0
        %3024 = vmatpush1.msra.mxu0 0.0
        %3025 = vmatprep.subr.mxu0 0.0
        %3026 = vmatpush1.msra.mxu0 0.0
        %3027 = vmatprep.subr.mxu0 0.0
        %3028 = vmatpush1.msra.mxu0 0.0
        %3029 = vmatprep.subr.mxu0 0.0
        %3030 = vmatpush1.msra.mxu0 0.0
        %3031 = vmatprep.subr.mxu0 0.0
        %3032 = vmatpush1.msra.mxu0 0.0
        %3033 = vmatprep.subr.mxu0 0.0
        %3034 = vmatpush1.msra.mxu0 %v3004
        %3035 = vmatprep.subr.mxu0 0.0
        %3036 = vmatpush1.msra.mxu0 %v3003
        %3037 = vmatprep.subr.mxu0 0.0
        %3038 = vmatpush1.msra.mxu0 %v3002
        %3039 = vmatprep.subr.mxu0 0.0
        %3040 = vmatpush1.msra.mxu0 %v3001
        %3041 = vmatprep.subr.mxu0 0.0
        %3042 = vmatpush2.msra.mxu0 0.0
        %3043 = vmatprep.subr.mxu0 0.0
        %3044 = vmatpush2.msra.mxu0 0.0
        %3045 = vmatprep.subr.mxu0 0.0
        %3046 = vmatpush2.msra.mxu0 0.0
        %3047 = vmatprep.subr.mxu0 0.0
        %3048 = vmatpush2.msra.mxu0 0.0
        %3049 = vmatprep.subr.mxu0 0.0
        %3050 = vmatpush2.msra.mxu0 0.0
        %3051 = vmatprep.subr.mxu0 0.0
        %3052 = vmatpush2.msra.mxu0 0.0
        %3053 = vmatprep.subr.mxu0 0.0
        %3054 = vmatpush2.msra.mxu0 0.0
        %3055 = vmatprep.subr.mxu0 0.0
        %3056 = vmatpush2.msra.mxu0 0.0
        %3057 = vmatprep.subr.mxu0 0.0
        %3058 = vmatpush2.msra.mxu0 0.0
        %3059 = vmatprep.subr.mxu0 0.0
        %3060 = vmatpush2.msra.mxu0 0.0
        %3061 = vmatprep.subr.mxu0 0.0
        %3062 = vmatpush2.msra.mxu0 0.0
        %3063 = vmatprep.subr.mxu0 0.0
        %3064 = vmatpush2.msra.mxu0 0.0
        %3065 = vmatprep.subr.mxu0 0.0
        %3066 = vmatpush2.msra.mxu0 0.0
        %3067 = vmatprep.subr.mxu0 0.0
        %3068 = vmatpush2.msra.mxu0 0.0
        %3069 = vmatprep.subr.mxu0 0.0
        %3070 = vmatpush2.msra.mxu0 0.0
        %3071 = vmatprep.subr.mxu0 0.0
        %3072 = vmatpush2.msra.mxu0 0.0
        %3073 = vmatprep.mubr.f32.mxu0 0.0
        %3074 = vmatmul.mubr.f32.gmra.mxu0 %v2409
        %v3075 = vpop.f32.mrf.mxu0
        %v3076 = vadd.f32 0.0, %v3075
        %v3077 = vpop.f32.mrf.mxu0
        %3078 = vmatprep.mubr.f32.mxu0 0.0
        %3079 = vmatmul.mubr.f32.gmra.mxu0 %v2412
        %v3080 = vpop.f32.mrf.mxu0
        %v3081 = vadd.f32 0.0, %v3080
        %v3082 = vpop.f32.mrf.mxu0
        %3083 = vdwg.mxu0
        %3084 = vmatprep.subr.mxu0 0.0
        %3085 = vmatpush1.msra.mxu0 0.0
        %3086 = vmatprep.subr.mxu0 0.0
        %3087 = vmatpush1.msra.mxu0 0.0
        %3088 = vmatprep.subr.mxu0 0.0
        %3089 = vmatpush1.msra.mxu0 0.0
        %3090 = vmatprep.subr.mxu0 0.0
        %3091 = vmatpush1.msra.mxu0 0.0
        %3092 = vmatprep.subr.mxu0 0.0
        %3093 = vmatpush1.msra.mxu0 0.0
        %3094 = vmatprep.subr.mxu0 0.0
        %3095 = vmatpush1.msra.mxu0 0.0
        %3096 = vmatprep.subr.mxu0 0.0
        %3097 = vmatpush1.msra.mxu0 0.0
        %3098 = vmatprep.subr.mxu0 0.0
        %3099 = vmatpush1.msra.mxu0 0.0
        %3100 = vmatprep.subr.mxu0 0.0
        %3101 = vmatpush1.msra.mxu0 0.0
        %3102 = vmatprep.subr.mxu0 0.0
        %3103 = vmatpush1.msra.mxu0 0.0
        %3104 = vmatprep.subr.mxu0 0.0
        %3105 = vmatpush1.msra.mxu0 0.0
        %3106 = vmatprep.subr.mxu0 0.0
        %3107 = vmatpush1.msra.mxu0 0.0
        %3108 = vmatprep.subr.mxu0 0.0
        %3109 = vmatpush1.msra.mxu0 %v3000
        %3110 = vmatprep.subr.mxu0 0.0
        %3111 = vmatpush1.msra.mxu0 %v2999
        %3112 = vmatprep.subr.mxu0 0.0
        %3113 = vmatpush1.msra.mxu0 %v2998
        %3114 = vmatprep.subr.mxu0 0.0
        %3115 = vmatpush1.msra.mxu0 %v2997
        %3116 = vmatprep.subr.mxu0 0.0
        %3117 = vmatpush2.msra.mxu0 0.0
        %3118 = vmatprep.subr.mxu0 0.0
        %3119 = vmatpush2.msra.mxu0 0.0
        %3120 = vmatprep.subr.mxu0 0.0
        %3121 = vmatpush2.msra.mxu0 0.0
        %3122 = vmatprep.subr.mxu0 0.0
        %3123 = vmatpush2.msra.mxu0 0.0
        %3124 = vmatprep.subr.mxu0 0.0
        %3125 = vmatpush2.msra.mxu0 0.0
        %3126 = vmatprep.subr.mxu0 0.0
        %3127 = vmatpush2.msra.mxu0 0.0
        %3128 = vmatprep.subr.mxu0 0.0
        %3129 = vmatpush2.msra.mxu0 0.0
        %3130 = vmatprep.subr.mxu0 0.0
        %3131 = vmatpush2.msra.mxu0 0.0
        %3132 = vmatprep.subr.mxu0 0.0
        %3133 = vmatpush2.msra.mxu0 0.0
        %3134 = vmatprep.subr.mxu0 0.0
        %3135 = vmatpush2.msra.mxu0 0.0
        %3136 = vmatprep.subr.mxu0 0.0
        %3137 = vmatpush2.msra.mxu0 0.0
        %3138 = vmatprep.subr.mxu0 0.0
        %3139 = vmatpush2.msra.mxu0 0.0
        %3140 = vmatprep.subr.mxu0 0.0
        %3141 = vmatpush2.msra.mxu0 0.0
        %3142 = vmatprep.subr.mxu0 0.0
        %3143 = vmatpush2.msra.mxu0 0.0
        %3144 = vmatprep.subr.mxu0 0.0
        %3145 = vmatpush2.msra.mxu0 0.0
        %3146 = vmatprep.subr.mxu0 0.0
        %3147 = vmatpush2.msra.mxu0 0.0
        %3148 = vmatprep.mubr.f32.mxu0 0.0
        %3149 = vmatmul.mubr.f32.gmra.mxu0 %v2490
        %v3150 = vpop.f32.mrf.mxu0
        %v3151 = vadd.f32 %v3076, %v3150
        %v3152 = vpop.f32.mrf.mxu0
        %3153 = vmatprep.mubr.f32.mxu0 0.0
        %3154 = vmatmul.mubr.f32.gmra.mxu0 %v2493
        %v3155 = vpop.f32.mrf.mxu0
        %v3156 = vadd.f32 %v3081, %v3155
        %v3157 = vpop.f32.mrf.mxu0
        %3158 = vdwg.mxu0
        %3159 = vmatprep.subr.mxu0 0.0
        %3160 = vmatpush1.msra.mxu0 0.0
        %3161 = vmatprep.subr.mxu0 0.0
        %3162 = vmatpush1.msra.mxu0 0.0
        %3163 = vmatprep.subr.mxu0 0.0
        %3164 = vmatpush1.msra.mxu0 0.0
        %3165 = vmatprep.subr.mxu0 0.0
        %3166 = vmatpush1.msra.mxu0 0.0
        %3167 = vmatprep.subr.mxu0 0.0
        %3168 = vmatpush1.msra.mxu0 0.0
        %3169 = vmatprep.subr.mxu0 0.0
        %3170 = vmatpush1.msra.mxu0 0.0
        %3171 = vmatprep.subr.mxu0 0.0
        %3172 = vmatpush1.msra.mxu0 0.0
        %3173 = vmatprep.subr.mxu0 0.0
        %3174 = vmatpush1.msra.mxu0 0.0
        %3175 = vmatprep.subr.mxu0 0.0
        %3176 = vmatpush1.msra.mxu0 0.0
        %3177 = vmatprep.subr.mxu0 0.0
        %3178 = vmatpush1.msra.mxu0 0.0
        %3179 = vmatprep.subr.mxu0 0.0
        %3180 = vmatpush1.msra.mxu0 0.0
        %3181 = vmatprep.subr.mxu0 0.0
        %3182 = vmatpush1.msra.mxu0 0.0
        %3183 = vmatprep.subr.mxu0 0.0
        %3184 = vmatpush1.msra.mxu0 %v3008
        %3185 = vmatprep.subr.mxu0 0.0
        %3186 = vmatpush1.msra.mxu0 %v3007
        %3187 = vmatprep.subr.mxu0 0.0
        %3188 = vmatpush1.msra.mxu0 %v3006
        %3189 = vmatprep.subr.mxu0 0.0
        %3190 = vmatpush1.msra.mxu0 %v3005
        %3191 = vmatprep.subr.mxu0 0.0
        %3192 = vmatpush2.msra.mxu0 0.0
        %3193 = vmatprep.subr.mxu0 0.0
        %3194 = vmatpush2.msra.mxu0 0.0
        %3195 = vmatprep.subr.mxu0 0.0
        %3196 = vmatpush2.msra.mxu0 0.0
        %3197 = vmatprep.subr.mxu0 0.0
        %3198 = vmatpush2.msra.mxu0 0.0
        %3199 = vmatprep.subr.mxu0 0.0
        %3200 = vmatpush2.msra.mxu0 0.0
        %3201 = vmatprep.subr.mxu0 0.0
        %3202 = vmatpush2.msra.mxu0 0.0
        %3203 = vmatprep.subr.mxu0 0.0
        %3204 = vmatpush2.msra.mxu0 0.0
        %3205 = vmatprep.subr.mxu0 0.0
        %3206 = vmatpush2.msra.mxu0 0.0
        %3207 = vmatprep.subr.mxu0 0.0
        %3208 = vmatpush2.msra.mxu0 0.0
        %3209 = vmatprep.subr.mxu0 0.0
        %3210 = vmatpush2.msra.mxu0 0.0
        %3211 = vmatprep.subr.mxu0 0.0
        %3212 = vmatpush2.msra.mxu0 0.0
        %3213 = vmatprep.subr.mxu0 0.0
        %3214 = vmatpush2.msra.mxu0 0.0
        %3215 = vmatprep.subr.mxu0 0.0
        %3216 = vmatpush2.msra.mxu0 0.0
        %3217 = vmatprep.subr.mxu0 0.0
        %3218 = vmatpush2.msra.mxu0 0.0
        %3219 = vmatprep.subr.mxu0 0.0
        %3220 = vmatpush2.msra.mxu0 0.0
        %3221 = vmatprep.subr.mxu0 0.0
        %3222 = vmatpush2.msra.mxu0 0.0
        %3223 = vmatprep.mubr.f32.mxu0 0.0
        %3224 = vmatmul.mubr.f32.gmra.mxu0 %v2571
        %v3225 = vpop.f32.mrf.mxu0
        %v3226 = vadd.f32 0.0, %v3225
        %v3227 = vpop.f32.mrf.mxu0
        %3228 = vmatprep.mubr.f32.mxu0 0.0
        %3229 = vmatmul.mubr.f32.gmra.mxu0 %v2574
        %v3230 = vpop.f32.mrf.mxu0
        %v3231 = vadd.f32 0.0, %v3230
        %v3232 = vpop.f32.mrf.mxu0
        %3233 = vdwg.mxu0
        %v3234 = vadd.f32 %v3151, %v3226
        %v3235 = vadd.f32 %v3156, %v3231
        %v3236 = vlaneseq
        %v3237 = vshrl.u32 %v3236, 7
        %v3238 = vsub.s32 0, %v3237
        %v3239 = vrot.slane %v2996, %v3238
        %v3240 = vadd.f32 %v3234, %v3239
        %v3241 = vadd.f32 %v3235, %v3239
        %v3242 = vld [vmem:[#allocation19 + $0x1] sm:$0x1]
        %s3243 = scalar_lea.vmem %s16, 96
        %v3244 = vld [vmem:[%s3243] sm:$0xff]
        %v3245 = vld [vmem:[%s3243 + $0x8] sm:$0xff]
        %v3246 = vld [vmem:[%s3243 + $0x10] sm:$0xff]
        %v3247 = vld [vmem:[%s3243 + $0x18] sm:$0xff]
        %v3248 = vld [vmem:[%s3243 + $0x20] sm:$0xff]
        %v3249 = vld [vmem:[%s3243 + $0x28] sm:$0xff]
        %v3250 = vld [vmem:[%s3243 + $0x30] sm:$0xff]
        %v3251 = vld [vmem:[%s3243 + $0x38] sm:$0xff]
        %v3252 = vld [vmem:[%s3243 + $0x40] sm:$0xff]
        %v3253 = vld [vmem:[%s3243 + $0x48] sm:$0xff]
        %v3254 = vld [vmem:[%s3243 + $0x50] sm:$0xff]
        %v3255 = vld [vmem:[%s3243 + $0x58] sm:$0xff]
        %3256 = vmatprep.subr.mxu0 0.0
        %3257 = vmatpush1.msra.mxu0 0.0
        %3258 = vmatprep.subr.mxu0 0.0
        %3259 = vmatpush1.msra.mxu0 0.0
        %3260 = vmatprep.subr.mxu0 0.0
        %3261 = vmatpush1.msra.mxu0 0.0
        %3262 = vmatprep.subr.mxu0 0.0
        %3263 = vmatpush1.msra.mxu0 0.0
        %3264 = vmatprep.subr.mxu0 0.0
        %3265 = vmatpush1.msra.mxu0 0.0
        %3266 = vmatprep.subr.mxu0 0.0
        %3267 = vmatpush1.msra.mxu0 0.0
        %3268 = vmatprep.subr.mxu0 0.0
        %3269 = vmatpush1.msra.mxu0 0.0
        %3270 = vmatprep.subr.mxu0 0.0
        %3271 = vmatpush1.msra.mxu0 0.0
        %3272 = vmatprep.subr.mxu0 0.0
        %3273 = vmatpush1.msra.mxu0 0.0
        %3274 = vmatprep.subr.mxu0 0.0
        %3275 = vmatpush1.msra.mxu0 0.0
        %3276 = vmatprep.subr.mxu0 0.0
        %3277 = vmatpush1.msra.mxu0 0.0
        %3278 = vmatprep.subr.mxu0 0.0
        %3279 = vmatpush1.msra.mxu0 0.0
        %3280 = vmatprep.subr.mxu0 0.0
        %3281 = vmatpush1.msra.mxu0 %v3251
        %3282 = vmatprep.subr.mxu0 0.0
        %3283 = vmatpush1.msra.mxu0 %v3250
        %3284 = vmatprep.subr.mxu0 0.0
        %3285 = vmatpush1.msra.mxu0 %v3249
        %3286 = vmatprep.subr.mxu0 0.0
        %3287 = vmatpush1.msra.mxu0 %v3248
        %3288 = vmatprep.subr.mxu0 0.0
        %3289 = vmatpush2.msra.mxu0 0.0
        %3290 = vmatprep.subr.mxu0 0.0
        %3291 = vmatpush2.msra.mxu0 0.0
        %3292 = vmatprep.subr.mxu0 0.0
        %3293 = vmatpush2.msra.mxu0 0.0
        %3294 = vmatprep.subr.mxu0 0.0
        %3295 = vmatpush2.msra.mxu0 0.0
        %3296 = vmatprep.subr.mxu0 0.0
        %3297 = vmatpush2.msra.mxu0 0.0
        %3298 = vmatprep.subr.mxu0 0.0
        %3299 = vmatpush2.msra.mxu0 0.0
        %3300 = vmatprep.subr.mxu0 0.0
        %3301 = vmatpush2.msra.mxu0 0.0
        %3302 = vmatprep.subr.mxu0 0.0
        %3303 = vmatpush2.msra.mxu0 0.0
        %3304 = vmatprep.subr.mxu0 0.0
        %3305 = vmatpush2.msra.mxu0 0.0
        %3306 = vmatprep.subr.mxu0 0.0
        %3307 = vmatpush2.msra.mxu0 0.0
        %3308 = vmatprep.subr.mxu0 0.0
        %3309 = vmatpush2.msra.mxu0 0.0
        %3310 = vmatprep.subr.mxu0 0.0
        %3311 = vmatpush2.msra.mxu0 0.0
        %3312 = vmatprep.subr.mxu0 0.0
        %3313 = vmatpush2.msra.mxu0 0.0
        %3314 = vmatprep.subr.mxu0 0.0
        %3315 = vmatpush2.msra.mxu0 0.0
        %3316 = vmatprep.subr.mxu0 0.0
        %3317 = vmatpush2.msra.mxu0 0.0
        %3318 = vmatprep.subr.mxu0 0.0
        %3319 = vmatpush2.msra.mxu0 0.0
        %3320 = vmatprep.mubr.f32.mxu0 0.0
        %3321 = vmatmul.mubr.f32.gmra.mxu0 %v2409
        %v3322 = vpop.f32.mrf.mxu0
        %v3323 = vadd.f32 0.0, %v3322
        %v3324 = vpop.f32.mrf.mxu0
        %3325 = vmatprep.mubr.f32.mxu0 0.0
        %3326 = vmatmul.mubr.f32.gmra.mxu0 %v2412
        %v3327 = vpop.f32.mrf.mxu0
        %v3328 = vadd.f32 0.0, %v3327
        %v3329 = vpop.f32.mrf.mxu0
        %3330 = vdwg.mxu0
        %3331 = vmatprep.subr.mxu0 0.0
        %3332 = vmatpush1.msra.mxu0 0.0
        %3333 = vmatprep.subr.mxu0 0.0
        %3334 = vmatpush1.msra.mxu0 0.0
        %3335 = vmatprep.subr.mxu0 0.0
        %3336 = vmatpush1.msra.mxu0 0.0
        %3337 = vmatprep.subr.mxu0 0.0
        %3338 = vmatpush1.msra.mxu0 0.0
        %3339 = vmatprep.subr.mxu0 0.0
        %3340 = vmatpush1.msra.mxu0 0.0
        %3341 = vmatprep.subr.mxu0 0.0
        %3342 = vmatpush1.msra.mxu0 0.0
        %3343 = vmatprep.subr.mxu0 0.0
        %3344 = vmatpush1.msra.mxu0 0.0
        %3345 = vmatprep.subr.mxu0 0.0
        %3346 = vmatpush1.msra.mxu0 0.0
        %3347 = vmatprep.subr.mxu0 0.0
        %3348 = vmatpush1.msra.mxu0 0.0
        %3349 = vmatprep.subr.mxu0 0.0
        %3350 = vmatpush1.msra.mxu0 0.0
        %3351 = vmatprep.subr.mxu0 0.0
        %3352 = vmatpush1.msra.mxu0 0.0
        %3353 = vmatprep.subr.mxu0 0.0
        %3354 = vmatpush1.msra.mxu0 0.0
        %3355 = vmatprep.subr.mxu0 0.0
        %3356 = vmatpush1.msra.mxu0 %v3247
        %3357 = vmatprep.subr.mxu0 0.0
        %3358 = vmatpush1.msra.mxu0 %v3246
        %3359 = vmatprep.subr.mxu0 0.0
        %3360 = vmatpush1.msra.mxu0 %v3245
        %3361 = vmatprep.subr.mxu0 0.0
        %3362 = vmatpush1.msra.mxu0 %v3244
        %3363 = vmatprep.subr.mxu0 0.0
        %3364 = vmatpush2.msra.mxu0 0.0
        %3365 = vmatprep.subr.mxu0 0.0
        %3366 = vmatpush2.msra.mxu0 0.0
        %3367 = vmatprep.subr.mxu0 0.0
        %3368 = vmatpush2.msra.mxu0 0.0
        %3369 = vmatprep.subr.mxu0 0.0
        %3370 = vmatpush2.msra.mxu0 0.0
        %3371 = vmatprep.subr.mxu0 0.0
        %3372 = vmatpush2.msra.mxu0 0.0
        %3373 = vmatprep.subr.mxu0 0.0
        %3374 = vmatpush2.msra.mxu0 0.0
        %3375 = vmatprep.subr.mxu0 0.0
        %3376 = vmatpush2.msra.mxu0 0.0
        %3377 = vmatprep.subr.mxu0 0.0
        %3378 = vmatpush2.msra.mxu0 0.0
        %3379 = vmatprep.subr.mxu0 0.0
        %3380 = vmatpush2.msra.mxu0 0.0
        %3381 = vmatprep.subr.mxu0 0.0
        %3382 = vmatpush2.msra.mxu0 0.0
        %3383 = vmatprep.subr.mxu0 0.0
        %3384 = vmatpush2.msra.mxu0 0.0
        %3385 = vmatprep.subr.mxu0 0.0
        %3386 = vmatpush2.msra.mxu0 0.0
        %3387 = vmatprep.subr.mxu0 0.0
        %3388 = vmatpush2.msra.mxu0 0.0
        %3389 = vmatprep.subr.mxu0 0.0
        %3390 = vmatpush2.msra.mxu0 0.0
        %3391 = vmatprep.subr.mxu0 0.0
        %3392 = vmatpush2.msra.mxu0 0.0
        %3393 = vmatprep.subr.mxu0 0.0
        %3394 = vmatpush2.msra.mxu0 0.0
        %3395 = vmatprep.mubr.f32.mxu0 0.0
        %3396 = vmatmul.mubr.f32.gmra.mxu0 %v2490
        %v3397 = vpop.f32.mrf.mxu0
        %v3398 = vadd.f32 %v3323, %v3397
        %v3399 = vpop.f32.mrf.mxu0
        %3400 = vmatprep.mubr.f32.mxu0 0.0
        %3401 = vmatmul.mubr.f32.gmra.mxu0 %v2493
        %v3402 = vpop.f32.mrf.mxu0
        %v3403 = vadd.f32 %v3328, %v3402
        %v3404 = vpop.f32.mrf.mxu0
        %3405 = vdwg.mxu0
        %3406 = vmatprep.subr.mxu0 0.0
        %3407 = vmatpush1.msra.mxu0 0.0
        %3408 = vmatprep.subr.mxu0 0.0
        %3409 = vmatpush1.msra.mxu0 0.0
        %3410 = vmatprep.subr.mxu0 0.0
        %3411 = vmatpush1.msra.mxu0 0.0
        %3412 = vmatprep.subr.mxu0 0.0
        %3413 = vmatpush1.msra.mxu0 0.0
        %3414 = vmatprep.subr.mxu0 0.0
        %3415 = vmatpush1.msra.mxu0 0.0
        %3416 = vmatprep.subr.mxu0 0.0
        %3417 = vmatpush1.msra.mxu0 0.0
        %3418 = vmatprep.subr.mxu0 0.0
        %3419 = vmatpush1.msra.mxu0 0.0
        %3420 = vmatprep.subr.mxu0 0.0
        %3421 = vmatpush1.msra.mxu0 0.0
        %3422 = vmatprep.subr.mxu0 0.0
        %3423 = vmatpush1.msra.mxu0 0.0
        %3424 = vmatprep.subr.mxu0 0.0
        %3425 = vmatpush1.msra.mxu0 0.0
        %3426 = vmatprep.subr.mxu0 0.0
        %3427 = vmatpush1.msra.mxu0 0.0
        %3428 = vmatprep.subr.mxu0 0.0
        %3429 = vmatpush1.msra.mxu0 0.0
        %3430 = vmatprep.subr.mxu0 0.0
        %3431 = vmatpush1.msra.mxu0 %v3255
        %3432 = vmatprep.subr.mxu0 0.0
        %3433 = vmatpush1.msra.mxu0 %v3254
        %3434 = vmatprep.subr.mxu0 0.0
        %3435 = vmatpush1.msra.mxu0 %v3253
        %3436 = vmatprep.subr.mxu0 0.0
        %3437 = vmatpush1.msra.mxu0 %v3252
        %3438 = vmatprep.subr.mxu0 0.0
        %3439 = vmatpush2.msra.mxu0 0.0
        %3440 = vmatprep.subr.mxu0 0.0
        %3441 = vmatpush2.msra.mxu0 0.0
        %3442 = vmatprep.subr.mxu0 0.0
        %3443 = vmatpush2.msra.mxu0 0.0
        %3444 = vmatprep.subr.mxu0 0.0
        %3445 = vmatpush2.msra.mxu0 0.0
        %3446 = vmatprep.subr.mxu0 0.0
        %3447 = vmatpush2.msra.mxu0 0.0
        %3448 = vmatprep.subr.mxu0 0.0
        %3449 = vmatpush2.msra.mxu0 0.0
        %3450 = vmatprep.subr.mxu0 0.0
        %3451 = vmatpush2.msra.mxu0 0.0
        %3452 = vmatprep.subr.mxu0 0.0
        %3453 = vmatpush2.msra.mxu0 0.0
        %3454 = vmatprep.subr.mxu0 0.0
        %3455 = vmatpush2.msra.mxu0 0.0
        %3456 = vmatprep.subr.mxu0 0.0
        %3457 = vmatpush2.msra.mxu0 0.0
        %3458 = vmatprep.subr.mxu0 0.0
        %3459 = vmatpush2.msra.mxu0 0.0
        %3460 = vmatprep.subr.mxu0 0.0
        %3461 = vmatpush2.msra.mxu0 0.0
        %3462 = vmatprep.subr.mxu0 0.0
        %3463 = vmatpush2.msra.mxu0 0.0
        %3464 = vmatprep.subr.mxu0 0.0
        %3465 = vmatpush2.msra.mxu0 0.0
        %3466 = vmatprep.subr.mxu0 0.0
        %3467 = vmatpush2.msra.mxu0 0.0
        %3468 = vmatprep.subr.mxu0 0.0
        %3469 = vmatpush2.msra.mxu0 0.0
        %3470 = vmatprep.mubr.f32.mxu0 0.0
        %3471 = vmatmul.mubr.f32.gmra.mxu0 %v2571
        %v3472 = vpop.f32.mrf.mxu0
        %v3473 = vadd.f32 0.0, %v3472
        %v3474 = vpop.f32.mrf.mxu0
        %3475 = vmatprep.mubr.f32.mxu0 0.0
        %3476 = vmatmul.mubr.f32.gmra.mxu0 %v2574
        %v3477 = vpop.f32.mrf.mxu0
        %v3478 = vadd.f32 0.0, %v3477
        %v3479 = vpop.f32.mrf.mxu0
        %3480 = vdwg.mxu0
        %v3481 = vadd.f32 %v3398, %v3473
        %v3482 = vadd.f32 %v3403, %v3478
        %v3483 = vlaneseq
        %v3484 = vshrl.u32 %v3483, 7
        %v3485 = vsub.s32 0, %v3484
        %v3486 = vrot.slane %v3242, %v3485
        %v3487 = vadd.f32 %v3481, %v3486
        %v3488 = vadd.f32 %v3482, %v3486
        %v3489 = vxor.u32 %v3487, 2147483648
        %v3490 = vxor.u32 %v3488, 2147483648
        %v3491 = vmul.f32 %v3489, 1.442695
        %v3492 = vpow.pop %v3491
        %v3493 = vmul.f32 %v3490, 1.442695
        %v3494 = vpow.pop %v3493
        %v3495 = vadd.f32 %v3492, 1.0
        %v3496 = vadd.f32 %v3494, 1.0
        %v3497 = vrcp.pop %v3495
        %v3498 = vmul.f32 1.0, %v3497
        %v3499 = vrcp.pop %v3496
        %v3500 = vmul.f32 1.0, %v3499
        %v3501 = vmul.f32 %v3240, %v3498
        %v3502 = vmul.f32 %v3241, %v3500
        %v3503 = vmul.f32 %v3501, %v2933
        %v3504 = vmul.f32 %v3502, %v2938
        %v3505 = vsel %vm2145, %v3503, 0.0
        %v3506 = vsel %vm2145, %v3504, 0.0
        %v3507 = vadd.f32 %v3505, %v3506
        %v3508 = vrot.slane %v3507, 4
        %v3509 = vadd.f32 %v3507, %v3508
        %v3510 = vrot.slane %v3509, 2
        %v3511 = vadd.f32 %v3509, %v3510
        %v3512 = vrot.slane %v3511, 1
        %v3513 = vadd.f32 %v3511, %v3512
        %v3514 = vmul.f32 %v3513, %v2956
        %v3515 = vsub.f32 %v3501, %v3514
        %v3516 = vsub.f32 %v3502, %v3514
        %v3517 = vmul.f32 %v3515, %v2933
        %v3518 = vmul.f32 %v3516, %v2938
        %v3519 = vmul.f32 %v3517, %v3517
        %v3520 = vmul.f32 %v3518, %v3518
        %v3521 = vsel %vm2145, %v3519, 0.0
        %v3522 = vsel %vm2145, %v3520, 0.0
        %v3523 = vadd.f32 %v3521, %v3522
        %v3524 = vrot.slane %v3523, 4
        %v3525 = vadd.f32 %v3523, %v3524
        %v3526 = vrot.slane %v3525, 2
        %v3527 = vadd.f32 %v3525, %v3526
        %v3528 = vrot.slane %v3527, 1
        %v3529 = vadd.f32 %v3527, %v3528
        %v3530 = vmul.f32 %v3529, %v2956
        %v3531 = vadd.f32 %v3530, 1e-05
        %v3532 = vrsqrt.pop %v3531
        %v3533 = vmul.f32 %v3515, %v3532
        %v3534 = vmul.f32 %v3516, %v3532
        %v3535 = vld [vmem:[#allocation20] sm:$0x1]
        %v3536 = vlaneseq
        %v3537 = vshrl.u32 %v3536, 7
        %v3538 = vsub.s32 0, %v3537
        %v3539 = vrot.slane %v3535, %v3538
        %v3540 = vmul.f32 %v3533, %v3539
        %v3541 = vmul.f32 %v3534, %v3539
        %v3542 = vld [vmem:[#allocation20 + $0x1] sm:$0x1]
        %v3543 = vlaneseq
        %v3544 = vshrl.u32 %v3543, 7
        %v3545 = vsub.s32 0, %v3544
        %v3546 = vrot.slane %v3542, %v3545
        %v3547 = vadd.f32 %v3540, %v3546
        %v3548 = vadd.f32 %v3541, %v3546
        %v3549 = vmul.f32 %v3547, %v2933
        %v3550 = vmul.f32 %v3548, %v2938
        %3551 = vst.msk [vmem:[%s963] sm:$0xff] %vm2145, %v3549
        %3552 = vst.msk [vmem:[%s963 + $0x8] sm:$0xff] %vm2145, %v3550
        %p3553 = scmp.lt.s32.totalorder %s46, 1
        %s3554 = scalar_select %p3553, %s46, 1
        %s3555 = smul.addr %s3554, 2
        %s3556 = smul.addr %s3555, 8
        %s3557 = scalar_lea.vmem %s19, %s3556
        %p3558 = scmp.lt.s32.totalorder %s46, 1
        %s3559 = scalar_select %p3558, %s46, 1
        %s3560 = smul.addr %s3559, 2
        %s3561 = smul.addr %s3560, 8
        %s3562 = scalar_lea.vmem %s20, %s3561
        %p3563 = scmp.lt.s32.totalorder %s46, 1
        %s3564 = scalar_select %p3563, %s46, 1
        %s3565 = smul.addr %s3564, 2
        %s3566 = smul.addr %s3565, 8
        %s3567 = scalar_lea.vmem %s21, %s3566
        %p3568 = scmp.lt.s32.totalorder %s46, 1
        %s3569 = scalar_select %p3568, %s46, 1
        %s3570 = smul.addr %s3569, 2
        %s3571 = smul.addr %s3570, 8
        %s3572 = scalar_lea.vmem %s22, %s3571
        %p3573 = scmp.lt.s32.totalorder %s46, 1
        %s3574 = scalar_select %p3573, %s46, 1
        %s3575 = smul.addr %s3574, 2
        %s3576 = smul.addr %s3575, 8
        %s3577 = scalar_lea.vmem %s23, %s3576
        // Predicated region
        $region145: #{variance_adaptor_forward.2} parent=95 // pred_check
          %p3578 = pneg %p478
        $region146: #{variance_adaptor_forward.2} parent=95 // pred_check_branch
          %3580 = sbr.rel (%p3578) target = $region148
        $region147: #{variance_adaptor_forward.2} parent=95 // pred_region
          _
        $region148: #{variance_adaptor_forward.2} parent=95 // pred_fallthru
          _
        // Predicated region
        $region149: #{variance_adaptor_forward.2} parent=95 // pred_check
          %p3581 = pneg %p504
        $region150: #{variance_adaptor_forward.2} parent=95 // pred_check_branch
          %3583 = sbr.rel (%p3581) target = $region152
        $region151: #{variance_adaptor_forward.2} parent=95 // pred_region
          _
        $region152: #{variance_adaptor_forward.2} parent=95 // pred_fallthru
          _
        // Predicated region
        $region153: #{variance_adaptor_forward.2} parent=95 // pred_check
          %p3584 = pneg %p530
        $region154: #{variance_adaptor_forward.2} parent=95 // pred_check_branch
          %3586 = sbr.rel (%p3584) target = $region156
        $region155: #{variance_adaptor_forward.2} parent=95 // pred_region
          _
        $region156: #{variance_adaptor_forward.2} parent=95 // pred_fallthru
          _
        // Predicated region
        $region157: #{variance_adaptor_forward.2} parent=95 // pred_check
          %p3587 = pneg %p556
        $region158: #{variance_adaptor_forward.2} parent=95 // pred_check_branch
          %3589 = sbr.rel (%p3587) target = $region160
        $region159: #{variance_adaptor_forward.2} parent=95 // pred_region
          _
        $region160: #{variance_adaptor_forward.2} parent=95 // pred_fallthru
          _
        // Predicated region
        $region161: #{variance_adaptor_forward.2} parent=95 // pred_check
          %p3590 = pneg %p582
        $region162: #{variance_adaptor_forward.2} parent=95 // pred_check_branch
          %3592 = sbr.rel (%p3590) target = $region164
        $region163: #{variance_adaptor_forward.2} parent=95 // pred_region
          _
        $region164: #{variance_adaptor_forward.2} parent=95 // pred_fallthru
          _
      $region96: #{variance_adaptor_forward.2} parent=5 // pred_fallthru
        _
      %p3593 = scmp.le.s32.totalorder 2, %s41
      // Predicated region
      $region165: #{variance_adaptor_forward.2} parent=5 // pred_check
        %p3594 = pneg %p3593
      $region166: #{variance_adaptor_forward.2} parent=5 // pred_check_branch
        %3596 = sbr.rel (%p3594) target = $region168
      $region167: #{variance_adaptor_forward.2} parent=5 // pred_region
        %s3597 = ssub.s32 %s41, 2
        // Predicated region
        $region169: #{variance_adaptor_forward.2} parent=167 // pred_check
          %p3598 = pneg %p484
        $region170: #{variance_adaptor_forward.2} parent=167 // pred_check_branch
          %3600 = sbr.rel (%p3598) target = $region172
        $region171: #{variance_adaptor_forward.2} parent=167 // pred_region
          %p3601 = scmp.lt.s32.totalorder %s47, 1
          %s3602 = scalar_select %p3601, %s47, 1
          %s3603 = smul.addr %s3602, 2
          %s3604 = smul.addr %s3603, 8
          %s3605 = scalar_lea.vmem %s19, %s3604
        $region172: #{variance_adaptor_forward.2} parent=167 // pred_fallthru
          _
        // Predicated region
        $region173: #{variance_adaptor_forward.2} parent=167 // pred_check
          %p3606 = pneg %p510
        $region174: #{variance_adaptor_forward.2} parent=167 // pred_check_branch
          %3608 = sbr.rel (%p3606) target = $region176
        $region175: #{variance_adaptor_forward.2} parent=167 // pred_region
          %p3609 = scmp.lt.s32.totalorder %s47, 1
          %s3610 = scalar_select %p3609, %s47, 1
          %s3611 = smul.addr %s3610, 2
          %s3612 = smul.addr %s3611, 8
          %s3613 = scalar_lea.vmem %s20, %s3612
        $region176: #{variance_adaptor_forward.2} parent=167 // pred_fallthru
          _
        // Predicated region
        $region177: #{variance_adaptor_forward.2} parent=167 // pred_check
          %p3614 = pneg %p536
        $region178: #{variance_adaptor_forward.2} parent=167 // pred_check_branch
          %3616 = sbr.rel (%p3614) target = $region180
        $region179: #{variance_adaptor_forward.2} parent=167 // pred_region
          %p3617 = scmp.lt.s32.totalorder %s47, 1
          %s3618 = scalar_select %p3617, %s47, 1
          %s3619 = smul.addr %s3618, 2
          %s3620 = smul.addr %s3619, 8
          %s3621 = scalar_lea.vmem %s21, %s3620
        $region180: #{variance_adaptor_forward.2} parent=167 // pred_fallthru
          _
        // Predicated region
        $region181: #{variance_adaptor_forward.2} parent=167 // pred_check
          %p3622 = pneg %p562
        $region182: #{variance_adaptor_forward.2} parent=167 // pred_check_branch
          %3624 = sbr.rel (%p3622) target = $region184
        $region183: #{variance_adaptor_forward.2} parent=167 // pred_region
          %p3625 = scmp.lt.s32.totalorder %s47, 1
          %s3626 = scalar_select %p3625, %s47, 1
          %s3627 = smul.addr %s3626, 2
          %s3628 = smul.addr %s3627, 8
          %s3629 = scalar_lea.vmem %s22, %s3628
        $region184: #{variance_adaptor_forward.2} parent=167 // pred_fallthru
          _
        // Predicated region
        $region185: #{variance_adaptor_forward.2} parent=167 // pred_check
          %p3630 = pneg %p588
        $region186: #{variance_adaptor_forward.2} parent=167 // pred_check_branch
          %3632 = sbr.rel (%p3630) target = $region188
        $region187: #{variance_adaptor_forward.2} parent=167 // pred_region
          %p3633 = scmp.lt.s32.totalorder %s47, 1
          %s3634 = scalar_select %p3633, %s47, 1
          %s3635 = smul.addr %s3634, 2
          %s3636 = smul.addr %s3635, 8
          %s3637 = scalar_lea.vmem %s23, %s3636
        $region188: #{variance_adaptor_forward.2} parent=167 // pred_fallthru
          _
      $region168: #{variance_adaptor_forward.2} parent=5 // pred_fallthru
        _
    $region6: #{variance_adaptor_forward.2} parent=1 // loop_footer
      %s45 = sadd.s32 1, %s41
    $region7: #{variance_adaptor_forward.2} parent=1 // loop_footer_branch
      %40 = sbr.rel target = $region3
    $region8: #{variance_adaptor_forward.2} parent=1 // loop_exit
      _
    %3638 = vsyncpa [#allocation4], 1
    %s3639 = scalar_lea.sflag [#allocation4], 1
    %3640 = vsyncpa %s3639, 1
    %3641 = vsyncpa [#allocation6], 1
    %3642 = vsyncpa [#allocation9], 1
    %3643 = vsyncpa [#allocation12], 1
    %3644 = vsyncpa [#allocation15], 1
    %3645 = vsyncpa [#allocation18], 1
    %3646 = vsyncpa [#allocation21], 1

// kernel: variance_adaptor_forward.3
$region0: #{variance_adaptor_forward.3}
  #allocation0 [shape = 'u32[]', space=smem, size = 0x4, offset = 0x4, fixed_abs, tag = 'smem constant byte address 0x4 - core index']
  #allocation1 [shape = 'u32[144,128]{1,0:T(1,128)}', space=vmem, size = 0x12000, scoped, tag = 'internal scratch']
  %s0 = inlined_call_operand.vmem [shape: f32[2,2,256], index: 0, kind: input, shape index: {}]
  %s1 = inlined_call_operand.vmem [shape: f32[2,4,16], index: 1, kind: input, shape index: {}]
  %s2 = inlined_call_operand.vmem [shape: f32[2,16,32], index: 2, kind: input, shape index: {}]
  %s3 = inlined_call_operand.vmem [shape: f32[2,31,1], index: 3, kind: input, shape index: {}]
  %s4 = inlined_call_operand.vmem [shape: f32[2,1,16], index: 4, kind: input, shape index: {}]
  %s5 = inlined_call_operand.vmem [shape: f32[2,256], index: 5, kind: input, shape index: {}]
  %s6 = inlined_call_operand.vmem [shape: f32[2,256,256], index: 6, kind: input, shape index: {}]
  %s7 = inlined_call_operand.vmem [shape: f32[2,256], index: 7, kind: input, shape index: {}]
  %s8 = inlined_call_operand.vmem [shape: f32[256,16], index: 8, kind: input, shape index: {}]
  %s9 = inlined_call_operand.vmem [shape: f32[3,32], index: 9, kind: input, shape index: {}]
  %s10 = inlined_call_operand.vmem [shape: f32[1,16], index: 10, kind: input, shape index: {}]
  %s11 = inlined_call_operand.vmem [shape: f32[2,31,32], index: 11, kind: output, shape index: {}]
  %s12 = sld [smem:[#allocation0]]
  $region77: #{variance_adaptor_forward.3} parent=0
    _
  %s14 = ssub.s32 1, %s12
  %s15 = scalar_select 0, %s14, %s12
  loop: start=0, step=1, limit=4
  $region2: #{variance_adaptor_forward.3} parent=0 // loop_pre_header
    _
  $region3: #{variance_adaptor_forward.3} parent=0 // loop_header
    %s17 = sphi 0, %s21
    %p18 = scmp.ge.s32.totalorder %s17, 4
    %s24 = sphi 0, %s36
    %s25 = sphi 0, %s32
    %s26 = sphi 0, %s24
    %s27 = sphi 0, %s25
    %s28 = sphi 0, %s26
    %s29 = sphi 0, %s27
    %s39 = sphi 0, %s41
    %s42 = sphi 0, %s39
    %s43 = sphi 0, %s42
    %s59 = sphi 0, %s43
    %s65 = sphi 0, %s67
    %s68 = sphi 0, %s65
    %s69 = sphi 0, %s68
    %s85 = sphi 0, %s69
    %s91 = sphi 0, %s93
    %s94 = sphi 0, %s91
    %s95 = sphi 0, %s94
    %s111 = sphi 0, %s95
    %s119 = sphi 0, %s121
    %s122 = sphi 0, %s119
    %s123 = sphi 0, %s122
    %s139 = sphi 0, %s123
    %s145 = sphi 0, %s147
    %s148 = sphi 0, %s145
    %s149 = sphi 0, %s148
    %s165 = sphi 0, %s149
    %s169 = sphi 0, %s169
    %s171 = sphi 0, %s169
    %s172 = sphi 0, %s171
    %s186 = sphi 0, %s172
    %s190 = sphi 0, %s190
    %s192 = sphi 0, %s190
    %s193 = sphi 0, %s192
    %s207 = sphi 0, %s193
    %s211 = sphi 0, %s211
    %s213 = sphi 0, %s211
    %s214 = sphi 0, %s213
    %s228 = sphi 0, %s214
    %s232 = sphi 0, %s232
    %s234 = sphi 0, %s232
    %s235 = sphi 0, %s234
    %s249 = sphi 0, %s235
    %s253 = sphi 0, %s253
    %s255 = sphi 0, %s253
    %s256 = sphi 0, %s255
    %s270 = sphi 0, %s256
    %s274 = sphi 0, %s274
    %s276 = sphi 0, %s274
    %s277 = sphi 0, %s276
    %s291 = sphi 0, %s277
    %s299 = sphi 0, %s301
    %s302 = sphi 0, %s299
    %s303 = sphi 0, %s302
    %s319 = sphi 0, %s303
  $region4: #{variance_adaptor_forward.3} parent=0 // loop_header_branch
    %20 = sbr.rel (%p18) target = $region8
  $region5: #{variance_adaptor_forward.3} parent=0 // loop_body
    %s22 = ssub.s32 %s17, 1
    %s23 = ssub.s32 %s17, 2
    %s30 = sadd.s32 1, %s25
    %p31 = scmp.ge.s32.totalorder %s30, 1
    %s32 = scalar_select %p31, 0, %s30
    %s33 = sadd.s32 1, %s24
    %s34 = scalar_select %p31, %s33, %s24
    %p35 = scmp.ge.s32.totalorder %s34, 2
    %s36 = scalar_select %p35, 0, %s34
    %s37 = ssub.s32 %s24, %s36
    %p38 = scmp.eq.s32.totalorder %s37, 0
    %s40 = sadd.s32 %s39, 1
    %s41 = scalar_select %p38, %s39, %s40
    %p44 = pneg %p38
    %p45 = scmp.eq.s32.totalorder %s17, 1
    %p46 = por %p44, %p45
    %p47 = scmp.ne.s32.totalorder %s39, %s42
    %p48 = scmp.eq.s32.totalorder %s17, 0
    %p49 = por %p47, %p48
    %p50 = scmp.ne.s32.totalorder %s39, %s42
    %p51 = scmp.eq.s32.totalorder %s22, 1
    %p52 = por %p50, %p51
    %p53 = scmp.ne.s32.totalorder %s42, %s43
    %p54 = scmp.eq.s32.totalorder %s22, 0
    %p55 = por %p53, %p54
    %p56 = scmp.ne.s32.totalorder %s42, %s43
    %p57 = scmp.eq.s32.totalorder %s23, 1
    %p58 = por %p56, %p57
    %p60 = scmp.ne.s32.totalorder %s43, %s59
    %p61 = scmp.eq.s32.totalorder %s23, 0
    %p62 = por %p60, %p61
    %s63 = ssub.s32 %s24, %s36
    %p64 = scmp.eq.s32.totalorder %s63, 0
    %s66 = sadd.s32 %s65, 1
    %s67 = scalar_select %p64, %s65, %s66
    %p70 = pneg %p64
    %p71 = scmp.eq.s32.totalorder %s17, 1
    %p72 = por %p70, %p71
    %p73 = scmp.ne.s32.totalorder %s65, %s68
    %p74 = scmp.eq.s32.totalorder %s17, 0
    %p75 = por %p73, %p74
    %p76 = scmp.ne.s32.totalorder %s65, %s68
    %p77 = scmp.eq.s32.totalorder %s22, 1
    %p78 = por %p76, %p77
    %p79 = scmp.ne.s32.totalorder %s68, %s69
    %p80 = scmp.eq.s32.totalorder %s22, 0
    %p81 = por %p79, %p80
    %p82 = scmp.ne.s32.totalorder %s68, %s69
    %p83 = scmp.eq.s32.totalorder %s23, 1
    %p84 = por %p82, %p83
    %p86 = scmp.ne.s32.totalorder %s69, %s85
    %p87 = scmp.eq.s32.totalorder %s23, 0
    %p88 = por %p86, %p87
    %s89 = ssub.s32 %s24, %s36
    %p90 = scmp.eq.s32.totalorder %s89, 0
    %s92 = sadd.s32 %s91, 1
    %s93 = scalar_select %p90, %s91, %s92
    %p96 = pneg %p90
    %p97 = scmp.eq.s32.totalorder %s17, 1
    %p98 = por %p96, %p97
    %p99 = scmp.ne.s32.totalorder %s91, %s94
    %p100 = scmp.eq.s32.totalorder %s17, 0
    %p101 = por %p99, %p100
    %p102 = scmp.ne.s32.totalorder %s91, %s94
    %p103 = scmp.eq.s32.totalorder %s22, 1
    %p104 = por %p102, %p103
    %p105 = scmp.ne.s32.totalorder %s94, %s95
    %p106 = scmp.eq.s32.totalorder %s22, 0
    %p107 = por %p105, %p106
    %p108 = scmp.ne.s32.totalorder %s94, %s95
    %p109 = scmp.eq.s32.totalorder %s23, 1
    %p110 = por %p108, %p109
    %p112 = scmp.ne.s32.totalorder %s95, %s111
    %p113 = scmp.eq.s32.totalorder %s23, 0
    %p114 = por %p112, %p113
    %s115 = ssub.s32 %s24, %s36
    %s116 = ssub.s32 %s25, %s32
    %s117 = sor.u32 %s115, %s116
    %p118 = scmp.eq.s32.totalorder %s117, 0
    %s120 = sadd.s32 %s119, 1
    %s121 = scalar_select %p118, %s119, %s120
    %p124 = pneg %p118
    %p125 = scmp.eq.s32.totalorder %s17, 1
    %p126 = por %p124, %p125
    %p127 = scmp.ne.s32.totalorder %s119, %s122
    %p128 = scmp.eq.s32.totalorder %s17, 0
    %p129 = por %p127, %p128
    %p130 = scmp.ne.s32.totalorder %s119, %s122
    %p131 = scmp.eq.s32.totalorder %s22, 1
    %p132 = por %p130, %p131
    %p133 = scmp.ne.s32.totalorder %s122, %s123
    %p134 = scmp.eq.s32.totalorder %s22, 0
    %p135 = por %p133, %p134
    %p136 = scmp.ne.s32.totalorder %s122, %s123
    %p137 = scmp.eq.s32.totalorder %s23, 1
    %p138 = por %p136, %p137
    %p140 = scmp.ne.s32.totalorder %s123, %s139
    %p141 = scmp.eq.s32.totalorder %s23, 0
    %p142 = por %p140, %p141
    %s143 = ssub.s32 %s24, %s36
    %p144 = scmp.eq.s32.totalorder %s143, 0
    %s146 = sadd.s32 %s145, 1
    %s147 = scalar_select %p144, %s145, %s146
    %p150 = pneg %p144
    %p151 = scmp.eq.s32.totalorder %s17, 1
    %p152 = por %p150, %p151
    %p153 = scmp.ne.s32.totalorder %s145, %s148
    %p154 = scmp.eq.s32.totalorder %s17, 0
    %p155 = por %p153, %p154
    %p156 = scmp.ne.s32.totalorder %s145, %s148
    %p157 = scmp.eq.s32.totalorder %s22, 1
    %p158 = por %p156, %p157
    %p159 = scmp.ne.s32.totalorder %s148, %s149
    %p160 = scmp.eq.s32.totalorder %s22, 0
    %p161 = por %p159, %p160
    %p162 = scmp.ne.s32.totalorder %s148, %s149
    %p163 = scmp.eq.s32.totalorder %s23, 1
    %p164 = por %p162, %p163
    %p166 = scmp.ne.s32.totalorder %s149, %s165
    %p167 = scmp.eq.s32.totalorder %s23, 0
    %p168 = por %p166, %p167
    %s170 = sadd.s32 %s169, 1
    %p173 = scmp.eq.s32.totalorder %s17, 1
    %p174 = scmp.ne.s32.totalorder %s169, %s171
    %p175 = scmp.eq.s32.totalorder %s17, 0
    %p176 = por %p174, %p175
    %p177 = scmp.ne.s32.totalorder %s169, %s171
    %p178 = scmp.eq.s32.totalorder %s22, 1
    %p179 = por %p177, %p178
    %p180 = scmp.ne.s32.totalorder %s171, %s172
    %p181 = scmp.eq.s32.totalorder %s22, 0
    %p182 = por %p180, %p181
    %p183 = scmp.ne.s32.totalorder %s171, %s172
    %p184 = scmp.eq.s32.totalorder %s23, 1
    %p185 = por %p183, %p184
    %p187 = scmp.ne.s32.totalorder %s172, %s186
    %p188 = scmp.eq.s32.totalorder %s23, 0
    %p189 = por %p187, %p188
    %s191 = sadd.s32 %s190, 1
    %p194 = scmp.eq.s32.totalorder %s17, 1
    %p195 = scmp.ne.s32.totalorder %s190, %s192
    %p196 = scmp.eq.s32.totalorder %s17, 0
    %p197 = por %p195, %p196
    %p198 = scmp.ne.s32.totalorder %s190, %s192
    %p199 = scmp.eq.s32.totalorder %s22, 1
    %p200 = por %p198, %p199
    %p201 = scmp.ne.s32.totalorder %s192, %s193
    %p202 = scmp.eq.s32.totalorder %s22, 0
    %p203 = por %p201, %p202
    %p204 = scmp.ne.s32.totalorder %s192, %s193
    %p205 = scmp.eq.s32.totalorder %s23, 1
    %p206 = por %p204, %p205
    %p208 = scmp.ne.s32.totalorder %s193, %s207
    %p209 = scmp.eq.s32.totalorder %s23, 0
    %p210 = por %p208, %p209
    %s212 = sadd.s32 %s211, 1
    %p215 = scmp.eq.s32.totalorder %s17, 1
    %p216 = scmp.ne.s32.totalorder %s211, %s213
    %p217 = scmp.eq.s32.totalorder %s17, 0
    %p218 = por %p216, %p217
    %p219 = scmp.ne.s32.totalorder %s211, %s213
    %p220 = scmp.eq.s32.totalorder %s22, 1
    %p221 = por %p219, %p220
    %p222 = scmp.ne.s32.totalorder %s213, %s214
    %p223 = scmp.eq.s32.totalorder %s22, 0
    %p224 = por %p222, %p223
    %p225 = scmp.ne.s32.totalorder %s213, %s214
    %p226 = scmp.eq.s32.totalorder %s23, 1
    %p227 = por %p225, %p226
    %p229 = scmp.ne.s32.totalorder %s214, %s228
    %p230 = scmp.eq.s32.totalorder %s23, 0
    %p231 = por %p229, %p230
    %s233 = sadd.s32 %s232, 1
    %p236 = scmp.eq.s32.totalorder %s17, 1
    %p237 = scmp.ne.s32.totalorder %s232, %s234
    %p238 = scmp.eq.s32.totalorder %s17, 0
    %p239 = por %p237, %p238
    %p240 = scmp.ne.s32.totalorder %s232, %s234
    %p241 = scmp.eq.s32.totalorder %s22, 1
    %p242 = por %p240, %p241
    %p243 = scmp.ne.s32.totalorder %s234, %s235
    %p244 = scmp.eq.s32.totalorder %s22, 0
    %p245 = por %p243, %p244
    %p246 = scmp.ne.s32.totalorder %s234, %s235
    %p247 = scmp.eq.s32.totalorder %s23, 1
    %p248 = por %p246, %p247
    %p250 = scmp.ne.s32.totalorder %s235, %s249
    %p251 = scmp.eq.s32.totalorder %s23, 0
    %p252 = por %p250, %p251
    %s254 = sadd.s32 %s253, 1
    %p257 = scmp.eq.s32.totalorder %s17, 1
    %p258 = scmp.ne.s32.totalorder %s253, %s255
    %p259 = scmp.eq.s32.totalorder %s17, 0
    %p260 = por %p258, %p259
    %p261 = scmp.ne.s32.totalorder %s253, %s255
    %p262 = scmp.eq.s32.totalorder %s22, 1
    %p263 = por %p261, %p262
    %p264 = scmp.ne.s32.totalorder %s255, %s256
    %p265 = scmp.eq.s32.totalorder %s22, 0
    %p266 = por %p264, %p265
    %p267 = scmp.ne.s32.totalorder %s255, %s256
    %p268 = scmp.eq.s32.totalorder %s23, 1
    %p269 = por %p267, %p268
    %p271 = scmp.ne.s32.totalorder %s256, %s270
    %p272 = scmp.eq.s32.totalorder %s23, 0
    %p273 = por %p271, %p272
    %s275 = sadd.s32 %s274, 1
    %p278 = scmp.eq.s32.totalorder %s17, 1
    %p279 = scmp.ne.s32.totalorder %s274, %s276
    %p280 = scmp.eq.s32.totalorder %s17, 0
    %p281 = por %p279, %p280
    %p282 = scmp.ne.s32.totalorder %s274, %s276
    %p283 = scmp.eq.s32.totalorder %s22, 1
    %p284 = por %p282, %p283
    %p285 = scmp.ne.s32.totalorder %s276, %s277
    %p286 = scmp.eq.s32.totalorder %s22, 0
    %p287 = por %p285, %p286
    %p288 = scmp.ne.s32.totalorder %s276, %s277
    %p289 = scmp.eq.s32.totalorder %s23, 1
    %p290 = por %p288, %p289
    %p292 = scmp.ne.s32.totalorder %s277, %s291
    %p293 = scmp.eq.s32.totalorder %s23, 0
    %p294 = por %p292, %p293
    %s295 = ssub.s32 %s24, %s36
    %s296 = ssub.s32 %s25, %s32
    %s297 = sor.u32 %s295, %s296
    %p298 = scmp.eq.s32.totalorder %s297, 0
    %s300 = sadd.s32 %s299, 1
    %s301 = scalar_select %p298, %s299, %s300
    %p304 = pneg %p298
    %p305 = scmp.eq.s32.totalorder %s17, 1
    %p306 = por %p304, %p305
    %p307 = scmp.ne.s32.totalorder %s299, %s302
    %p308 = scmp.eq.s32.totalorder %s17, 0
    %p309 = por %p307, %p308
    %p310 = scmp.ne.s32.totalorder %s299, %s302
    %p311 = scmp.eq.s32.totalorder %s22, 1
    %p312 = por %p310, %p311
    %p313 = scmp.ne.s32.totalorder %s302, %s303
    %p314 = scmp.eq.s32.totalorder %s22, 0
    %p315 = por %p313, %p314
    %p316 = scmp.ne.s32.totalorder %s302, %s303
    %p317 = scmp.eq.s32.totalorder %s23, 1
    %p318 = por %p316, %p317
    %p320 = scmp.ne.s32.totalorder %s303, %s319
    %p321 = scmp.eq.s32.totalorder %s23, 0
    %p322 = por %p320, %p321
    %p323 = scmp.le.s32.totalorder 1, %s17
    %p324 = scmp.lt.s32.totalorder %s17, 3
    %p325 = pnand %p323, %p324
    %p326 = pneg %p325
    // Predicated region
    $region9: #{variance_adaptor_forward.3} parent=5 // pred_check
      _
    $region10: #{variance_adaptor_forward.3} parent=5 // pred_check_branch
      %328 = sbr.rel (%p325) target = $region12
    $region11: #{variance_adaptor_forward.3} parent=5 // pred_region
      %s329 = ssub.s32 %s17, 1
      // Predicated region
      $region13: #{variance_adaptor_forward.3} parent=11 // pred_check
        %p330 = pneg %p182
      $region14: #{variance_adaptor_forward.3} parent=11 // pred_check_branch
        %332 = sbr.rel (%p330) target = $region16
      $region15: #{variance_adaptor_forward.3} parent=11 // pred_region
        _
      $region16: #{variance_adaptor_forward.3} parent=11 // pred_fallthru
        _
      // Predicated region
      $region17: #{variance_adaptor_forward.3} parent=11 // pred_check
        %p333 = pneg %p203
      $region18: #{variance_adaptor_forward.3} parent=11 // pred_check_branch
        %335 = sbr.rel (%p333) target = $region20
      $region19: #{variance_adaptor_forward.3} parent=11 // pred_region
        _
      $region20: #{variance_adaptor_forward.3} parent=11 // pred_fallthru
        _
      // Predicated region
      $region21: #{variance_adaptor_forward.3} parent=11 // pred_check
        %p336 = pneg %p224
      $region22: #{variance_adaptor_forward.3} parent=11 // pred_check_branch
        %338 = sbr.rel (%p336) target = $region24
      $region23: #{variance_adaptor_forward.3} parent=11 // pred_region
        _
      $region24: #{variance_adaptor_forward.3} parent=11 // pred_fallthru
        _
      // Predicated region
      $region25: #{variance_adaptor_forward.3} parent=11 // pred_check
        %p339 = pneg %p245
      $region26: #{variance_adaptor_forward.3} parent=11 // pred_check_branch
        %341 = sbr.rel (%p339) target = $region28
      $region27: #{variance_adaptor_forward.3} parent=11 // pred_region
        _
      $region28: #{variance_adaptor_forward.3} parent=11 // pred_fallthru
        _
      // Predicated region
      $region29: #{variance_adaptor_forward.3} parent=11 // pred_check
        %p342 = pneg %p266
      $region30: #{variance_adaptor_forward.3} parent=11 // pred_check_branch
        %344 = sbr.rel (%p342) target = $region32
      $region31: #{variance_adaptor_forward.3} parent=11 // pred_region
        _
      $region32: #{variance_adaptor_forward.3} parent=11 // pred_fallthru
        _
      // Predicated region
      $region33: #{variance_adaptor_forward.3} parent=11 // pred_check
        %p345 = pneg %p287
      $region34: #{variance_adaptor_forward.3} parent=11 // pred_check_branch
        %347 = sbr.rel (%p345) target = $region36
      $region35: #{variance_adaptor_forward.3} parent=11 // pred_region
        _
      $region36: #{variance_adaptor_forward.3} parent=11 // pred_fallthru
        _
    $region12: #{variance_adaptor_forward.3} parent=5 // pred_fallthru
      _
    %p348 = scmp.lt.s32.totalorder %s17, 2
    // Predicated region
    $region37: #{variance_adaptor_forward.3} parent=5 // pred_check
      %p349 = pneg %p348
    $region38: #{variance_adaptor_forward.3} parent=5 // pred_check_branch
      %351 = sbr.rel (%p349) target = $region40
    $region39: #{variance_adaptor_forward.3} parent=5 // pred_region
      // Predicated region
      $region41: #{variance_adaptor_forward.3} parent=39 // pred_check
        %p352 = pneg %p49
      $region42: #{variance_adaptor_forward.3} parent=39 // pred_check_branch
        %354 = sbr.rel (%p352) target = $region44
      $region43: #{variance_adaptor_forward.3} parent=39 // pred_region
        %p355 = scmp.lt.s32.totalorder %s24, 1
        %s356 = scalar_select %p355, %s24, 1
        %s357 = smul.addr %s356, 2
        %s358 = smul.addr %s357, 2
        %s359 = scalar_lea.vmem %s0, %s358
      $region44: #{variance_adaptor_forward.3} parent=39 // pred_fallthru
        _
      // Predicated region
      $region45: #{variance_adaptor_forward.3} parent=39 // pred_check
        %p360 = pneg %p75
      $region46: #{variance_adaptor_forward.3} parent=39 // pred_check_branch
        %362 = sbr.rel (%p360) target = $region48
      $region47: #{variance_adaptor_forward.3} parent=39 // pred_region
        %p363 = scmp.lt.s32.totalorder %s24, 1
        %s364 = scalar_select %p363, %s24, 1
        %s365 = smul.addr %s364, 4
        %s366 = scalar_lea.vmem %s1, %s365
      $region48: #{variance_adaptor_forward.3} parent=39 // pred_fallthru
        _
      // Predicated region
      $region49: #{variance_adaptor_forward.3} parent=39 // pred_check
        %p367 = pneg %p101
      $region50: #{variance_adaptor_forward.3} parent=39 // pred_check_branch
        %369 = sbr.rel (%p367) target = $region52
      $region51: #{variance_adaptor_forward.3} parent=39 // pred_region
        %p370 = scmp.lt.s32.totalorder %s24, 1
        %s371 = scalar_select %p370, %s24, 1
        %s372 = smul.addr %s371, 2
        %s373 = smul.addr %s372, 8
        %s374 = scalar_lea.vmem %s2, %s373
      $region52: #{variance_adaptor_forward.3} parent=39 // pred_fallthru
        _
      // Predicated region
      $region53: #{variance_adaptor_forward.3} parent=39 // pred_check
        %p375 = pneg %p129
      $region54: #{variance_adaptor_forward.3} parent=39 // pred_check_branch
        %377 = sbr.rel (%p375) target = $region56
      $region55: #{variance_adaptor_forward.3} parent=39 // pred_region
        %s378 = smul.u32 4, %s25
        %p379 = scmp.lt.s32.totalorder %s24, 1
        %s380 = scalar_select %p379, %s24, 1
        %p381 = scmp.lt.s32.totalorder %s378, 3
        %s382 = scalar_select %p381, %s378, 3
        %s383 = smul.addr %s380, 4
        %s384 = sadd.s32 %s382, %s383
        %s385 = smul.addr %s384, 8
        %s386 = scalar_lea.vmem %s3, %s385
        %s387 = smul.u32 4, %s25
      $region56: #{variance_adaptor_forward.3} parent=39 // pred_fallthru
        _
      // Predicated region
      $region57: #{variance_adaptor_forward.3} parent=39 // pred_check
        %p388 = pneg %p155
      $region58: #{variance_adaptor_forward.3} parent=39 // pred_check_branch
        %390 = sbr.rel (%p388) target = $region60
      $region59: #{variance_adaptor_forward.3} parent=39 // pred_region
        %p391 = scmp.lt.s32.totalorder %s24, 1
        %s392 = scalar_select %p391, %s24, 1
        %s393 = scalar_lea.vmem %s4, %s392
      $region60: #{variance_adaptor_forward.3} parent=39 // pred_fallthru
        _
    $region40: #{variance_adaptor_forward.3} parent=5 // pred_fallthru
      _
    %p394 = scmp.le.s32.totalorder 1, %s17
    %p395 = scmp.lt.s32.totalorder %s17, 3
    %p396 = pnand %p394, %p395
    %p397 = pneg %p396
    // Predicated region
    $region61: #{variance_adaptor_forward.3} parent=5 // pred_check
      _
    $region62: #{variance_adaptor_forward.3} parent=5 // pred_check_branch
      %399 = sbr.rel (%p396) target = $region64
    $region63: #{variance_adaptor_forward.3} parent=5 // pred_region
      %s400 = ssub.s32 %s17, 1
      %p401 = scmp.lt.s32.totalorder %s26, 1
      %s402 = scalar_select %p401, %s26, 1
      %s403 = smul.addr %s402, 2
      %s404 = smul.addr %s403, 2
      %s405 = scalar_lea.vmem %s0, %s404
      %p406 = pneg %p55
      %p407 = pneg %p52
      %p408 = scmp.lt.s32.totalorder %s26, 1
      %s409 = scalar_select %p408, %s26, 1
      %s410 = smul.addr %s409, 4
      %s411 = scalar_lea.vmem %s1, %s410
      %p412 = pneg %p81
      %p413 = pneg %p78
      %p414 = scmp.lt.s32.totalorder %s26, 1
      %s415 = scalar_select %p414, %s26, 1
      %s416 = smul.addr %s415, 2
      %s417 = smul.addr %s416, 8
      %s418 = scalar_lea.vmem %s2, %s417
      %p419 = pneg %p107
      %p420 = pneg %p104
      %s421 = smul.u32 4, %s27
      %p422 = scmp.lt.s32.totalorder %s26, 1
      %s423 = scalar_select %p422, %s26, 1
      %p424 = scmp.lt.s32.totalorder %s421, 3
      %s425 = scalar_select %p424, %s421, 3
      %s426 = smul.addr %s423, 4
      %s427 = sadd.s32 %s425, %s426
      %s428 = smul.addr %s427, 8
      %s429 = scalar_lea.vmem %s3, %s428
      %p430 = pneg %p135
      %p431 = pneg %p132
      %p432 = scmp.lt.s32.totalorder %s26, 1
      %s433 = scalar_select %p432, %s26, 1
      %s434 = scalar_lea.vmem %s4, %s433
      %p435 = pneg %p161
      %p436 = pneg %p158
      %p437 = pneg %p182
      %p438 = pneg %p179
      %p439 = pneg %p203
      %p440 = pneg %p200
      %p441 = pneg %p224
      %p442 = pneg %p221
      %p443 = pneg %p245
      %p444 = pneg %p242
      %p445 = pneg %p266
      %p446 = pneg %p263
      %p447 = pneg %p287
      %p448 = pneg %p284
      %p449 = pneg %p315
      %p450 = pneg %p312
      %s451 = smul.u32 4, %s27
      %p452 = scmp.lt.s32.totalorder %s26, 1
      %s453 = scalar_select %p452, %s26, 1
      %p454 = scmp.lt.s32.totalorder %s451, 3
      %s455 = scalar_select %p454, %s451, 3
      %s456 = smul.addr %s453, 4
      %s457 = sadd.s32 %s455, %s456
      %s458 = smul.addr %s457, 8
      %s459 = scalar_lea.vmem %s11, %s458
      %p460 = scmp.lt.s32.totalorder %s26, 1
      %s461 = scalar_select %p460, %s26, 1
      %s462 = smul.addr %s461, 2
      %s463 = smul.addr %s462, 2
      %s464 = scalar_lea.vmem %s0, %s463
      %p465 = scmp.lt.s32.totalorder %s26, 1
      %s466 = scalar_select %p465, %s26, 1
      %s467 = smul.addr %s466, 4
      %s468 = scalar_lea.vmem %s1, %s467
      %p469 = scmp.lt.s32.totalorder %s26, 1
      %s470 = scalar_select %p469, %s26, 1
      %s471 = smul.addr %s470, 2
      %s472 = smul.addr %s471, 8
      %s473 = scalar_lea.vmem %s2, %s472
      %s474 = smul.u32 4, %s27
      %p475 = scmp.lt.s32.totalorder %s26, 1
      %s476 = scalar_select %p475, %s26, 1
      %p477 = scmp.lt.s32.totalorder %s474, 3
      %s478 = scalar_select %p477, %s474, 3
      %s479 = smul.addr %s476, 4
      %s480 = sadd.s32 %s478, %s479
      %s481 = smul.addr %s480, 8
      %s482 = scalar_lea.vmem %s3, %s481
      %s483 = smul.u32 4, %s27
      %p484 = scmp.lt.s32.totalorder %s26, 1
      %s485 = scalar_select %p484, %s26, 1
      %s486 = scalar_lea.vmem %s4, %s485
      %s487 = smul.u32 4, %s27
      %p488 = scmp.lt.s32.totalorder %s26, 1
      %s489 = scalar_select %p488, %s26, 1
      %p490 = scmp.lt.s32.totalorder %s487, 3
      %s491 = scalar_select %p490, %s487, 3
      %s492 = smul.addr %s489, 4
      %s493 = sadd.s32 %s491, %s492
      %s494 = smul.addr %s493, 8
      %s495 = scalar_lea.vmem %s11, %s494
      %s496 = smul.u32 4, %s27
      %s497 = smul.u32 %s27, 31
      %v498 = vlaneseq
      %v499 = vshrl.u32 %v498, 7
      %v500 = vadd.s32 %v499, 8
      %v501 = vadd.s32 %v499, 16
      %v502 = vadd.s32 %v499, 24
      %v503 = vstv %s497
      %v504 = vadd.s32 %v499, %v503
      %v505 = vadd.s32 %v500, %v503
      %v506 = vadd.s32 %v501, %v503
      %v507 = vadd.s32 %v502, %v503
      %v508 = vcvt.s32.f32 %v504
      %v509 = vcvt.s32.f32 %v505
      %v510 = vcvt.s32.f32 %v506
      %v511 = vcvt.s32.f32 %v507
      %v512 = vld [vmem:[%s482] sm:$0xff]
      %v513 = vld [vmem:[%s482 + $0x8] sm:$0xff]
      %v514 = vld [vmem:[%s482 + $0x10] sm:$0xff]
      %v515 = vld [vmem:[%s482 + $0x18] sm:$0x7f]
      %v516 = vld [vmem:[%s486] sm:$0x1]
      %518 = vset.pattern.permute.xlu0 0
      %519 = vperm.xlu0 %518, %v512
      %v520 = vpop.permute.xlu0 %519
      %523 = vset.pattern.permute.xlu0 0
      %524 = vperm.xlu0 %523, %v513
      %v525 = vpop.permute.xlu0 %524
      %528 = vset.pattern.permute.xlu0 0
      %529 = vperm.xlu0 %528, %v514
      %v530 = vpop.permute.xlu0 %529
      %533 = vset.pattern.permute.xlu0 0
      %534 = vperm.xlu0 %533, %v515
      %v535 = vpop.permute.xlu0 %534
      %v538 = vlaneseq
      %v539 = vshrl.u32 %v538, 7
      %v540 = vsub.s32 0, %v539
      %v541 = vrot.slane %v516, %v540
      %v543 = vmul.f32 %v520, %v541
      %v544 = vmul.f32 %v525, %v541
      %v545 = vmul.f32 %v530, %v541
      %v546 = vmul.f32 %v535, %v541
      %v547 = vld [vmem:[%s464] sm:$0xf]
      %v548 = vld [vmem:[%s5] ss:$2 sm:$0x3]
      %v550 = vlaneseq
      %v551 = vshrl.u32 %v550, 7
      %v552 = vsub.s32 0, %v551
      %v553 = vrot.slane %v548, %v552
      %v554 = vlaneseq
      %v555 = vshrl.u32 %v554, 7
      %v556 = vsub.s32 1, %v555
      %v557 = vrot.slane %v548, %v556
      %v560 = vmul.f32 %v508, %v553
      %v561 = vmul.f32 %v508, %v557
      %v562 = vmul.f32 %v509, %v553
      %v563 = vmul.f32 %v509, %v557
      %v564 = vmul.f32 %v510, %v553
      %v565 = vmul.f32 %v510, %v557
      %v566 = vmul.f32 %v511, %v553
      %v567 = vmul.f32 %v511, %v557
      %v569 = vlaneseq
      %v570 = vshrl.u32 %v569, 7
      %v571 = vsub.s32 0, %v570
      %v572 = vrot.slane %v547, %v571
      %v573 = vlaneseq
      %v574 = vshrl.u32 %v573, 7
      %v575 = vsub.s32 2, %v574
      %v576 = vrot.slane %v547, %v575
      %v579 = vlaneseq
      %v580 = vshrl.u32 %v579, 7
      %v581 = vsub.s32 0, %v580
      %v582 = vrot.slane %v572, %v581
      %v583 = vlaneseq
      %v584 = vshrl.u32 %v583, 7
      %v585 = vsub.s32 0, %v584
      %v586 = vrot.slane %v576, %v585
      %v587 = vadd.f32 %v560, %v582
      %v588 = vadd.f32 %v561, %v586
      %v589 = vadd.f32 %v562, %v582
      %v590 = vadd.f32 %v563, %v586
      %v591 = vadd.f32 %v564, %v582
      %v592 = vadd.f32 %v565, %v586
      %v593 = vadd.f32 %v566, %v582
      %v594 = vadd.f32 %v567, %v586
      %s595 = scalar_lea.vmem %s5, 1
      %v596 = vld [vmem:[%s595] ss:$2 sm:$0x3]
      %v598 = vlaneseq
      %v599 = vshrl.u32 %v598, 7
      %v600 = vsub.s32 0, %v599
      %v601 = vrot.slane %v596, %v600
      %v602 = vlaneseq
      %v603 = vshrl.u32 %v602, 7
      %v604 = vsub.s32 1, %v603
      %v605 = vrot.slane %v596, %v604
      %v608 = vmul.f32 %v508, %v601
      %v609 = vmul.f32 %v508, %v605
      %v610 = vmul.f32 %v509, %v601
      %v611 = vmul.f32 %v509, %v605
      %v612 = vmul.f32 %v510, %v601
      %v613 = vmul.f32 %v510, %v605
      %v614 = vmul.f32 %v511, %v601
      %v615 = vmul.f32 %v511, %v605
      %v616 = vlaneseq
      %v617 = vshrl.u32 %v616, 7
      %v618 = vsub.s32 1, %v617
      %v619 = vrot.slane %v547, %v618
      %v620 = vlaneseq
      %v621 = vshrl.u32 %v620, 7
      %v622 = vsub.s32 3, %v621
      %v623 = vrot.slane %v547, %v622
      %v626 = vlaneseq
      %v627 = vshrl.u32 %v626, 7
      %v628 = vsub.s32 1, %v627
      %v629 = vrot.slane %v619, %v628
      %v630 = vlaneseq
      %v631 = vshrl.u32 %v630, 7
      %v632 = vsub.s32 1, %v631
      %v633 = vrot.slane %v623, %v632
      %v634 = vadd.f32 %v608, %v629
      %v635 = vadd.f32 %v609, %v633
      %v636 = vadd.f32 %v610, %v629
      %v637 = vadd.f32 %v611, %v633
      %v638 = vadd.f32 %v612, %v629
      %v639 = vadd.f32 %v613, %v633
      %v640 = vadd.f32 %v614, %v629
      %v641 = vadd.f32 %v615, %v633
      %v642 = vxor.u32 %v634, 2147483648
      %v643 = vxor.u32 %v635, 2147483648
      %v644 = vxor.u32 %v636, 2147483648
      %v645 = vxor.u32 %v637, 2147483648
      %v646 = vxor.u32 %v638, 2147483648
      %v647 = vxor.u32 %v639, 2147483648
      %v648 = vxor.u32 %v640, 2147483648
      %v649 = vxor.u32 %v641, 2147483648
      %v650 = vmul.f32 %v642, 1.442695
      %v651 = vpow.pop %v650
      %v652 = vmul.f32 %v643, 1.442695
      %v653 = vpow.pop %v652
      %v654 = vmul.f32 %v644, 1.442695
      %v655 = vpow.pop %v654
      %v656 = vmul.f32 %v645, 1.442695
      %v657 = vpow.pop %v656
      %v658 = vmul.f32 %v646, 1.442695
      %v659 = vpow.pop %v658
      %v660 = vmul.f32 %v647, 1.442695
      %v661 = vpow.pop %v660
      %v662 = vmul.f32 %v648, 1.442695
      %v663 = vpow.pop %v662
      %v664 = vmul.f32 %v649, 1.442695
      %v665 = vpow.pop %v664
      %v666 = vadd.f32 %v651, 1.0
      %v667 = vadd.f32 %v653, 1.0
      %v668 = vadd.f32 %v655, 1.0
      %v669 = vadd.f32 %v657, 1.0
      %v670 = vadd.f32 %v659, 1.0
      %v671 = vadd.f32 %v661, 1.0
      %v672 = vadd.f32 %v663, 1.0
      %v673 = vadd.f32 %v665, 1.0
      %v674 = vrcp.pop %v666
      %v675 = vmul.f32 1.0, %v674
      %v676 = vrcp.pop %v667
      %v677 = vmul.f32 1.0, %v676
      %v678 = vrcp.pop %v668
      %v679 = vmul.f32 1.0, %v678
      %v680 = vrcp.pop %v669
      %v681 = vmul.f32 1.0, %v680
      %v682 = vrcp.pop %v670
      %v683 = vmul.f32 1.0, %v682
      %v684 = vrcp.pop %v671
      %v685 = vmul.f32 1.0, %v684
      %v686 = vrcp.pop %v672
      %v687 = vmul.f32 1.0, %v686
      %v688 = vrcp.pop %v673
      %v689 = vmul.f32 1.0, %v688
      %v690 = vmul.f32 %v587, %v675
      %v691 = vmul.f32 %v588, %v677
      %v692 = vmul.f32 %v589, %v679
      %v693 = vmul.f32 %v590, %v681
      %v694 = vmul.f32 %v591, %v683
      %v695 = vmul.f32 %v592, %v685
      %v696 = vmul.f32 %v593, %v687
      %v697 = vmul.f32 %v594, %v689
      %v698 = vld [vmem:[%s6] sm:$0xff]
      %v699 = vld [vmem:[%s6 + $0x8] sm:$0xff]
      %v700 = vld [vmem:[%s6 + $0x10] sm:$0xff]
      %v701 = vld [vmem:[%s6 + $0x18] sm:$0xff]
      %v702 = vld [vmem:[%s6 + $0x20] sm:$0xff]
      %v703 = vld [vmem:[%s6 + $0x28] sm:$0xff]
      %v704 = vld [vmem:[%s6 + $0x30] sm:$0xff]
      %v705 = vld [vmem:[%s6 + $0x38] sm:$0xff]
      %v706 = vld [vmem:[%s6 + $0x40] sm:$0xff]
      %v707 = vld [vmem:[%s6 + $0x48] sm:$0xff]
      %v708 = vld [vmem:[%s6 + $0x50] sm:$0xff]
      %v709 = vld [vmem:[%s6 + $0x58] sm:$0xff]
      %v710 = vld [vmem:[%s6 + $0x60] sm:$0xff]
      %v711 = vld [vmem:[%s6 + $0x68] sm:$0xff]
      %v712 = vld [vmem:[%s6 + $0x70] sm:$0xff]
      %v713 = vld [vmem:[%s6 + $0x78] sm:$0xff]
      %v714 = vld [vmem:[%s6 + $0x80] sm:$0xff]
      %v715 = vld [vmem:[%s6 + $0x88] sm:$0xff]
      %v716 = vld [vmem:[%s6 + $0x90] sm:$0xff]
      %v717 = vld [vmem:[%s6 + $0x98] sm:$0xff]
      %v718 = vld [vmem:[%s6 + $0xa0] sm:$0xff]
      %v719 = vld [vmem:[%s6 + $0xa8] sm:$0xff]
      %v720 = vld [vmem:[%s6 + $0xb0] sm:$0xff]
      %v721 = vld [vmem:[%s6 + $0xb8] sm:$0xff]
      %v722 = vld [vmem:[%s6 + $0xc0] sm:$0xff]
      %v723 = vld [vmem:[%s6 + $0xc8] sm:$0xff]
      %v724 = vld [vmem:[%s6 + $0xd0] sm:$0xff]
      %v725 = vld [vmem:[%s6 + $0xd8] sm:$0xff]
      %v726 = vld [vmem:[%s6 + $0xe0] sm:$0xff]
      %v727 = vld [vmem:[%s6 + $0xe8] sm:$0xff]
      %v728 = vld [vmem:[%s6 + $0xf0] sm:$0xff]
      %v729 = vld [vmem:[%s6 + $0xf8] sm:$0xff]
      %v730 = vld [vmem:[%s6 + $0x100] sm:$0xff]
      %v731 = vld [vmem:[%s6 + $0x108] sm:$0xff]
      %v732 = vld [vmem:[%s6 + $0x110] sm:$0xff]
      %v733 = vld [vmem:[%s6 + $0x118] sm:$0xff]
      %v734 = vld [vmem:[%s6 + $0x120] sm:$0xff]
      %v735 = vld [vmem:[%s6 + $0x128] sm:$0xff]
      %v736 = vld [vmem:[%s6 + $0x130] sm:$0xff]
      %v737 = vld [vmem:[%s6 + $0x138] sm:$0xff]
      %v738 = vld [vmem:[%s6 + $0x140] sm:$0xff]
      %v739 = vld [vmem:[%s6 + $0x148] sm:$0xff]
      %v740 = vld [vmem:[%s6 + $0x150] sm:$0xff]
      %v741 = vld [vmem:[%s6 + $0x158] sm:$0xff]
      %v742 = vld [vmem:[%s6 + $0x160] sm:$0xff]
      %v743 = vld [vmem:[%s6 + $0x168] sm:$0xff]
      %v744 = vld [vmem:[%s6 + $0x170] sm:$0xff]
      %v745 = vld [vmem:[%s6 + $0x178] sm:$0xff]
      %v746 = vld [vmem:[%s6 + $0x180] sm:$0xff]
      %v747 = vld [vmem:[%s6 + $0x188] sm:$0xff]
      %v748 = vld [vmem:[%s6 + $0x190] sm:$0xff]
      %v749 = vld [vmem:[%s6 + $0x198] sm:$0xff]
      %v750 = vld [vmem:[%s6 + $0x1a0] sm:$0xff]
      %v751 = vld [vmem:[%s6 + $0x1a8] sm:$0xff]
      %v752 = vld [vmem:[%s6 + $0x1b0] sm:$0xff]
      %v753 = vld [vmem:[%s6 + $0x1b8] sm:$0xff]
      %v754 = vld [vmem:[%s6 + $0x1c0] sm:$0xff]
      %v755 = vld [vmem:[%s6 + $0x1c8] sm:$0xff]
      %v756 = vld [vmem:[%s6 + $0x1d0] sm:$0xff]
      %v757 = vld [vmem:[%s6 + $0x1d8] sm:$0xff]
      %v758 = vld [vmem:[%s6 + $0x1e0] sm:$0xff]
      %v759 = vld [vmem:[%s6 + $0x1e8] sm:$0xff]
      %v760 = vld [vmem:[%s6 + $0x1f0] sm:$0xff]
      %v761 = vld [vmem:[%s6 + $0x1f8] sm:$0xff]
      %v762 = vld [vmem:[%s7] ss:$2 sm:$0x3]
      %v764 = vlaneseq
      %v765 = vshrl.u32 %v764, 7
      %v766 = vsub.s32 0, %v765
      %v767 = vrot.slane %v762, %v766
      %v768 = vlaneseq
      %v769 = vshrl.u32 %v768, 7
      %v770 = vsub.s32 1, %v769
      %v771 = vrot.slane %v762, %v770
      %774 = vmatprep.subr.mxu0 %v729
      %775 = vmatpush1.msra.mxu0 %v728
      %776 = vmatprep.subr.mxu0 %v727
      %777 = vmatpush1.msra.mxu0 %v726
      %778 = vmatprep.subr.mxu0 %v725
      %779 = vmatpush1.msra.mxu0 %v724
      %780 = vmatprep.subr.mxu0 %v723
      %781 = vmatpush1.msra.mxu0 %v722
      %782 = vmatprep.subr.mxu0 %v721
      %783 = vmatpush1.msra.mxu0 %v720
      %784 = vmatprep.subr.mxu0 %v719
      %785 = vmatpush1.msra.mxu0 %v718
      %786 = vmatprep.subr.mxu0 %v717
      %787 = vmatpush1.msra.mxu0 %v716
      %788 = vmatprep.subr.mxu0 %v715
      %789 = vmatpush1.msra.mxu0 %v714
      %790 = vmatprep.subr.mxu0 %v713
      %791 = vmatpush1.msra.mxu0 %v712
      %792 = vmatprep.subr.mxu0 %v711
      %793 = vmatpush1.msra.mxu0 %v710
      %794 = vmatprep.subr.mxu0 %v709
      %795 = vmatpush1.msra.mxu0 %v708
      %796 = vmatprep.subr.mxu0 %v707
      %797 = vmatpush1.msra.mxu0 %v706
      %798 = vmatprep.subr.mxu0 %v705
      %799 = vmatpush1.msra.mxu0 %v704
      %800 = vmatprep.subr.mxu0 %v703
      %801 = vmatpush1.msra.mxu0 %v702
      %802 = vmatprep.subr.mxu0 %v701
      %803 = vmatpush1.msra.mxu0 %v700
      %804 = vmatprep.subr.mxu0 %v699
      %805 = vmatpush1.msra.mxu0 %v698
      %806 = vmatprep.subr.mxu0 %v761
      %807 = vmatpush2.msra.mxu0 %v760
      %808 = vmatprep.subr.mxu0 %v759
      %809 = vmatpush2.msra.mxu0 %v758
      %810 = vmatprep.subr.mxu0 %v757
      %811 = vmatpush2.msra.mxu0 %v756
      %812 = vmatprep.subr.mxu0 %v755
      %813 = vmatpush2.msra.mxu0 %v754
      %814 = vmatprep.subr.mxu0 %v753
      %815 = vmatpush2.msra.mxu0 %v752
      %816 = vmatprep.subr.mxu0 %v751
      %817 = vmatpush2.msra.mxu0 %v750
      %818 = vmatprep.subr.mxu0 %v749
      %819 = vmatpush2.msra.mxu0 %v748
      %820 = vmatprep.subr.mxu0 %v747
      %821 = vmatpush2.msra.mxu0 %v746
      %822 = vmatprep.subr.mxu0 %v745
      %823 = vmatpush2.msra.mxu0 %v744
      %824 = vmatprep.subr.mxu0 %v743
      %825 = vmatpush2.msra.mxu0 %v742
      %826 = vmatprep.subr.mxu0 %v741
      %827 = vmatpush2.msra.mxu0 %v740
      %828 = vmatprep.subr.mxu0 %v739
      %829 = vmatpush2.msra.mxu0 %v738
      %830 = vmatprep.subr.mxu0 %v737
      %831 = vmatpush2.msra.mxu0 %v736
      %832 = vmatprep.subr.mxu0 %v735
      %833 = vmatpush2.msra.mxu0 %v734
      %834 = vmatprep.subr.mxu0 %v733
      %835 = vmatpush2.msra.mxu0 %v732
      %836 = vmatprep.subr.mxu0 %v731
      %837 = vmatpush2.msra.mxu0 %v730
      %838 = vmatprep.mubr.f32.mxu0 %v691
      %839 = vmatmul.mubr.f32.gmra.mxu0 %v690
      %v840 = vpop.f32.mrf.mxu0
      %v841 = vadd.f32 %v767, %v840
      %v842 = vpop.f32.mrf.mxu0
      %v843 = vadd.f32 %v771, %v842
      %844 = vmatprep.mubr.f32.mxu0 %v693
      %845 = vmatmul.mubr.f32.gmra.mxu0 %v692
      %v846 = vpop.f32.mrf.mxu0
      %v847 = vadd.f32 %v767, %v846
      %v848 = vpop.f32.mrf.mxu0
      %v849 = vadd.f32 %v771, %v848
      %850 = vmatprep.mubr.f32.mxu0 %v695
      %851 = vmatmul.mubr.f32.gmra.mxu0 %v694
      %v852 = vpop.f32.mrf.mxu0
      %v853 = vadd.f32 %v767, %v852
      %v854 = vpop.f32.mrf.mxu0
      %v855 = vadd.f32 %v771, %v854
      %856 = vmatprep.mubr.f32.mxu0 %v697
      %857 = vmatmul.mubr.f32.gmra.mxu0 %v696
      %v858 = vpop.f32.mrf.mxu0
      %v859 = vadd.f32 %v767, %v858
      %v860 = vpop.f32.mrf.mxu0
      %v861 = vadd.f32 %v771, %v860
      %862 = vdwg.mxu0
      %s863 = scalar_lea.vmem %s6, 512
      %v864 = vld [vmem:[%s863] sm:$0xff]
      %v865 = vld [vmem:[%s863 + $0x8] sm:$0xff]
      %v866 = vld [vmem:[%s863 + $0x10] sm:$0xff]
      %v867 = vld [vmem:[%s863 + $0x18] sm:$0xff]
      %v868 = vld [vmem:[%s863 + $0x20] sm:$0xff]
      %v869 = vld [vmem:[%s863 + $0x28] sm:$0xff]
      %v870 = vld [vmem:[%s863 + $0x30] sm:$0xff]
      %v871 = vld [vmem:[%s863 + $0x38] sm:$0xff]
      %v872 = vld [vmem:[%s863 + $0x40] sm:$0xff]
      %v873 = vld [vmem:[%s863 + $0x48] sm:$0xff]
      %v874 = vld [vmem:[%s863 + $0x50] sm:$0xff]
      %v875 = vld [vmem:[%s863 + $0x58] sm:$0xff]
      %v876 = vld [vmem:[%s863 + $0x60] sm:$0xff]
      %v877 = vld [vmem:[%s863 + $0x68] sm:$0xff]
      %v878 = vld [vmem:[%s863 + $0x70] sm:$0xff]
      %v879 = vld [vmem:[%s863 + $0x78] sm:$0xff]
      %v880 = vld [vmem:[%s863 + $0x80] sm:$0xff]
      %v881 = vld [vmem:[%s863 + $0x88] sm:$0xff]
      %v882 = vld [vmem:[%s863 + $0x90] sm:$0xff]
      %v883 = vld [vmem:[%s863 + $0x98] sm:$0xff]
      %v884 = vld [vmem:[%s863 + $0xa0] sm:$0xff]
      %v885 = vld [vmem:[%s863 + $0xa8] sm:$0xff]
      %v886 = vld [vmem:[%s863 + $0xb0] sm:$0xff]
      %v887 = vld [vmem:[%s863 + $0xb8] sm:$0xff]
      %v888 = vld [vmem:[%s863 + $0xc0] sm:$0xff]
      %v889 = vld [vmem:[%s863 + $0xc8] sm:$0xff]
      %v890 = vld [vmem:[%s863 + $0xd0] sm:$0xff]
      %v891 = vld [vmem:[%s863 + $0xd8] sm:$0xff]
      %v892 = vld [vmem:[%s863 + $0xe0] sm:$0xff]
      %v893 = vld [vmem:[%s863 + $0xe8] sm:$0xff]
      %v894 = vld [vmem:[%s863 + $0xf0] sm:$0xff]
      %v895 = vld [vmem:[%s863 + $0xf8] sm:$0xff]
      %v896 = vld [vmem:[%s863 + $0x100] sm:$0xff]
      %v897 = vld [vmem:[%s863 + $0x108] sm:$0xff]
      %v898 = vld [vmem:[%s863 + $0x110] sm:$0xff]
      %v899 = vld [vmem:[%s863 + $0x118] sm:$0xff]
      %v900 = vld [vmem:[%s863 + $0x120] sm:$0xff]
      %v901 = vld [vmem:[%s863 + $0x128] sm:$0xff]
      %v902 = vld [vmem:[%s863 + $0x130] sm:$0xff]
      %v903 = vld [vmem:[%s863 + $0x138] sm:$0xff]
      %v904 = vld [vmem:[%s863 + $0x140] sm:$0xff]
      %v905 = vld [vmem:[%s863 + $0x148] sm:$0xff]
      %v906 = vld [vmem:[%s863 + $0x150] sm:$0xff]
      %v907 = vld [vmem:[%s863 + $0x158] sm:$0xff]
      %v908 = vld [vmem:[%s863 + $0x160] sm:$0xff]
      %v909 = vld [vmem:[%s863 + $0x168] sm:$0xff]
      %v910 = vld [vmem:[%s863 + $0x170] sm:$0xff]
      %v911 = vld [vmem:[%s863 + $0x178] sm:$0xff]
      %v912 = vld [vmem:[%s863 + $0x180] sm:$0xff]
      %v913 = vld [vmem:[%s863 + $0x188] sm:$0xff]
      %v914 = vld [vmem:[%s863 + $0x190] sm:$0xff]
      %v915 = vld [vmem:[%s863 + $0x198] sm:$0xff]
      %v916 = vld [vmem:[%s863 + $0x1a0] sm:$0xff]
      %v917 = vld [vmem:[%s863 + $0x1a8] sm:$0xff]
      %v918 = vld [vmem:[%s863 + $0x1b0] sm:$0xff]
      %v919 = vld [vmem:[%s863 + $0x1b8] sm:$0xff]
      %v920 = vld [vmem:[%s863 + $0x1c0] sm:$0xff]
      %v921 = vld [vmem:[%s863 + $0x1c8] sm:$0xff]
      %v922 = vld [vmem:[%s863 + $0x1d0] sm:$0xff]
      %v923 = vld [vmem:[%s863 + $0x1d8] sm:$0xff]
      %v924 = vld [vmem:[%s863 + $0x1e0] sm:$0xff]
      %v925 = vld [vmem:[%s863 + $0x1e8] sm:$0xff]
      %v926 = vld [vmem:[%s863 + $0x1f0] sm:$0xff]
      %v927 = vld [vmem:[%s863 + $0x1f8] sm:$0xff]
      %s928 = scalar_lea.vmem %s7, 1
      %v929 = vld [vmem:[%s928] ss:$2 sm:$0x3]
      %v931 = vlaneseq
      %v932 = vshrl.u32 %v931, 7
      %v933 = vsub.s32 0, %v932
      %v934 = vrot.slane %v929, %v933
      %v935 = vlaneseq
      %v936 = vshrl.u32 %v935, 7
      %v937 = vsub.s32 1, %v936
      %v938 = vrot.slane %v929, %v937
      %941 = vmatprep.subr.mxu0 %v895
      %942 = vmatpush1.msra.mxu0 %v894
      %943 = vmatprep.subr.mxu0 %v893
      %944 = vmatpush1.msra.mxu0 %v892
      %945 = vmatprep.subr.mxu0 %v891
      %946 = vmatpush1.msra.mxu0 %v890
      %947 = vmatprep.subr.mxu0 %v889
      %948 = vmatpush1.msra.mxu0 %v888
      %949 = vmatprep.subr.mxu0 %v887
      %950 = vmatpush1.msra.mxu0 %v886
      %951 = vmatprep.subr.mxu0 %v885
      %952 = vmatpush1.msra.mxu0 %v884
      %953 = vmatprep.subr.mxu0 %v883
      %954 = vmatpush1.msra.mxu0 %v882
      %955 = vmatprep.subr.mxu0 %v881
      %956 = vmatpush1.msra.mxu0 %v880
      %957 = vmatprep.subr.mxu0 %v879
      %958 = vmatpush1.msra.mxu0 %v878
      %959 = vmatprep.subr.mxu0 %v877
      %960 = vmatpush1.msra.mxu0 %v876
      %961 = vmatprep.subr.mxu0 %v875
      %962 = vmatpush1.msra.mxu0 %v874
      %963 = vmatprep.subr.mxu0 %v873
      %964 = vmatpush1.msra.mxu0 %v872
      %965 = vmatprep.subr.mxu0 %v871
      %966 = vmatpush1.msra.mxu0 %v870
      %967 = vmatprep.subr.mxu0 %v869
      %968 = vmatpush1.msra.mxu0 %v868
      %969 = vmatprep.subr.mxu0 %v867
      %970 = vmatpush1.msra.mxu0 %v866
      %971 = vmatprep.subr.mxu0 %v865
      %972 = vmatpush1.msra.mxu0 %v864
      %973 = vmatprep.subr.mxu0 %v927
      %974 = vmatpush2.msra.mxu0 %v926
      %975 = vmatprep.subr.mxu0 %v925
      %976 = vmatpush2.msra.mxu0 %v924
      %977 = vmatprep.subr.mxu0 %v923
      %978 = vmatpush2.msra.mxu0 %v922
      %979 = vmatprep.subr.mxu0 %v921
      %980 = vmatpush2.msra.mxu0 %v920
      %981 = vmatprep.subr.mxu0 %v919
      %982 = vmatpush2.msra.mxu0 %v918
      %983 = vmatprep.subr.mxu0 %v917
      %984 = vmatpush2.msra.mxu0 %v916
      %985 = vmatprep.subr.mxu0 %v915
      %986 = vmatpush2.msra.mxu0 %v914
      %987 = vmatprep.subr.mxu0 %v913
      %988 = vmatpush2.msra.mxu0 %v912
      %989 = vmatprep.subr.mxu0 %v911
      %990 = vmatpush2.msra.mxu0 %v910
      %991 = vmatprep.subr.mxu0 %v909
      %992 = vmatpush2.msra.mxu0 %v908
      %993 = vmatprep.subr.mxu0 %v907
      %994 = vmatpush2.msra.mxu0 %v906
      %995 = vmatprep.subr.mxu0 %v905
      %996 = vmatpush2.msra.mxu0 %v904
      %997 = vmatprep.subr.mxu0 %v903
      %998 = vmatpush2.msra.mxu0 %v902
      %999 = vmatprep.subr.mxu0 %v901
      %1000 = vmatpush2.msra.mxu0 %v900
      %1001 = vmatprep.subr.mxu0 %v899
      %1002 = vmatpush2.msra.mxu0 %v898
      %1003 = vmatprep.subr.mxu0 %v897
      %1004 = vmatpush2.msra.mxu0 %v896
      %1005 = vmatprep.mubr.f32.mxu0 %v691
      %1006 = vmatmul.mubr.f32.gmra.mxu0 %v690
      %v1007 = vpop.f32.mrf.mxu0
      %v1008 = vadd.f32 %v934, %v1007
      %v1009 = vpop.f32.mrf.mxu0
      %v1010 = vadd.f32 %v938, %v1009
      %1011 = vmatprep.mubr.f32.mxu0 %v693
      %1012 = vmatmul.mubr.f32.gmra.mxu0 %v692
      %v1013 = vpop.f32.mrf.mxu0
      %v1014 = vadd.f32 %v934, %v1013
      %v1015 = vpop.f32.mrf.mxu0
      %v1016 = vadd.f32 %v938, %v1015
      %1017 = vmatprep.mubr.f32.mxu0 %v695
      %1018 = vmatmul.mubr.f32.gmra.mxu0 %v694
      %v1019 = vpop.f32.mrf.mxu0
      %v1020 = vadd.f32 %v934, %v1019
      %v1021 = vpop.f32.mrf.mxu0
      %v1022 = vadd.f32 %v938, %v1021
      %1023 = vmatprep.mubr.f32.mxu0 %v697
      %1024 = vmatmul.mubr.f32.gmra.mxu0 %v696
      %v1025 = vpop.f32.mrf.mxu0
      %v1026 = vadd.f32 %v934, %v1025
      %v1027 = vpop.f32.mrf.mxu0
      %v1028 = vadd.f32 %v938, %v1027
      %1029 = vdwg.mxu0
      %v1030 = vxor.u32 %v1008, 2147483648
      %v1031 = vxor.u32 %v1010, 2147483648
      %v1032 = vxor.u32 %v1014, 2147483648
      %v1033 = vxor.u32 %v1016, 2147483648
      %v1034 = vxor.u32 %v1020, 2147483648
      %v1035 = vxor.u32 %v1022, 2147483648
      %v1036 = vxor.u32 %v1026, 2147483648
      %v1037 = vxor.u32 %v1028, 2147483648
      %v1038 = vmul.f32 %v1030, 1.442695
      %v1039 = vpow.pop %v1038
      %v1040 = vmul.f32 %v1031, 1.442695
      %v1041 = vpow.pop %v1040
      %v1042 = vmul.f32 %v1032, 1.442695
      %v1043 = vpow.pop %v1042
      %v1044 = vmul.f32 %v1033, 1.442695
      %v1045 = vpow.pop %v1044
      %v1046 = vmul.f32 %v1034, 1.442695
      %v1047 = vpow.pop %v1046
      %v1048 = vmul.f32 %v1035, 1.442695
      %v1049 = vpow.pop %v1048
      %v1050 = vmul.f32 %v1036, 1.442695
      %v1051 = vpow.pop %v1050
      %v1052 = vmul.f32 %v1037, 1.442695
      %v1053 = vpow.pop %v1052
      %v1054 = vadd.f32 %v1039, 1.0
      %v1055 = vadd.f32 %v1041, 1.0
      %v1056 = vadd.f32 %v1043, 1.0
      %v1057 = vadd.f32 %v1045, 1.0
      %v1058 = vadd.f32 %v1047, 1.0
      %v1059 = vadd.f32 %v1049, 1.0
      %v1060 = vadd.f32 %v1051, 1.0
      %v1061 = vadd.f32 %v1053, 1.0
      %v1062 = vrcp.pop %v1054
      %v1063 = vmul.f32 1.0, %v1062
      %v1064 = vrcp.pop %v1055
      %v1065 = vmul.f32 1.0, %v1064
      %v1066 = vrcp.pop %v1056
      %v1067 = vmul.f32 1.0, %v1066
      %v1068 = vrcp.pop %v1057
      %v1069 = vmul.f32 1.0, %v1068
      %v1070 = vrcp.pop %v1058
      %v1071 = vmul.f32 1.0, %v1070
      %v1072 = vrcp.pop %v1059
      %v1073 = vmul.f32 1.0, %v1072
      %v1074 = vrcp.pop %v1060
      %v1075 = vmul.f32 1.0, %v1074
      %v1076 = vrcp.pop %v1061
      %v1077 = vmul.f32 1.0, %v1076
      %v1078 = vmul.f32 %v841, %v1063
      %v1079 = vmul.f32 %v843, %v1065
      %v1080 = vmul.f32 %v847, %v1067
      %v1081 = vmul.f32 %v849, %v1069
      %v1082 = vmul.f32 %v853, %v1071
      %v1083 = vmul.f32 %v855, %v1073
      %v1084 = vmul.f32 %v859, %v1075
      %v1085 = vmul.f32 %v861, %v1077
      %v1086 = vld [vmem:[%s8] sm:$0xff]
      %v1087 = vld [vmem:[%s8 + $0x8] sm:$0xff]
      %v1088 = vld [vmem:[%s8 + $0x10] sm:$0xff]
      %v1089 = vld [vmem:[%s8 + $0x18] sm:$0xff]
      %v1090 = vld [vmem:[%s8 + $0x20] sm:$0xff]
      %v1091 = vld [vmem:[%s8 + $0x28] sm:$0xff]
      %v1092 = vld [vmem:[%s8 + $0x30] sm:$0xff]
      %v1093 = vld [vmem:[%s8 + $0x38] sm:$0xff]
      %v1094 = vld [vmem:[%s8 + $0x40] sm:$0xff]
      %v1095 = vld [vmem:[%s8 + $0x48] sm:$0xff]
      %v1096 = vld [vmem:[%s8 + $0x50] sm:$0xff]
      %v1097 = vld [vmem:[%s8 + $0x58] sm:$0xff]
      %v1098 = vld [vmem:[%s8 + $0x60] sm:$0xff]
      %v1099 = vld [vmem:[%s8 + $0x68] sm:$0xff]
      %v1100 = vld [vmem:[%s8 + $0x70] sm:$0xff]
      %v1101 = vld [vmem:[%s8 + $0x78] sm:$0xff]
      %v1102 = vld [vmem:[%s8 + $0x80] sm:$0xff]
      %v1103 = vld [vmem:[%s8 + $0x88] sm:$0xff]
      %v1104 = vld [vmem:[%s8 + $0x90] sm:$0xff]
      %v1105 = vld [vmem:[%s8 + $0x98] sm:$0xff]
      %v1106 = vld [vmem:[%s8 + $0xa0] sm:$0xff]
      %v1107 = vld [vmem:[%s8 + $0xa8] sm:$0xff]
      %v1108 = vld [vmem:[%s8 + $0xb0] sm:$0xff]
      %v1109 = vld [vmem:[%s8 + $0xb8] sm:$0xff]
      %v1110 = vld [vmem:[%s8 + $0xc0] sm:$0xff]
      %v1111 = vld [vmem:[%s8 + $0xc8] sm:$0xff]
      %v1112 = vld [vmem:[%s8 + $0xd0] sm:$0xff]
      %v1113 = vld [vmem:[%s8 + $0xd8] sm:$0xff]
      %v1114 = vld [vmem:[%s8 + $0xe0] sm:$0xff]
      %v1115 = vld [vmem:[%s8 + $0xe8] sm:$0xff]
      %v1116 = vld [vmem:[%s8 + $0xf0] sm:$0xff]
      %v1117 = vld [vmem:[%s8 + $0xf8] sm:$0xff]
      %1118 = vmatprep.subr.mxu0 0.0
      %1119 = vmatpush1.msra.mxu0 %v1101
      %1120 = vmatprep.subr.mxu0 0.0
      %1121 = vmatpush1.msra.mxu0 %v1100
      %1122 = vmatprep.subr.mxu0 0.0
      %1123 = vmatpush1.msra.mxu0 %v1099
      %1124 = vmatprep.subr.mxu0 0.0
      %1125 = vmatpush1.msra.mxu0 %v1098
      %1126 = vmatprep.subr.mxu0 0.0
      %1127 = vmatpush1.msra.mxu0 %v1097
      %1128 = vmatprep.subr.mxu0 0.0
      %1129 = vmatpush1.msra.mxu0 %v1096
      %1130 = vmatprep.subr.mxu0 0.0
      %1131 = vmatpush1.msra.mxu0 %v1095
      %1132 = vmatprep.subr.mxu0 0.0
      %1133 = vmatpush1.msra.mxu0 %v1094
      %1134 = vmatprep.subr.mxu0 0.0
      %1135 = vmatpush1.msra.mxu0 %v1093
      %1136 = vmatprep.subr.mxu0 0.0
      %1137 = vmatpush1.msra.mxu0 %v1092
      %1138 = vmatprep.subr.mxu0 0.0
      %1139 = vmatpush1.msra.mxu0 %v1091
      %1140 = vmatprep.subr.mxu0 0.0
      %1141 = vmatpush1.msra.mxu0 %v1090
      %1142 = vmatprep.subr.mxu0 0.0
      %1143 = vmatpush1.msra.mxu0 %v1089
      %1144 = vmatprep.subr.mxu0 0.0
      %1145 = vmatpush1.msra.mxu0 %v1088
      %1146 = vmatprep.subr.mxu0 0.0
      %1147 = vmatpush1.msra.mxu0 %v1087
      %1148 = vmatprep.subr.mxu0 0.0
      %1149 = vmatpush1.msra.mxu0 %v1086
      %1150 = vmatprep.subr.mxu0 0.0
      %1151 = vmatpush2.msra.mxu0 %v1117
      %1152 = vmatprep.subr.mxu0 0.0
      %1153 = vmatpush2.msra.mxu0 %v1116
      %1154 = vmatprep.subr.mxu0 0.0
      %1155 = vmatpush2.msra.mxu0 %v1115
      %1156 = vmatprep.subr.mxu0 0.0
      %1157 = vmatpush2.msra.mxu0 %v1114
      %1158 = vmatprep.subr.mxu0 0.0
      %1159 = vmatpush2.msra.mxu0 %v1113
      %1160 = vmatprep.subr.mxu0 0.0
      %1161 = vmatpush2.msra.mxu0 %v1112
      %1162 = vmatprep.subr.mxu0 0.0
      %1163 = vmatpush2.msra.mxu0 %v1111
      %1164 = vmatprep.subr.mxu0 0.0
      %1165 = vmatpush2.msra.mxu0 %v1110
      %1166 = vmatprep.subr.mxu0 0.0
      %1167 = vmatpush2.msra.mxu0 %v1109
      %1168 = vmatprep.subr.mxu0 0.0
      %1169 = vmatpush2.msra.mxu0 %v1108
      %1170 = vmatprep.subr.mxu0 0.0
      %1171 = vmatpush2.msra.mxu0 %v1107
      %1172 = vmatprep.subr.mxu0 0.0
      %1173 = vmatpush2.msra.mxu0 %v1106
      %1174 = vmatprep.subr.mxu0 0.0
      %1175 = vmatpush2.msra.mxu0 %v1105
      %1176 = vmatprep.subr.mxu0 0.0
      %1177 = vmatpush2.msra.mxu0 %v1104
      %1178 = vmatprep.subr.mxu0 0.0
      %1179 = vmatpush2.msra.mxu0 %v1103
      %1180 = vmatprep.subr.mxu0 0.0
      %1181 = vmatpush2.msra.mxu0 %v1102
      %1182 = vmatprep.mubr.f32.mxu0 %v1079
      %1183 = vmatmul.mubr.f32.gmra.mxu0 %v1078
      %v1184 = vpop.f32.mrf.mxu0
      %v1185 = vadd.f32 0.0, %v1184
      %v1186 = vpop.f32.mrf.mxu0
      %1187 = vmatprep.mubr.f32.mxu0 %v1081
      %1188 = vmatmul.mubr.f32.gmra.mxu0 %v1080
      %v1189 = vpop.f32.mrf.mxu0
      %v1190 = vadd.f32 0.0, %v1189
      %v1191 = vpop.f32.mrf.mxu0
      %1192 = vmatprep.mubr.f32.mxu0 %v1083
      %1193 = vmatmul.mubr.f32.gmra.mxu0 %v1082
      %v1194 = vpop.f32.mrf.mxu0
      %v1195 = vadd.f32 0.0, %v1194
      %v1196 = vpop.f32.mrf.mxu0
      %1197 = vmatprep.mubr.f32.mxu0 %v1085
      %1198 = vmatmul.mubr.f32.gmra.mxu0 %v1084
      %v1199 = vpop.f32.mrf.mxu0
      %v1200 = vadd.f32 0.0, %v1199
      %v1201 = vpop.f32.mrf.mxu0
      %1202 = vdwg.mxu0
      %vm1203 = vcmp.gt.f32.partialorder %v543, 0.0
      %vm1204 = vcmp.gt.f32.partialorder %v544, 0.0
      %vm1205 = vcmp.gt.f32.partialorder %v545, 0.0
      %vm1206 = vcmp.gt.f32.partialorder %v546, 0.0
      %v1207 = vsel %vm1203, %v1185, -1e+30
      %v1208 = vsel %vm1204, %v1190, -1e+30
      %v1209 = vsel %vm1205, %v1195, -1e+30
      %v1210 = vsel %vm1206, %v1200, -1e+30
      %vm1211 = vcmask 130048
      %v1212 = vsel %vm1211, %v1207, -inf
      %1213 = vmax.xlane.f32.xlu0 %v1212
      %v1214 = vpop.xlane.xlu0 %1213
      %v1215 = vsel %vm1211, %v1208, -inf
      %1216 = vmax.xlane.f32.xlu0 %v1215
      %v1217 = vpop.xlane.xlu0 %1216
      %v1218 = vsel %vm1211, %v1209, -inf
      %1219 = vmax.xlane.f32.xlu0 %v1218
      %v1220 = vpop.xlane.xlu0 %1219
      %vm1221 = vcmask 129024
      %v1222 = vsel %vm1221, %v1210, -inf
      %1223 = vmax.xlane.f32.xlu0 %v1222
      %v1224 = vpop.xlane.xlu0 %1223
      %v1225 = vsub.f32 %v1207, %v1214
      %v1226 = vsub.f32 %v1208, %v1217
      %v1227 = vsub.f32 %v1209, %v1220
      %v1228 = vsub.f32 %v1210, %v1224
      %v1229 = vmul.f32 %v1225, 1.442695
      %v1230 = vpow.pop %v1229
      %v1231 = vmul.f32 %v1226, 1.442695
      %v1232 = vpow.pop %v1231
      %v1233 = vmul.f32 %v1227, 1.442695
      %v1234 = vpow.pop %v1233
      %v1235 = vmul.f32 %v1228, 1.442695
      %v1236 = vpow.pop %v1235
      %v1237 = vsel %vm1211, %v1230, 0.0
      %1238 = vadd.xlane.f32.xlu0 %v1237
      %v1239 = vpop.xlane.xlu0 %1238
      %v1240 = vsel %vm1211, %v1232, 0.0
      %1241 = vadd.xlane.f32.xlu0 %v1240
      %v1242 = vpop.xlane.xlu0 %1241
      %v1243 = vsel %vm1211, %v1234, 0.0
      %1244 = vadd.xlane.f32.xlu0 %v1243
      %v1245 = vpop.xlane.xlu0 %1244
      %v1246 = vsel %vm1221, %v1236, 0.0
      %1247 = vadd.xlane.f32.xlu0 %v1246
      %v1248 = vpop.xlane.xlu0 %1247
      %v1249 = vrcp.pop %v1239
      %v1250 = vmul.f32 %v1230, %v1249
      %v1251 = vrcp.pop %v1242
      %v1252 = vmul.f32 %v1232, %v1251
      %v1253 = vrcp.pop %v1245
      %v1254 = vmul.f32 %v1234, %v1253
      %v1255 = vrcp.pop %v1248
      %v1256 = vmul.f32 %v1236, %v1255
      %v1257 = vsel %vm1203, %v1250, 0.0
      %v1258 = vsel %vm1204, %v1252, 0.0
      %v1259 = vsel %vm1205, %v1254, 0.0
      %v1260 = vsel %vm1206, %v1256, 0.0
      %v1261 = vld [vmem:[%s468] sm:$0xf]
      %v1262 = vld [vmem:[%s10] sm:$0x1]
      %v1264 = vlaneseq
      %v1265 = vshrl.u32 %v1264, 7
      %v1266 = vsub.s32 0, %v1265
      %v1267 = vrot.slane %v1262, %v1266
      %v1269 = vmul.f32 %v508, %v1267
      %v1270 = vmul.f32 %v509, %v1267
      %v1271 = vmul.f32 %v510, %v1267
      %v1272 = vmul.f32 %v511, %v1267
      %1274 = vset.pattern.permute.xlu0 0
      %1275 = vperm.xlu0 %1274, %v1269
      %v1276 = vpop.permute.xlu0 %1275
      %1279 = vset.pattern.permute.xlu0 0
      %1280 = vperm.xlu0 %1279, %v1270
      %v1281 = vpop.permute.xlu0 %1280
      %1284 = vset.pattern.permute.xlu0 0
      %1285 = vperm.xlu0 %1284, %v1271
      %v1286 = vpop.permute.xlu0 %1285
      %1289 = vset.pattern.permute.xlu0 0
      %1290 = vperm.xlu0 %1289, %v1272
      %v1291 = vpop.permute.xlu0 %1290
      %v1293 = vlaneseq
      %v1294 = vshrl.u32 %v1293, 7
      %v1295 = vsub.s32 0, %v1294
      %v1296 = vrot.slane %v1261, %v1295
      %v1297 = vadd.f32 %v1276, %v1296
      %v1298 = vadd.f32 %v1281, %v1296
      %v1299 = vadd.f32 %v1286, %v1296
      %v1300 = vadd.f32 %v1291, %v1296
      %1301 = vset.pattern.permute.xlu0 1
      %1302 = vperm.xlu0 %1301, %v1269
      %v1303 = vpop.permute.xlu0 %1302
      %1305 = vset.pattern.permute.xlu0 1
      %1306 = vperm.xlu0 %1305, %v1270
      %v1307 = vpop.permute.xlu0 %1306
      %1309 = vset.pattern.permute.xlu0 1
      %1310 = vperm.xlu0 %1309, %v1271
      %v1311 = vpop.permute.xlu0 %1310
      %1313 = vset.pattern.permute.xlu0 1
      %1314 = vperm.xlu0 %1313, %v1272
      %v1315 = vpop.permute.xlu0 %1314
      %v1317 = vlaneseq
      %v1318 = vshrl.u32 %v1317, 7
      %v1319 = vsub.s32 1, %v1318
      %v1320 = vrot.slane %v1261, %v1319
      %v1321 = vadd.f32 %v1303, %v1320
      %v1322 = vadd.f32 %v1307, %v1320
      %v1323 = vadd.f32 %v1311, %v1320
      %v1324 = vadd.f32 %v1315, %v1320
      %1325 = vset.pattern.permute.xlu0 2
      %1326 = vperm.xlu0 %1325, %v1269
      %v1327 = vpop.permute.xlu0 %1326
      %1329 = vset.pattern.permute.xlu0 2
      %1330 = vperm.xlu0 %1329, %v1270
      %v1331 = vpop.permute.xlu0 %1330
      %1333 = vset.pattern.permute.xlu0 2
      %1334 = vperm.xlu0 %1333, %v1271
      %v1335 = vpop.permute.xlu0 %1334
      %1337 = vset.pattern.permute.xlu0 2
      %1338 = vperm.xlu0 %1337, %v1272
      %v1339 = vpop.permute.xlu0 %1338
      %v1341 = vlaneseq
      %v1342 = vshrl.u32 %v1341, 7
      %v1343 = vsub.s32 2, %v1342
      %v1344 = vrot.slane %v1261, %v1343
      %v1345 = vadd.f32 %v1327, %v1344
      %v1346 = vadd.f32 %v1331, %v1344
      %v1347 = vadd.f32 %v1335, %v1344
      %v1348 = vadd.f32 %v1339, %v1344
      %1349 = vset.pattern.permute.xlu0 3
      %1350 = vperm.xlu0 %1349, %v1269
      %v1351 = vpop.permute.xlu0 %1350
      %1353 = vset.pattern.permute.xlu0 3
      %1354 = vperm.xlu0 %1353, %v1270
      %v1355 = vpop.permute.xlu0 %1354
      %1357 = vset.pattern.permute.xlu0 3
      %1358 = vperm.xlu0 %1357, %v1271
      %v1359 = vpop.permute.xlu0 %1358
      %1361 = vset.pattern.permute.xlu0 3
      %1362 = vperm.xlu0 %1361, %v1272
      %v1363 = vpop.permute.xlu0 %1362
      %v1365 = vlaneseq
      %v1366 = vshrl.u32 %v1365, 7
      %v1367 = vsub.s32 3, %v1366
      %v1368 = vrot.slane %v1261, %v1367
      %v1369 = vadd.f32 %v1351, %v1368
      %v1370 = vadd.f32 %v1355, %v1368
      %v1371 = vadd.f32 %v1359, %v1368
      %v1372 = vadd.f32 %v1363, %v1368
      %v1373 = vxor.u32 %v1345, 2147483648
      %v1374 = vxor.u32 %v1346, 2147483648
      %v1375 = vxor.u32 %v1347, 2147483648
      %v1376 = vxor.u32 %v1348, 2147483648
      %v1377 = vmul.f32 %v1373, 1.442695
      %v1378 = vpow.pop %v1377
      %v1379 = vmul.f32 %v1374, 1.442695
      %v1380 = vpow.pop %v1379
      %v1381 = vmul.f32 %v1375, 1.442695
      %v1382 = vpow.pop %v1381
      %v1383 = vmul.f32 %v1376, 1.442695
      %v1384 = vpow.pop %v1383
      %v1385 = vadd.f32 %v1378, 1.0
      %v1386 = vadd.f32 %v1380, 1.0
      %v1387 = vadd.f32 %v1382, 1.0
      %v1388 = vadd.f32 %v1384, 1.0
      %v1389 = vrcp.pop %v1385
      %v1390 = vmul.f32 1.0, %v1389
      %v1391 = vrcp.pop %v1386
      %v1392 = vmul.f32 1.0, %v1391
      %v1393 = vrcp.pop %v1387
      %v1394 = vmul.f32 1.0, %v1393
      %v1395 = vrcp.pop %v1388
      %v1396 = vmul.f32 1.0, %v1395
      %v1397 = vmul.f32 %v1297, %v1390
      %v1398 = vmul.f32 %v1298, %v1392
      %v1399 = vmul.f32 %v1299, %v1394
      %v1400 = vmul.f32 %v1300, %v1396
      %v1401 = vxor.u32 %v1369, 2147483648
      %v1402 = vxor.u32 %v1370, 2147483648
      %v1403 = vxor.u32 %v1371, 2147483648
      %v1404 = vxor.u32 %v1372, 2147483648
      %v1405 = vmul.f32 %v1401, 1.442695
      %v1406 = vpow.pop %v1405
      %v1407 = vmul.f32 %v1402, 1.442695
      %v1408 = vpow.pop %v1407
      %v1409 = vmul.f32 %v1403, 1.442695
      %v1410 = vpow.pop %v1409
      %v1411 = vmul.f32 %v1404, 1.442695
      %v1412 = vpow.pop %v1411
      %v1413 = vadd.f32 %v1406, 1.0
      %v1414 = vadd.f32 %v1408, 1.0
      %v1415 = vadd.f32 %v1410, 1.0
      %v1416 = vadd.f32 %v1412, 1.0
      %v1417 = vrcp.pop %v1413
      %v1418 = vmul.f32 1.0, %v1417
      %v1419 = vrcp.pop %v1414
      %v1420 = vmul.f32 1.0, %v1419
      %v1421 = vrcp.pop %v1415
      %v1422 = vmul.f32 1.0, %v1421
      %v1423 = vrcp.pop %v1416
      %v1424 = vmul.f32 1.0, %v1423
      %v1425 = vmul.f32 %v1321, %v1418
      %v1426 = vmul.f32 %v1322, %v1420
      %v1427 = vmul.f32 %v1323, %v1422
      %v1428 = vmul.f32 %v1324, %v1424
      %1429 = vset.pattern.permute.xlu0 4
      %1430 = vperm.xlu0 %1429, %v1267
      %v1431 = vpop.permute.xlu0 %1430
      %v1433 = vmul.f32 %v1397, %v1431
      %v1434 = vmul.f32 %v1398, %v1431
      %v1435 = vmul.f32 %v1399, %v1431
      %v1436 = vmul.f32 %v1400, %v1431
      %1437 = vset.pattern.permute.xlu0 8
      %1438 = vperm.xlu0 %1437, %v1267
      %v1439 = vpop.permute.xlu0 %1438
      %v1441 = vmul.f32 %v1425, %v1439
      %v1442 = vmul.f32 %v1426, %v1439
      %v1443 = vmul.f32 %v1427, %v1439
      %v1444 = vmul.f32 %v1428, %v1439
      %v1445 = vadd.f32 %v1433, %v1441
      %v1446 = vadd.f32 %v1434, %v1442
      %v1447 = vadd.f32 %v1435, %v1443
      %v1448 = vadd.f32 %v1436, %v1444
      %1449 = vset.pattern.permute.xlu0 12
      %1450 = vperm.xlu0 %1449, %v1267
      %v1451 = vpop.permute.xlu0 %1450
      %v1453 = vadd.f32 %v1445, %v1451
      %v1454 = vadd.f32 %v1446, %v1451
      %v1455 = vadd.f32 %v1447, %v1451
      %v1456 = vadd.f32 %v1448, %v1451
      %1457 = vset.pattern.permute.xlu0 5
      %1458 = vperm.xlu0 %1457, %v1267
      %v1459 = vpop.permute.xlu0 %1458
      %v1461 = vmul.f32 %v1397, %v1459
      %v1462 = vmul.f32 %v1398, %v1459
      %v1463 = vmul.f32 %v1399, %v1459
      %v1464 = vmul.f32 %v1400, %v1459
      %1465 = vset.pattern.permute.xlu0 9
      %1466 = vperm.xlu0 %1465, %v1267
      %v1467 = vpop.permute.xlu0 %1466
      %v1469 = vmul.f32 %v1425, %v1467
      %v1470 = vmul.f32 %v1426, %v1467
      %v1471 = vmul.f32 %v1427, %v1467
      %v1472 = vmul.f32 %v1428, %v1467
      %v1473 = vadd.f32 %v1461, %v1469
      %v1474 = vadd.f32 %v1462, %v1470
      %v1475 = vadd.f32 %v1463, %v1471
      %v1476 = vadd.f32 %v1464, %v1472
      %1477 = vset.pattern.permute.xlu0 13
      %1478 = vperm.xlu0 %1477, %v1267
      %v1479 = vpop.permute.xlu0 %1478
      %v1481 = vadd.f32 %v1473, %v1479
      %v1482 = vadd.f32 %v1474, %v1479
      %v1483 = vadd.f32 %v1475, %v1479
      %v1484 = vadd.f32 %v1476, %v1479
      %1485 = vset.pattern.permute.xlu0 6
      %1486 = vperm.xlu0 %1485, %v1267
      %v1487 = vpop.permute.xlu0 %1486
      %v1489 = vmul.f32 %v1397, %v1487
      %v1490 = vmul.f32 %v1398, %v1487
      %v1491 = vmul.f32 %v1399, %v1487
      %v1492 = vmul.f32 %v1400, %v1487
      %1493 = vset.pattern.permute.xlu0 10
      %1494 = vperm.xlu0 %1493, %v1267
      %v1495 = vpop.permute.xlu0 %1494
      %v1497 = vmul.f32 %v1425, %v1495
      %v1498 = vmul.f32 %v1426, %v1495
      %v1499 = vmul.f32 %v1427, %v1495
      %v1500 = vmul.f32 %v1428, %v1495
      %v1501 = vadd.f32 %v1489, %v1497
      %v1502 = vadd.f32 %v1490, %v1498
      %v1503 = vadd.f32 %v1491, %v1499
      %v1504 = vadd.f32 %v1492, %v1500
      %1505 = vset.pattern.permute.xlu0 14
      %1506 = vperm.xlu0 %1505, %v1267
      %v1507 = vpop.permute.xlu0 %1506
      %v1509 = vadd.f32 %v1501, %v1507
      %v1510 = vadd.f32 %v1502, %v1507
      %v1511 = vadd.f32 %v1503, %v1507
      %v1512 = vadd.f32 %v1504, %v1507
      %1513 = vset.pattern.permute.xlu0 7
      %1514 = vperm.xlu0 %1513, %v1267
      %v1515 = vpop.permute.xlu0 %1514
      %v1517 = vmul.f32 %v1397, %v1515
      %v1518 = vmul.f32 %v1398, %v1515
      %v1519 = vmul.f32 %v1399, %v1515
      %v1520 = vmul.f32 %v1400, %v1515
      %1521 = vset.pattern.permute.xlu0 11
      %1522 = vperm.xlu0 %1521, %v1267
      %v1523 = vpop.permute.xlu0 %1522
      %v1525 = vmul.f32 %v1425, %v1523
      %v1526 = vmul.f32 %v1426, %v1523
      %v1527 = vmul.f32 %v1427, %v1523
      %v1528 = vmul.f32 %v1428, %v1523
      %v1529 = vadd.f32 %v1517, %v1525
      %v1530 = vadd.f32 %v1518, %v1526
      %v1531 = vadd.f32 %v1519, %v1527
      %v1532 = vadd.f32 %v1520, %v1528
      %1533 = vset.pattern.permute.xlu0 15
      %1534 = vperm.xlu0 %1533, %v1267
      %v1535 = vpop.permute.xlu0 %1534
      %v1537 = vadd.f32 %v1529, %v1535
      %v1538 = vadd.f32 %v1530, %v1535
      %v1539 = vadd.f32 %v1531, %v1535
      %v1540 = vadd.f32 %v1532, %v1535
      %v1541 = vxor.u32 %v1509, 2147483648
      %v1542 = vxor.u32 %v1510, 2147483648
      %v1543 = vxor.u32 %v1511, 2147483648
      %v1544 = vxor.u32 %v1512, 2147483648
      %v1545 = vmul.f32 %v1541, 1.442695
      %v1546 = vpow.pop %v1545
      %v1547 = vmul.f32 %v1542, 1.442695
      %v1548 = vpow.pop %v1547
      %v1549 = vmul.f32 %v1543, 1.442695
      %v1550 = vpow.pop %v1549
      %v1551 = vmul.f32 %v1544, 1.442695
      %v1552 = vpow.pop %v1551
      %v1553 = vadd.f32 %v1546, 1.0
      %v1554 = vadd.f32 %v1548, 1.0
      %v1555 = vadd.f32 %v1550, 1.0
      %v1556 = vadd.f32 %v1552, 1.0
      %v1557 = vrcp.pop %v1553
      %v1558 = vmul.f32 1.0, %v1557
      %v1559 = vrcp.pop %v1554
      %v1560 = vmul.f32 1.0, %v1559
      %v1561 = vrcp.pop %v1555
      %v1562 = vmul.f32 1.0, %v1561
      %v1563 = vrcp.pop %v1556
      %v1564 = vmul.f32 1.0, %v1563
      %v1565 = vmul.f32 %v1453, %v1558
      %v1566 = vmul.f32 %v1454, %v1560
      %v1567 = vmul.f32 %v1455, %v1562
      %v1568 = vmul.f32 %v1456, %v1564
      %v1569 = vxor.u32 %v1537, 2147483648
      %v1570 = vxor.u32 %v1538, 2147483648
      %v1571 = vxor.u32 %v1539, 2147483648
      %v1572 = vxor.u32 %v1540, 2147483648
      %v1573 = vmul.f32 %v1569, 1.442695
      %v1574 = vpow.pop %v1573
      %v1575 = vmul.f32 %v1570, 1.442695
      %v1576 = vpow.pop %v1575
      %v1577 = vmul.f32 %v1571, 1.442695
      %v1578 = vpow.pop %v1577
      %v1579 = vmul.f32 %v1572, 1.442695
      %v1580 = vpow.pop %v1579
      %v1581 = vadd.f32 %v1574, 1.0
      %v1582 = vadd.f32 %v1576, 1.0
      %v1583 = vadd.f32 %v1578, 1.0
      %v1584 = vadd.f32 %v1580, 1.0
      %v1585 = vrcp.pop %v1581
      %v1586 = vmul.f32 1.0, %v1585
      %v1587 = vrcp.pop %v1582
      %v1588 = vmul.f32 1.0, %v1587
      %v1589 = vrcp.pop %v1583
      %v1590 = vmul.f32 1.0, %v1589
      %v1591 = vrcp.pop %v1584
      %v1592 = vmul.f32 1.0, %v1591
      %v1593 = vmul.f32 %v1481, %v1586
      %v1594 = vmul.f32 %v1482, %v1588
      %v1595 = vmul.f32 %v1483, %v1590
      %v1596 = vmul.f32 %v1484, %v1592
      %v1597 = vld [vmem:[%s473] sm:$0xff]
      %v1598 = vld [vmem:[%s473 + $0x8] sm:$0xff]
      %v1599 = vmul.f32 %v1257, %v1565
      %v1600 = vmul.f32 %v1258, %v1566
      %v1601 = vmul.f32 %v1259, %v1567
      %v1602 = vmul.f32 %v1260, %v1568
      %v1603 = vsel %vm1211, %v1599, 0.0
      %1604 = vadd.xlane.f32.xlu0 %v1603
      %v1605 = vpop.xlane.xlu0 %1604
      %v1606 = vsel %vm1211, %v1600, 0.0
      %1607 = vadd.xlane.f32.xlu0 %v1606
      %v1608 = vpop.xlane.xlu0 %1607
      %v1609 = vsel %vm1211, %v1601, 0.0
      %1610 = vadd.xlane.f32.xlu0 %v1609
      %v1611 = vpop.xlane.xlu0 %1610
      %v1612 = vsel %vm1221, %v1602, 0.0
      %1613 = vadd.xlane.f32.xlu0 %v1612
      %v1614 = vpop.xlane.xlu0 %1613
      %v1615 = vmul.f32 %v1257, %v1593
      %v1616 = vmul.f32 %v1258, %v1594
      %v1617 = vmul.f32 %v1259, %v1595
      %v1618 = vmul.f32 %v1260, %v1596
      %v1619 = vsel %vm1211, %v1615, 0.0
      %1620 = vadd.xlane.f32.xlu0 %v1619
      %v1621 = vpop.xlane.xlu0 %1620
      %v1622 = vsel %vm1211, %v1616, 0.0
      %1623 = vadd.xlane.f32.xlu0 %v1622
      %v1624 = vpop.xlane.xlu0 %1623
      %v1625 = vsel %vm1211, %v1617, 0.0
      %1626 = vadd.xlane.f32.xlu0 %v1625
      %v1627 = vpop.xlane.xlu0 %1626
      %v1628 = vsel %vm1221, %v1618, 0.0
      %1629 = vadd.xlane.f32.xlu0 %v1628
      %v1630 = vpop.xlane.xlu0 %1629
      %v1631 = vld [vmem:[%s9] sm:$0x1]
      %v1632 = vlaneseq
      %v1633 = vshrl.u32 %v1632, 7
      %v1634 = vsub.s32 0, %v1633
      %v1635 = vrot.slane %v1631, %v1634
      %v1636 = vmul.f32 %v1605, %v1635
      %v1637 = vmul.f32 %v1608, %v1635
      %v1638 = vmul.f32 %v1611, %v1635
      %v1639 = vmul.f32 %v1614, %v1635
      %v1641 = vsel %vm1211, %v1257, 0
      %v1644 = vsel %vm1211, %v1258, 0
      %v1647 = vsel %vm1211, %v1259, 0
      %v1650 = vsel %vm1211, %v1260, 0
      %1652 = vmatprep.subr.mxu0 0.0
      %1653 = vmatpush1.msra.mxu0 0.0
      %1654 = vmatprep.subr.mxu0 0.0
      %1655 = vmatpush1.msra.mxu0 0.0
      %1656 = vmatprep.subr.mxu0 0.0
      %1657 = vmatpush1.msra.mxu0 0.0
      %1658 = vmatprep.subr.mxu0 0.0
      %1659 = vmatpush1.msra.mxu0 0.0
      %1660 = vmatprep.subr.mxu0 0.0
      %1661 = vmatpush1.msra.mxu0 0.0
      %1662 = vmatprep.subr.mxu0 0.0
      %1663 = vmatpush1.msra.mxu0 0.0
      %1664 = vmatprep.subr.mxu0 0.0
      %1665 = vmatpush1.msra.mxu0 0.0
      %1666 = vmatprep.subr.mxu0 0.0
      %1667 = vmatpush1.msra.mxu0 0.0
      %1668 = vmatprep.subr.mxu0 0.0
      %1669 = vmatpush1.msra.mxu0 0.0
      %1670 = vmatprep.subr.mxu0 0.0
      %1671 = vmatpush1.msra.mxu0 0.0
      %1672 = vmatprep.subr.mxu0 0.0
      %1673 = vmatpush1.msra.mxu0 0.0
      %1674 = vmatprep.subr.mxu0 0.0
      %1675 = vmatpush1.msra.mxu0 0.0
      %1676 = vmatprep.subr.mxu0 0.0
      %1677 = vmatpush1.msra.mxu0 0.0
      %1678 = vmatprep.subr.mxu0 0.0
      %1679 = vmatpush1.msra.mxu0 0.0
      %1680 = vmatprep.subr.mxu0 0.0
      %1681 = vmatpush1.msra.mxu0 %v1598
      %1682 = vmatprep.subr.mxu0 0.0
      %1683 = vmatpush1.msra.mxu0 %v1597
      %1684 = vmatprep.subr.mxu0 0.0
      %1685 = vmatpush2.msra.mxu0 0.0
      %1686 = vmatprep.subr.mxu0 0.0
      %1687 = vmatpush2.msra.mxu0 0.0
      %1688 = vmatprep.subr.mxu0 0.0
      %1689 = vmatpush2.msra.mxu0 0.0
      %1690 = vmatprep.subr.mxu0 0.0
      %1691 = vmatpush2.msra.mxu0 0.0
      %1692 = vmatprep.subr.mxu0 0.0
      %1693 = vmatpush2.msra.mxu0 0.0
      %1694 = vmatprep.subr.mxu0 0.0
      %1695 = vmatpush2.msra.mxu0 0.0
      %1696 = vmatprep.subr.mxu0 0.0
      %1697 = vmatpush2.msra.mxu0 0.0
      %1698 = vmatprep.subr.mxu0 0.0
      %1699 = vmatpush2.msra.mxu0 0.0
      %1700 = vmatprep.subr.mxu0 0.0
      %1701 = vmatpush2.msra.mxu0 0.0
      %1702 = vmatprep.subr.mxu0 0.0
      %1703 = vmatpush2.msra.mxu0 0.0
      %1704 = vmatprep.subr.mxu0 0.0
      %1705 = vmatpush2.msra.mxu0 0.0
      %1706 = vmatprep.subr.mxu0 0.0
      %1707 = vmatpush2.msra.mxu0 0.0
      %1708 = vmatprep.subr.mxu0 0.0
      %1709 = vmatpush2.msra.mxu0 0.0
      %1710 = vmatprep.subr.mxu0 0.0
      %1711 = vmatpush2.msra.mxu0 0.0
      %1712 = vmatprep.subr.mxu0 0.0
      %1713 = vmatpush2.msra.mxu0 0.0
      %1714 = vmatprep.subr.mxu0 0.0
      %1715 = vmatpush2.msra.mxu0 0.0
      %1716 = vmatprep.mubr.f32.mxu0 0.0
      %1717 = vmatmul.mubr.f32.gmra.mxu0 %v1641
      %v1718 = vpop.f32.mrf.mxu0
      %v1719 = vadd.f32 %v1636, %v1718
      %v1720 = vpop.f32.mrf.mxu0
      %1721 = vmatprep.mubr.f32.mxu0 0.0
      %1722 = vmatmul.mubr.f32.gmra.mxu0 %v1644
      %v1723 = vpop.f32.mrf.mxu0
      %v1724 = vadd.f32 %v1637, %v1723
      %v1725 = vpop.f32.mrf.mxu0
      %1726 = vmatprep.mubr.f32.mxu0 0.0
      %1727 = vmatmul.mubr.f32.gmra.mxu0 %v1647
      %v1728 = vpop.f32.mrf.mxu0
      %v1729 = vadd.f32 %v1638, %v1728
      %v1730 = vpop.f32.mrf.mxu0
      %1731 = vmatprep.mubr.f32.mxu0 0.0
      %1732 = vmatmul.mubr.f32.gmra.mxu0 %v1650
      %v1733 = vpop.f32.mrf.mxu0
      %v1734 = vadd.f32 %v1639, %v1733
      %v1735 = vpop.f32.mrf.mxu0
      %1736 = vdwg.mxu0
      %v1737 = vld [vmem:[%s9 + $0x1] sm:$0x1]
      %v1738 = vlaneseq
      %v1739 = vshrl.u32 %v1738, 7
      %v1740 = vsub.s32 0, %v1739
      %v1741 = vrot.slane %v1737, %v1740
      %v1742 = vmul.f32 %v1621, %v1741
      %v1743 = vmul.f32 %v1624, %v1741
      %v1744 = vmul.f32 %v1627, %v1741
      %v1745 = vmul.f32 %v1630, %v1741
      %v1746 = vadd.f32 %v1719, %v1742
      %v1747 = vadd.f32 %v1724, %v1743
      %v1748 = vadd.f32 %v1729, %v1744
      %v1749 = vadd.f32 %v1734, %v1745
      %v1750 = vld [vmem:[%s9 + $0x2] sm:$0x1]
      %v1751 = vlaneseq
      %v1752 = vshrl.u32 %v1751, 7
      %v1753 = vsub.s32 0, %v1752
      %v1754 = vrot.slane %v1750, %v1753
      %v1755 = vadd.f32 %v1746, %v1754
      %v1756 = vadd.f32 %v1747, %v1754
      %v1757 = vadd.f32 %v1748, %v1754
      %v1758 = vadd.f32 %v1749, %v1754
      %v1759 = vmul.f32 %v1755, %v520
      %v1760 = vmul.f32 %v1756, %v525
      %v1761 = vmul.f32 %v1757, %v530
      %v1762 = vmul.f32 %v1758, %v535
      %vm1763 = vcmask 261120
      %1764 = vst.msk [vmem:[%s495] sm:$0xff] %vm1763, %v1759
      %1765 = vst.msk [vmem:[%s495 + $0x8] sm:$0xff] %vm1763, %v1760
      %1766 = vst.msk [vmem:[%s495 + $0x10] sm:$0xff] %vm1763, %v1761
      %vm1767 = vcmask 260096
      %1768 = vst.msk [vmem:[%s495 + $0x18] sm:$0x7f] %vm1767, %v1762
      %s1769 = smul.u32 4, %s27
      %p1770 = scmp.lt.s32.totalorder %s26, 1
      %s1771 = scalar_select %p1770, %s26, 1
      %p1772 = scmp.lt.s32.totalorder %s1769, 3
      %s1773 = scalar_select %p1772, %s1769, 3
      %s1774 = smul.addr %s1771, 4
      %s1775 = sadd.s32 %s1773, %s1774
      %s1776 = smul.addr %s1775, 8
      %s1777 = scalar_lea.vmem %s11, %s1776
      // Predicated region
      $region65: #{variance_adaptor_forward.3} parent=63 // pred_check
        %p1778 = pneg %p312
      $region66: #{variance_adaptor_forward.3} parent=63 // pred_check_branch
        %1780 = sbr.rel (%p1778) target = $region68
      $region67: #{variance_adaptor_forward.3} parent=63 // pred_region
        %s1781 = smul.u32 4, %s27
      $region68: #{variance_adaptor_forward.3} parent=63 // pred_fallthru
        _
    $region64: #{variance_adaptor_forward.3} parent=5 // pred_fallthru
      _
    %p1782 = scmp.le.s32.totalorder 2, %s17
    // Predicated region
    $region69: #{variance_adaptor_forward.3} parent=5 // pred_check
      %p1783 = pneg %p1782
    $region70: #{variance_adaptor_forward.3} parent=5 // pred_check_branch
      %1785 = sbr.rel (%p1783) target = $region72
    $region71: #{variance_adaptor_forward.3} parent=5 // pred_region
      %s1786 = ssub.s32 %s17, 2
      // Predicated region
      $region73: #{variance_adaptor_forward.3} parent=71 // pred_check
        %p1787 = pneg %p318
      $region74: #{variance_adaptor_forward.3} parent=71 // pred_check_branch
        %1789 = sbr.rel (%p1787) target = $region76
      $region75: #{variance_adaptor_forward.3} parent=71 // pred_region
        %s1790 = smul.u32 4, %s29
        %p1791 = scmp.lt.s32.totalorder %s28, 1
        %s1792 = scalar_select %p1791, %s28, 1
        %p1793 = scmp.lt.s32.totalorder %s1790, 3
        %s1794 = scalar_select %p1793, %s1790, 3
        %s1795 = smul.addr %s1792, 4
        %s1796 = sadd.s32 %s1794, %s1795
        %s1797 = smul.addr %s1796, 8
        %s1798 = scalar_lea.vmem %s11, %s1797
      $region76: #{variance_adaptor_forward.3} parent=71 // pred_fallthru
        _
    $region72: #{variance_adaptor_forward.3} parent=5 // pred_fallthru
      _
  $region6: #{variance_adaptor_forward.3} parent=0 // loop_footer
    %s21 = sadd.s32 1, %s17
  $region7: #{variance_adaptor_forward.3} parent=0 // loop_footer_branch
    %16 = sbr.rel target = $region3
  $region8: #{variance_adaptor_forward.3} parent=0 // loop_exit
    _

</llo_original>
